<compile_context>
chip_gen: v7x
topology: tpu7x:2x2x1
jax: 0.10.0
libtpu: 0.0.40
codegen_flags: <defaults>
</compile_context>

<pallas_src>
import functools

import jax
import jax.numpy as jnp
from jax.experimental import pallas as pl
from jax.experimental.pallas import tpu as pltpu

LANES = 128
NEG_BIG = -1e30  # padded-atom logit (exp -> 0), avoids inf arithmetic


def _round_up(x, m):
    return (x + m - 1) // m * m


def _pick_row_tile(M, unit, t_max):
    """Row tile (multiple of `unit`): >=2 grid steps when possible (v7x
    megacore), capped at t_max.  Returns (tile, padded_M)."""
    Mu = _round_up(max(M, unit), unit)
    if Mu <= 2 * unit:
        t = Mu
    else:
        t = min(t_max, _round_up((Mu + 1) // 2, unit))
    return t, _round_up(M, t)


# ----------------------------------------------------------------------------
# Kernel 1: matmul + bias + ReLU (all conv layers via im2col).
# K untiled (<=640), weight/bias VMEM-resident, M streamed on a parallel grid.
# ----------------------------------------------------------------------------
def _matmul_bias_relu_kernel(x_ref, w_ref, b_ref, o_ref):
    y = jnp.dot(x_ref[...], w_ref[...], preferred_element_type=jnp.float32)
    o_ref[...] = jnp.maximum(y + b_ref[...], 0.0).astype(o_ref.dtype)


def matmul_bias_relu(x, w, b, *, tm_max=512):
    """relu(x @ w + b). x:(M,K) bf16, w:(K,N) bf16, b:(1,N) f32. N % 128 == 0."""
    M, K = x.shape
    K2, N = w.shape
    assert K == K2 and N % LANES == 0, (K, K2, N)
    tm, Mp = _pick_row_tile(M, 8, tm_max)
    if Mp != M:
        x = jnp.pad(x, ((0, Mp - M), (0, 0)))

    out = pl.pallas_call(
        _matmul_bias_relu_kernel,
        out_shape=jax.ShapeDtypeStruct((Mp, N), jnp.bfloat16),
        grid_spec=pltpu.PrefetchScalarGridSpec(
            num_scalar_prefetch=0,
            grid=(Mp // tm,),
            in_specs=[
                pl.BlockSpec((tm, K), lambda i: (i, 0)),   # streamed patch rows
                pl.BlockSpec((K, N), lambda i: (0, 0)),    # resident weight
                pl.BlockSpec((1, N), lambda i: (0, 0)),    # resident bias
            ],
            out_specs=pl.BlockSpec((tm, N), lambda i: (i, 0)),
        ),
        compiler_params=pltpu.CompilerParams(
            dimension_semantics=("parallel",),
            vmem_limit_bytes=32 * 1024 * 1024,
        ),
    )(x, w, b)
    return out if Mp == M else out[:M]


# ----------------------------------------------------------------------------
# Kernel 2: fused main linear (1024x1024) + dueling head + per-action softmax,
# gridded over batch-row tiles, all weights VMEM-resident.
# ----------------------------------------------------------------------------
def _fc_dueling_head_kernel(h_ref, wm_ref, bm_ref, wa_ref, ba_ref,
                            wv_ref, bv_ref, q_ref, *, n_actions, seg):
    h = jnp.dot(h_ref[...], wm_ref[...], preferred_element_type=jnp.float32)
    h = jnp.maximum(h + bm_ref[...], 0.0).astype(jnp.bfloat16)          # (tb,1024)
    half = h.shape[1] // 2
    h_a = h[:, :half]
    h_v = h[:, half:]
    # advantage stream (mean-subtraction folded into wa/ba) and value stream
    ya = jnp.dot(h_a, wa_ref[...], preferred_element_type=jnp.float32) + ba_ref[...]
    ys = jnp.dot(h_v, wv_ref[...], preferred_element_type=jnp.float32) + bv_ref[...]
    for a in range(n_actions):                      # static, lane-aligned segments
        logits = ya[:, a * seg:(a + 1) * seg] + ys
        m = jnp.max(logits, axis=1, keepdims=True)
        e = jnp.exp(logits - m)
        denom = jnp.sum(e, axis=1, keepdims=True)
        q_ref[:, a * seg:(a + 1) * seg] = e / denom          # exact division


def fc_dueling_head(h_flat, pp, *, n_actions, seg, tb_max=128):
    B, Kin = h_flat.shape
    tb, Bp = _pick_row_tile(B, 16, tb_max)   # bf16 packs 16 rows per sublane tile
    if Bp != B:
        h_flat = jnp.pad(h_flat, ((0, Bp - B), (0, 0)))
    Nout = n_actions * seg
    q_full = pl.pallas_call(
        functools.partial(_fc_dueling_head_kernel, n_actions=n_actions, seg=seg),
        out_shape=jax.ShapeDtypeStruct((Bp, Nout), jnp.float32),
        grid_spec=pltpu.PrefetchScalarGridSpec(
            num_scalar_prefetch=0,
            grid=(Bp // tb,),
            in_specs=[
                pl.BlockSpec((tb, Kin), lambda i: (i, 0)),           # streamed rows
                pl.BlockSpec(pp["main_w"].shape, lambda i: (0, 0)),  # resident
                pl.BlockSpec(pp["main_b"].shape, lambda i: (0, 0)),
                pl.BlockSpec(pp["a_w"].shape, lambda i: (0, 0)),
                pl.BlockSpec(pp["a_b"].shape, lambda i: (0, 0)),
                pl.BlockSpec(pp["v_w"].shape, lambda i: (0, 0)),
                pl.BlockSpec(pp["v_b"].shape, lambda i: (0, 0)),
            ],
            out_specs=pl.BlockSpec((tb, Nout), lambda i: (i, 0)),
        ),
        compiler_params=pltpu.CompilerParams(
            dimension_semantics=("parallel",),
            vmem_limit_bytes=32 * 1024 * 1024,
        ),
    )(h_flat, pp["main_w"], pp["main_b"], pp["a_w"], pp["a_b"],
      pp["v_w"], pp["v_b"])
    return q_full[:B]


# ----------------------------------------------------------------------------
# im2col (NHWC) — pure data-layout glue, operates on de-padded channels
# ----------------------------------------------------------------------------
def _im2col_nhwc(x, kh, kw, stride):
    """x:(B,H,W,C) -> (B*Ho*Wo, kh*kw*C); element order (i, j, c)."""
    B, H, W, C = x.shape
    Ho = (H - kh) // stride + 1
    Wo = (W - kw) // stride + 1
    cols = []
    for i in range(kh):
        for j in range(kw):
            cols.append(x[:, i:i + stride * Ho:stride, j:j + stride * Wo:stride, :])
    p = jnp.stack(cols, axis=3)                    # (B, Ho, Wo, kh*kw, C)
    return p.reshape(B * Ho * Wo, kh * kw * C), Ho, Wo


def conv2d_relu_nhwc(x, wmat, b, kh, kw, stride, c_out):
    """x NHWC bf16, wmat:(kh*kw*Cin, Cout_pad128) bf16. Output is sliced back to
    the true c_out so lane-padded channels never enter the next contraction."""
    B = x.shape[0]
    patches, Ho, Wo = _im2col_nhwc(x, kh, kw, stride)
    y = matmul_bias_relu(patches, wmat, b)
    return y.reshape(B, Ho, Wo, wmat.shape[1])[..., :c_out]


# ----------------------------------------------------------------------------
# One-time parameter preparation (transpose / pad / fold / bf16-cast)
# ----------------------------------------------------------------------------
def _prep_conv(w, b):
    """w OIHW (Cout,Cin,kh,kw) -> ((kh*kw*Cin), Cout_pad128) bf16 with rows in
    NHWC patch order (i, j, cin); b -> (1, Cout_pad) f32.  No Cin padding."""
    Cout, Cin, kh, kw = w.shape
    cout_pad = _round_up(Cout, LANES)
    wm = jnp.transpose(w, (2, 3, 1, 0)).reshape(kh * kw * Cin, Cout)
    wm = jnp.pad(wm, ((0, 0), (0, cout_pad - Cout)))
    bp = jnp.pad(b, (0, cout_pad - Cout)).reshape(1, cout_pad)
    return wm.astype(jnp.bfloat16), bp.astype(jnp.float32)


def prepare_params(params, n_actions, n_atoms):
    A, Z = n_actions, n_atoms
    seg = _round_up(Z, LANES)
    pp = {}
    pp["conv1_w"], pp["conv1_b"] = _prep_conv(params["conv1_w"], params["conv1_b"])
    pp["conv2_w"], pp["conv2_b"] = _prep_conv(params["conv2_w"], params["conv2_b"])
    pp["conv3_w"], pp["conv3_b"] = _prep_conv(params["conv3_w"], params["conv3_b"])

    # main_stream: rows are the NCHW flatten (c,h,w) of the (64,4,4) conv3
    # output; re-permute to the NHWC (h,w,c) flatten (no channel padding now).
    C3, Hs, Ws = 64, 4, 4
    wm = params["main_w"].reshape(C3, Hs, Ws, -1).transpose(1, 2, 0, 3)
    pp["main_w"] = wm.reshape(Hs * Ws * C3, -1).astype(jnp.bfloat16)   # (1024,1024)
    pp["main_b"] = params["main_b"].reshape(1, -1).astype(jnp.float32)

    # advantage stream: fold the dueling mean subtraction into the weights and
    # bias, pad each action's atom segment to 128 lanes (padded logit = -1e30).
    wa = params["a_w"].reshape(-1, A, Z)
    wa = wa - jnp.mean(wa, axis=1, keepdims=True)
    wa = jnp.pad(wa, ((0, 0), (0, 0), (0, seg - Z)))
    pp["a_w"] = wa.reshape(-1, A * seg).astype(jnp.bfloat16)
    ba = params["a_b"].reshape(A, Z)
    ba = ba - jnp.mean(ba, axis=0, keepdims=True)
    ba = jnp.pad(ba, ((0, 0), (0, seg - Z)), constant_values=NEG_BIG)
    pp["a_b"] = ba.reshape(1, A * seg).astype(jnp.float32)

    # value stream: pad atoms to 128 lanes (padded columns contribute 0).
    pp["v_w"] = jnp.pad(params["v_w"], ((0, 0), (0, seg - Z))).astype(jnp.bfloat16)
    pp["v_b"] = jnp.pad(params["v_b"], (0, seg - Z)).reshape(1, seg).astype(jnp.float32)

    pp["z_values"] = params["z_values"]
    return pp


# ----------------------------------------------------------------------------
# Full forward pass (external interface: NCHW input, like PyTorch)
# ----------------------------------------------------------------------------
def forward(pp, x, *, n_actions, n_atoms):
    seg = _round_up(n_atoms, LANES)
    B = x.shape[0]
    h = jnp.transpose(x, (0, 2, 3, 1)).astype(jnp.bfloat16)   # single NCHW->NHWC
    h = conv2d_relu_nhwc(h, pp["conv1_w"], pp["conv1_b"], 8, 8, 4, c_out=32)
    h = conv2d_relu_nhwc(h, pp["conv2_w"], pp["conv2_b"], 4, 4, 2, c_out=64)
    h = conv2d_relu_nhwc(h, pp["conv3_w"], pp["conv3_b"], 3, 3, 1, c_out=64)
    h_flat = h.reshape(B, -1)                    # NHWC (h,w,c) flatten -> (B, 1024)
    q_flat = fc_dueling_head(h_flat, pp, n_actions=n_actions, seg=seg)
    q = q_flat.reshape(B, n_actions, seg)[:, :, :n_atoms]
    return q, pp["z_values"]


# ----------------------------------------------------------------------------
# Deterministic parameter init (mimics init_chainer_default: LeCun-normal
# weights, zero linear bias; conv biases = 0.1)
# ----------------------------------------------------------------------------
def init_params(key, n_actions, n_atoms, n_input_channels=4,
                v_min=-10.0, v_max=10.0, conv_bias=0.1):
    ks = jax.random.split(key, 6)

    def lecun(k, shape, fan_in):
        return jax.random.normal(k, shape, jnp.float32) / jnp.sqrt(float(fan_in))

    return {
        "conv1_w": lecun(ks[0], (32, n_input_channels, 8, 8), n_input_channels * 64),
        "conv1_b": jnp.full((32,), conv_bias, jnp.float32),
        "conv2_w": lecun(ks[1], (64, 32, 4, 4), 32 * 16),
        "conv2_b": jnp.full((64,), conv_bias, jnp.float32),
        "conv3_w": lecun(ks[2], (64, 64, 3, 3), 64 * 9),
        "conv3_b": jnp.full((64,), conv_bias, jnp.float32),
        "main_w": lecun(ks[3], (1024, 1024), 1024),
        "main_b": jnp.zeros((1024,), jnp.float32),
        "a_w": lecun(ks[4], (512, n_actions * n_atoms), 512),
        "a_b": jnp.zeros((n_actions * n_atoms,), jnp.float32),
        "v_w": lecun(ks[5], (512, n_atoms), 512),
        "v_b": jnp.zeros((n_atoms,), jnp.float32),
        "z_values": jnp.linspace(v_min, v_max, n_atoms, dtype=jnp.float32),
    }


# ----------------------------------------------------------------------------
# Pure-JAX f32 reference (correctness check only)
# ----------------------------------------------------------------------------
def reference_forward(params, x, n_actions, n_atoms):
    def conv(h, w, b, s):
        y = jax.lax.conv_general_dilated(
            h, w, (s, s), "VALID", dimension_numbers=("NCHW", "OIHW", "NCHW"))
        return jax.nn.relu(y + b[None, :, None, None])

    h = conv(x, params["conv1_w"], params["conv1_b"], 4)
    h = conv(h, params["conv2_w"], params["conv2_b"], 2)
    h = conv(h, params["conv3_w"], params["conv3_b"], 1)
    B = x.shape[0]
    h = h.reshape(B, -1)
    h = jax.nn.relu(h @ params["main_w"] + params["main_b"])
    h_a, h_v = h[:, :512], h[:, 512:]
    ya = (h_a @ params["a_w"] + params["a_b"]).reshape(B, n_actions, n_atoms)
    ya = ya - ya.sum(axis=1, keepdims=True) / n_actions
    ys = (h_v @ params["v_w"] + params["v_b"]).reshape(B, 1, n_atoms)
    return jax.nn.softmax(ya + ys, axis=2)


if __name__ == "__main__":
    n_actions, n_atoms = 4, 51
    batch = 2
    # Input spatial size implied by main_stream=Linear(1024,1024): 64x64 -> 64*4*4=1024
    key = jax.random.PRNGKey(0)
    pkey, xkey = jax.random.split(key)
    params = init_params(pkey, n_actions, n_atoms, n_input_channels=4)
    x = jax.random.normal(xkey, (batch, 4, 64, 64), jnp.float32)

    pp = prepare_params(params, n_actions, n_atoms)   # one-time weight prep
    fwd = jax.jit(functools.partial(forward, n_actions=n_actions, n_atoms=n_atoms))
    q, z = fwd(pp, x)
    q = jax.block_until_ready(q)

    assert q.shape == (batch, n_actions, n_atoms)
    assert z.shape == (n_atoms,)
    # distribution sanity (exact softmax division -> tight normalization)
    assert bool(jnp.all(jnp.abs(jnp.sum(q, axis=2) - 1.0) < 1e-3))
    # match pure-JAX f32 reference (kernel uses bf16 MXU inputs)
    q_ref = reference_forward(params, x, n_actions, n_atoms)
    assert bool(jnp.allclose(q, q_ref, atol=1e-2, rtol=1e-2)), float(
        jnp.max(jnp.abs(q - q_ref)))

    print("KERNEL_OK")
</pallas_src>

<mosaic_0001>
module attributes {stable_mosaic.version = 11 : i64} {
  func.func @_matmul_bias_relu_kernel(%arg0: i32, %arg1: memref<232x256xbf16, #tpu.memory_space<vmem>>, %arg2: memref<256x128xbf16, #tpu.memory_space<vmem>>, %arg3: memref<1x128xf32, #tpu.memory_space<vmem>>, %arg4: memref<232x128xbf16, #tpu.memory_space<vmem>>) attributes {dimension_semantics = [#tpu.dimension_semantics<parallel>], iteration_bounds = array<i64: 2>, scalar_prefetch = 0 : i64, scratch_operands = 0 : i64, tpu.core_type = #tpu.core_type<tc>, window_params = [{transform_indices = @transform_0, window_bounds = array<i64: 232, 256>}, {pipeline_mode = #tpu.pipeline_mode<synchronous>, transform_indices = @transform_1, window_bounds = array<i64: 256, 128>}, {pipeline_mode = #tpu.pipeline_mode<synchronous>, transform_indices = @transform_2, window_bounds = array<i64: 1, 128>}, {transform_indices = @transform_3, window_bounds = array<i64: 232, 128>}]} {
    %c0 = arith.constant 0 : index
    %c0_0 = arith.constant 0 : index
    %0 = vector.load %arg1[%c0, %c0_0] : memref<232x256xbf16, #tpu.memory_space<vmem>>, vector<232x256xbf16>
    %c0_1 = arith.constant 0 : index
    %c0_2 = arith.constant 0 : index
    %1 = vector.load %arg2[%c0_1, %c0_2] : memref<256x128xbf16, #tpu.memory_space<vmem>>, vector<256x128xbf16>
    %cst = arith.constant dense<0.000000e+00> : vector<232x128xf32>
    %2 = tpu.matmul %0, %1, %cst {dimension_numbers = #tpu.dot_dimension_numbers<[1], [0], [0], [1], [0, 0, 1, 1], [], []>} : vector<232x256xbf16>, vector<256x128xbf16>, vector<232x128xf32> -> vector<232x128xf32>
    %c0_3 = arith.constant 0 : index
    %c0_4 = arith.constant 0 : index
    %3 = vector.load %arg3[%c0_3, %c0_4] : memref<1x128xf32, #tpu.memory_space<vmem>>, vector<1x128xf32>
    %4 = vector.broadcast %3 : vector<1x128xf32> to vector<232x128xf32>
    %5 = arith.addf %2, %4 : vector<232x128xf32>
    %cst_5 = arith.constant 0.000000e+00 : f32
    %6 = vector.broadcast %cst_5 : f32 to vector<232x128xf32>
    %7 = arith.maximumf %5, %6 : vector<232x128xf32>
    %8 = arith.truncf %7 : vector<232x128xf32> to vector<232x128xbf16>
    %c0_6 = arith.constant 0 : index
    %c0_7 = arith.constant 0 : index
    %9 = vector.load %arg4[%c0_6, %c0_7] : memref<232x128xbf16, #tpu.memory_space<vmem>>, vector<232x128xbf16>
    tpu.vector_store %arg4[%c0_6, %c0_7], %8 {strides = array<i32>} : memref<232x128xbf16, #tpu.memory_space<vmem>>, vector<232x128xbf16>,
    return
  }
  func.func @transform_0(%arg0: i32) -> (i32, i32) {
    %c0_i32 = arith.constant 0 : i32
    %c0_i32_0 = arith.constant 0 : i32
    return %arg0, %c0_i32 : i32, i32
  }
  func.func @transform_1(%arg0: i32) -> (i32, i32) {
    %c0_i32 = arith.constant 0 : i32
    %c0_i32_0 = arith.constant 0 : i32
    %c0_i32_1 = arith.constant 0 : i32
    return %c0_i32, %c0_i32_0 : i32, i32
  }
  func.func @transform_2(%arg0: i32) -> (i32, i32) {
    %c0_i32 = arith.constant 0 : i32
    %c0_i32_0 = arith.constant 0 : i32
    %c0_i32_1 = arith.constant 0 : i32
    return %c0_i32, %c0_i32_0 : i32, i32
  }
  func.func @transform_3(%arg0: i32) -> (i32, i32) {
    %c0_i32 = arith.constant 0 : i32
    %c0_i32_0 = arith.constant 0 : i32
    return %arg0, %c0_i32 : i32, i32
  }
}

module attributes {stable_mosaic.version = 11 : i64} {
  func.func @_matmul_bias_relu_kernel(%arg0: i32, %arg1: memref<40x512xbf16, #tpu.memory_space<vmem>>, %arg2: memref<512x128xbf16, #tpu.memory_space<vmem>>, %arg3: memref<1x128xf32, #tpu.memory_space<vmem>>, %arg4: memref<40x128xbf16, #tpu.memory_space<vmem>>) attributes {dimension_semantics = [#tpu.dimension_semantics<parallel>], iteration_bounds = array<i64: 2>, scalar_prefetch = 0 : i64, scratch_operands = 0 : i64, tpu.core_type = #tpu.core_type<tc>, window_params = [{transform_indices = @transform_0, window_bounds = array<i64: 40, 512>}, {pipeline_mode = #tpu.pipeline_mode<synchronous>, transform_indices = @transform_1, window_bounds = array<i64: 512, 128>}, {pipeline_mode = #tpu.pipeline_mode<synchronous>, transform_indices = @transform_2, window_bounds = array<i64: 1, 128>}, {transform_indices = @transform_3, window_bounds = array<i64: 40, 128>}]} {
    %c0 = arith.constant 0 : index
    %c0_0 = arith.constant 0 : index
    %0 = vector.load %arg1[%c0, %c0_0] : memref<40x512xbf16, #tpu.memory_space<vmem>>, vector<40x512xbf16>
    %c0_1 = arith.constant 0 : index
    %c0_2 = arith.constant 0 : index
    %1 = vector.load %arg2[%c0_1, %c0_2] : memref<512x128xbf16, #tpu.memory_space<vmem>>, vector<512x128xbf16>
    %cst = arith.constant dense<0.000000e+00> : vector<40x128xf32>
    %2 = tpu.matmul %0, %1, %cst {dimension_numbers = #tpu.dot_dimension_numbers<[1], [0], [0], [1], [0, 0, 1, 1], [], []>} : vector<40x512xbf16>, vector<512x128xbf16>, vector<40x128xf32> -> vector<40x128xf32>
    %c0_3 = arith.constant 0 : index
    %c0_4 = arith.constant 0 : index
    %3 = vector.load %arg3[%c0_3, %c0_4] : memref<1x128xf32, #tpu.memory_space<vmem>>, vector<1x128xf32>
    %4 = vector.broadcast %3 : vector<1x128xf32> to vector<40x128xf32>
    %5 = arith.addf %2, %4 : vector<40x128xf32>
    %cst_5 = arith.constant 0.000000e+00 : f32
    %6 = vector.broadcast %cst_5 : f32 to vector<40x128xf32>
    %7 = arith.maximumf %5, %6 : vector<40x128xf32>
    %8 = arith.truncf %7 : vector<40x128xf32> to vector<40x128xbf16>
    %c0_6 = arith.constant 0 : index
    %c0_7 = arith.constant 0 : index
    %9 = vector.load %arg4[%c0_6, %c0_7] : memref<40x128xbf16, #tpu.memory_space<vmem>>, vector<40x128xbf16>
    tpu.vector_store %arg4[%c0_6, %c0_7], %8 {strides = array<i32>} : memref<40x128xbf16, #tpu.memory_space<vmem>>, vector<40x128xbf16>,
    return
  }
  func.func @transform_0(%arg0: i32) -> (i32, i32) {
    %c0_i32 = arith.constant 0 : i32
    %c0_i32_0 = arith.constant 0 : i32
    return %arg0, %c0_i32 : i32, i32
  }
  func.func @transform_1(%arg0: i32) -> (i32, i32) {
    %c0_i32 = arith.constant 0 : i32
    %c0_i32_0 = arith.constant 0 : i32
    %c0_i32_1 = arith.constant 0 : i32
    return %c0_i32, %c0_i32_0 : i32, i32
  }
  func.func @transform_2(%arg0: i32) -> (i32, i32) {
    %c0_i32 = arith.constant 0 : i32
    %c0_i32_0 = arith.constant 0 : i32
    %c0_i32_1 = arith.constant 0 : i32
    return %c0_i32, %c0_i32_0 : i32, i32
  }
  func.func @transform_3(%arg0: i32) -> (i32, i32) {
    %c0_i32 = arith.constant 0 : i32
    %c0_i32_0 = arith.constant 0 : i32
    return %arg0, %c0_i32 : i32, i32
  }
}

module attributes {stable_mosaic.version = 11 : i64} {
  func.func @_matmul_bias_relu_kernel(%arg0: i32, %arg1: memref<16x576xbf16, #tpu.memory_space<vmem>>, %arg2: memref<576x128xbf16, #tpu.memory_space<vmem>>, %arg3: memref<1x128xf32, #tpu.memory_space<vmem>>, %arg4: memref<16x128xbf16, #tpu.memory_space<vmem>>) attributes {dimension_semantics = [#tpu.dimension_semantics<parallel>], iteration_bounds = array<i64: 2>, scalar_prefetch = 0 : i64, scratch_operands = 0 : i64, tpu.core_type = #tpu.core_type<tc>, window_params = [{transform_indices = @transform_0, window_bounds = array<i64: 16, 576>}, {pipeline_mode = #tpu.pipeline_mode<synchronous>, transform_indices = @transform_1, window_bounds = array<i64: 576, 128>}, {pipeline_mode = #tpu.pipeline_mode<synchronous>, transform_indices = @transform_2, window_bounds = array<i64: 1, 128>}, {transform_indices = @transform_3, window_bounds = array<i64: 16, 128>}]} {
    %c0 = arith.constant 0 : index
    %c0_0 = arith.constant 0 : index
    %0 = vector.load %arg1[%c0, %c0_0] : memref<16x576xbf16, #tpu.memory_space<vmem>>, vector<16x576xbf16>
    %c0_1 = arith.constant 0 : index
    %c0_2 = arith.constant 0 : index
    %1 = vector.load %arg2[%c0_1, %c0_2] : memref<576x128xbf16, #tpu.memory_space<vmem>>, vector<576x128xbf16>
    %cst = arith.constant dense<0.000000e+00> : vector<16x128xf32>
    %2 = tpu.matmul %0, %1, %cst {dimension_numbers = #tpu.dot_dimension_numbers<[1], [0], [0], [1], [0, 0, 1, 1], [], []>} : vector<16x576xbf16>, vector<576x128xbf16>, vector<16x128xf32> -> vector<16x128xf32>
    %c0_3 = arith.constant 0 : index
    %c0_4 = arith.constant 0 : index
    %3 = vector.load %arg3[%c0_3, %c0_4] : memref<1x128xf32, #tpu.memory_space<vmem>>, vector<1x128xf32>
    %4 = vector.broadcast %3 : vector<1x128xf32> to vector<16x128xf32>
    %5 = arith.addf %2, %4 : vector<16x128xf32>
    %cst_5 = arith.constant 0.000000e+00 : f32
    %6 = vector.broadcast %cst_5 : f32 to vector<16x128xf32>
    %7 = arith.maximumf %5, %6 : vector<16x128xf32>
    %8 = arith.truncf %7 : vector<16x128xf32> to vector<16x128xbf16>
    %c0_6 = arith.constant 0 : index
    %c0_7 = arith.constant 0 : index
    %9 = vector.load %arg4[%c0_6, %c0_7] : memref<16x128xbf16, #tpu.memory_space<vmem>>, vector<16x128xbf16>
    tpu.vector_store %arg4[%c0_6, %c0_7], %8 {strides = array<i32>} : memref<16x128xbf16, #tpu.memory_space<vmem>>, vector<16x128xbf16>,
    return
  }
  func.func @transform_0(%arg0: i32) -> (i32, i32) {
    %c0_i32 = arith.constant 0 : i32
    %c0_i32_0 = arith.constant 0 : i32
    return %arg0, %c0_i32 : i32, i32
  }
  func.func @transform_1(%arg0: i32) -> (i32, i32) {
    %c0_i32 = arith.constant 0 : i32
    %c0_i32_0 = arith.constant 0 : i32
    %c0_i32_1 = arith.constant 0 : i32
    return %c0_i32, %c0_i32_0 : i32, i32
  }
  func.func @transform_2(%arg0: i32) -> (i32, i32) {
    %c0_i32 = arith.constant 0 : i32
    %c0_i32_0 = arith.constant 0 : i32
    %c0_i32_1 = arith.constant 0 : i32
    return %c0_i32, %c0_i32_0 : i32, i32
  }
  func.func @transform_3(%arg0: i32) -> (i32, i32) {
    %c0_i32 = arith.constant 0 : i32
    %c0_i32_0 = arith.constant 0 : i32
    return %arg0, %c0_i32 : i32, i32
  }
}

module attributes {stable_mosaic.version = 11 : i64} {
  func.func @_fc_dueling_head_kernel(%arg0: i32, %arg1: memref<16x1024xbf16, #tpu.memory_space<vmem>>, %arg2: memref<1024x1024xbf16, #tpu.memory_space<vmem>>, %arg3: memref<1x1024xf32, #tpu.memory_space<vmem>>, %arg4: memref<512x512xbf16, #tpu.memory_space<vmem>>, %arg5: memref<1x512xf32, #tpu.memory_space<vmem>>, %arg6: memref<512x128xbf16, #tpu.memory_space<vmem>>, %arg7: memref<1x128xf32, #tpu.memory_space<vmem>>, %arg8: memref<16x512xf32, #tpu.memory_space<vmem>>) attributes {dimension_semantics = [#tpu.dimension_semantics<parallel>], iteration_bounds = array<i64: 1>, scalar_prefetch = 0 : i64, scratch_operands = 0 : i64, tpu.core_type = #tpu.core_type<tc>, window_params = [{transform_indices = @transform_0, window_bounds = array<i64: 16, 1024>}, {pipeline_mode = #tpu.pipeline_mode<synchronous>, transform_indices = @transform_1, window_bounds = array<i64: 1024, 1024>}, {pipeline_mode = #tpu.pipeline_mode<synchronous>, transform_indices = @transform_2, window_bounds = array<i64: 1, 1024>}, {pipeline_mode = #tpu.pipeline_mode<synchronous>, transform_indices = @transform_3, window_bounds = array<i64: 512, 512>}, {pipeline_mode = #tpu.pipeline_mode<synchronous>, transform_indices = @transform_4, window_bounds = array<i64: 1, 512>}, {pipeline_mode = #tpu.pipeline_mode<synchronous>, transform_indices = @transform_5, window_bounds = array<i64: 512, 128>}, {pipeline_mode = #tpu.pipeline_mode<synchronous>, transform_indices = @transform_6, window_bounds = array<i64: 1, 128>}, {transform_indices = @transform_7, window_bounds = array<i64: 16, 512>}]} {
    %c0 = arith.constant 0 : index
    %c0_0 = arith.constant 0 : index
    %0 = vector.load %arg1[%c0, %c0_0] : memref<16x1024xbf16, #tpu.memory_space<vmem>>, vector<16x1024xbf16>
    %c0_1 = arith.constant 0 : index
    %c0_2 = arith.constant 0 : index
    %1 = vector.load %arg2[%c0_1, %c0_2] : memref<1024x1024xbf16, #tpu.memory_space<vmem>>, vector<1024x1024xbf16>
    %cst = arith.constant dense<0.000000e+00> : vector<16x1024xf32>
    %2 = tpu.matmul %0, %1, %cst {dimension_numbers = #tpu.dot_dimension_numbers<[1], [0], [0], [1], [0, 0, 1, 1], [], []>} : vector<16x1024xbf16>, vector<1024x1024xbf16>, vector<16x1024xf32> -> vector<16x1024xf32>
    %c0_3 = arith.constant 0 : index
    %c0_4 = arith.constant 0 : index
    %3 = vector.load %arg3[%c0_3, %c0_4] : memref<1x1024xf32, #tpu.memory_space<vmem>>, vector<1x1024xf32>
    %4 = vector.broadcast %3 : vector<1x1024xf32> to vector<16x1024xf32>
    %5 = arith.addf %2, %4 : vector<16x1024xf32>
    %cst_5 = arith.constant 0.000000e+00 : f32
    %6 = vector.broadcast %cst_5 : f32 to vector<16x1024xf32>
    %7 = arith.maximumf %5, %6 : vector<16x1024xf32>
    %8 = arith.truncf %7 : vector<16x1024xf32> to vector<16x1024xbf16>
    %9 = vector.extract_strided_slice %8 {offsets = [0, 0], sizes = [16, 512], strides = [1, 1]} : vector<16x1024xbf16> to vector<16x512xbf16>
    %10 = vector.extract_strided_slice %8 {offsets = [0, 512], sizes = [16, 512], strides = [1, 1]} : vector<16x1024xbf16> to vector<16x512xbf16>
    %c0_6 = arith.constant 0 : index
    %c0_7 = arith.constant 0 : index
    %11 = vector.load %arg4[%c0_6, %c0_7] : memref<512x512xbf16, #tpu.memory_space<vmem>>, vector<512x512xbf16>
    %cst_8 = arith.constant dense<0.000000e+00> : vector<16x512xf32>
    %12 = tpu.matmul %9, %11, %cst_8 {dimension_numbers = #tpu.dot_dimension_numbers<[1], [0], [0], [1], [0, 0, 1, 1], [], []>} : vector<16x512xbf16>, vector<512x512xbf16>, vector<16x512xf32> -> vector<16x512xf32>
    %c0_9 = arith.constant 0 : index
    %c0_10 = arith.constant 0 : index
    %13 = vector.load %arg5[%c0_9, %c0_10] : memref<1x512xf32, #tpu.memory_space<vmem>>, vector<1x512xf32>
    %14 = vector.broadcast %13 : vector<1x512xf32> to vector<16x512xf32>
    %15 = arith.addf %12, %14 : vector<16x512xf32>
    %c0_11 = arith.constant 0 : index
    %c0_12 = arith.constant 0 : index
    %16 = vector.load %arg6[%c0_11, %c0_12] : memref<512x128xbf16, #tpu.memory_space<vmem>>, vector<512x128xbf16>
    %cst_13 = arith.constant dense<0.000000e+00> : vector<16x128xf32>
    %17 = tpu.matmul %10, %16, %cst_13 {dimension_numbers = #tpu.dot_dimension_numbers<[1], [0], [0], [1], [0, 0, 1, 1], [], []>} : vector<16x512xbf16>, vector<512x128xbf16>, vector<16x128xf32> -> vector<16x128xf32>
    %c0_14 = arith.constant 0 : index
    %c0_15 = arith.constant 0 : index
    %18 = vector.load %arg7[%c0_14, %c0_15] : memref<1x128xf32, #tpu.memory_space<vmem>>, vector<1x128xf32>
    %19 = vector.broadcast %18 : vector<1x128xf32> to vector<16x128xf32>
    %20 = arith.addf %17, %19 : vector<16x128xf32>
    %21 = vector.extract_strided_slice %15 {offsets = [0, 0], sizes = [16, 128], strides = [1, 1]} : vector<16x512xf32> to vector<16x128xf32>
    %22 = arith.addf %21, %20 : vector<16x128xf32>
    %cst_16 = arith.constant dense<0xFF800000> : vector<16xf32>
    %23 = vector.multi_reduction <maximumf>, %22, %cst_16 [1] : vector<16x128xf32> to vector<16xf32>
    %24 = vector.shape_cast %23 : vector<16xf32> to vector<16x1xf32>
    %25 = vector.broadcast %24 : vector<16x1xf32> to vector<16x128xf32>
    %26 = arith.subf %22, %25 : vector<16x128xf32>
    %27 = math.exp %26 : vector<16x128xf32>
    %cst_17 = arith.constant dense<0.000000e+00> : vector<16xf32>
    %28 = vector.multi_reduction <add>, %27, %cst_17 [1] : vector<16x128xf32> to vector<16xf32>
    %29 = vector.shape_cast %28 : vector<16xf32> to vector<16x1xf32>
    %30 = vector.broadcast %29 : vector<16x1xf32> to vector<16x128xf32>
    %31 = arith.divf %27, %30 : vector<16x128xf32>
    %c0_18 = arith.constant 0 : index
    %c0_19 = arith.constant 0 : index
    %32 = vector.load %arg8[%c0_18, %c0_19] : memref<16x512xf32, #tpu.memory_space<vmem>>, vector<16x128xf32>
    tpu.vector_store %arg8[%c0_18, %c0_19], %31 {strides = array<i32>} : memref<16x512xf32, #tpu.memory_space<vmem>>, vector<16x128xf32>,
    %33 = vector.extract_strided_slice %15 {offsets = [0, 128], sizes = [16, 128], strides = [1, 1]} : vector<16x512xf32> to vector<16x128xf32>
    %34 = arith.addf %33, %20 : vector<16x128xf32>
    %cst_20 = arith.constant dense<0xFF800000> : vector<16xf32>
    %35 = vector.multi_reduction <maximumf>, %34, %cst_20 [1] : vector<16x128xf32> to vector<16xf32>
    %36 = vector.shape_cast %35 : vector<16xf32> to vector<16x1xf32>
    %37 = vector.broadcast %36 : vector<16x1xf32> to vector<16x128xf32>
    %38 = arith.subf %34, %37 : vector<16x128xf32>
    %39 = math.exp %38 : vector<16x128xf32>
    %cst_21 = arith.constant dense<0.000000e+00> : vector<16xf32>
    %40 = vector.multi_reduction <add>, %39, %cst_21 [1] : vector<16x128xf32> to vector<16xf32>
    %41 = vector.shape_cast %40 : vector<16xf32> to vector<16x1xf32>
    %42 = vector.broadcast %41 : vector<16x1xf32> to vector<16x128xf32>
    %43 = arith.divf %39, %42 : vector<16x128xf32>
    %c0_22 = arith.constant 0 : index
    %c128 = arith.constant 128 : index
    %44 = vector.load %arg8[%c0_22, %c128] : memref<16x512xf32, #tpu.memory_space<vmem>>, vector<16x128xf32>
    tpu.vector_store %arg8[%c0_22, %c128], %43 {strides = array<i32>} : memref<16x512xf32, #tpu.memory_space<vmem>>, vector<16x128xf32>,
    %45 = vector.extract_strided_slice %15 {offsets = [0, 256], sizes = [16, 128], strides = [1, 1]} : vector<16x512xf32> to vector<16x128xf32>
    %46 = arith.addf %45, %20 : vector<16x128xf32>
    %cst_23 = arith.constant dense<0xFF800000> : vector<16xf32>
    %47 = vector.multi_reduction <maximumf>, %46, %cst_23 [1] : vector<16x128xf32> to vector<16xf32>
    %48 = vector.shape_cast %47 : vector<16xf32> to vector<16x1xf32>
    %49 = vector.broadcast %48 : vector<16x1xf32> to vector<16x128xf32>
    %50 = arith.subf %46, %49 : vector<16x128xf32>
    %51 = math.exp %50 : vector<16x128xf32>
    %cst_24 = arith.constant dense<0.000000e+00> : vector<16xf32>
    %52 = vector.multi_reduction <add>, %51, %cst_24 [1] : vector<16x128xf32> to vector<16xf32>
    %53 = vector.shape_cast %52 : vector<16xf32> to vector<16x1xf32>
    %54 = vector.broadcast %53 : vector<16x1xf32> to vector<16x128xf32>
    %55 = arith.divf %51, %54 : vector<16x128xf32>
    %c0_25 = arith.constant 0 : index
    %c256 = arith.constant 256 : index
    %56 = vector.load %arg8[%c0_25, %c256] : memref<16x512xf32, #tpu.memory_space<vmem>>, vector<16x128xf32>
    tpu.vector_store %arg8[%c0_25, %c256], %55 {strides = array<i32>} : memref<16x512xf32, #tpu.memory_space<vmem>>, vector<16x128xf32>,
    %57 = vector.extract_strided_slice %15 {offsets = [0, 384], sizes = [16, 128], strides = [1, 1]} : vector<16x512xf32> to vector<16x128xf32>
    %58 = arith.addf %57, %20 : vector<16x128xf32>
    %cst_26 = arith.constant dense<0xFF800000> : vector<16xf32>
    %59 = vector.multi_reduction <maximumf>, %58, %cst_26 [1] : vector<16x128xf32> to vector<16xf32>
    %60 = vector.shape_cast %59 : vector<16xf32> to vector<16x1xf32>
    %61 = vector.broadcast %60 : vector<16x1xf32> to vector<16x128xf32>
    %62 = arith.subf %58, %61 : vector<16x128xf32>
    %63 = math.exp %62 : vector<16x128xf32>
    %cst_27 = arith.constant dense<0.000000e+00> : vector<16xf32>
    %64 = vector.multi_reduction <add>, %63, %cst_27 [1] : vector<16x128xf32> to vector<16xf32>
    %65 = vector.shape_cast %64 : vector<16xf32> to vector<16x1xf32>
    %66 = vector.broadcast %65 : vector<16x1xf32> to vector<16x128xf32>
    %67 = arith.divf %63, %66 : vector<16x128xf32>
    %c0_28 = arith.constant 0 : index
    %c384 = arith.constant 384 : index
    %68 = vector.load %arg8[%c0_28, %c384] : memref<16x512xf32, #tpu.memory_space<vmem>>, vector<16x128xf32>
    tpu.vector_store %arg8[%c0_28, %c384], %67 {strides = array<i32>} : memref<16x512xf32, #tpu.memory_space<vmem>>, vector<16x128xf32>,
    return
  }
  func.func @transform_0(%arg0: i32) -> (i32, i32) {
    %c0_i32 = arith.constant 0 : i32
    %c0_i32_0 = arith.constant 0 : i32
    return %arg0, %c0_i32 : i32, i32
  }
  func.func @transform_1(%arg0: i32) -> (i32, i32) {
    %c0_i32 = arith.constant 0 : i32
    %c0_i32_0 = arith.constant 0 : i32
    %c0_i32_1 = arith.constant 0 : i32
    return %c0_i32, %c0_i32_0 : i32, i32
  }
  func.func @transform_2(%arg0: i32) -> (i32, i32) {
    %c0_i32 = arith.constant 0 : i32
    %c0_i32_0 = arith.constant 0 : i32
    %c0_i32_1 = arith.constant 0 : i32
    return %c0_i32, %c0_i32_0 : i32, i32
  }
  func.func @transform_3(%arg0: i32) -> (i32, i32) {
    %c0_i32 = arith.constant 0 : i32
    %c0_i32_0 = arith.constant 0 : i32
    %c0_i32_1 = arith.constant 0 : i32
    return %c0_i32, %c0_i32_0 : i32, i32
  }
  func.func @transform_4(%arg0: i32) -> (i32, i32) {
    %c0_i32 = arith.constant 0 : i32
    %c0_i32_0 = arith.constant 0 : i32
    %c0_i32_1 = arith.constant 0 : i32
    return %c0_i32, %c0_i32_0 : i32, i32
  }
  func.func @transform_5(%arg0: i32) -> (i32, i32) {
    %c0_i32 = arith.constant 0 : i32
    %c0_i32_0 = arith.constant 0 : i32
    %c0_i32_1 = arith.constant 0 : i32
    return %c0_i32, %c0_i32_0 : i32, i32
  }
  func.func @transform_6(%arg0: i32) -> (i32, i32) {
    %c0_i32 = arith.constant 0 : i32
    %c0_i32_0 = arith.constant 0 : i32
    %c0_i32_1 = arith.constant 0 : i32
    return %c0_i32, %c0_i32_0 : i32, i32
  }
  func.func @transform_7(%arg0: i32) -> (i32, i32) {
    %c0_i32 = arith.constant 0 : i32
    %c0_i32_0 = arith.constant 0 : i32
    return %arg0, %c0_i32 : i32, i32
  }
}

</mosaic_0001>

<llo_original>
// kernel: forward.4
$region0: #{forward.4}
  #allocation0 [shape = 'u32[]', space=smem, size = 0x4, offset = 0x4, fixed_abs, tag = 'smem constant byte address 0x4 - core index']
  #allocation1 [shape = 'u32[144,128]{1,0:T(1,128)}', space=vmem, size = 0x12000, scoped, tag = 'internal scratch']
  %s0 = inlined_call_operand.vmem [shape: bf16[464,256], index: 0, kind: input, shape index: {}]
  %s1 = inlined_call_operand.vmem [shape: bf16[256,128], index: 1, kind: input, shape index: {}]
  %s2 = inlined_call_operand.vmem [shape: f32[1,128], index: 2, kind: input, shape index: {}]
  %s3 = inlined_call_operand.vmem [shape: bf16[464,128], index: 3, kind: output, shape index: {}]
  %s4 = sld [smem:[#allocation0]]
  $region45: #{forward.4} parent=0
    _
  %s6 = ssub.s32 1, %s4
  %s7 = scalar_select 0, %s6, %s4
  loop: start=0, step=1, limit=4
  $region2: #{forward.4} parent=0 // loop_pre_header
    _
  $region3: #{forward.4} parent=0 // loop_header
    %s9 = sphi 0, %s13
    %p10 = scmp.ge.s32.totalorder %s9, 4
    %s19 = sphi 0, %s21
    %s22 = sphi 0, %s19
    %s23 = sphi 0, %s22
    %s39 = sphi 0, %s23
    %s43 = sphi 0, %s43
    %s45 = sphi 0, %s43
    %s46 = sphi 0, %s45
    %s60 = sphi 0, %s46
    %s64 = sphi 0, %s64
    %s66 = sphi 0, %s64
    %s67 = sphi 0, %s66
    %s81 = sphi 0, %s67
    %s87 = sphi 0, %s89
    %s90 = sphi 0, %s87
    %s91 = sphi 0, %s90
    %s107 = sphi 0, %s91
  $region4: #{forward.4} parent=0 // loop_header_branch
    %12 = sbr.rel (%p10) target = $region8
  $region5: #{forward.4} parent=0 // loop_body
    %s14 = ssub.s32 %s9, 1
    %s15 = ssub.s32 %s9, 2
    %s16 = sadd.s32 %s9, 1
    %s17 = ssub.s32 %s9, %s16
    %p18 = scmp.eq.s32.totalorder %s17, 0
    %s20 = sadd.s32 %s19, 1
    %s21 = scalar_select %p18, %s19, %s20
    %p24 = pneg %p18
    %p25 = scmp.eq.s32.totalorder %s9, 1
    %p26 = por %p24, %p25
    %p27 = scmp.ne.s32.totalorder %s19, %s22
    %p28 = scmp.eq.s32.totalorder %s9, 0
    %p29 = por %p27, %p28
    %p30 = scmp.ne.s32.totalorder %s19, %s22
    %p31 = scmp.eq.s32.totalorder %s14, 1
    %p32 = por %p30, %p31
    %p33 = scmp.ne.s32.totalorder %s22, %s23
    %p34 = scmp.eq.s32.totalorder %s14, 0
    %p35 = por %p33, %p34
    %p36 = scmp.ne.s32.totalorder %s22, %s23
    %p37 = scmp.eq.s32.totalorder %s15, 1
    %p38 = por %p36, %p37
    %p40 = scmp.ne.s32.totalorder %s23, %s39
    %p41 = scmp.eq.s32.totalorder %s15, 0
    %p42 = por %p40, %p41
    %s44 = sadd.s32 %s43, 1
    %p47 = scmp.eq.s32.totalorder %s9, 1
    %p48 = scmp.ne.s32.totalorder %s43, %s45
    %p49 = scmp.eq.s32.totalorder %s9, 0
    %p50 = por %p48, %p49
    %p51 = scmp.ne.s32.totalorder %s43, %s45
    %p52 = scmp.eq.s32.totalorder %s14, 1
    %p53 = por %p51, %p52
    %p54 = scmp.ne.s32.totalorder %s45, %s46
    %p55 = scmp.eq.s32.totalorder %s14, 0
    %p56 = por %p54, %p55
    %p57 = scmp.ne.s32.totalorder %s45, %s46
    %p58 = scmp.eq.s32.totalorder %s15, 1
    %p59 = por %p57, %p58
    %p61 = scmp.ne.s32.totalorder %s46, %s60
    %p62 = scmp.eq.s32.totalorder %s15, 0
    %p63 = por %p61, %p62
    %s65 = sadd.s32 %s64, 1
    %p68 = scmp.eq.s32.totalorder %s9, 1
    %p69 = scmp.ne.s32.totalorder %s64, %s66
    %p70 = scmp.eq.s32.totalorder %s9, 0
    %p71 = por %p69, %p70
    %p72 = scmp.ne.s32.totalorder %s64, %s66
    %p73 = scmp.eq.s32.totalorder %s14, 1
    %p74 = por %p72, %p73
    %p75 = scmp.ne.s32.totalorder %s66, %s67
    %p76 = scmp.eq.s32.totalorder %s14, 0
    %p77 = por %p75, %p76
    %p78 = scmp.ne.s32.totalorder %s66, %s67
    %p79 = scmp.eq.s32.totalorder %s15, 1
    %p80 = por %p78, %p79
    %p82 = scmp.ne.s32.totalorder %s67, %s81
    %p83 = scmp.eq.s32.totalorder %s15, 0
    %p84 = por %p82, %p83
    %s85 = ssub.s32 %s9, %s16
    %p86 = scmp.eq.s32.totalorder %s85, 0
    %s88 = sadd.s32 %s87, 1
    %s89 = scalar_select %p86, %s87, %s88
    %p92 = pneg %p86
    %p93 = scmp.eq.s32.totalorder %s9, 1
    %p94 = por %p92, %p93
    %p95 = scmp.ne.s32.totalorder %s87, %s90
    %p96 = scmp.eq.s32.totalorder %s9, 0
    %p97 = por %p95, %p96
    %p98 = scmp.ne.s32.totalorder %s87, %s90
    %p99 = scmp.eq.s32.totalorder %s14, 1
    %p100 = por %p98, %p99
    %p101 = scmp.ne.s32.totalorder %s90, %s91
    %p102 = scmp.eq.s32.totalorder %s14, 0
    %p103 = por %p101, %p102
    %p104 = scmp.ne.s32.totalorder %s90, %s91
    %p105 = scmp.eq.s32.totalorder %s15, 1
    %p106 = por %p104, %p105
    %p108 = scmp.ne.s32.totalorder %s91, %s107
    %p109 = scmp.eq.s32.totalorder %s15, 0
    %p110 = por %p108, %p109
    %p111 = scmp.le.s32.totalorder 1, %s9
    %p112 = scmp.lt.s32.totalorder %s9, 3
    %p113 = pnand %p111, %p112
    %p114 = pneg %p113
    // Predicated region
    $region9: #{forward.4} parent=5 // pred_check
      _
    $region10: #{forward.4} parent=5 // pred_check_branch
      %116 = sbr.rel (%p113) target = $region12
    $region11: #{forward.4} parent=5 // pred_region
      %s117 = ssub.s32 %s9, 1
      // Predicated region
      $region13: #{forward.4} parent=11 // pred_check
        %p118 = pneg %p56
      $region14: #{forward.4} parent=11 // pred_check_branch
        %120 = sbr.rel (%p118) target = $region16
      $region15: #{forward.4} parent=11 // pred_region
        _
      $region16: #{forward.4} parent=11 // pred_fallthru
        _
      // Predicated region
      $region17: #{forward.4} parent=11 // pred_check
        %p121 = pneg %p77
      $region18: #{forward.4} parent=11 // pred_check_branch
        %123 = sbr.rel (%p121) target = $region20
      $region19: #{forward.4} parent=11 // pred_region
        _
      $region20: #{forward.4} parent=11 // pred_fallthru
        _
    $region12: #{forward.4} parent=5 // pred_fallthru
      _
    %p124 = scmp.lt.s32.totalorder %s9, 2
    // Predicated region
    $region21: #{forward.4} parent=5 // pred_check
      %p125 = pneg %p124
    $region22: #{forward.4} parent=5 // pred_check_branch
      %127 = sbr.rel (%p125) target = $region24
    $region23: #{forward.4} parent=5 // pred_region
      // Predicated region
      $region25: #{forward.4} parent=23 // pred_check
        %p128 = pneg %p29
      $region26: #{forward.4} parent=23 // pred_check_branch
        %130 = sbr.rel (%p128) target = $region28
      $region27: #{forward.4} parent=23 // pred_region
        %s131 = smul.u32 29, %s9
        %p132 = scmp.lt.s32.totalorder %s131, 57
        %s133 = scalar_select %p132, %s131, 57
        %s134 = smul.addr %s133, 2
        %s135 = smul.addr %s134, 4
        %s136 = scalar_lea.vmem %s0, %s135
        %s137 = smul.u32 29, %s9
      $region28: #{forward.4} parent=23 // pred_fallthru
        _
    $region24: #{forward.4} parent=5 // pred_fallthru
      _
    %p138 = scmp.le.s32.totalorder 1, %s9
    %p139 = scmp.lt.s32.totalorder %s9, 3
    %p140 = pnand %p138, %p139
    %p141 = pneg %p140
    // Predicated region
    $region29: #{forward.4} parent=5 // pred_check
      _
    $region30: #{forward.4} parent=5 // pred_check_branch
      %143 = sbr.rel (%p140) target = $region32
    $region31: #{forward.4} parent=5 // pred_region
      %s144 = ssub.s32 %s9, 1
      %s145 = smul.u32 29, %s14
      %p146 = scmp.lt.s32.totalorder %s145, 57
      %s147 = scalar_select %p146, %s145, 57
      %s148 = smul.addr %s147, 2
      %s149 = smul.addr %s148, 4
      %s150 = scalar_lea.vmem %s0, %s149
      %p151 = pneg %p35
      %p152 = pneg %p32
      %p153 = pneg %p56
      %p154 = pneg %p53
      %p155 = pneg %p77
      %p156 = pneg %p74
      %p157 = pneg %p103
      %p158 = pneg %p100
      %s159 = smul.u32 29, %s14
      %p160 = scmp.lt.s32.totalorder %s159, 57
      %s161 = scalar_select %p160, %s159, 57
      %s162 = smul.addr %s161, 4
      %s163 = scalar_lea.vmem %s3, %s162
      %s164 = smul.u32 29, %s14
      %p165 = scmp.lt.s32.totalorder %s164, 57
      %s166 = scalar_select %p165, %s164, 57
      %s167 = smul.addr %s166, 2
      %s168 = smul.addr %s167, 4
      %s169 = scalar_lea.vmem %s0, %s168
      %s170 = smul.u32 29, %s14
      %s171 = smul.u32 29, %s14
      %p172 = scmp.lt.s32.totalorder %s171, 57
      %s173 = scalar_select %p172, %s171, 57
      %s174 = smul.addr %s173, 4
      %s175 = scalar_lea.vmem %s3, %s174
      %s176 = smul.u32 29, %s14
      %v178 = vld [vmem:[%s169] sm:$0xff]
      %v179 = vld [vmem:[%s169 + $0x8] sm:$0xff]
      %v180 = vld [vmem:[%s169 + $0x10] sm:$0xff]
      %v181 = vld [vmem:[%s169 + $0x18] sm:$0xff]
      %v182 = vld [vmem:[%s169 + $0x20] sm:$0xff]
      %v183 = vld [vmem:[%s169 + $0x28] sm:$0xff]
      %v184 = vld [vmem:[%s169 + $0x30] sm:$0xff]
      %v185 = vld [vmem:[%s169 + $0x38] sm:$0xff]
      %v186 = vld [vmem:[%s169 + $0x40] sm:$0xff]
      %v187 = vld [vmem:[%s169 + $0x48] sm:$0xff]
      %v188 = vld [vmem:[%s169 + $0x50] sm:$0xff]
      %v189 = vld [vmem:[%s169 + $0x58] sm:$0xff]
      %v190 = vld [vmem:[%s169 + $0x60] sm:$0xff]
      %v191 = vld [vmem:[%s169 + $0x68] sm:$0xff]
      %v192 = vld [vmem:[%s169 + $0x70] sm:$0xff]
      %v193 = vld [vmem:[%s169 + $0x78] sm:$0xff]
      %v194 = vld [vmem:[%s169 + $0x80] sm:$0xff]
      %v195 = vld [vmem:[%s169 + $0x88] sm:$0xff]
      %v196 = vld [vmem:[%s169 + $0x90] sm:$0xff]
      %v197 = vld [vmem:[%s169 + $0x98] sm:$0xff]
      %v198 = vld [vmem:[%s169 + $0xa0] sm:$0xff]
      %v199 = vld [vmem:[%s169 + $0xa8] sm:$0xff]
      %v200 = vld [vmem:[%s169 + $0xb0] sm:$0xff]
      %v201 = vld [vmem:[%s169 + $0xb8] sm:$0xff]
      %v202 = vld [vmem:[%s169 + $0xc0] sm:$0xff]
      %v203 = vld [vmem:[%s169 + $0xc8] sm:$0xff]
      %v204 = vld [vmem:[%s169 + $0xd0] sm:$0xff]
      %v205 = vld [vmem:[%s169 + $0xd8] sm:$0xff]
      %v206 = vld [vmem:[%s169 + $0xe0] sm:$0xff]
      %v207 = vld [vmem:[%s1] sm:$0xf]
      %v208 = vld [vmem:[%s1 + $0x4] sm:$0xf]
      %v209 = vld [vmem:[%s1 + $0x8] sm:$0xf]
      %v210 = vld [vmem:[%s1 + $0xc] sm:$0xf]
      %v211 = vld [vmem:[%s1 + $0x10] sm:$0xf]
      %v212 = vld [vmem:[%s1 + $0x14] sm:$0xf]
      %v213 = vld [vmem:[%s1 + $0x18] sm:$0xf]
      %v214 = vld [vmem:[%s1 + $0x1c] sm:$0xf]
      %v215 = vld [vmem:[%s1 + $0x20] sm:$0xf]
      %v216 = vld [vmem:[%s1 + $0x24] sm:$0xf]
      %v217 = vld [vmem:[%s1 + $0x28] sm:$0xf]
      %v218 = vld [vmem:[%s1 + $0x2c] sm:$0xf]
      %v219 = vld [vmem:[%s1 + $0x30] sm:$0xf]
      %v220 = vld [vmem:[%s1 + $0x34] sm:$0xf]
      %v221 = vld [vmem:[%s1 + $0x38] sm:$0xf]
      %v222 = vld [vmem:[%s1 + $0x3c] sm:$0xf]
      %v223 = vld [vmem:[%s1 + $0x40] sm:$0xf]
      %v224 = vld [vmem:[%s1 + $0x44] sm:$0xf]
      %v225 = vld [vmem:[%s1 + $0x48] sm:$0xf]
      %v226 = vld [vmem:[%s1 + $0x4c] sm:$0xf]
      %v227 = vld [vmem:[%s1 + $0x50] sm:$0xf]
      %v228 = vld [vmem:[%s1 + $0x54] sm:$0xf]
      %v229 = vld [vmem:[%s1 + $0x58] sm:$0xf]
      %v230 = vld [vmem:[%s1 + $0x5c] sm:$0xf]
      %v231 = vld [vmem:[%s1 + $0x60] sm:$0xf]
      %v232 = vld [vmem:[%s1 + $0x64] sm:$0xf]
      %v233 = vld [vmem:[%s1 + $0x68] sm:$0xf]
      %v234 = vld [vmem:[%s1 + $0x6c] sm:$0xf]
      %v235 = vld [vmem:[%s1 + $0x70] sm:$0xf]
      %v236 = vld [vmem:[%s1 + $0x74] sm:$0xf]
      %v237 = vld [vmem:[%s1 + $0x78] sm:$0xf]
      %v238 = vld [vmem:[%s1 + $0x7c] sm:$0xf]
      %v239 = vld [vmem:[%s2] sm:$0x1]
      %v241 = vlaneseq
      %v242 = vshrl.u32 %v241, 7
      %v243 = vsub.s32 0, %v242
      %v244 = vrot.slane %v239, %v243
      %v275 = vunpack.c.l.b16 %v178
      %v276 = vunpack.c.h.b16 %v178
      %v277 = vunpack.c.l.b16 %v179
      %v278 = vunpack.c.h.b16 %v179
      %v279 = vunpack.c.l.b16 %v180
      %v280 = vunpack.c.h.b16 %v180
      %v281 = vunpack.c.l.b16 %v181
      %v282 = vunpack.c.h.b16 %v181
      %v283 = vunpack.c.l.b16 %v182
      %v284 = vunpack.c.h.b16 %v182
      %v285 = vunpack.c.l.b16 %v183
      %v286 = vunpack.c.h.b16 %v183
      %v287 = vunpack.c.l.b16 %v184
      %v288 = vunpack.c.h.b16 %v184
      %v289 = vunpack.c.l.b16 %v185
      %v290 = vunpack.c.h.b16 %v185
      %v291 = vunpack.c.l.b16 %v186
      %v292 = vunpack.c.h.b16 %v186
      %v293 = vunpack.c.l.b16 %v187
      %v294 = vunpack.c.h.b16 %v187
      %v295 = vunpack.c.l.b16 %v188
      %v296 = vunpack.c.h.b16 %v188
      %v297 = vunpack.c.l.b16 %v189
      %v298 = vunpack.c.h.b16 %v189
      %v299 = vunpack.c.l.b16 %v190
      %v300 = vunpack.c.h.b16 %v190
      %v301 = vunpack.c.l.b16 %v191
      %v302 = vunpack.c.h.b16 %v191
      %v303 = vunpack.c.l.b16 %v192
      %v304 = vunpack.c.h.b16 %v192
      %v305 = vunpack.c.l.b16 %v193
      %v306 = vunpack.c.h.b16 %v193
      %v307 = vunpack.c.l.b16 %v194
      %v308 = vunpack.c.h.b16 %v194
      %v309 = vunpack.c.l.b16 %v195
      %v310 = vunpack.c.h.b16 %v195
      %v311 = vunpack.c.l.b16 %v196
      %v312 = vunpack.c.h.b16 %v196
      %v313 = vunpack.c.l.b16 %v197
      %v314 = vunpack.c.h.b16 %v197
      %v315 = vunpack.c.l.b16 %v198
      %v316 = vunpack.c.h.b16 %v198
      %v317 = vunpack.c.l.b16 %v199
      %v318 = vunpack.c.h.b16 %v199
      %v319 = vunpack.c.l.b16 %v200
      %v320 = vunpack.c.h.b16 %v200
      %v321 = vunpack.c.l.b16 %v201
      %v322 = vunpack.c.h.b16 %v201
      %v323 = vunpack.c.l.b16 %v202
      %v324 = vunpack.c.h.b16 %v202
      %v325 = vunpack.c.l.b16 %v203
      %v326 = vunpack.c.h.b16 %v203
      %v327 = vunpack.c.l.b16 %v204
      %v328 = vunpack.c.h.b16 %v204
      %v329 = vunpack.c.l.b16 %v205
      %v330 = vunpack.c.h.b16 %v205
      %v331 = vunpack.c.l.b16 %v206
      %v332 = vunpack.c.h.b16 %v206
      %v333 = vpack.c.b16 %v277, %v275
      %v334 = vpack.c.b16 %v278, %v276
      %v335 = vpack.c.b16 %v281, %v279
      %v336 = vpack.c.b16 %v282, %v280
      %v337 = vpack.c.b16 %v285, %v283
      %v338 = vpack.c.b16 %v286, %v284
      %v339 = vpack.c.b16 %v289, %v287
      %v340 = vpack.c.b16 %v290, %v288
      %v341 = vpack.c.b16 %v293, %v291
      %v342 = vpack.c.b16 %v294, %v292
      %v343 = vpack.c.b16 %v297, %v295
      %v344 = vpack.c.b16 %v298, %v296
      %v345 = vpack.c.b16 %v301, %v299
      %v346 = vpack.c.b16 %v302, %v300
      %v347 = vpack.c.b16 %v305, %v303
      %v348 = vpack.c.b16 %v306, %v304
      %v349 = vpack.c.b16 %v309, %v307
      %v350 = vpack.c.b16 %v310, %v308
      %v351 = vpack.c.b16 %v313, %v311
      %v352 = vpack.c.b16 %v314, %v312
      %v353 = vpack.c.b16 %v317, %v315
      %v354 = vpack.c.b16 %v318, %v316
      %v355 = vpack.c.b16 %v321, %v319
      %v356 = vpack.c.b16 %v322, %v320
      %v357 = vpack.c.b16 %v325, %v323
      %v358 = vpack.c.b16 %v326, %v324
      %v359 = vpack.c.b16 %v329, %v327
      %v360 = vpack.c.b16 %v330, %v328
      %v361 = vpack.c.b16 %v331, %v331
      %v362 = vpack.c.b16 %v332, %v332
      %v425 = vunpack.c.l.b16 %v207
      %v426 = vunpack.c.l.b16 %v208
      %v427 = vunpack.c.l.b16 %v209
      %v428 = vunpack.c.l.b16 %v210
      %v429 = vunpack.c.l.b16 %v211
      %v430 = vunpack.c.l.b16 %v212
      %v431 = vunpack.c.l.b16 %v213
      %v432 = vunpack.c.l.b16 %v214
      %v433 = vunpack.c.l.b16 %v215
      %v434 = vunpack.c.l.b16 %v216
      %v435 = vunpack.c.l.b16 %v217
      %v436 = vunpack.c.l.b16 %v218
      %v437 = vunpack.c.l.b16 %v219
      %v438 = vunpack.c.l.b16 %v220
      %v439 = vunpack.c.l.b16 %v221
      %v440 = vunpack.c.l.b16 %v222
      %v441 = vunpack.c.l.b16 %v223
      %v442 = vunpack.c.l.b16 %v224
      %v443 = vunpack.c.l.b16 %v225
      %v444 = vunpack.c.l.b16 %v226
      %v445 = vunpack.c.l.b16 %v227
      %v446 = vunpack.c.l.b16 %v228
      %v447 = vunpack.c.l.b16 %v229
      %v448 = vunpack.c.l.b16 %v230
      %v449 = vunpack.c.l.b16 %v231
      %v450 = vunpack.c.l.b16 %v232
      %v451 = vunpack.c.l.b16 %v233
      %v452 = vunpack.c.l.b16 %v234
      %v453 = vunpack.c.l.b16 %v235
      %v454 = vunpack.c.l.b16 %v236
      %v455 = vunpack.c.l.b16 %v237
      %v456 = vunpack.c.l.b16 %v238
      %v457 = vpack.c.b16 %v426, %v425
      %v458 = vpack.c.b16 %v428, %v427
      %v459 = vpack.c.b16 %v430, %v429
      %v460 = vpack.c.b16 %v432, %v431
      %v461 = vpack.c.b16 %v434, %v433
      %v462 = vpack.c.b16 %v436, %v435
      %v463 = vpack.c.b16 %v438, %v437
      %v464 = vpack.c.b16 %v440, %v439
      %v465 = vpack.c.b16 %v442, %v441
      %v466 = vpack.c.b16 %v444, %v443
      %v467 = vpack.c.b16 %v446, %v445
      %v468 = vpack.c.b16 %v448, %v447
      %v469 = vpack.c.b16 %v450, %v449
      %v470 = vpack.c.b16 %v452, %v451
      %v471 = vpack.c.b16 %v454, %v453
      %v472 = vpack.c.b16 %v456, %v455
      %489 = vmatprep.subr.bf16.mxu0 0
      %490 = vmatpush1.bf16.msra.mxu0 %v457
      %491 = vmatprep.subr.bf16.mxu0 0
      %492 = vmatpush1.bf16.msra.mxu0 %v458
      %493 = vmatprep.subr.bf16.mxu0 0
      %494 = vmatpush1.bf16.msra.mxu0 %v459
      %495 = vmatprep.subr.bf16.mxu0 0
      %496 = vmatpush1.bf16.msra.mxu0 %v460
      %497 = vmatprep.subr.bf16.mxu0 0
      %498 = vmatpush1.bf16.msra.mxu0 %v461
      %499 = vmatprep.subr.bf16.mxu0 0
      %500 = vmatpush1.bf16.msra.mxu0 %v462
      %501 = vmatprep.subr.bf16.mxu0 0
      %502 = vmatpush1.bf16.msra.mxu0 %v463
      %503 = vmatprep.subr.bf16.mxu0 0
      %504 = vmatpush1.bf16.msra.mxu0 %v464
      %505 = vmatprep.subr.bf16.mxu0 0
      %506 = vmatpush1.bf16.msra.mxu0 %v465
      %507 = vmatprep.subr.bf16.mxu0 0
      %508 = vmatpush1.bf16.msra.mxu0 %v466
      %509 = vmatprep.subr.bf16.mxu0 0
      %510 = vmatpush1.bf16.msra.mxu0 %v467
      %511 = vmatprep.subr.bf16.mxu0 0
      %512 = vmatpush1.bf16.msra.mxu0 %v468
      %513 = vmatprep.subr.bf16.mxu0 0
      %514 = vmatpush1.bf16.msra.mxu0 %v469
      %515 = vmatprep.subr.bf16.mxu0 0
      %516 = vmatpush1.bf16.msra.mxu0 %v470
      %517 = vmatprep.subr.bf16.mxu0 0
      %518 = vmatpush1.bf16.msra.mxu0 %v471
      %519 = vmatprep.subr.bf16.mxu0 0
      %520 = vmatpush1.bf16.msra.mxu0 %v472
      %521 = vmatprep.mubr.bf16.mxu0 %v334
      %522 = vmatmul.mubr.bf16.gmra.mrb[0].mxu0 %v333
      %v523 = vpop.f32.mrb[0].mxu0
      %v524 = vadd.f32 %v244, %v523
      %v525 = vpop.f32.mrb[0].mxu0
      %v526 = vpop.f32.mrb[0].mxu0
      %v527 = vadd.f32 %v244, %v526
      %v528 = vpop.f32.mrb[0].mxu0
      %529 = vmatprep.mubr.bf16.mxu0 %v336
      %530 = vmatmul.mubr.bf16.gmra.mrb[0].mxu0 %v335
      %v531 = vpop.f32.mrb[0].mxu0
      %v532 = vadd.f32 %v244, %v531
      %v533 = vpop.f32.mrb[0].mxu0
      %v534 = vpop.f32.mrb[0].mxu0
      %v535 = vadd.f32 %v244, %v534
      %v536 = vpop.f32.mrb[0].mxu0
      %537 = vmatprep.mubr.bf16.mxu0 %v338
      %538 = vmatmul.mubr.bf16.gmra.mrb[0].mxu0 %v337
      %v539 = vpop.f32.mrb[0].mxu0
      %v540 = vadd.f32 %v244, %v539
      %v541 = vpop.f32.mrb[0].mxu0
      %v542 = vpop.f32.mrb[0].mxu0
      %v543 = vadd.f32 %v244, %v542
      %v544 = vpop.f32.mrb[0].mxu0
      %545 = vmatprep.mubr.bf16.mxu0 %v340
      %546 = vmatmul.mubr.bf16.gmra.mrb[0].mxu0 %v339
      %v547 = vpop.f32.mrb[0].mxu0
      %v548 = vadd.f32 %v244, %v547
      %v549 = vpop.f32.mrb[0].mxu0
      %v550 = vpop.f32.mrb[0].mxu0
      %v551 = vadd.f32 %v244, %v550
      %v552 = vpop.f32.mrb[0].mxu0
      %553 = vmatprep.mubr.bf16.mxu0 %v342
      %554 = vmatmul.mubr.bf16.gmra.mrb[0].mxu0 %v341
      %v555 = vpop.f32.mrb[0].mxu0
      %v556 = vadd.f32 %v244, %v555
      %v557 = vpop.f32.mrb[0].mxu0
      %v558 = vpop.f32.mrb[0].mxu0
      %v559 = vadd.f32 %v244, %v558
      %v560 = vpop.f32.mrb[0].mxu0
      %561 = vmatprep.mubr.bf16.mxu0 %v344
      %562 = vmatmul.mubr.bf16.gmra.mrb[0].mxu0 %v343
      %v563 = vpop.f32.mrb[0].mxu0
      %v564 = vadd.f32 %v244, %v563
      %v565 = vpop.f32.mrb[0].mxu0
      %v566 = vpop.f32.mrb[0].mxu0
      %v567 = vadd.f32 %v244, %v566
      %v568 = vpop.f32.mrb[0].mxu0
      %569 = vmatprep.mubr.bf16.mxu0 %v346
      %570 = vmatmul.mubr.bf16.gmra.mrb[0].mxu0 %v345
      %v571 = vpop.f32.mrb[0].mxu0
      %v572 = vadd.f32 %v244, %v571
      %v573 = vpop.f32.mrb[0].mxu0
      %v574 = vpop.f32.mrb[0].mxu0
      %v575 = vadd.f32 %v244, %v574
      %v576 = vpop.f32.mrb[0].mxu0
      %577 = vmatprep.mubr.bf16.mxu0 %v348
      %578 = vmatmul.mubr.bf16.gmra.mrb[0].mxu0 %v347
      %v579 = vpop.f32.mrb[0].mxu0
      %v580 = vadd.f32 %v244, %v579
      %v581 = vpop.f32.mrb[0].mxu0
      %v582 = vpop.f32.mrb[0].mxu0
      %v583 = vadd.f32 %v244, %v582
      %v584 = vpop.f32.mrb[0].mxu0
      %585 = vmatprep.mubr.bf16.mxu0 %v350
      %586 = vmatmul.mubr.bf16.gmra.mrb[0].mxu0 %v349
      %v587 = vpop.f32.mrb[0].mxu0
      %v588 = vadd.f32 %v244, %v587
      %v589 = vpop.f32.mrb[0].mxu0
      %v590 = vpop.f32.mrb[0].mxu0
      %v591 = vadd.f32 %v244, %v590
      %v592 = vpop.f32.mrb[0].mxu0
      %593 = vmatprep.mubr.bf16.mxu0 %v352
      %594 = vmatmul.mubr.bf16.gmra.mrb[0].mxu0 %v351
      %v595 = vpop.f32.mrb[0].mxu0
      %v596 = vadd.f32 %v244, %v595
      %v597 = vpop.f32.mrb[0].mxu0
      %v598 = vpop.f32.mrb[0].mxu0
      %v599 = vadd.f32 %v244, %v598
      %v600 = vpop.f32.mrb[0].mxu0
      %601 = vmatprep.mubr.bf16.mxu0 %v354
      %602 = vmatmul.mubr.bf16.gmra.mrb[0].mxu0 %v353
      %v603 = vpop.f32.mrb[0].mxu0
      %v604 = vadd.f32 %v244, %v603
      %v605 = vpop.f32.mrb[0].mxu0
      %v606 = vpop.f32.mrb[0].mxu0
      %v607 = vadd.f32 %v244, %v606
      %v608 = vpop.f32.mrb[0].mxu0
      %609 = vmatprep.mubr.bf16.mxu0 %v356
      %610 = vmatmul.mubr.bf16.gmra.mrb[0].mxu0 %v355
      %v611 = vpop.f32.mrb[0].mxu0
      %v612 = vadd.f32 %v244, %v611
      %v613 = vpop.f32.mrb[0].mxu0
      %v614 = vpop.f32.mrb[0].mxu0
      %v615 = vadd.f32 %v244, %v614
      %v616 = vpop.f32.mrb[0].mxu0
      %617 = vmatprep.mubr.bf16.mxu0 %v358
      %618 = vmatmul.mubr.bf16.gmra.mrb[0].mxu0 %v357
      %v619 = vpop.f32.mrb[0].mxu0
      %v620 = vadd.f32 %v244, %v619
      %v621 = vpop.f32.mrb[0].mxu0
      %v622 = vpop.f32.mrb[0].mxu0
      %v623 = vadd.f32 %v244, %v622
      %v624 = vpop.f32.mrb[0].mxu0
      %625 = vmatprep.mubr.bf16.mxu0 %v360
      %626 = vmatmul.mubr.bf16.gmra.mrb[0].mxu0 %v359
      %v627 = vpop.f32.mrb[0].mxu0
      %v628 = vadd.f32 %v244, %v627
      %v629 = vpop.f32.mrb[0].mxu0
      %v630 = vpop.f32.mrb[0].mxu0
      %v631 = vadd.f32 %v244, %v630
      %v632 = vpop.f32.mrb[0].mxu0
      %633 = vmatprep.mubr.bf16.mxu0 %v362
      %634 = vmatmul.mubr.bf16.gmra.mrb[0].mxu0 %v361
      %v635 = vpop.f32.mrb[0].mxu0
      %v636 = vadd.f32 %v244, %v635
      %v637 = vpop.f32.mrb[0].mxu0
      %v638 = vpop.f32.mrb[0].mxu0
      %v639 = vpop.f32.mrb[0].mxu0
      %640 = vdwg.mxu0
      %v641 = vmax.f32 %v524, 0.0
      %v642 = vmax.f32 %v527, 0.0
      %v643 = vmax.f32 %v532, 0.0
      %v644 = vmax.f32 %v535, 0.0
      %v645 = vmax.f32 %v540, 0.0
      %v646 = vmax.f32 %v543, 0.0
      %v647 = vmax.f32 %v548, 0.0
      %v648 = vmax.f32 %v551, 0.0
      %v649 = vmax.f32 %v556, 0.0
      %v650 = vmax.f32 %v559, 0.0
      %v651 = vmax.f32 %v564, 0.0
      %v652 = vmax.f32 %v567, 0.0
      %v653 = vmax.f32 %v572, 0.0
      %v654 = vmax.f32 %v575, 0.0
      %v655 = vmax.f32 %v580, 0.0
      %v656 = vmax.f32 %v583, 0.0
      %v657 = vmax.f32 %v588, 0.0
      %v658 = vmax.f32 %v591, 0.0
      %v659 = vmax.f32 %v596, 0.0
      %v660 = vmax.f32 %v599, 0.0
      %v661 = vmax.f32 %v604, 0.0
      %v662 = vmax.f32 %v607, 0.0
      %v663 = vmax.f32 %v612, 0.0
      %v664 = vmax.f32 %v615, 0.0
      %v665 = vmax.f32 %v620, 0.0
      %v666 = vmax.f32 %v623, 0.0
      %v667 = vmax.f32 %v628, 0.0
      %v668 = vmax.f32 %v631, 0.0
      %v669 = vmax.f32 %v636, 0.0
      %v670 = vpack.c.bf16 %v642, %v641
      %v671 = vpack.c.bf16 %v644, %v643
      %v672 = vpack.c.bf16 %v646, %v645
      %v673 = vpack.c.bf16 %v648, %v647
      %v674 = vpack.c.bf16 %v650, %v649
      %v675 = vpack.c.bf16 %v652, %v651
      %v676 = vpack.c.bf16 %v654, %v653
      %v677 = vpack.c.bf16 %v656, %v655
      %v678 = vpack.c.bf16 %v658, %v657
      %v679 = vpack.c.bf16 %v660, %v659
      %v680 = vpack.c.bf16 %v662, %v661
      %v681 = vpack.c.bf16 %v664, %v663
      %v682 = vpack.c.bf16 %v666, %v665
      %v683 = vpack.c.bf16 %v668, %v667
      %v684 = vpack.c.bf16 %v669, %v669
      %v700 = vunpack.c.l.b16 %v670
      %v701 = vunpack.c.h.b16 %v670
      %v702 = vunpack.c.l.b16 %v671
      %v703 = vunpack.c.h.b16 %v671
      %v704 = vunpack.c.l.b16 %v672
      %v705 = vunpack.c.h.b16 %v672
      %v706 = vunpack.c.l.b16 %v673
      %v707 = vunpack.c.h.b16 %v673
      %v708 = vunpack.c.l.b16 %v674
      %v709 = vunpack.c.h.b16 %v674
      %v710 = vunpack.c.l.b16 %v675
      %v711 = vunpack.c.h.b16 %v675
      %v712 = vunpack.c.l.b16 %v676
      %v713 = vunpack.c.h.b16 %v676
      %v714 = vunpack.c.l.b16 %v677
      %v715 = vunpack.c.h.b16 %v677
      %v716 = vunpack.c.l.b16 %v678
      %v717 = vunpack.c.h.b16 %v678
      %v718 = vunpack.c.l.b16 %v679
      %v719 = vunpack.c.h.b16 %v679
      %v720 = vunpack.c.l.b16 %v680
      %v721 = vunpack.c.h.b16 %v680
      %v722 = vunpack.c.l.b16 %v681
      %v723 = vunpack.c.h.b16 %v681
      %v724 = vunpack.c.l.b16 %v682
      %v725 = vunpack.c.h.b16 %v682
      %v726 = vunpack.c.l.b16 %v683
      %v727 = vunpack.c.h.b16 %v683
      %v728 = vunpack.c.l.b16 %v684
      %v729 = vpack.c.b16 %v700, %v700
      %v730 = vpack.c.b16 %v701, %v701
      %v731 = vpack.c.b16 %v702, %v702
      %v732 = vpack.c.b16 %v703, %v703
      %v733 = vpack.c.b16 %v704, %v704
      %v734 = vpack.c.b16 %v705, %v705
      %v735 = vpack.c.b16 %v706, %v706
      %v736 = vpack.c.b16 %v707, %v707
      %v737 = vpack.c.b16 %v708, %v708
      %v738 = vpack.c.b16 %v709, %v709
      %v739 = vpack.c.b16 %v710, %v710
      %v740 = vpack.c.b16 %v711, %v711
      %v741 = vpack.c.b16 %v712, %v712
      %v742 = vpack.c.b16 %v713, %v713
      %v743 = vpack.c.b16 %v714, %v714
      %v744 = vpack.c.b16 %v715, %v715
      %v745 = vpack.c.b16 %v716, %v716
      %v746 = vpack.c.b16 %v717, %v717
      %v747 = vpack.c.b16 %v718, %v718
      %v748 = vpack.c.b16 %v719, %v719
      %v749 = vpack.c.b16 %v720, %v720
      %v750 = vpack.c.b16 %v721, %v721
      %v751 = vpack.c.b16 %v722, %v722
      %v752 = vpack.c.b16 %v723, %v723
      %v753 = vpack.c.b16 %v724, %v724
      %v754 = vpack.c.b16 %v725, %v725
      %v755 = vpack.c.b16 %v726, %v726
      %v756 = vpack.c.b16 %v727, %v727
      %v757 = vpack.c.b16 %v728, %v728
      %787 = vst [vmem:[%s175] sm:$0xf] %v729
      %788 = vst [vmem:[%s175 + $0x4] sm:$0xf] %v730
      %789 = vst [vmem:[%s175 + $0x8] sm:$0xf] %v731
      %790 = vst [vmem:[%s175 + $0xc] sm:$0xf] %v732
      %791 = vst [vmem:[%s175 + $0x10] sm:$0xf] %v733
      %792 = vst [vmem:[%s175 + $0x14] sm:$0xf] %v734
      %793 = vst [vmem:[%s175 + $0x18] sm:$0xf] %v735
      %794 = vst [vmem:[%s175 + $0x1c] sm:$0xf] %v736
      %795 = vst [vmem:[%s175 + $0x20] sm:$0xf] %v737
      %796 = vst [vmem:[%s175 + $0x24] sm:$0xf] %v738
      %797 = vst [vmem:[%s175 + $0x28] sm:$0xf] %v739
      %798 = vst [vmem:[%s175 + $0x2c] sm:$0xf] %v740
      %799 = vst [vmem:[%s175 + $0x30] sm:$0xf] %v741
      %800 = vst [vmem:[%s175 + $0x34] sm:$0xf] %v742
      %801 = vst [vmem:[%s175 + $0x38] sm:$0xf] %v743
      %802 = vst [vmem:[%s175 + $0x3c] sm:$0xf] %v744
      %803 = vst [vmem:[%s175 + $0x40] sm:$0xf] %v745
      %804 = vst [vmem:[%s175 + $0x44] sm:$0xf] %v746
      %805 = vst [vmem:[%s175 + $0x48] sm:$0xf] %v747
      %806 = vst [vmem:[%s175 + $0x4c] sm:$0xf] %v748
      %807 = vst [vmem:[%s175 + $0x50] sm:$0xf] %v749
      %808 = vst [vmem:[%s175 + $0x54] sm:$0xf] %v750
      %809 = vst [vmem:[%s175 + $0x58] sm:$0xf] %v751
      %810 = vst [vmem:[%s175 + $0x5c] sm:$0xf] %v752
      %811 = vst [vmem:[%s175 + $0x60] sm:$0xf] %v753
      %812 = vst [vmem:[%s175 + $0x64] sm:$0xf] %v754
      %813 = vst [vmem:[%s175 + $0x68] sm:$0xf] %v755
      %814 = vst [vmem:[%s175 + $0x6c] sm:$0xf] %v756
      %815 = vst [vmem:[%s175 + $0x70] sm:$0xf] %v757
      %s816 = smul.u32 29, %s14
      %p817 = scmp.lt.s32.totalorder %s816, 57
      %s818 = scalar_select %p817, %s816, 57
      %s819 = smul.addr %s818, 4
      %s820 = scalar_lea.vmem %s3, %s819
      // Predicated region
      $region33: #{forward.4} parent=31 // pred_check
        %p821 = pneg %p100
      $region34: #{forward.4} parent=31 // pred_check_branch
        %823 = sbr.rel (%p821) target = $region36
      $region35: #{forward.4} parent=31 // pred_region
        %s824 = smul.u32 29, %s14
      $region36: #{forward.4} parent=31 // pred_fallthru
        _
    $region32: #{forward.4} parent=5 // pred_fallthru
      _
    %p825 = scmp.le.s32.totalorder 2, %s9
    // Predicated region
    $region37: #{forward.4} parent=5 // pred_check
      %p826 = pneg %p825
    $region38: #{forward.4} parent=5 // pred_check_branch
      %828 = sbr.rel (%p826) target = $region40
    $region39: #{forward.4} parent=5 // pred_region
      %s829 = ssub.s32 %s9, 2
      // Predicated region
      $region41: #{forward.4} parent=39 // pred_check
        %p830 = pneg %p106
      $region42: #{forward.4} parent=39 // pred_check_branch
        %832 = sbr.rel (%p830) target = $region44
      $region43: #{forward.4} parent=39 // pred_region
        %s833 = smul.u32 29, %s15
        %p834 = scmp.lt.s32.totalorder %s833, 57
        %s835 = scalar_select %p834, %s833, 57
        %s836 = smul.addr %s835, 4
        %s837 = scalar_lea.vmem %s3, %s836
      $region44: #{forward.4} parent=39 // pred_fallthru
        _
    $region40: #{forward.4} parent=5 // pred_fallthru
      _
  $region6: #{forward.4} parent=0 // loop_footer
    %s13 = sadd.s32 1, %s9
  $region7: #{forward.4} parent=0 // loop_footer_branch
    %8 = sbr.rel target = $region3
  $region8: #{forward.4} parent=0 // loop_exit
    _

// kernel: forward.5
$region0: #{forward.5}
  #allocation0 [shape = 'u32[]', space=smem, size = 0x4, offset = 0x4, fixed_abs, tag = 'smem constant byte address 0x4 - core index']
  #allocation1 [shape = 'u32[144,128]{1,0:T(1,128)}', space=vmem, size = 0x12000, scoped, tag = 'internal scratch']
  %s0 = inlined_call_operand.vmem [shape: bf16[80,512], index: 0, kind: input, shape index: {}]
  %s1 = inlined_call_operand.vmem [shape: bf16[512,128], index: 1, kind: input, shape index: {}]
  %s2 = inlined_call_operand.vmem [shape: f32[1,128], index: 2, kind: input, shape index: {}]
  %s3 = inlined_call_operand.vmem [shape: bf16[80,128], index: 3, kind: output, shape index: {}]
  %s4 = sld [smem:[#allocation0]]
  $region45: #{forward.5} parent=0
    _
  %s6 = ssub.s32 1, %s4
  %s7 = scalar_select 0, %s6, %s4
  loop: start=0, step=1, limit=4
  $region2: #{forward.5} parent=0 // loop_pre_header
    _
  $region3: #{forward.5} parent=0 // loop_header
    %s9 = sphi 0, %s13
    %p10 = scmp.ge.s32.totalorder %s9, 4
    %s19 = sphi 0, %s21
    %s22 = sphi 0, %s19
    %s23 = sphi 0, %s22
    %s39 = sphi 0, %s23
    %s43 = sphi 0, %s43
    %s45 = sphi 0, %s43
    %s46 = sphi 0, %s45
    %s60 = sphi 0, %s46
    %s64 = sphi 0, %s64
    %s66 = sphi 0, %s64
    %s67 = sphi 0, %s66
    %s81 = sphi 0, %s67
    %s87 = sphi 0, %s89
    %s90 = sphi 0, %s87
    %s91 = sphi 0, %s90
    %s107 = sphi 0, %s91
  $region4: #{forward.5} parent=0 // loop_header_branch
    %12 = sbr.rel (%p10) target = $region8
  $region5: #{forward.5} parent=0 // loop_body
    %s14 = ssub.s32 %s9, 1
    %s15 = ssub.s32 %s9, 2
    %s16 = sadd.s32 %s9, 1
    %s17 = ssub.s32 %s9, %s16
    %p18 = scmp.eq.s32.totalorder %s17, 0
    %s20 = sadd.s32 %s19, 1
    %s21 = scalar_select %p18, %s19, %s20
    %p24 = pneg %p18
    %p25 = scmp.eq.s32.totalorder %s9, 1
    %p26 = por %p24, %p25
    %p27 = scmp.ne.s32.totalorder %s19, %s22
    %p28 = scmp.eq.s32.totalorder %s9, 0
    %p29 = por %p27, %p28
    %p30 = scmp.ne.s32.totalorder %s19, %s22
    %p31 = scmp.eq.s32.totalorder %s14, 1
    %p32 = por %p30, %p31
    %p33 = scmp.ne.s32.totalorder %s22, %s23
    %p34 = scmp.eq.s32.totalorder %s14, 0
    %p35 = por %p33, %p34
    %p36 = scmp.ne.s32.totalorder %s22, %s23
    %p37 = scmp.eq.s32.totalorder %s15, 1
    %p38 = por %p36, %p37
    %p40 = scmp.ne.s32.totalorder %s23, %s39
    %p41 = scmp.eq.s32.totalorder %s15, 0
    %p42 = por %p40, %p41
    %s44 = sadd.s32 %s43, 1
    %p47 = scmp.eq.s32.totalorder %s9, 1
    %p48 = scmp.ne.s32.totalorder %s43, %s45
    %p49 = scmp.eq.s32.totalorder %s9, 0
    %p50 = por %p48, %p49
    %p51 = scmp.ne.s32.totalorder %s43, %s45
    %p52 = scmp.eq.s32.totalorder %s14, 1
    %p53 = por %p51, %p52
    %p54 = scmp.ne.s32.totalorder %s45, %s46
    %p55 = scmp.eq.s32.totalorder %s14, 0
    %p56 = por %p54, %p55
    %p57 = scmp.ne.s32.totalorder %s45, %s46
    %p58 = scmp.eq.s32.totalorder %s15, 1
    %p59 = por %p57, %p58
    %p61 = scmp.ne.s32.totalorder %s46, %s60
    %p62 = scmp.eq.s32.totalorder %s15, 0
    %p63 = por %p61, %p62
    %s65 = sadd.s32 %s64, 1
    %p68 = scmp.eq.s32.totalorder %s9, 1
    %p69 = scmp.ne.s32.totalorder %s64, %s66
    %p70 = scmp.eq.s32.totalorder %s9, 0
    %p71 = por %p69, %p70
    %p72 = scmp.ne.s32.totalorder %s64, %s66
    %p73 = scmp.eq.s32.totalorder %s14, 1
    %p74 = por %p72, %p73
    %p75 = scmp.ne.s32.totalorder %s66, %s67
    %p76 = scmp.eq.s32.totalorder %s14, 0
    %p77 = por %p75, %p76
    %p78 = scmp.ne.s32.totalorder %s66, %s67
    %p79 = scmp.eq.s32.totalorder %s15, 1
    %p80 = por %p78, %p79
    %p82 = scmp.ne.s32.totalorder %s67, %s81
    %p83 = scmp.eq.s32.totalorder %s15, 0
    %p84 = por %p82, %p83
    %s85 = ssub.s32 %s9, %s16
    %p86 = scmp.eq.s32.totalorder %s85, 0
    %s88 = sadd.s32 %s87, 1
    %s89 = scalar_select %p86, %s87, %s88
    %p92 = pneg %p86
    %p93 = scmp.eq.s32.totalorder %s9, 1
    %p94 = por %p92, %p93
    %p95 = scmp.ne.s32.totalorder %s87, %s90
    %p96 = scmp.eq.s32.totalorder %s9, 0
    %p97 = por %p95, %p96
    %p98 = scmp.ne.s32.totalorder %s87, %s90
    %p99 = scmp.eq.s32.totalorder %s14, 1
    %p100 = por %p98, %p99
    %p101 = scmp.ne.s32.totalorder %s90, %s91
    %p102 = scmp.eq.s32.totalorder %s14, 0
    %p103 = por %p101, %p102
    %p104 = scmp.ne.s32.totalorder %s90, %s91
    %p105 = scmp.eq.s32.totalorder %s15, 1
    %p106 = por %p104, %p105
    %p108 = scmp.ne.s32.totalorder %s91, %s107
    %p109 = scmp.eq.s32.totalorder %s15, 0
    %p110 = por %p108, %p109
    %p111 = scmp.le.s32.totalorder 1, %s9
    %p112 = scmp.lt.s32.totalorder %s9, 3
    %p113 = pnand %p111, %p112
    %p114 = pneg %p113
    // Predicated region
    $region9: #{forward.5} parent=5 // pred_check
      _
    $region10: #{forward.5} parent=5 // pred_check_branch
      %116 = sbr.rel (%p113) target = $region12
    $region11: #{forward.5} parent=5 // pred_region
      %s117 = ssub.s32 %s9, 1
      // Predicated region
      $region13: #{forward.5} parent=11 // pred_check
        %p118 = pneg %p56
      $region14: #{forward.5} parent=11 // pred_check_branch
        %120 = sbr.rel (%p118) target = $region16
      $region15: #{forward.5} parent=11 // pred_region
        _
      $region16: #{forward.5} parent=11 // pred_fallthru
        _
      // Predicated region
      $region17: #{forward.5} parent=11 // pred_check
        %p121 = pneg %p77
      $region18: #{forward.5} parent=11 // pred_check_branch
        %123 = sbr.rel (%p121) target = $region20
      $region19: #{forward.5} parent=11 // pred_region
        _
      $region20: #{forward.5} parent=11 // pred_fallthru
        _
    $region12: #{forward.5} parent=5 // pred_fallthru
      _
    %p124 = scmp.lt.s32.totalorder %s9, 2
    // Predicated region
    $region21: #{forward.5} parent=5 // pred_check
      %p125 = pneg %p124
    $region22: #{forward.5} parent=5 // pred_check_branch
      %127 = sbr.rel (%p125) target = $region24
    $region23: #{forward.5} parent=5 // pred_region
      // Predicated region
      $region25: #{forward.5} parent=23 // pred_check
        %p128 = pneg %p29
      $region26: #{forward.5} parent=23 // pred_check_branch
        %130 = sbr.rel (%p128) target = $region28
      $region27: #{forward.5} parent=23 // pred_region
        %s131 = smul.u32 5, %s9
        %p132 = scmp.lt.s32.totalorder %s131, 9
        %s133 = scalar_select %p132, %s131, 9
        %s134 = smul.addr %s133, 4
        %s135 = smul.addr %s134, 4
        %s136 = scalar_lea.vmem %s0, %s135
        %s137 = smul.u32 5, %s9
      $region28: #{forward.5} parent=23 // pred_fallthru
        _
    $region24: #{forward.5} parent=5 // pred_fallthru
      _
    %p138 = scmp.le.s32.totalorder 1, %s9
    %p139 = scmp.lt.s32.totalorder %s9, 3
    %p140 = pnand %p138, %p139
    %p141 = pneg %p140
    // Predicated region
    $region29: #{forward.5} parent=5 // pred_check
      _
    $region30: #{forward.5} parent=5 // pred_check_branch
      %143 = sbr.rel (%p140) target = $region32
    $region31: #{forward.5} parent=5 // pred_region
      %s144 = ssub.s32 %s9, 1
      %s145 = smul.u32 5, %s14
      %p146 = scmp.lt.s32.totalorder %s145, 9
      %s147 = scalar_select %p146, %s145, 9
      %s148 = smul.addr %s147, 4
      %s149 = smul.addr %s148, 4
      %s150 = scalar_lea.vmem %s0, %s149
      %p151 = pneg %p35
      %p152 = pneg %p32
      %p153 = pneg %p56
      %p154 = pneg %p53
      %p155 = pneg %p77
      %p156 = pneg %p74
      %p157 = pneg %p103
      %p158 = pneg %p100
      %s159 = smul.u32 5, %s14
      %p160 = scmp.lt.s32.totalorder %s159, 9
      %s161 = scalar_select %p160, %s159, 9
      %s162 = smul.addr %s161, 4
      %s163 = scalar_lea.vmem %s3, %s162
      %s164 = smul.u32 5, %s14
      %p165 = scmp.lt.s32.totalorder %s164, 9
      %s166 = scalar_select %p165, %s164, 9
      %s167 = smul.addr %s166, 4
      %s168 = smul.addr %s167, 4
      %s169 = scalar_lea.vmem %s0, %s168
      %s170 = smul.u32 5, %s14
      %s171 = smul.u32 5, %s14
      %p172 = scmp.lt.s32.totalorder %s171, 9
      %s173 = scalar_select %p172, %s171, 9
      %s174 = smul.addr %s173, 4
      %s175 = scalar_lea.vmem %s3, %s174
      %s176 = smul.u32 5, %s14
      %v178 = vld [vmem:[%s169] sm:$0xff]
      %v179 = vld [vmem:[%s169 + $0x8] sm:$0xff]
      %v180 = vld [vmem:[%s169 + $0x10] sm:$0xff]
      %v181 = vld [vmem:[%s169 + $0x18] sm:$0xff]
      %v182 = vld [vmem:[%s169 + $0x20] sm:$0xff]
      %v183 = vld [vmem:[%s169 + $0x28] sm:$0xff]
      %v184 = vld [vmem:[%s169 + $0x30] sm:$0xff]
      %v185 = vld [vmem:[%s169 + $0x38] sm:$0xff]
      %v186 = vld [vmem:[%s169 + $0x40] sm:$0xff]
      %v187 = vld [vmem:[%s169 + $0x48] sm:$0xff]
      %v188 = vld [vmem:[%s1] sm:$0xf]
      %v189 = vld [vmem:[%s1 + $0x4] sm:$0xf]
      %v190 = vld [vmem:[%s1 + $0x8] sm:$0xf]
      %v191 = vld [vmem:[%s1 + $0xc] sm:$0xf]
      %v192 = vld [vmem:[%s1 + $0x10] sm:$0xf]
      %v193 = vld [vmem:[%s1 + $0x14] sm:$0xf]
      %v194 = vld [vmem:[%s1 + $0x18] sm:$0xf]
      %v195 = vld [vmem:[%s1 + $0x1c] sm:$0xf]
      %v196 = vld [vmem:[%s1 + $0x20] sm:$0xf]
      %v197 = vld [vmem:[%s1 + $0x24] sm:$0xf]
      %v198 = vld [vmem:[%s1 + $0x28] sm:$0xf]
      %v199 = vld [vmem:[%s1 + $0x2c] sm:$0xf]
      %v200 = vld [vmem:[%s1 + $0x30] sm:$0xf]
      %v201 = vld [vmem:[%s1 + $0x34] sm:$0xf]
      %v202 = vld [vmem:[%s1 + $0x38] sm:$0xf]
      %v203 = vld [vmem:[%s1 + $0x3c] sm:$0xf]
      %v204 = vld [vmem:[%s1 + $0x40] sm:$0xf]
      %v205 = vld [vmem:[%s1 + $0x44] sm:$0xf]
      %v206 = vld [vmem:[%s1 + $0x48] sm:$0xf]
      %v207 = vld [vmem:[%s1 + $0x4c] sm:$0xf]
      %v208 = vld [vmem:[%s1 + $0x50] sm:$0xf]
      %v209 = vld [vmem:[%s1 + $0x54] sm:$0xf]
      %v210 = vld [vmem:[%s1 + $0x58] sm:$0xf]
      %v211 = vld [vmem:[%s1 + $0x5c] sm:$0xf]
      %v212 = vld [vmem:[%s1 + $0x60] sm:$0xf]
      %v213 = vld [vmem:[%s1 + $0x64] sm:$0xf]
      %v214 = vld [vmem:[%s1 + $0x68] sm:$0xf]
      %v215 = vld [vmem:[%s1 + $0x6c] sm:$0xf]
      %v216 = vld [vmem:[%s1 + $0x70] sm:$0xf]
      %v217 = vld [vmem:[%s1 + $0x74] sm:$0xf]
      %v218 = vld [vmem:[%s1 + $0x78] sm:$0xf]
      %v219 = vld [vmem:[%s1 + $0x7c] sm:$0xf]
      %v220 = vld [vmem:[%s1 + $0x80] sm:$0xf]
      %v221 = vld [vmem:[%s1 + $0x84] sm:$0xf]
      %v222 = vld [vmem:[%s1 + $0x88] sm:$0xf]
      %v223 = vld [vmem:[%s1 + $0x8c] sm:$0xf]
      %v224 = vld [vmem:[%s1 + $0x90] sm:$0xf]
      %v225 = vld [vmem:[%s1 + $0x94] sm:$0xf]
      %v226 = vld [vmem:[%s1 + $0x98] sm:$0xf]
      %v227 = vld [vmem:[%s1 + $0x9c] sm:$0xf]
      %v228 = vld [vmem:[%s1 + $0xa0] sm:$0xf]
      %v229 = vld [vmem:[%s1 + $0xa4] sm:$0xf]
      %v230 = vld [vmem:[%s1 + $0xa8] sm:$0xf]
      %v231 = vld [vmem:[%s1 + $0xac] sm:$0xf]
      %v232 = vld [vmem:[%s1 + $0xb0] sm:$0xf]
      %v233 = vld [vmem:[%s1 + $0xb4] sm:$0xf]
      %v234 = vld [vmem:[%s1 + $0xb8] sm:$0xf]
      %v235 = vld [vmem:[%s1 + $0xbc] sm:$0xf]
      %v236 = vld [vmem:[%s1 + $0xc0] sm:$0xf]
      %v237 = vld [vmem:[%s1 + $0xc4] sm:$0xf]
      %v238 = vld [vmem:[%s1 + $0xc8] sm:$0xf]
      %v239 = vld [vmem:[%s1 + $0xcc] sm:$0xf]
      %v240 = vld [vmem:[%s1 + $0xd0] sm:$0xf]
      %v241 = vld [vmem:[%s1 + $0xd4] sm:$0xf]
      %v242 = vld [vmem:[%s1 + $0xd8] sm:$0xf]
      %v243 = vld [vmem:[%s1 + $0xdc] sm:$0xf]
      %v244 = vld [vmem:[%s1 + $0xe0] sm:$0xf]
      %v245 = vld [vmem:[%s1 + $0xe4] sm:$0xf]
      %v246 = vld [vmem:[%s1 + $0xe8] sm:$0xf]
      %v247 = vld [vmem:[%s1 + $0xec] sm:$0xf]
      %v248 = vld [vmem:[%s1 + $0xf0] sm:$0xf]
      %v249 = vld [vmem:[%s1 + $0xf4] sm:$0xf]
      %v250 = vld [vmem:[%s1 + $0xf8] sm:$0xf]
      %v251 = vld [vmem:[%s1 + $0xfc] sm:$0xf]
      %v252 = vld [vmem:[%s2] sm:$0x1]
      %v254 = vlaneseq
      %v255 = vshrl.u32 %v254, 7
      %v256 = vsub.s32 0, %v255
      %v257 = vrot.slane %v252, %v256
      %v269 = vunpack.c.l.b16 %v178
      %v270 = vunpack.c.h.b16 %v178
      %v271 = vunpack.c.l.b16 %v179
      %v272 = vunpack.c.h.b16 %v179
      %v273 = vunpack.c.l.b16 %v180
      %v274 = vunpack.c.h.b16 %v180
      %v275 = vunpack.c.l.b16 %v181
      %v276 = vunpack.c.h.b16 %v181
      %v277 = vunpack.c.l.b16 %v182
      %v278 = vunpack.c.h.b16 %v182
      %v279 = vunpack.c.l.b16 %v183
      %v280 = vunpack.c.h.b16 %v183
      %v281 = vunpack.c.l.b16 %v184
      %v282 = vunpack.c.h.b16 %v184
      %v283 = vunpack.c.l.b16 %v185
      %v284 = vunpack.c.h.b16 %v185
      %v285 = vunpack.c.l.b16 %v186
      %v286 = vunpack.c.h.b16 %v186
      %v287 = vunpack.c.l.b16 %v187
      %v288 = vunpack.c.h.b16 %v187
      %v289 = vpack.c.b16 %v273, %v269
      %v290 = vpack.c.b16 %v274, %v270
      %v291 = vpack.c.b16 %v275, %v271
      %v292 = vpack.c.b16 %v276, %v272
      %v293 = vpack.c.b16 %v281, %v277
      %v294 = vpack.c.b16 %v282, %v278
      %v295 = vpack.c.b16 %v283, %v279
      %v296 = vpack.c.b16 %v284, %v280
      %v297 = vpack.c.b16 %v285, %v285
      %v298 = vpack.c.b16 %v286, %v286
      %v299 = vpack.c.b16 %v287, %v287
      %v300 = vpack.c.b16 %v288, %v288
      %v377 = vunpack.c.l.b16 %v188
      %v378 = vunpack.c.l.b16 %v189
      %v379 = vunpack.c.l.b16 %v190
      %v380 = vunpack.c.l.b16 %v191
      %v381 = vunpack.c.l.b16 %v192
      %v382 = vunpack.c.l.b16 %v193
      %v383 = vunpack.c.l.b16 %v194
      %v384 = vunpack.c.l.b16 %v195
      %v385 = vunpack.c.l.b16 %v196
      %v386 = vunpack.c.l.b16 %v197
      %v387 = vunpack.c.l.b16 %v198
      %v388 = vunpack.c.l.b16 %v199
      %v389 = vunpack.c.l.b16 %v200
      %v390 = vunpack.c.l.b16 %v201
      %v391 = vunpack.c.l.b16 %v202
      %v392 = vunpack.c.l.b16 %v203
      %v393 = vunpack.c.l.b16 %v204
      %v394 = vunpack.c.l.b16 %v205
      %v395 = vunpack.c.l.b16 %v206
      %v396 = vunpack.c.l.b16 %v207
      %v397 = vunpack.c.l.b16 %v208
      %v398 = vunpack.c.l.b16 %v209
      %v399 = vunpack.c.l.b16 %v210
      %v400 = vunpack.c.l.b16 %v211
      %v401 = vunpack.c.l.b16 %v212
      %v402 = vunpack.c.l.b16 %v213
      %v403 = vunpack.c.l.b16 %v214
      %v404 = vunpack.c.l.b16 %v215
      %v405 = vunpack.c.l.b16 %v216
      %v406 = vunpack.c.l.b16 %v217
      %v407 = vunpack.c.l.b16 %v218
      %v408 = vunpack.c.l.b16 %v219
      %v409 = vunpack.c.l.b16 %v220
      %v410 = vunpack.c.l.b16 %v221
      %v411 = vunpack.c.l.b16 %v222
      %v412 = vunpack.c.l.b16 %v223
      %v413 = vunpack.c.l.b16 %v224
      %v414 = vunpack.c.l.b16 %v225
      %v415 = vunpack.c.l.b16 %v226
      %v416 = vunpack.c.l.b16 %v227
      %v417 = vunpack.c.l.b16 %v228
      %v418 = vunpack.c.l.b16 %v229
      %v419 = vunpack.c.l.b16 %v230
      %v420 = vunpack.c.l.b16 %v231
      %v421 = vunpack.c.l.b16 %v232
      %v422 = vunpack.c.l.b16 %v233
      %v423 = vunpack.c.l.b16 %v234
      %v424 = vunpack.c.l.b16 %v235
      %v425 = vunpack.c.l.b16 %v236
      %v426 = vunpack.c.l.b16 %v237
      %v427 = vunpack.c.l.b16 %v238
      %v428 = vunpack.c.l.b16 %v239
      %v429 = vunpack.c.l.b16 %v240
      %v430 = vunpack.c.l.b16 %v241
      %v431 = vunpack.c.l.b16 %v242
      %v432 = vunpack.c.l.b16 %v243
      %v433 = vunpack.c.l.b16 %v244
      %v434 = vunpack.c.l.b16 %v245
      %v435 = vunpack.c.l.b16 %v246
      %v436 = vunpack.c.l.b16 %v247
      %v437 = vunpack.c.l.b16 %v248
      %v438 = vunpack.c.l.b16 %v249
      %v439 = vunpack.c.l.b16 %v250
      %v440 = vunpack.c.l.b16 %v251
      %v441 = vpack.c.b16 %v378, %v377
      %v442 = vpack.c.b16 %v380, %v379
      %v443 = vpack.c.b16 %v382, %v381
      %v444 = vpack.c.b16 %v384, %v383
      %v445 = vpack.c.b16 %v386, %v385
      %v446 = vpack.c.b16 %v388, %v387
      %v447 = vpack.c.b16 %v390, %v389
      %v448 = vpack.c.b16 %v392, %v391
      %v449 = vpack.c.b16 %v394, %v393
      %v450 = vpack.c.b16 %v396, %v395
      %v451 = vpack.c.b16 %v398, %v397
      %v452 = vpack.c.b16 %v400, %v399
      %v453 = vpack.c.b16 %v402, %v401
      %v454 = vpack.c.b16 %v404, %v403
      %v455 = vpack.c.b16 %v406, %v405
      %v456 = vpack.c.b16 %v408, %v407
      %v457 = vpack.c.b16 %v410, %v409
      %v458 = vpack.c.b16 %v412, %v411
      %v459 = vpack.c.b16 %v414, %v413
      %v460 = vpack.c.b16 %v416, %v415
      %v461 = vpack.c.b16 %v418, %v417
      %v462 = vpack.c.b16 %v420, %v419
      %v463 = vpack.c.b16 %v422, %v421
      %v464 = vpack.c.b16 %v424, %v423
      %v465 = vpack.c.b16 %v426, %v425
      %v466 = vpack.c.b16 %v428, %v427
      %v467 = vpack.c.b16 %v430, %v429
      %v468 = vpack.c.b16 %v432, %v431
      %v469 = vpack.c.b16 %v434, %v433
      %v470 = vpack.c.b16 %v436, %v435
      %v471 = vpack.c.b16 %v438, %v437
      %v472 = vpack.c.b16 %v440, %v439
      %505 = vmatprep.subr.bf16.mxu0 0
      %506 = vmatpush1.bf16.msra.mxu0 %v441
      %507 = vmatprep.subr.bf16.mxu0 0
      %508 = vmatpush1.bf16.msra.mxu0 %v442
      %509 = vmatprep.subr.bf16.mxu0 0
      %510 = vmatpush1.bf16.msra.mxu0 %v443
      %511 = vmatprep.subr.bf16.mxu0 0
      %512 = vmatpush1.bf16.msra.mxu0 %v444
      %513 = vmatprep.subr.bf16.mxu0 0
      %514 = vmatpush1.bf16.msra.mxu0 %v445
      %515 = vmatprep.subr.bf16.mxu0 0
      %516 = vmatpush1.bf16.msra.mxu0 %v446
      %517 = vmatprep.subr.bf16.mxu0 0
      %518 = vmatpush1.bf16.msra.mxu0 %v447
      %519 = vmatprep.subr.bf16.mxu0 0
      %520 = vmatpush1.bf16.msra.mxu0 %v448
      %521 = vmatprep.subr.bf16.mxu0 0
      %522 = vmatpush1.bf16.msra.mxu0 %v449
      %523 = vmatprep.subr.bf16.mxu0 0
      %524 = vmatpush1.bf16.msra.mxu0 %v450
      %525 = vmatprep.subr.bf16.mxu0 0
      %526 = vmatpush1.bf16.msra.mxu0 %v451
      %527 = vmatprep.subr.bf16.mxu0 0
      %528 = vmatpush1.bf16.msra.mxu0 %v452
      %529 = vmatprep.subr.bf16.mxu0 0
      %530 = vmatpush1.bf16.msra.mxu0 %v453
      %531 = vmatprep.subr.bf16.mxu0 0
      %532 = vmatpush1.bf16.msra.mxu0 %v454
      %533 = vmatprep.subr.bf16.mxu0 0
      %534 = vmatpush1.bf16.msra.mxu0 %v455
      %535 = vmatprep.subr.bf16.mxu0 0
      %536 = vmatpush1.bf16.msra.mxu0 %v456
      %537 = vmatprep.mubr.bf16.mxu0 %v290
      %538 = vmatmul.mubr.bf16.gmra.mrb[0].mxu0 %v289
      %v539 = vpop.f32.mrb[0].mxu0
      %v540 = vadd.f32 %v257, %v539
      %v541 = vpop.f32.mrb[0].mxu0
      %v542 = vpop.f32.mrb[0].mxu0
      %v543 = vadd.f32 %v257, %v542
      %v544 = vpop.f32.mrb[0].mxu0
      %545 = vmatprep.mubr.bf16.mxu0 %v294
      %546 = vmatmul.mubr.bf16.gmra.mrb[0].mxu0 %v293
      %v547 = vpop.f32.mrb[0].mxu0
      %v548 = vadd.f32 %v257, %v547
      %v549 = vpop.f32.mrb[0].mxu0
      %v550 = vpop.f32.mrb[0].mxu0
      %v551 = vadd.f32 %v257, %v550
      %v552 = vpop.f32.mrb[0].mxu0
      %553 = vmatprep.mubr.bf16.mxu0 %v298
      %554 = vmatmul.mubr.bf16.gmra.mrb[0].mxu0 %v297
      %v555 = vpop.f32.mrb[0].mxu0
      %v556 = vadd.f32 %v257, %v555
      %v557 = vpop.f32.mrb[0].mxu0
      %v558 = vpop.f32.mrb[0].mxu0
      %v559 = vpop.f32.mrb[0].mxu0
      %560 = vdwg.mxu0
      %561 = vmatprep.subr.bf16.mxu0 0
      %562 = vmatpush1.bf16.msra.mxu0 %v457
      %563 = vmatprep.subr.bf16.mxu0 0
      %564 = vmatpush1.bf16.msra.mxu0 %v458
      %565 = vmatprep.subr.bf16.mxu0 0
      %566 = vmatpush1.bf16.msra.mxu0 %v459
      %567 = vmatprep.subr.bf16.mxu0 0
      %568 = vmatpush1.bf16.msra.mxu0 %v460
      %569 = vmatprep.subr.bf16.mxu0 0
      %570 = vmatpush1.bf16.msra.mxu0 %v461
      %571 = vmatprep.subr.bf16.mxu0 0
      %572 = vmatpush1.bf16.msra.mxu0 %v462
      %573 = vmatprep.subr.bf16.mxu0 0
      %574 = vmatpush1.bf16.msra.mxu0 %v463
      %575 = vmatprep.subr.bf16.mxu0 0
      %576 = vmatpush1.bf16.msra.mxu0 %v464
      %577 = vmatprep.subr.bf16.mxu0 0
      %578 = vmatpush1.bf16.msra.mxu0 %v465
      %579 = vmatprep.subr.bf16.mxu0 0
      %580 = vmatpush1.bf16.msra.mxu0 %v466
      %581 = vmatprep.subr.bf16.mxu0 0
      %582 = vmatpush1.bf16.msra.mxu0 %v467
      %583 = vmatprep.subr.bf16.mxu0 0
      %584 = vmatpush1.bf16.msra.mxu0 %v468
      %585 = vmatprep.subr.bf16.mxu0 0
      %586 = vmatpush1.bf16.msra.mxu0 %v469
      %587 = vmatprep.subr.bf16.mxu0 0
      %588 = vmatpush1.bf16.msra.mxu0 %v470
      %589 = vmatprep.subr.bf16.mxu0 0
      %590 = vmatpush1.bf16.msra.mxu0 %v471
      %591 = vmatprep.subr.bf16.mxu0 0
      %592 = vmatpush1.bf16.msra.mxu0 %v472
      %593 = vmatprep.mubr.bf16.mxu0 %v292
      %594 = vmatmul.mubr.bf16.gmra.mrb[0].mxu0 %v291
      %v595 = vpop.f32.mrb[0].mxu0
      %v596 = vadd.f32 %v540, %v595
      %v597 = vpop.f32.mrb[0].mxu0
      %v598 = vpop.f32.mrb[0].mxu0
      %v599 = vadd.f32 %v543, %v598
      %v600 = vpop.f32.mrb[0].mxu0
      %601 = vmatprep.mubr.bf16.mxu0 %v296
      %602 = vmatmul.mubr.bf16.gmra.mrb[0].mxu0 %v295
      %v603 = vpop.f32.mrb[0].mxu0
      %v604 = vadd.f32 %v548, %v603
      %v605 = vpop.f32.mrb[0].mxu0
      %v606 = vpop.f32.mrb[0].mxu0
      %v607 = vadd.f32 %v551, %v606
      %v608 = vpop.f32.mrb[0].mxu0
      %609 = vmatprep.mubr.bf16.mxu0 %v300
      %610 = vmatmul.mubr.bf16.gmra.mrb[0].mxu0 %v299
      %v611 = vpop.f32.mrb[0].mxu0
      %v612 = vadd.f32 %v556, %v611
      %v613 = vpop.f32.mrb[0].mxu0
      %v614 = vpop.f32.mrb[0].mxu0
      %v615 = vpop.f32.mrb[0].mxu0
      %616 = vdwg.mxu0
      %v617 = vmax.f32 %v596, 0.0
      %v618 = vmax.f32 %v599, 0.0
      %v619 = vmax.f32 %v604, 0.0
      %v620 = vmax.f32 %v607, 0.0
      %v621 = vmax.f32 %v612, 0.0
      %v622 = vpack.c.bf16 %v618, %v617
      %v623 = vpack.c.bf16 %v620, %v619
      %v624 = vpack.c.bf16 %v621, %v621
      %v628 = vunpack.c.l.b16 %v622
      %v629 = vunpack.c.h.b16 %v622
      %v630 = vunpack.c.l.b16 %v623
      %v631 = vunpack.c.h.b16 %v623
      %v632 = vunpack.c.l.b16 %v624
      %v633 = vpack.c.b16 %v628, %v628
      %v634 = vpack.c.b16 %v629, %v629
      %v635 = vpack.c.b16 %v630, %v630
      %v636 = vpack.c.b16 %v631, %v631
      %v637 = vpack.c.b16 %v632, %v632
      %643 = vst [vmem:[%s175] sm:$0xf] %v633
      %644 = vst [vmem:[%s175 + $0x4] sm:$0xf] %v634
      %645 = vst [vmem:[%s175 + $0x8] sm:$0xf] %v635
      %646 = vst [vmem:[%s175 + $0xc] sm:$0xf] %v636
      %647 = vst [vmem:[%s175 + $0x10] sm:$0xf] %v637
      %s648 = smul.u32 5, %s14
      %p649 = scmp.lt.s32.totalorder %s648, 9
      %s650 = scalar_select %p649, %s648, 9
      %s651 = smul.addr %s650, 4
      %s652 = scalar_lea.vmem %s3, %s651
      // Predicated region
      $region33: #{forward.5} parent=31 // pred_check
        %p653 = pneg %p100
      $region34: #{forward.5} parent=31 // pred_check_branch
        %655 = sbr.rel (%p653) target = $region36
      $region35: #{forward.5} parent=31 // pred_region
        %s656 = smul.u32 5, %s14
      $region36: #{forward.5} parent=31 // pred_fallthru
        _
    $region32: #{forward.5} parent=5 // pred_fallthru
      _
    %p657 = scmp.le.s32.totalorder 2, %s9
    // Predicated region
    $region37: #{forward.5} parent=5 // pred_check
      %p658 = pneg %p657
    $region38: #{forward.5} parent=5 // pred_check_branch
      %660 = sbr.rel (%p658) target = $region40
    $region39: #{forward.5} parent=5 // pred_region
      %s661 = ssub.s32 %s9, 2
      // Predicated region
      $region41: #{forward.5} parent=39 // pred_check
        %p662 = pneg %p106
      $region42: #{forward.5} parent=39 // pred_check_branch
        %664 = sbr.rel (%p662) target = $region44
      $region43: #{forward.5} parent=39 // pred_region
        %s665 = smul.u32 5, %s15
        %p666 = scmp.lt.s32.totalorder %s665, 9
        %s667 = scalar_select %p666, %s665, 9
        %s668 = smul.addr %s667, 4
        %s669 = scalar_lea.vmem %s3, %s668
      $region44: #{forward.5} parent=39 // pred_fallthru
        _
    $region40: #{forward.5} parent=5 // pred_fallthru
      _
  $region6: #{forward.5} parent=0 // loop_footer
    %s13 = sadd.s32 1, %s9
  $region7: #{forward.5} parent=0 // loop_footer_branch
    %8 = sbr.rel target = $region3
  $region8: #{forward.5} parent=0 // loop_exit
    _

// kernel: forward.6
$region0: #{forward.6}
  #allocation0 [shape = 'u32[]', space=smem, size = 0x4, offset = 0x4, fixed_abs, tag = 'smem constant byte address 0x4 - core index']
  #allocation1 [shape = 'u32[144,128]{1,0:T(1,128)}', space=vmem, size = 0x12000, scoped, tag = 'internal scratch']
  %s0 = inlined_call_operand.vmem [shape: bf16[32,576], index: 0, kind: input, shape index: {}]
  %s1 = inlined_call_operand.vmem [shape: bf16[576,128], index: 1, kind: input, shape index: {}]
  %s2 = inlined_call_operand.vmem [shape: f32[1,128], index: 2, kind: input, shape index: {}]
  %s3 = inlined_call_operand.vmem [shape: bf16[32,128], index: 3, kind: output, shape index: {}]
  %s4 = sld [smem:[#allocation0]]
  $region45: #{forward.6} parent=0
    _
  %s6 = ssub.s32 1, %s4
  %s7 = scalar_select 0, %s6, %s4
  loop: start=0, step=1, limit=4
  $region2: #{forward.6} parent=0 // loop_pre_header
    _
  $region3: #{forward.6} parent=0 // loop_header
    %s9 = sphi 0, %s13
    %p10 = scmp.ge.s32.totalorder %s9, 4
    %s19 = sphi 0, %s21
    %s22 = sphi 0, %s19
    %s23 = sphi 0, %s22
    %s39 = sphi 0, %s23
    %s43 = sphi 0, %s43
    %s45 = sphi 0, %s43
    %s46 = sphi 0, %s45
    %s60 = sphi 0, %s46
    %s64 = sphi 0, %s64
    %s66 = sphi 0, %s64
    %s67 = sphi 0, %s66
    %s81 = sphi 0, %s67
    %s87 = sphi 0, %s89
    %s90 = sphi 0, %s87
    %s91 = sphi 0, %s90
    %s107 = sphi 0, %s91
  $region4: #{forward.6} parent=0 // loop_header_branch
    %12 = sbr.rel (%p10) target = $region8
  $region5: #{forward.6} parent=0 // loop_body
    %s14 = ssub.s32 %s9, 1
    %s15 = ssub.s32 %s9, 2
    %s16 = sadd.s32 %s9, 1
    %s17 = ssub.s32 %s9, %s16
    %p18 = scmp.eq.s32.totalorder %s17, 0
    %s20 = sadd.s32 %s19, 1
    %s21 = scalar_select %p18, %s19, %s20
    %p24 = pneg %p18
    %p25 = scmp.eq.s32.totalorder %s9, 1
    %p26 = por %p24, %p25
    %p27 = scmp.ne.s32.totalorder %s19, %s22
    %p28 = scmp.eq.s32.totalorder %s9, 0
    %p29 = por %p27, %p28
    %p30 = scmp.ne.s32.totalorder %s19, %s22
    %p31 = scmp.eq.s32.totalorder %s14, 1
    %p32 = por %p30, %p31
    %p33 = scmp.ne.s32.totalorder %s22, %s23
    %p34 = scmp.eq.s32.totalorder %s14, 0
    %p35 = por %p33, %p34
    %p36 = scmp.ne.s32.totalorder %s22, %s23
    %p37 = scmp.eq.s32.totalorder %s15, 1
    %p38 = por %p36, %p37
    %p40 = scmp.ne.s32.totalorder %s23, %s39
    %p41 = scmp.eq.s32.totalorder %s15, 0
    %p42 = por %p40, %p41
    %s44 = sadd.s32 %s43, 1
    %p47 = scmp.eq.s32.totalorder %s9, 1
    %p48 = scmp.ne.s32.totalorder %s43, %s45
    %p49 = scmp.eq.s32.totalorder %s9, 0
    %p50 = por %p48, %p49
    %p51 = scmp.ne.s32.totalorder %s43, %s45
    %p52 = scmp.eq.s32.totalorder %s14, 1
    %p53 = por %p51, %p52
    %p54 = scmp.ne.s32.totalorder %s45, %s46
    %p55 = scmp.eq.s32.totalorder %s14, 0
    %p56 = por %p54, %p55
    %p57 = scmp.ne.s32.totalorder %s45, %s46
    %p58 = scmp.eq.s32.totalorder %s15, 1
    %p59 = por %p57, %p58
    %p61 = scmp.ne.s32.totalorder %s46, %s60
    %p62 = scmp.eq.s32.totalorder %s15, 0
    %p63 = por %p61, %p62
    %s65 = sadd.s32 %s64, 1
    %p68 = scmp.eq.s32.totalorder %s9, 1
    %p69 = scmp.ne.s32.totalorder %s64, %s66
    %p70 = scmp.eq.s32.totalorder %s9, 0
    %p71 = por %p69, %p70
    %p72 = scmp.ne.s32.totalorder %s64, %s66
    %p73 = scmp.eq.s32.totalorder %s14, 1
    %p74 = por %p72, %p73
    %p75 = scmp.ne.s32.totalorder %s66, %s67
    %p76 = scmp.eq.s32.totalorder %s14, 0
    %p77 = por %p75, %p76
    %p78 = scmp.ne.s32.totalorder %s66, %s67
    %p79 = scmp.eq.s32.totalorder %s15, 1
    %p80 = por %p78, %p79
    %p82 = scmp.ne.s32.totalorder %s67, %s81
    %p83 = scmp.eq.s32.totalorder %s15, 0
    %p84 = por %p82, %p83
    %s85 = ssub.s32 %s9, %s16
    %p86 = scmp.eq.s32.totalorder %s85, 0
    %s88 = sadd.s32 %s87, 1
    %s89 = scalar_select %p86, %s87, %s88
    %p92 = pneg %p86
    %p93 = scmp.eq.s32.totalorder %s9, 1
    %p94 = por %p92, %p93
    %p95 = scmp.ne.s32.totalorder %s87, %s90
    %p96 = scmp.eq.s32.totalorder %s9, 0
    %p97 = por %p95, %p96
    %p98 = scmp.ne.s32.totalorder %s87, %s90
    %p99 = scmp.eq.s32.totalorder %s14, 1
    %p100 = por %p98, %p99
    %p101 = scmp.ne.s32.totalorder %s90, %s91
    %p102 = scmp.eq.s32.totalorder %s14, 0
    %p103 = por %p101, %p102
    %p104 = scmp.ne.s32.totalorder %s90, %s91
    %p105 = scmp.eq.s32.totalorder %s15, 1
    %p106 = por %p104, %p105
    %p108 = scmp.ne.s32.totalorder %s91, %s107
    %p109 = scmp.eq.s32.totalorder %s15, 0
    %p110 = por %p108, %p109
    %p111 = scmp.le.s32.totalorder 1, %s9
    %p112 = scmp.lt.s32.totalorder %s9, 3
    %p113 = pnand %p111, %p112
    %p114 = pneg %p113
    // Predicated region
    $region9: #{forward.6} parent=5 // pred_check
      _
    $region10: #{forward.6} parent=5 // pred_check_branch
      %116 = sbr.rel (%p113) target = $region12
    $region11: #{forward.6} parent=5 // pred_region
      %s117 = ssub.s32 %s9, 1
      // Predicated region
      $region13: #{forward.6} parent=11 // pred_check
        %p118 = pneg %p56
      $region14: #{forward.6} parent=11 // pred_check_branch
        %120 = sbr.rel (%p118) target = $region16
      $region15: #{forward.6} parent=11 // pred_region
        _
      $region16: #{forward.6} parent=11 // pred_fallthru
        _
      // Predicated region
      $region17: #{forward.6} parent=11 // pred_check
        %p121 = pneg %p77
      $region18: #{forward.6} parent=11 // pred_check_branch
        %123 = sbr.rel (%p121) target = $region20
      $region19: #{forward.6} parent=11 // pred_region
        _
      $region20: #{forward.6} parent=11 // pred_fallthru
        _
    $region12: #{forward.6} parent=5 // pred_fallthru
      _
    %p124 = scmp.lt.s32.totalorder %s9, 2
    // Predicated region
    $region21: #{forward.6} parent=5 // pred_check
      %p125 = pneg %p124
    $region22: #{forward.6} parent=5 // pred_check_branch
      %127 = sbr.rel (%p125) target = $region24
    $region23: #{forward.6} parent=5 // pred_region
      // Predicated region
      $region25: #{forward.6} parent=23 // pred_check
        %p128 = pneg %p29
      $region26: #{forward.6} parent=23 // pred_check_branch
        %130 = sbr.rel (%p128) target = $region28
      $region27: #{forward.6} parent=23 // pred_region
        %s131 = smul.u32 2, %s9
        %p132 = scmp.lt.s32.totalorder %s131, 3
        %s133 = scalar_select %p132, %s131, 3
        %s134 = smul.addr %s133, 5
        %s135 = smul.addr %s134, 4
        %s136 = scalar_lea.vmem %s0, %s135
        %s137 = smul.u32 2, %s9
      $region28: #{forward.6} parent=23 // pred_fallthru
        _
    $region24: #{forward.6} parent=5 // pred_fallthru
      _
    %p138 = scmp.le.s32.totalorder 1, %s9
    %p139 = scmp.lt.s32.totalorder %s9, 3
    %p140 = pnand %p138, %p139
    %p141 = pneg %p140
    // Predicated region
    $region29: #{forward.6} parent=5 // pred_check
      _
    $region30: #{forward.6} parent=5 // pred_check_branch
      %143 = sbr.rel (%p140) target = $region32
    $region31: #{forward.6} parent=5 // pred_region
      %s144 = ssub.s32 %s9, 1
      %s145 = smul.u32 2, %s14
      %p146 = scmp.lt.s32.totalorder %s145, 3
      %s147 = scalar_select %p146, %s145, 3
      %s148 = smul.addr %s147, 5
      %s149 = smul.addr %s148, 4
      %s150 = scalar_lea.vmem %s0, %s149
      %p151 = pneg %p35
      %p152 = pneg %p32
      %p153 = pneg %p56
      %p154 = pneg %p53
      %p155 = pneg %p77
      %p156 = pneg %p74
      %p157 = pneg %p103
      %p158 = pneg %p100
      %s159 = smul.u32 2, %s14
      %p160 = scmp.lt.s32.totalorder %s159, 3
      %s161 = scalar_select %p160, %s159, 3
      %s162 = smul.addr %s161, 4
      %s163 = scalar_lea.vmem %s3, %s162
      %s164 = smul.u32 2, %s14
      %p165 = scmp.lt.s32.totalorder %s164, 3
      %s166 = scalar_select %p165, %s164, 3
      %s167 = smul.addr %s166, 5
      %s168 = smul.addr %s167, 4
      %s169 = scalar_lea.vmem %s0, %s168
      %s170 = smul.u32 2, %s14
      %s171 = smul.u32 2, %s14
      %p172 = scmp.lt.s32.totalorder %s171, 3
      %s173 = scalar_select %p172, %s171, 3
      %s174 = smul.addr %s173, 4
      %s175 = scalar_lea.vmem %s3, %s174
      %s176 = smul.u32 2, %s14
      %v178 = vld [vmem:[%s169] sm:$0xff]
      %v179 = vld [vmem:[%s169 + $0x8] sm:$0xff]
      %v180 = vld [vmem:[%s169 + $0x10] sm:$0xf]
      %v181 = vld [vmem:[%s169 + $0x14] sm:$0xff]
      %v182 = vld [vmem:[%s169 + $0x1c] sm:$0xff]
      %v183 = vld [vmem:[%s169 + $0x24] sm:$0xf]
      %v184 = vld [vmem:[%s1] sm:$0xf]
      %v185 = vld [vmem:[%s1 + $0x4] sm:$0xf]
      %v186 = vld [vmem:[%s1 + $0x8] sm:$0xf]
      %v187 = vld [vmem:[%s1 + $0xc] sm:$0xf]
      %v188 = vld [vmem:[%s1 + $0x10] sm:$0xf]
      %v189 = vld [vmem:[%s1 + $0x14] sm:$0xf]
      %v190 = vld [vmem:[%s1 + $0x18] sm:$0xf]
      %v191 = vld [vmem:[%s1 + $0x1c] sm:$0xf]
      %v192 = vld [vmem:[%s1 + $0x20] sm:$0xf]
      %v193 = vld [vmem:[%s1 + $0x24] sm:$0xf]
      %v194 = vld [vmem:[%s1 + $0x28] sm:$0xf]
      %v195 = vld [vmem:[%s1 + $0x2c] sm:$0xf]
      %v196 = vld [vmem:[%s1 + $0x30] sm:$0xf]
      %v197 = vld [vmem:[%s1 + $0x34] sm:$0xf]
      %v198 = vld [vmem:[%s1 + $0x38] sm:$0xf]
      %v199 = vld [vmem:[%s1 + $0x3c] sm:$0xf]
      %v200 = vld [vmem:[%s1 + $0x40] sm:$0xf]
      %v201 = vld [vmem:[%s1 + $0x44] sm:$0xf]
      %v202 = vld [vmem:[%s1 + $0x48] sm:$0xf]
      %v203 = vld [vmem:[%s1 + $0x4c] sm:$0xf]
      %v204 = vld [vmem:[%s1 + $0x50] sm:$0xf]
      %v205 = vld [vmem:[%s1 + $0x54] sm:$0xf]
      %v206 = vld [vmem:[%s1 + $0x58] sm:$0xf]
      %v207 = vld [vmem:[%s1 + $0x5c] sm:$0xf]
      %v208 = vld [vmem:[%s1 + $0x60] sm:$0xf]
      %v209 = vld [vmem:[%s1 + $0x64] sm:$0xf]
      %v210 = vld [vmem:[%s1 + $0x68] sm:$0xf]
      %v211 = vld [vmem:[%s1 + $0x6c] sm:$0xf]
      %v212 = vld [vmem:[%s1 + $0x70] sm:$0xf]
      %v213 = vld [vmem:[%s1 + $0x74] sm:$0xf]
      %v214 = vld [vmem:[%s1 + $0x78] sm:$0xf]
      %v215 = vld [vmem:[%s1 + $0x7c] sm:$0xf]
      %v216 = vld [vmem:[%s1 + $0x80] sm:$0xf]
      %v217 = vld [vmem:[%s1 + $0x84] sm:$0xf]
      %v218 = vld [vmem:[%s1 + $0x88] sm:$0xf]
      %v219 = vld [vmem:[%s1 + $0x8c] sm:$0xf]
      %v220 = vld [vmem:[%s1 + $0x90] sm:$0xf]
      %v221 = vld [vmem:[%s1 + $0x94] sm:$0xf]
      %v222 = vld [vmem:[%s1 + $0x98] sm:$0xf]
      %v223 = vld [vmem:[%s1 + $0x9c] sm:$0xf]
      %v224 = vld [vmem:[%s1 + $0xa0] sm:$0xf]
      %v225 = vld [vmem:[%s1 + $0xa4] sm:$0xf]
      %v226 = vld [vmem:[%s1 + $0xa8] sm:$0xf]
      %v227 = vld [vmem:[%s1 + $0xac] sm:$0xf]
      %v228 = vld [vmem:[%s1 + $0xb0] sm:$0xf]
      %v229 = vld [vmem:[%s1 + $0xb4] sm:$0xf]
      %v230 = vld [vmem:[%s1 + $0xb8] sm:$0xf]
      %v231 = vld [vmem:[%s1 + $0xbc] sm:$0xf]
      %v232 = vld [vmem:[%s1 + $0xc0] sm:$0xf]
      %v233 = vld [vmem:[%s1 + $0xc4] sm:$0xf]
      %v234 = vld [vmem:[%s1 + $0xc8] sm:$0xf]
      %v235 = vld [vmem:[%s1 + $0xcc] sm:$0xf]
      %v236 = vld [vmem:[%s1 + $0xd0] sm:$0xf]
      %v237 = vld [vmem:[%s1 + $0xd4] sm:$0xf]
      %v238 = vld [vmem:[%s1 + $0xd8] sm:$0xf]
      %v239 = vld [vmem:[%s1 + $0xdc] sm:$0xf]
      %v240 = vld [vmem:[%s1 + $0xe0] sm:$0xf]
      %v241 = vld [vmem:[%s1 + $0xe4] sm:$0xf]
      %v242 = vld [vmem:[%s1 + $0xe8] sm:$0xf]
      %v243 = vld [vmem:[%s1 + $0xec] sm:$0xf]
      %v244 = vld [vmem:[%s1 + $0xf0] sm:$0xf]
      %v245 = vld [vmem:[%s1 + $0xf4] sm:$0xf]
      %v246 = vld [vmem:[%s1 + $0xf8] sm:$0xf]
      %v247 = vld [vmem:[%s1 + $0xfc] sm:$0xf]
      %v248 = vld [vmem:[%s1 + $0x100] sm:$0xf]
      %v249 = vld [vmem:[%s1 + $0x104] sm:$0xf]
      %v250 = vld [vmem:[%s1 + $0x108] sm:$0xf]
      %v251 = vld [vmem:[%s1 + $0x10c] sm:$0xf]
      %v252 = vld [vmem:[%s1 + $0x110] sm:$0xf]
      %v253 = vld [vmem:[%s1 + $0x114] sm:$0xf]
      %v254 = vld [vmem:[%s1 + $0x118] sm:$0xf]
      %v255 = vld [vmem:[%s1 + $0x11c] sm:$0xf]
      %v256 = vld [vmem:[%s2] sm:$0x1]
      %v258 = vlaneseq
      %v259 = vshrl.u32 %v258, 7
      %v260 = vsub.s32 0, %v259
      %v261 = vrot.slane %v256, %v260
      %v269 = vunpack.c.l.b16 %v178
      %v270 = vunpack.c.h.b16 %v178
      %v271 = vunpack.c.l.b16 %v179
      %v272 = vunpack.c.h.b16 %v179
      %v273 = vunpack.c.l.b16 %v180
      %v274 = vunpack.c.l.b16 %v181
      %v275 = vunpack.c.h.b16 %v181
      %v276 = vunpack.c.l.b16 %v182
      %v277 = vunpack.c.h.b16 %v182
      %v278 = vunpack.c.l.b16 %v183
      %v279 = vpack.c.b16 %v274, %v269
      %v280 = vpack.c.b16 %v275, %v270
      %v281 = vpack.c.b16 %v276, %v271
      %v282 = vpack.c.b16 %v277, %v272
      %v283 = vpack.c.b16 %v278, %v273
      %v360 = vunpack.c.l.b16 %v184
      %v361 = vunpack.c.l.b16 %v185
      %v362 = vunpack.c.l.b16 %v186
      %v363 = vunpack.c.l.b16 %v187
      %v364 = vunpack.c.l.b16 %v188
      %v365 = vunpack.c.l.b16 %v189
      %v366 = vunpack.c.l.b16 %v190
      %v367 = vunpack.c.l.b16 %v191
      %v368 = vunpack.c.l.b16 %v192
      %v369 = vunpack.c.l.b16 %v193
      %v370 = vunpack.c.l.b16 %v194
      %v371 = vunpack.c.l.b16 %v195
      %v372 = vunpack.c.l.b16 %v196
      %v373 = vunpack.c.l.b16 %v197
      %v374 = vunpack.c.l.b16 %v198
      %v375 = vunpack.c.l.b16 %v199
      %v376 = vunpack.c.l.b16 %v200
      %v377 = vunpack.c.l.b16 %v201
      %v378 = vunpack.c.l.b16 %v202
      %v379 = vunpack.c.l.b16 %v203
      %v380 = vunpack.c.l.b16 %v204
      %v381 = vunpack.c.l.b16 %v205
      %v382 = vunpack.c.l.b16 %v206
      %v383 = vunpack.c.l.b16 %v207
      %v384 = vunpack.c.l.b16 %v208
      %v385 = vunpack.c.l.b16 %v209
      %v386 = vunpack.c.l.b16 %v210
      %v387 = vunpack.c.l.b16 %v211
      %v388 = vunpack.c.l.b16 %v212
      %v389 = vunpack.c.l.b16 %v213
      %v390 = vunpack.c.l.b16 %v214
      %v391 = vunpack.c.l.b16 %v215
      %v392 = vunpack.c.l.b16 %v216
      %v393 = vunpack.c.l.b16 %v217
      %v394 = vunpack.c.l.b16 %v218
      %v395 = vunpack.c.l.b16 %v219
      %v396 = vunpack.c.l.b16 %v220
      %v397 = vunpack.c.l.b16 %v221
      %v398 = vunpack.c.l.b16 %v222
      %v399 = vunpack.c.l.b16 %v223
      %v400 = vunpack.c.l.b16 %v224
      %v401 = vunpack.c.l.b16 %v225
      %v402 = vunpack.c.l.b16 %v226
      %v403 = vunpack.c.l.b16 %v227
      %v404 = vunpack.c.l.b16 %v228
      %v405 = vunpack.c.l.b16 %v229
      %v406 = vunpack.c.l.b16 %v230
      %v407 = vunpack.c.l.b16 %v231
      %v408 = vunpack.c.l.b16 %v232
      %v409 = vunpack.c.l.b16 %v233
      %v410 = vunpack.c.l.b16 %v234
      %v411 = vunpack.c.l.b16 %v235
      %v412 = vunpack.c.l.b16 %v236
      %v413 = vunpack.c.l.b16 %v237
      %v414 = vunpack.c.l.b16 %v238
      %v415 = vunpack.c.l.b16 %v239
      %v416 = vunpack.c.l.b16 %v240
      %v417 = vunpack.c.l.b16 %v241
      %v418 = vunpack.c.l.b16 %v242
      %v419 = vunpack.c.l.b16 %v243
      %v420 = vunpack.c.l.b16 %v244
      %v421 = vunpack.c.l.b16 %v245
      %v422 = vunpack.c.l.b16 %v246
      %v423 = vunpack.c.l.b16 %v247
      %v424 = vunpack.c.l.b16 %v248
      %v425 = vunpack.c.l.b16 %v249
      %v426 = vunpack.c.l.b16 %v250
      %v427 = vunpack.c.l.b16 %v251
      %v428 = vunpack.c.l.b16 %v252
      %v429 = vunpack.c.l.b16 %v253
      %v430 = vunpack.c.l.b16 %v254
      %v431 = vunpack.c.l.b16 %v255
      %v432 = vpack.c.b16 %v361, %v360
      %v433 = vpack.c.b16 %v363, %v362
      %v434 = vpack.c.b16 %v365, %v364
      %v435 = vpack.c.b16 %v367, %v366
      %v436 = vpack.c.b16 %v369, %v368
      %v437 = vpack.c.b16 %v371, %v370
      %v438 = vpack.c.b16 %v373, %v372
      %v439 = vpack.c.b16 %v375, %v374
      %v440 = vpack.c.b16 %v377, %v376
      %v441 = vpack.c.b16 %v379, %v378
      %v442 = vpack.c.b16 %v381, %v380
      %v443 = vpack.c.b16 %v383, %v382
      %v444 = vpack.c.b16 %v385, %v384
      %v445 = vpack.c.b16 %v387, %v386
      %v446 = vpack.c.b16 %v389, %v388
      %v447 = vpack.c.b16 %v391, %v390
      %v448 = vpack.c.b16 %v393, %v392
      %v449 = vpack.c.b16 %v395, %v394
      %v450 = vpack.c.b16 %v397, %v396
      %v451 = vpack.c.b16 %v399, %v398
      %v452 = vpack.c.b16 %v401, %v400
      %v453 = vpack.c.b16 %v403, %v402
      %v454 = vpack.c.b16 %v405, %v404
      %v455 = vpack.c.b16 %v407, %v406
      %v456 = vpack.c.b16 %v409, %v408
      %v457 = vpack.c.b16 %v411, %v410
      %v458 = vpack.c.b16 %v413, %v412
      %v459 = vpack.c.b16 %v415, %v414
      %v460 = vpack.c.b16 %v417, %v416
      %v461 = vpack.c.b16 %v419, %v418
      %v462 = vpack.c.b16 %v421, %v420
      %v463 = vpack.c.b16 %v423, %v422
      %v464 = vpack.c.b16 %v425, %v424
      %v465 = vpack.c.b16 %v427, %v426
      %v466 = vpack.c.b16 %v429, %v428
      %v467 = vpack.c.b16 %v431, %v430
      %vm504 = vcmask 523264
      %v506 = vsel %vm504, %v283, 0
      %508 = vmatprep.subr.bf16.mxu0 0
      %509 = vmatpush1.bf16.msra.mxu0 %v432
      %510 = vmatprep.subr.bf16.mxu0 0
      %511 = vmatpush1.bf16.msra.mxu0 %v433
      %512 = vmatprep.subr.bf16.mxu0 0
      %513 = vmatpush1.bf16.msra.mxu0 %v434
      %514 = vmatprep.subr.bf16.mxu0 0
      %515 = vmatpush1.bf16.msra.mxu0 %v435
      %516 = vmatprep.subr.bf16.mxu0 0
      %517 = vmatpush1.bf16.msra.mxu0 %v436
      %518 = vmatprep.subr.bf16.mxu0 0
      %519 = vmatpush1.bf16.msra.mxu0 %v437
      %520 = vmatprep.subr.bf16.mxu0 0
      %521 = vmatpush1.bf16.msra.mxu0 %v438
      %522 = vmatprep.subr.bf16.mxu0 0
      %523 = vmatpush1.bf16.msra.mxu0 %v439
      %524 = vmatprep.subr.bf16.mxu0 0
      %525 = vmatpush1.bf16.msra.mxu0 %v440
      %526 = vmatprep.subr.bf16.mxu0 0
      %527 = vmatpush1.bf16.msra.mxu0 %v441
      %528 = vmatprep.subr.bf16.mxu0 0
      %529 = vmatpush1.bf16.msra.mxu0 %v442
      %530 = vmatprep.subr.bf16.mxu0 0
      %531 = vmatpush1.bf16.msra.mxu0 %v443
      %532 = vmatprep.subr.bf16.mxu0 0
      %533 = vmatpush1.bf16.msra.mxu0 %v444
      %534 = vmatprep.subr.bf16.mxu0 0
      %535 = vmatpush1.bf16.msra.mxu0 %v445
      %536 = vmatprep.subr.bf16.mxu0 0
      %537 = vmatpush1.bf16.msra.mxu0 %v446
      %538 = vmatprep.subr.bf16.mxu0 0
      %539 = vmatpush1.bf16.msra.mxu0 %v447
      %540 = vmatprep.mubr.bf16.mxu0 %v280
      %541 = vmatmul.mubr.bf16.gmra.mrb[0].mxu0 %v279
      %v542 = vpop.f32.mrb[0].mxu0
      %v543 = vadd.f32 %v261, %v542
      %v544 = vpop.f32.mrb[0].mxu0
      %v545 = vpop.f32.mrb[0].mxu0
      %v546 = vadd.f32 %v261, %v545
      %v547 = vpop.f32.mrb[0].mxu0
      %548 = vdwg.mxu0
      %549 = vmatprep.subr.bf16.mxu0 0
      %550 = vmatpush1.bf16.msra.mxu0 %v448
      %551 = vmatprep.subr.bf16.mxu0 0
      %552 = vmatpush1.bf16.msra.mxu0 %v449
      %553 = vmatprep.subr.bf16.mxu0 0
      %554 = vmatpush1.bf16.msra.mxu0 %v450
      %555 = vmatprep.subr.bf16.mxu0 0
      %556 = vmatpush1.bf16.msra.mxu0 %v451
      %557 = vmatprep.subr.bf16.mxu0 0
      %558 = vmatpush1.bf16.msra.mxu0 %v452
      %559 = vmatprep.subr.bf16.mxu0 0
      %560 = vmatpush1.bf16.msra.mxu0 %v453
      %561 = vmatprep.subr.bf16.mxu0 0
      %562 = vmatpush1.bf16.msra.mxu0 %v454
      %563 = vmatprep.subr.bf16.mxu0 0
      %564 = vmatpush1.bf16.msra.mxu0 %v455
      %565 = vmatprep.subr.bf16.mxu0 0
      %566 = vmatpush1.bf16.msra.mxu0 %v456
      %567 = vmatprep.subr.bf16.mxu0 0
      %568 = vmatpush1.bf16.msra.mxu0 %v457
      %569 = vmatprep.subr.bf16.mxu0 0
      %570 = vmatpush1.bf16.msra.mxu0 %v458
      %571 = vmatprep.subr.bf16.mxu0 0
      %572 = vmatpush1.bf16.msra.mxu0 %v459
      %573 = vmatprep.subr.bf16.mxu0 0
      %574 = vmatpush1.bf16.msra.mxu0 %v460
      %575 = vmatprep.subr.bf16.mxu0 0
      %576 = vmatpush1.bf16.msra.mxu0 %v461
      %577 = vmatprep.subr.bf16.mxu0 0
      %578 = vmatpush1.bf16.msra.mxu0 %v462
      %579 = vmatprep.subr.bf16.mxu0 0
      %580 = vmatpush1.bf16.msra.mxu0 %v463
      %581 = vmatprep.mubr.bf16.mxu0 %v282
      %582 = vmatmul.mubr.bf16.gmra.mrb[0].mxu0 %v281
      %v583 = vpop.f32.mrb[0].mxu0
      %v584 = vadd.f32 %v543, %v583
      %v585 = vpop.f32.mrb[0].mxu0
      %v586 = vpop.f32.mrb[0].mxu0
      %v587 = vadd.f32 %v546, %v586
      %v588 = vpop.f32.mrb[0].mxu0
      %589 = vdwg.mxu0
      %590 = vmatprep.subr.bf16.mxu0 0
      %591 = vmatpush1.bf16.msra.mxu0 %v464
      %592 = vmatprep.subr.bf16.mxu0 0
      %593 = vmatpush1.bf16.msra.mxu0 %v465
      %594 = vmatprep.subr.bf16.mxu0 0
      %595 = vmatpush1.bf16.msra.mxu0 %v466
      %596 = vmatprep.subr.bf16.mxu0 0
      %597 = vmatpush1.bf16.msra.mxu0 %v467
      %598 = vmatprep.subr.bf16.mxu0 0
      %599 = vmatpush1.bf16.msra.mxu0 0
      %600 = vmatprep.subr.bf16.mxu0 0
      %601 = vmatpush1.bf16.msra.mxu0 0
      %602 = vmatprep.subr.bf16.mxu0 0
      %603 = vmatpush1.bf16.msra.mxu0 0
      %604 = vmatprep.subr.bf16.mxu0 0
      %605 = vmatpush1.bf16.msra.mxu0 0
      %606 = vmatprep.subr.bf16.mxu0 0
      %607 = vmatpush1.bf16.msra.mxu0 0
      %608 = vmatprep.subr.bf16.mxu0 0
      %609 = vmatpush1.bf16.msra.mxu0 0
      %610 = vmatprep.subr.bf16.mxu0 0
      %611 = vmatpush1.bf16.msra.mxu0 0
      %612 = vmatprep.subr.bf16.mxu0 0
      %613 = vmatpush1.bf16.msra.mxu0 0
      %614 = vmatprep.subr.bf16.mxu0 0
      %615 = vmatpush1.bf16.msra.mxu0 0
      %616 = vmatprep.subr.bf16.mxu0 0
      %617 = vmatpush1.bf16.msra.mxu0 0
      %618 = vmatprep.subr.bf16.mxu0 0
      %619 = vmatpush1.bf16.msra.mxu0 0
      %620 = vmatprep.subr.bf16.mxu0 0
      %621 = vmatpush1.bf16.msra.mxu0 0
      %622 = vmatprep.mubr.bf16.mxu0 0
      %623 = vmatmul.mubr.bf16.gmra.mrb[0].mxu0 %v506
      %v624 = vpop.f32.mrb[0].mxu0
      %v625 = vadd.f32 %v584, %v624
      %v626 = vpop.f32.mrb[0].mxu0
      %v627 = vpop.f32.mrb[0].mxu0
      %v628 = vadd.f32 %v587, %v627
      %v629 = vpop.f32.mrb[0].mxu0
      %630 = vdwg.mxu0
      %v631 = vmax.f32 %v625, 0.0
      %v632 = vmax.f32 %v628, 0.0
      %v633 = vpack.c.bf16 %v632, %v631
      %v635 = vunpack.c.l.b16 %v633
      %v636 = vunpack.c.h.b16 %v633
      %v637 = vpack.c.b16 %v635, %v635
      %v638 = vpack.c.b16 %v636, %v636
      %641 = vst [vmem:[%s175] sm:$0xf] %v637
      %642 = vst [vmem:[%s175 + $0x4] sm:$0xf] %v638
      %s643 = smul.u32 2, %s14
      %p644 = scmp.lt.s32.totalorder %s643, 3
      %s645 = scalar_select %p644, %s643, 3
      %s646 = smul.addr %s645, 4
      %s647 = scalar_lea.vmem %s3, %s646
      // Predicated region
      $region33: #{forward.6} parent=31 // pred_check
        %p648 = pneg %p100
      $region34: #{forward.6} parent=31 // pred_check_branch
        %650 = sbr.rel (%p648) target = $region36
      $region35: #{forward.6} parent=31 // pred_region
        %s651 = smul.u32 2, %s14
      $region36: #{forward.6} parent=31 // pred_fallthru
        _
    $region32: #{forward.6} parent=5 // pred_fallthru
      _
    %p652 = scmp.le.s32.totalorder 2, %s9
    // Predicated region
    $region37: #{forward.6} parent=5 // pred_check
      %p653 = pneg %p652
    $region38: #{forward.6} parent=5 // pred_check_branch
      %655 = sbr.rel (%p653) target = $region40
    $region39: #{forward.6} parent=5 // pred_region
      %s656 = ssub.s32 %s9, 2
      // Predicated region
      $region41: #{forward.6} parent=39 // pred_check
        %p657 = pneg %p106
      $region42: #{forward.6} parent=39 // pred_check_branch
        %659 = sbr.rel (%p657) target = $region44
      $region43: #{forward.6} parent=39 // pred_region
        %s660 = smul.u32 2, %s15
        %p661 = scmp.lt.s32.totalorder %s660, 3
        %s662 = scalar_select %p661, %s660, 3
        %s663 = smul.addr %s662, 4
        %s664 = scalar_lea.vmem %s3, %s663
      $region44: #{forward.6} parent=39 // pred_fallthru
        _
    $region40: #{forward.6} parent=5 // pred_fallthru
      _
  $region6: #{forward.6} parent=0 // loop_footer
    %s13 = sadd.s32 1, %s9
  $region7: #{forward.6} parent=0 // loop_footer_branch
    %8 = sbr.rel target = $region3
  $region8: #{forward.6} parent=0 // loop_exit
    _

// kernel: forward.7
$region0: #{forward.7}
  #allocation0 [shape = 'u32[]', space=smem, size = 0x4, offset = 0x4, fixed_abs, tag = 'smem constant byte address 0x4 - core index']
  #allocation1 [shape = 'u32[144,128]{1,0:T(1,128)}', space=vmem, size = 0x12000, scoped, tag = 'internal scratch']
  %s0 = inlined_call_operand.vmem [shape: bf16[16,1024], index: 0, kind: input, shape index: {}]
  %s1 = inlined_call_operand.vmem [shape: bf16[1024,1024], index: 1, kind: input, shape index: {}]
  %s2 = inlined_call_operand.vmem [shape: f32[1,1024], index: 2, kind: input, shape index: {}]
  %s3 = inlined_call_operand.vmem [shape: bf16[512,512], index: 3, kind: input, shape index: {}]
  %s4 = inlined_call_operand.vmem [shape: f32[1,512], index: 4, kind: input, shape index: {}]
  %s5 = inlined_call_operand.vmem [shape: bf16[512,128], index: 5, kind: input, shape index: {}]
  %s6 = inlined_call_operand.vmem [shape: f32[1,128], index: 6, kind: input, shape index: {}]
  %s7 = inlined_call_operand.vmem [shape: f32[16,512], index: 7, kind: output, shape index: {}]
  %s8 = sld [smem:[#allocation0]]
  $region38: #{forward.7} parent=0
    _
  %s10 = ssub.s32 1, %s8
  %s11 = scalar_select 0, %s10, %s8
  // Predicated region
  $region2: #{forward.7} parent=0 // pred_check
    _
  $region3: #{forward.7} parent=0 // pred_check_branch
    %13 = sbr.rel (0) target = $region5
  $region4: #{forward.7} parent=0 // pred_region
    _
  $region5: #{forward.7} parent=0 // pred_fallthru
    _
  // Predicated region
  $region6: #{forward.7} parent=0 // pred_check
    _
  $region7: #{forward.7} parent=0 // pred_check_branch
    %15 = sbr.rel (0) target = $region9
  $region8: #{forward.7} parent=0 // pred_region
    _
  $region9: #{forward.7} parent=0 // pred_fallthru
    _
  // Predicated region
  $region10: #{forward.7} parent=0 // pred_check
    _
  $region11: #{forward.7} parent=0 // pred_check_branch
    %17 = sbr.rel (0) target = $region13
  $region12: #{forward.7} parent=0 // pred_region
    _
  $region13: #{forward.7} parent=0 // pred_fallthru
    _
  // Predicated region
  $region14: #{forward.7} parent=0 // pred_check
    _
  $region15: #{forward.7} parent=0 // pred_check_branch
    %19 = sbr.rel (0) target = $region17
  $region16: #{forward.7} parent=0 // pred_region
    _
  $region17: #{forward.7} parent=0 // pred_fallthru
    _
  // Predicated region
  $region18: #{forward.7} parent=0 // pred_check
    _
  $region19: #{forward.7} parent=0 // pred_check_branch
    %21 = sbr.rel (0) target = $region21
  $region20: #{forward.7} parent=0 // pred_region
    _
  $region21: #{forward.7} parent=0 // pred_fallthru
    _
  // Predicated region
  $region22: #{forward.7} parent=0 // pred_check
    _
  $region23: #{forward.7} parent=0 // pred_check_branch
    %23 = sbr.rel (0) target = $region25
  $region24: #{forward.7} parent=0 // pred_region
    _
  $region25: #{forward.7} parent=0 // pred_fallthru
    _
  // Predicated region
  $region26: #{forward.7} parent=0 // pred_check
    _
  $region27: #{forward.7} parent=0 // pred_check_branch
    %25 = sbr.rel (0) target = $region29
  $region28: #{forward.7} parent=0 // pred_region
    _
  $region29: #{forward.7} parent=0 // pred_fallthru
    _
  %v27 = vld [vmem:[%s0] sm:$0xff]
  %v28 = vld [vmem:[%s0 + $0x8] sm:$0xff]
  %v29 = vld [vmem:[%s0 + $0x10] sm:$0xff]
  %v30 = vld [vmem:[%s0 + $0x18] sm:$0xff]
  %v31 = vld [vmem:[%s0 + $0x20] sm:$0xff]
  %v32 = vld [vmem:[%s0 + $0x28] sm:$0xff]
  %v33 = vld [vmem:[%s0 + $0x30] sm:$0xff]
  %v34 = vld [vmem:[%s0 + $0x38] sm:$0xff]
  %v35 = vld [vmem:[%s1] sm:$0xff]
  %v36 = vld [vmem:[%s1 + $0x8] sm:$0xff]
  %v37 = vld [vmem:[%s1 + $0x10] sm:$0xff]
  %v38 = vld [vmem:[%s1 + $0x18] sm:$0xff]
  %v39 = vld [vmem:[%s1 + $0x20] sm:$0xff]
  %v40 = vld [vmem:[%s1 + $0x28] sm:$0xff]
  %v41 = vld [vmem:[%s1 + $0x30] sm:$0xff]
  %v42 = vld [vmem:[%s1 + $0x38] sm:$0xff]
  %v43 = vld [vmem:[%s1 + $0x40] sm:$0xff]
  %v44 = vld [vmem:[%s1 + $0x48] sm:$0xff]
  %v45 = vld [vmem:[%s1 + $0x50] sm:$0xff]
  %v46 = vld [vmem:[%s1 + $0x58] sm:$0xff]
  %v47 = vld [vmem:[%s1 + $0x60] sm:$0xff]
  %v48 = vld [vmem:[%s1 + $0x68] sm:$0xff]
  %v49 = vld [vmem:[%s1 + $0x70] sm:$0xff]
  %v50 = vld [vmem:[%s1 + $0x78] sm:$0xff]
  %v51 = vld [vmem:[%s1 + $0x80] sm:$0xff]
  %v52 = vld [vmem:[%s1 + $0x88] sm:$0xff]
  %v53 = vld [vmem:[%s1 + $0x90] sm:$0xff]
  %v54 = vld [vmem:[%s1 + $0x98] sm:$0xff]
  %v55 = vld [vmem:[%s1 + $0xa0] sm:$0xff]
  %v56 = vld [vmem:[%s1 + $0xa8] sm:$0xff]
  %v57 = vld [vmem:[%s1 + $0xb0] sm:$0xff]
  %v58 = vld [vmem:[%s1 + $0xb8] sm:$0xff]
  %v59 = vld [vmem:[%s1 + $0xc0] sm:$0xff]
  %v60 = vld [vmem:[%s1 + $0xc8] sm:$0xff]
  %v61 = vld [vmem:[%s1 + $0xd0] sm:$0xff]
  %v62 = vld [vmem:[%s1 + $0xd8] sm:$0xff]
  %v63 = vld [vmem:[%s1 + $0xe0] sm:$0xff]
  %v64 = vld [vmem:[%s1 + $0xe8] sm:$0xff]
  %v65 = vld [vmem:[%s1 + $0xf0] sm:$0xff]
  %v66 = vld [vmem:[%s1 + $0xf8] sm:$0xff]
  %v67 = vld [vmem:[%s1 + $0x100] sm:$0xff]
  %v68 = vld [vmem:[%s1 + $0x108] sm:$0xff]
  %v69 = vld [vmem:[%s1 + $0x110] sm:$0xff]
  %v70 = vld [vmem:[%s1 + $0x118] sm:$0xff]
  %v71 = vld [vmem:[%s1 + $0x120] sm:$0xff]
  %v72 = vld [vmem:[%s1 + $0x128] sm:$0xff]
  %v73 = vld [vmem:[%s1 + $0x130] sm:$0xff]
  %v74 = vld [vmem:[%s1 + $0x138] sm:$0xff]
  %v75 = vld [vmem:[%s1 + $0x140] sm:$0xff]
  %v76 = vld [vmem:[%s1 + $0x148] sm:$0xff]
  %v77 = vld [vmem:[%s1 + $0x150] sm:$0xff]
  %v78 = vld [vmem:[%s1 + $0x158] sm:$0xff]
  %v79 = vld [vmem:[%s1 + $0x160] sm:$0xff]
  %v80 = vld [vmem:[%s1 + $0x168] sm:$0xff]
  %v81 = vld [vmem:[%s1 + $0x170] sm:$0xff]
  %v82 = vld [vmem:[%s1 + $0x178] sm:$0xff]
  %v83 = vld [vmem:[%s1 + $0x180] sm:$0xff]
  %v84 = vld [vmem:[%s1 + $0x188] sm:$0xff]
  %v85 = vld [vmem:[%s1 + $0x190] sm:$0xff]
  %v86 = vld [vmem:[%s1 + $0x198] sm:$0xff]
  %v87 = vld [vmem:[%s1 + $0x1a0] sm:$0xff]
  %v88 = vld [vmem:[%s1 + $0x1a8] sm:$0xff]
  %v89 = vld [vmem:[%s1 + $0x1b0] sm:$0xff]
  %v90 = vld [vmem:[%s1 + $0x1b8] sm:$0xff]
  %v91 = vld [vmem:[%s1 + $0x1c0] sm:$0xff]
  %v92 = vld [vmem:[%s1 + $0x1c8] sm:$0xff]
  %v93 = vld [vmem:[%s1 + $0x1d0] sm:$0xff]
  %v94 = vld [vmem:[%s1 + $0x1d8] sm:$0xff]
  %v95 = vld [vmem:[%s1 + $0x1e0] sm:$0xff]
  %v96 = vld [vmem:[%s1 + $0x1e8] sm:$0xff]
  %v97 = vld [vmem:[%s1 + $0x1f0] sm:$0xff]
  %v98 = vld [vmem:[%s1 + $0x1f8] sm:$0xff]
  %v99 = vld [vmem:[%s1 + $0x200] sm:$0xff]
  %v100 = vld [vmem:[%s1 + $0x208] sm:$0xff]
  %v101 = vld [vmem:[%s1 + $0x210] sm:$0xff]
  %v102 = vld [vmem:[%s1 + $0x218] sm:$0xff]
  %v103 = vld [vmem:[%s1 + $0x220] sm:$0xff]
  %v104 = vld [vmem:[%s1 + $0x228] sm:$0xff]
  %v105 = vld [vmem:[%s1 + $0x230] sm:$0xff]
  %v106 = vld [vmem:[%s1 + $0x238] sm:$0xff]
  %v107 = vld [vmem:[%s1 + $0x240] sm:$0xff]
  %v108 = vld [vmem:[%s1 + $0x248] sm:$0xff]
  %v109 = vld [vmem:[%s1 + $0x250] sm:$0xff]
  %v110 = vld [vmem:[%s1 + $0x258] sm:$0xff]
  %v111 = vld [vmem:[%s1 + $0x260] sm:$0xff]
  %v112 = vld [vmem:[%s1 + $0x268] sm:$0xff]
  %v113 = vld [vmem:[%s1 + $0x270] sm:$0xff]
  %v114 = vld [vmem:[%s1 + $0x278] sm:$0xff]
  %v115 = vld [vmem:[%s1 + $0x280] sm:$0xff]
  %v116 = vld [vmem:[%s1 + $0x288] sm:$0xff]
  %v117 = vld [vmem:[%s1 + $0x290] sm:$0xff]
  %v118 = vld [vmem:[%s1 + $0x298] sm:$0xff]
  %v119 = vld [vmem:[%s1 + $0x2a0] sm:$0xff]
  %v120 = vld [vmem:[%s1 + $0x2a8] sm:$0xff]
  %v121 = vld [vmem:[%s1 + $0x2b0] sm:$0xff]
  %v122 = vld [vmem:[%s1 + $0x2b8] sm:$0xff]
  %v123 = vld [vmem:[%s1 + $0x2c0] sm:$0xff]
  %v124 = vld [vmem:[%s1 + $0x2c8] sm:$0xff]
  %v125 = vld [vmem:[%s1 + $0x2d0] sm:$0xff]
  %v126 = vld [vmem:[%s1 + $0x2d8] sm:$0xff]
  %v127 = vld [vmem:[%s1 + $0x2e0] sm:$0xff]
  %v128 = vld [vmem:[%s1 + $0x2e8] sm:$0xff]
  %v129 = vld [vmem:[%s1 + $0x2f0] sm:$0xff]
  %v130 = vld [vmem:[%s1 + $0x2f8] sm:$0xff]
  %v131 = vld [vmem:[%s1 + $0x300] sm:$0xff]
  %v132 = vld [vmem:[%s1 + $0x308] sm:$0xff]
  %v133 = vld [vmem:[%s1 + $0x310] sm:$0xff]
  %v134 = vld [vmem:[%s1 + $0x318] sm:$0xff]
  %v135 = vld [vmem:[%s1 + $0x320] sm:$0xff]
  %v136 = vld [vmem:[%s1 + $0x328] sm:$0xff]
  %v137 = vld [vmem:[%s1 + $0x330] sm:$0xff]
  %v138 = vld [vmem:[%s1 + $0x338] sm:$0xff]
  %v139 = vld [vmem:[%s1 + $0x340] sm:$0xff]
  %v140 = vld [vmem:[%s1 + $0x348] sm:$0xff]
  %v141 = vld [vmem:[%s1 + $0x350] sm:$0xff]
  %v142 = vld [vmem:[%s1 + $0x358] sm:$0xff]
  %v143 = vld [vmem:[%s1 + $0x360] sm:$0xff]
  %v144 = vld [vmem:[%s1 + $0x368] sm:$0xff]
  %v145 = vld [vmem:[%s1 + $0x370] sm:$0xff]
  %v146 = vld [vmem:[%s1 + $0x378] sm:$0xff]
  %v147 = vld [vmem:[%s1 + $0x380] sm:$0xff]
  %v148 = vld [vmem:[%s1 + $0x388] sm:$0xff]
  %v149 = vld [vmem:[%s1 + $0x390] sm:$0xff]
  %v150 = vld [vmem:[%s1 + $0x398] sm:$0xff]
  %v151 = vld [vmem:[%s1 + $0x3a0] sm:$0xff]
  %v152 = vld [vmem:[%s1 + $0x3a8] sm:$0xff]
  %v153 = vld [vmem:[%s1 + $0x3b0] sm:$0xff]
  %v154 = vld [vmem:[%s1 + $0x3b8] sm:$0xff]
  %v155 = vld [vmem:[%s1 + $0x3c0] sm:$0xff]
  %v156 = vld [vmem:[%s1 + $0x3c8] sm:$0xff]
  %v157 = vld [vmem:[%s1 + $0x3d0] sm:$0xff]
  %v158 = vld [vmem:[%s1 + $0x3d8] sm:$0xff]
  %v159 = vld [vmem:[%s1 + $0x3e0] sm:$0xff]
  %v160 = vld [vmem:[%s1 + $0x3e8] sm:$0xff]
  %v161 = vld [vmem:[%s1 + $0x3f0] sm:$0xff]
  %v162 = vld [vmem:[%s1 + $0x3f8] sm:$0xff]
  %v163 = vld [vmem:[%s1 + $0x400] sm:$0xff]
  %v164 = vld [vmem:[%s1 + $0x408] sm:$0xff]
  %v165 = vld [vmem:[%s1 + $0x410] sm:$0xff]
  %v166 = vld [vmem:[%s1 + $0x418] sm:$0xff]
  %v167 = vld [vmem:[%s1 + $0x420] sm:$0xff]
  %v168 = vld [vmem:[%s1 + $0x428] sm:$0xff]
  %v169 = vld [vmem:[%s1 + $0x430] sm:$0xff]
  %v170 = vld [vmem:[%s1 + $0x438] sm:$0xff]
  %v171 = vld [vmem:[%s1 + $0x440] sm:$0xff]
  %v172 = vld [vmem:[%s1 + $0x448] sm:$0xff]
  %v173 = vld [vmem:[%s1 + $0x450] sm:$0xff]
  %v174 = vld [vmem:[%s1 + $0x458] sm:$0xff]
  %v175 = vld [vmem:[%s1 + $0x460] sm:$0xff]
  %v176 = vld [vmem:[%s1 + $0x468] sm:$0xff]
  %v177 = vld [vmem:[%s1 + $0x470] sm:$0xff]
  %v178 = vld [vmem:[%s1 + $0x478] sm:$0xff]
  %v179 = vld [vmem:[%s1 + $0x480] sm:$0xff]
  %v180 = vld [vmem:[%s1 + $0x488] sm:$0xff]
  %v181 = vld [vmem:[%s1 + $0x490] sm:$0xff]
  %v182 = vld [vmem:[%s1 + $0x498] sm:$0xff]
  %v183 = vld [vmem:[%s1 + $0x4a0] sm:$0xff]
  %v184 = vld [vmem:[%s1 + $0x4a8] sm:$0xff]
  %v185 = vld [vmem:[%s1 + $0x4b0] sm:$0xff]
  %v186 = vld [vmem:[%s1 + $0x4b8] sm:$0xff]
  %v187 = vld [vmem:[%s1 + $0x4c0] sm:$0xff]
  %v188 = vld [vmem:[%s1 + $0x4c8] sm:$0xff]
  %v189 = vld [vmem:[%s1 + $0x4d0] sm:$0xff]
  %v190 = vld [vmem:[%s1 + $0x4d8] sm:$0xff]
  %v191 = vld [vmem:[%s1 + $0x4e0] sm:$0xff]
  %v192 = vld [vmem:[%s1 + $0x4e8] sm:$0xff]
  %v193 = vld [vmem:[%s1 + $0x4f0] sm:$0xff]
  %v194 = vld [vmem:[%s1 + $0x4f8] sm:$0xff]
  %v195 = vld [vmem:[%s1 + $0x500] sm:$0xff]
  %v196 = vld [vmem:[%s1 + $0x508] sm:$0xff]
  %v197 = vld [vmem:[%s1 + $0x510] sm:$0xff]
  %v198 = vld [vmem:[%s1 + $0x518] sm:$0xff]
  %v199 = vld [vmem:[%s1 + $0x520] sm:$0xff]
  %v200 = vld [vmem:[%s1 + $0x528] sm:$0xff]
  %v201 = vld [vmem:[%s1 + $0x530] sm:$0xff]
  %v202 = vld [vmem:[%s1 + $0x538] sm:$0xff]
  %v203 = vld [vmem:[%s1 + $0x540] sm:$0xff]
  %v204 = vld [vmem:[%s1 + $0x548] sm:$0xff]
  %v205 = vld [vmem:[%s1 + $0x550] sm:$0xff]
  %v206 = vld [vmem:[%s1 + $0x558] sm:$0xff]
  %v207 = vld [vmem:[%s1 + $0x560] sm:$0xff]
  %v208 = vld [vmem:[%s1 + $0x568] sm:$0xff]
  %v209 = vld [vmem:[%s1 + $0x570] sm:$0xff]
  %v210 = vld [vmem:[%s1 + $0x578] sm:$0xff]
  %v211 = vld [vmem:[%s1 + $0x580] sm:$0xff]
  %v212 = vld [vmem:[%s1 + $0x588] sm:$0xff]
  %v213 = vld [vmem:[%s1 + $0x590] sm:$0xff]
  %v214 = vld [vmem:[%s1 + $0x598] sm:$0xff]
  %v215 = vld [vmem:[%s1 + $0x5a0] sm:$0xff]
  %v216 = vld [vmem:[%s1 + $0x5a8] sm:$0xff]
  %v217 = vld [vmem:[%s1 + $0x5b0] sm:$0xff]
  %v218 = vld [vmem:[%s1 + $0x5b8] sm:$0xff]
  %v219 = vld [vmem:[%s1 + $0x5c0] sm:$0xff]
  %v220 = vld [vmem:[%s1 + $0x5c8] sm:$0xff]
  %v221 = vld [vmem:[%s1 + $0x5d0] sm:$0xff]
  %v222 = vld [vmem:[%s1 + $0x5d8] sm:$0xff]
  %v223 = vld [vmem:[%s1 + $0x5e0] sm:$0xff]
  %v224 = vld [vmem:[%s1 + $0x5e8] sm:$0xff]
  %v225 = vld [vmem:[%s1 + $0x5f0] sm:$0xff]
  %v226 = vld [vmem:[%s1 + $0x5f8] sm:$0xff]
  %v227 = vld [vmem:[%s1 + $0x600] sm:$0xff]
  %v228 = vld [vmem:[%s1 + $0x608] sm:$0xff]
  %v229 = vld [vmem:[%s1 + $0x610] sm:$0xff]
  %v230 = vld [vmem:[%s1 + $0x618] sm:$0xff]
  %v231 = vld [vmem:[%s1 + $0x620] sm:$0xff]
  %v232 = vld [vmem:[%s1 + $0x628] sm:$0xff]
  %v233 = vld [vmem:[%s1 + $0x630] sm:$0xff]
  %v234 = vld [vmem:[%s1 + $0x638] sm:$0xff]
  %v235 = vld [vmem:[%s1 + $0x640] sm:$0xff]
  %v236 = vld [vmem:[%s1 + $0x648] sm:$0xff]
  %v237 = vld [vmem:[%s1 + $0x650] sm:$0xff]
  %v238 = vld [vmem:[%s1 + $0x658] sm:$0xff]
  %v239 = vld [vmem:[%s1 + $0x660] sm:$0xff]
  %v240 = vld [vmem:[%s1 + $0x668] sm:$0xff]
  %v241 = vld [vmem:[%s1 + $0x670] sm:$0xff]
  %v242 = vld [vmem:[%s1 + $0x678] sm:$0xff]
  %v243 = vld [vmem:[%s1 + $0x680] sm:$0xff]
  %v244 = vld [vmem:[%s1 + $0x688] sm:$0xff]
  %v245 = vld [vmem:[%s1 + $0x690] sm:$0xff]
  %v246 = vld [vmem:[%s1 + $0x698] sm:$0xff]
  %v247 = vld [vmem:[%s1 + $0x6a0] sm:$0xff]
  %v248 = vld [vmem:[%s1 + $0x6a8] sm:$0xff]
  %v249 = vld [vmem:[%s1 + $0x6b0] sm:$0xff]
  %v250 = vld [vmem:[%s1 + $0x6b8] sm:$0xff]
  %v251 = vld [vmem:[%s1 + $0x6c0] sm:$0xff]
  %v252 = vld [vmem:[%s1 + $0x6c8] sm:$0xff]
  %v253 = vld [vmem:[%s1 + $0x6d0] sm:$0xff]
  %v254 = vld [vmem:[%s1 + $0x6d8] sm:$0xff]
  %v255 = vld [vmem:[%s1 + $0x6e0] sm:$0xff]
  %v256 = vld [vmem:[%s1 + $0x6e8] sm:$0xff]
  %v257 = vld [vmem:[%s1 + $0x6f0] sm:$0xff]
  %v258 = vld [vmem:[%s1 + $0x6f8] sm:$0xff]
  %v259 = vld [vmem:[%s1 + $0x700] sm:$0xff]
  %v260 = vld [vmem:[%s1 + $0x708] sm:$0xff]
  %v261 = vld [vmem:[%s1 + $0x710] sm:$0xff]
  %v262 = vld [vmem:[%s1 + $0x718] sm:$0xff]
  %v263 = vld [vmem:[%s1 + $0x720] sm:$0xff]
  %v264 = vld [vmem:[%s1 + $0x728] sm:$0xff]
  %v265 = vld [vmem:[%s1 + $0x730] sm:$0xff]
  %v266 = vld [vmem:[%s1 + $0x738] sm:$0xff]
  %v267 = vld [vmem:[%s1 + $0x740] sm:$0xff]
  %v268 = vld [vmem:[%s1 + $0x748] sm:$0xff]
  %v269 = vld [vmem:[%s1 + $0x750] sm:$0xff]
  %v270 = vld [vmem:[%s1 + $0x758] sm:$0xff]
  %v271 = vld [vmem:[%s1 + $0x760] sm:$0xff]
  %v272 = vld [vmem:[%s1 + $0x768] sm:$0xff]
  %v273 = vld [vmem:[%s1 + $0x770] sm:$0xff]
  %v274 = vld [vmem:[%s1 + $0x778] sm:$0xff]
  %v275 = vld [vmem:[%s1 + $0x780] sm:$0xff]
  %v276 = vld [vmem:[%s1 + $0x788] sm:$0xff]
  %v277 = vld [vmem:[%s1 + $0x790] sm:$0xff]
  %v278 = vld [vmem:[%s1 + $0x798] sm:$0xff]
  %v279 = vld [vmem:[%s1 + $0x7a0] sm:$0xff]
  %v280 = vld [vmem:[%s1 + $0x7a8] sm:$0xff]
  %v281 = vld [vmem:[%s1 + $0x7b0] sm:$0xff]
  %v282 = vld [vmem:[%s1 + $0x7b8] sm:$0xff]
  %v283 = vld [vmem:[%s1 + $0x7c0] sm:$0xff]
  %v284 = vld [vmem:[%s1 + $0x7c8] sm:$0xff]
  %v285 = vld [vmem:[%s1 + $0x7d0] sm:$0xff]
  %v286 = vld [vmem:[%s1 + $0x7d8] sm:$0xff]
  %v287 = vld [vmem:[%s1 + $0x7e0] sm:$0xff]
  %v288 = vld [vmem:[%s1 + $0x7e8] sm:$0xff]
  %v289 = vld [vmem:[%s1 + $0x7f0] sm:$0xff]
  %v290 = vld [vmem:[%s1 + $0x7f8] sm:$0xff]
  %v291 = vld [vmem:[%s1 + $0x800] sm:$0xff]
  %v292 = vld [vmem:[%s1 + $0x808] sm:$0xff]
  %v293 = vld [vmem:[%s1 + $0x810] sm:$0xff]
  %v294 = vld [vmem:[%s1 + $0x818] sm:$0xff]
  %v295 = vld [vmem:[%s1 + $0x820] sm:$0xff]
  %v296 = vld [vmem:[%s1 + $0x828] sm:$0xff]
  %v297 = vld [vmem:[%s1 + $0x830] sm:$0xff]
  %v298 = vld [vmem:[%s1 + $0x838] sm:$0xff]
  %v299 = vld [vmem:[%s1 + $0x840] sm:$0xff]
  %v300 = vld [vmem:[%s1 + $0x848] sm:$0xff]
  %v301 = vld [vmem:[%s1 + $0x850] sm:$0xff]
  %v302 = vld [vmem:[%s1 + $0x858] sm:$0xff]
  %v303 = vld [vmem:[%s1 + $0x860] sm:$0xff]
  %v304 = vld [vmem:[%s1 + $0x868] sm:$0xff]
  %v305 = vld [vmem:[%s1 + $0x870] sm:$0xff]
  %v306 = vld [vmem:[%s1 + $0x878] sm:$0xff]
  %v307 = vld [vmem:[%s1 + $0x880] sm:$0xff]
  %v308 = vld [vmem:[%s1 + $0x888] sm:$0xff]
  %v309 = vld [vmem:[%s1 + $0x890] sm:$0xff]
  %v310 = vld [vmem:[%s1 + $0x898] sm:$0xff]
  %v311 = vld [vmem:[%s1 + $0x8a0] sm:$0xff]
  %v312 = vld [vmem:[%s1 + $0x8a8] sm:$0xff]
  %v313 = vld [vmem:[%s1 + $0x8b0] sm:$0xff]
  %v314 = vld [vmem:[%s1 + $0x8b8] sm:$0xff]
  %v315 = vld [vmem:[%s1 + $0x8c0] sm:$0xff]
  %v316 = vld [vmem:[%s1 + $0x8c8] sm:$0xff]
  %v317 = vld [vmem:[%s1 + $0x8d0] sm:$0xff]
  %v318 = vld [vmem:[%s1 + $0x8d8] sm:$0xff]
  %v319 = vld [vmem:[%s1 + $0x8e0] sm:$0xff]
  %v320 = vld [vmem:[%s1 + $0x8e8] sm:$0xff]
  %v321 = vld [vmem:[%s1 + $0x8f0] sm:$0xff]
  %v322 = vld [vmem:[%s1 + $0x8f8] sm:$0xff]
  %v323 = vld [vmem:[%s1 + $0x900] sm:$0xff]
  %v324 = vld [vmem:[%s1 + $0x908] sm:$0xff]
  %v325 = vld [vmem:[%s1 + $0x910] sm:$0xff]
  %v326 = vld [vmem:[%s1 + $0x918] sm:$0xff]
  %v327 = vld [vmem:[%s1 + $0x920] sm:$0xff]
  %v328 = vld [vmem:[%s1 + $0x928] sm:$0xff]
  %v329 = vld [vmem:[%s1 + $0x930] sm:$0xff]
  %v330 = vld [vmem:[%s1 + $0x938] sm:$0xff]
  %v331 = vld [vmem:[%s1 + $0x940] sm:$0xff]
  %v332 = vld [vmem:[%s1 + $0x948] sm:$0xff]
  %v333 = vld [vmem:[%s1 + $0x950] sm:$0xff]
  %v334 = vld [vmem:[%s1 + $0x958] sm:$0xff]
  %v335 = vld [vmem:[%s1 + $0x960] sm:$0xff]
  %v336 = vld [vmem:[%s1 + $0x968] sm:$0xff]
  %v337 = vld [vmem:[%s1 + $0x970] sm:$0xff]
  %v338 = vld [vmem:[%s1 + $0x978] sm:$0xff]
  %v339 = vld [vmem:[%s1 + $0x980] sm:$0xff]
  %v340 = vld [vmem:[%s1 + $0x988] sm:$0xff]
  %v341 = vld [vmem:[%s1 + $0x990] sm:$0xff]
  %v342 = vld [vmem:[%s1 + $0x998] sm:$0xff]
  %v343 = vld [vmem:[%s1 + $0x9a0] sm:$0xff]
  %v344 = vld [vmem:[%s1 + $0x9a8] sm:$0xff]
  %v345 = vld [vmem:[%s1 + $0x9b0] sm:$0xff]
  %v346 = vld [vmem:[%s1 + $0x9b8] sm:$0xff]
  %v347 = vld [vmem:[%s1 + $0x9c0] sm:$0xff]
  %v348 = vld [vmem:[%s1 + $0x9c8] sm:$0xff]
  %v349 = vld [vmem:[%s1 + $0x9d0] sm:$0xff]
  %v350 = vld [vmem:[%s1 + $0x9d8] sm:$0xff]
  %v351 = vld [vmem:[%s1 + $0x9e0] sm:$0xff]
  %v352 = vld [vmem:[%s1 + $0x9e8] sm:$0xff]
  %v353 = vld [vmem:[%s1 + $0x9f0] sm:$0xff]
  %v354 = vld [vmem:[%s1 + $0x9f8] sm:$0xff]
  %v355 = vld [vmem:[%s1 + $0xa00] sm:$0xff]
  %v356 = vld [vmem:[%s1 + $0xa08] sm:$0xff]
  %v357 = vld [vmem:[%s1 + $0xa10] sm:$0xff]
  %v358 = vld [vmem:[%s1 + $0xa18] sm:$0xff]
  %v359 = vld [vmem:[%s1 + $0xa20] sm:$0xff]
  %v360 = vld [vmem:[%s1 + $0xa28] sm:$0xff]
  %v361 = vld [vmem:[%s1 + $0xa30] sm:$0xff]
  %v362 = vld [vmem:[%s1 + $0xa38] sm:$0xff]
  %v363 = vld [vmem:[%s1 + $0xa40] sm:$0xff]
  %v364 = vld [vmem:[%s1 + $0xa48] sm:$0xff]
  %v365 = vld [vmem:[%s1 + $0xa50] sm:$0xff]
  %v366 = vld [vmem:[%s1 + $0xa58] sm:$0xff]
  %v367 = vld [vmem:[%s1 + $0xa60] sm:$0xff]
  %v368 = vld [vmem:[%s1 + $0xa68] sm:$0xff]
  %v369 = vld [vmem:[%s1 + $0xa70] sm:$0xff]
  %v370 = vld [vmem:[%s1 + $0xa78] sm:$0xff]
  %v371 = vld [vmem:[%s1 + $0xa80] sm:$0xff]
  %v372 = vld [vmem:[%s1 + $0xa88] sm:$0xff]
  %v373 = vld [vmem:[%s1 + $0xa90] sm:$0xff]
  %v374 = vld [vmem:[%s1 + $0xa98] sm:$0xff]
  %v375 = vld [vmem:[%s1 + $0xaa0] sm:$0xff]
  %v376 = vld [vmem:[%s1 + $0xaa8] sm:$0xff]
  %v377 = vld [vmem:[%s1 + $0xab0] sm:$0xff]
  %v378 = vld [vmem:[%s1 + $0xab8] sm:$0xff]
  %v379 = vld [vmem:[%s1 + $0xac0] sm:$0xff]
  %v380 = vld [vmem:[%s1 + $0xac8] sm:$0xff]
  %v381 = vld [vmem:[%s1 + $0xad0] sm:$0xff]
  %v382 = vld [vmem:[%s1 + $0xad8] sm:$0xff]
  %v383 = vld [vmem:[%s1 + $0xae0] sm:$0xff]
  %v384 = vld [vmem:[%s1 + $0xae8] sm:$0xff]
  %v385 = vld [vmem:[%s1 + $0xaf0] sm:$0xff]
  %v386 = vld [vmem:[%s1 + $0xaf8] sm:$0xff]
  %v387 = vld [vmem:[%s1 + $0xb00] sm:$0xff]
  %v388 = vld [vmem:[%s1 + $0xb08] sm:$0xff]
  %v389 = vld [vmem:[%s1 + $0xb10] sm:$0xff]
  %v390 = vld [vmem:[%s1 + $0xb18] sm:$0xff]
  %v391 = vld [vmem:[%s1 + $0xb20] sm:$0xff]
  %v392 = vld [vmem:[%s1 + $0xb28] sm:$0xff]
  %v393 = vld [vmem:[%s1 + $0xb30] sm:$0xff]
  %v394 = vld [vmem:[%s1 + $0xb38] sm:$0xff]
  %v395 = vld [vmem:[%s1 + $0xb40] sm:$0xff]
  %v396 = vld [vmem:[%s1 + $0xb48] sm:$0xff]
  %v397 = vld [vmem:[%s1 + $0xb50] sm:$0xff]
  %v398 = vld [vmem:[%s1 + $0xb58] sm:$0xff]
  %v399 = vld [vmem:[%s1 + $0xb60] sm:$0xff]
  %v400 = vld [vmem:[%s1 + $0xb68] sm:$0xff]
  %v401 = vld [vmem:[%s1 + $0xb70] sm:$0xff]
  %v402 = vld [vmem:[%s1 + $0xb78] sm:$0xff]
  %v403 = vld [vmem:[%s1 + $0xb80] sm:$0xff]
  %v404 = vld [vmem:[%s1 + $0xb88] sm:$0xff]
  %v405 = vld [vmem:[%s1 + $0xb90] sm:$0xff]
  %v406 = vld [vmem:[%s1 + $0xb98] sm:$0xff]
  %v407 = vld [vmem:[%s1 + $0xba0] sm:$0xff]
  %v408 = vld [vmem:[%s1 + $0xba8] sm:$0xff]
  %v409 = vld [vmem:[%s1 + $0xbb0] sm:$0xff]
  %v410 = vld [vmem:[%s1 + $0xbb8] sm:$0xff]
  %v411 = vld [vmem:[%s1 + $0xbc0] sm:$0xff]
  %v412 = vld [vmem:[%s1 + $0xbc8] sm:$0xff]
  %v413 = vld [vmem:[%s1 + $0xbd0] sm:$0xff]
  %v414 = vld [vmem:[%s1 + $0xbd8] sm:$0xff]
  %v415 = vld [vmem:[%s1 + $0xbe0] sm:$0xff]
  %v416 = vld [vmem:[%s1 + $0xbe8] sm:$0xff]
  %v417 = vld [vmem:[%s1 + $0xbf0] sm:$0xff]
  %v418 = vld [vmem:[%s1 + $0xbf8] sm:$0xff]
  %v419 = vld [vmem:[%s1 + $0xc00] sm:$0xff]
  %v420 = vld [vmem:[%s1 + $0xc08] sm:$0xff]
  %v421 = vld [vmem:[%s1 + $0xc10] sm:$0xff]
  %v422 = vld [vmem:[%s1 + $0xc18] sm:$0xff]
  %v423 = vld [vmem:[%s1 + $0xc20] sm:$0xff]
  %v424 = vld [vmem:[%s1 + $0xc28] sm:$0xff]
  %v425 = vld [vmem:[%s1 + $0xc30] sm:$0xff]
  %v426 = vld [vmem:[%s1 + $0xc38] sm:$0xff]
  %v427 = vld [vmem:[%s1 + $0xc40] sm:$0xff]
  %v428 = vld [vmem:[%s1 + $0xc48] sm:$0xff]
  %v429 = vld [vmem:[%s1 + $0xc50] sm:$0xff]
  %v430 = vld [vmem:[%s1 + $0xc58] sm:$0xff]
  %v431 = vld [vmem:[%s1 + $0xc60] sm:$0xff]
  %v432 = vld [vmem:[%s1 + $0xc68] sm:$0xff]
  %v433 = vld [vmem:[%s1 + $0xc70] sm:$0xff]
  %v434 = vld [vmem:[%s1 + $0xc78] sm:$0xff]
  %v435 = vld [vmem:[%s1 + $0xc80] sm:$0xff]
  %v436 = vld [vmem:[%s1 + $0xc88] sm:$0xff]
  %v437 = vld [vmem:[%s1 + $0xc90] sm:$0xff]
  %v438 = vld [vmem:[%s1 + $0xc98] sm:$0xff]
  %v439 = vld [vmem:[%s1 + $0xca0] sm:$0xff]
  %v440 = vld [vmem:[%s1 + $0xca8] sm:$0xff]
  %v441 = vld [vmem:[%s1 + $0xcb0] sm:$0xff]
  %v442 = vld [vmem:[%s1 + $0xcb8] sm:$0xff]
  %v443 = vld [vmem:[%s1 + $0xcc0] sm:$0xff]
  %v444 = vld [vmem:[%s1 + $0xcc8] sm:$0xff]
  %v445 = vld [vmem:[%s1 + $0xcd0] sm:$0xff]
  %v446 = vld [vmem:[%s1 + $0xcd8] sm:$0xff]
  %v447 = vld [vmem:[%s1 + $0xce0] sm:$0xff]
  %v448 = vld [vmem:[%s1 + $0xce8] sm:$0xff]
  %v449 = vld [vmem:[%s1 + $0xcf0] sm:$0xff]
  %v450 = vld [vmem:[%s1 + $0xcf8] sm:$0xff]
  %v451 = vld [vmem:[%s1 + $0xd00] sm:$0xff]
  %v452 = vld [vmem:[%s1 + $0xd08] sm:$0xff]
  %v453 = vld [vmem:[%s1 + $0xd10] sm:$0xff]
  %v454 = vld [vmem:[%s1 + $0xd18] sm:$0xff]
  %v455 = vld [vmem:[%s1 + $0xd20] sm:$0xff]
  %v456 = vld [vmem:[%s1 + $0xd28] sm:$0xff]
  %v457 = vld [vmem:[%s1 + $0xd30] sm:$0xff]
  %v458 = vld [vmem:[%s1 + $0xd38] sm:$0xff]
  %v459 = vld [vmem:[%s1 + $0xd40] sm:$0xff]
  %v460 = vld [vmem:[%s1 + $0xd48] sm:$0xff]
  %v461 = vld [vmem:[%s1 + $0xd50] sm:$0xff]
  %v462 = vld [vmem:[%s1 + $0xd58] sm:$0xff]
  %v463 = vld [vmem:[%s1 + $0xd60] sm:$0xff]
  %v464 = vld [vmem:[%s1 + $0xd68] sm:$0xff]
  %v465 = vld [vmem:[%s1 + $0xd70] sm:$0xff]
  %v466 = vld [vmem:[%s1 + $0xd78] sm:$0xff]
  %v467 = vld [vmem:[%s1 + $0xd80] sm:$0xff]
  %v468 = vld [vmem:[%s1 + $0xd88] sm:$0xff]
  %v469 = vld [vmem:[%s1 + $0xd90] sm:$0xff]
  %v470 = vld [vmem:[%s1 + $0xd98] sm:$0xff]
  %v471 = vld [vmem:[%s1 + $0xda0] sm:$0xff]
  %v472 = vld [vmem:[%s1 + $0xda8] sm:$0xff]
  %v473 = vld [vmem:[%s1 + $0xdb0] sm:$0xff]
  %v474 = vld [vmem:[%s1 + $0xdb8] sm:$0xff]
  %v475 = vld [vmem:[%s1 + $0xdc0] sm:$0xff]
  %v476 = vld [vmem:[%s1 + $0xdc8] sm:$0xff]
  %v477 = vld [vmem:[%s1 + $0xdd0] sm:$0xff]
  %v478 = vld [vmem:[%s1 + $0xdd8] sm:$0xff]
  %v479 = vld [vmem:[%s1 + $0xde0] sm:$0xff]
  %v480 = vld [vmem:[%s1 + $0xde8] sm:$0xff]
  %v481 = vld [vmem:[%s1 + $0xdf0] sm:$0xff]
  %v482 = vld [vmem:[%s1 + $0xdf8] sm:$0xff]
  %v483 = vld [vmem:[%s1 + $0xe00] sm:$0xff]
  %v484 = vld [vmem:[%s1 + $0xe08] sm:$0xff]
  %v485 = vld [vmem:[%s1 + $0xe10] sm:$0xff]
  %v486 = vld [vmem:[%s1 + $0xe18] sm:$0xff]
  %v487 = vld [vmem:[%s1 + $0xe20] sm:$0xff]
  %v488 = vld [vmem:[%s1 + $0xe28] sm:$0xff]
  %v489 = vld [vmem:[%s1 + $0xe30] sm:$0xff]
  %v490 = vld [vmem:[%s1 + $0xe38] sm:$0xff]
  %v491 = vld [vmem:[%s1 + $0xe40] sm:$0xff]
  %v492 = vld [vmem:[%s1 + $0xe48] sm:$0xff]
  %v493 = vld [vmem:[%s1 + $0xe50] sm:$0xff]
  %v494 = vld [vmem:[%s1 + $0xe58] sm:$0xff]
  %v495 = vld [vmem:[%s1 + $0xe60] sm:$0xff]
  %v496 = vld [vmem:[%s1 + $0xe68] sm:$0xff]
  %v497 = vld [vmem:[%s1 + $0xe70] sm:$0xff]
  %v498 = vld [vmem:[%s1 + $0xe78] sm:$0xff]
  %v499 = vld [vmem:[%s1 + $0xe80] sm:$0xff]
  %v500 = vld [vmem:[%s1 + $0xe88] sm:$0xff]
  %v501 = vld [vmem:[%s1 + $0xe90] sm:$0xff]
  %v502 = vld [vmem:[%s1 + $0xe98] sm:$0xff]
  %v503 = vld [vmem:[%s1 + $0xea0] sm:$0xff]
  %v504 = vld [vmem:[%s1 + $0xea8] sm:$0xff]
  %v505 = vld [vmem:[%s1 + $0xeb0] sm:$0xff]
  %v506 = vld [vmem:[%s1 + $0xeb8] sm:$0xff]
  %v507 = vld [vmem:[%s1 + $0xec0] sm:$0xff]
  %v508 = vld [vmem:[%s1 + $0xec8] sm:$0xff]
  %v509 = vld [vmem:[%s1 + $0xed0] sm:$0xff]
  %v510 = vld [vmem:[%s1 + $0xed8] sm:$0xff]
  %v511 = vld [vmem:[%s1 + $0xee0] sm:$0xff]
  %v512 = vld [vmem:[%s1 + $0xee8] sm:$0xff]
  %v513 = vld [vmem:[%s1 + $0xef0] sm:$0xff]
  %v514 = vld [vmem:[%s1 + $0xef8] sm:$0xff]
  %v515 = vld [vmem:[%s1 + $0xf00] sm:$0xff]
  %v516 = vld [vmem:[%s1 + $0xf08] sm:$0xff]
  %v517 = vld [vmem:[%s1 + $0xf10] sm:$0xff]
  %v518 = vld [vmem:[%s1 + $0xf18] sm:$0xff]
  %v519 = vld [vmem:[%s1 + $0xf20] sm:$0xff]
  %v520 = vld [vmem:[%s1 + $0xf28] sm:$0xff]
  %v521 = vld [vmem:[%s1 + $0xf30] sm:$0xff]
  %v522 = vld [vmem:[%s1 + $0xf38] sm:$0xff]
  %v523 = vld [vmem:[%s1 + $0xf40] sm:$0xff]
  %v524 = vld [vmem:[%s1 + $0xf48] sm:$0xff]
  %v525 = vld [vmem:[%s1 + $0xf50] sm:$0xff]
  %v526 = vld [vmem:[%s1 + $0xf58] sm:$0xff]
  %v527 = vld [vmem:[%s1 + $0xf60] sm:$0xff]
  %v528 = vld [vmem:[%s1 + $0xf68] sm:$0xff]
  %v529 = vld [vmem:[%s1 + $0xf70] sm:$0xff]
  %v530 = vld [vmem:[%s1 + $0xf78] sm:$0xff]
  %v531 = vld [vmem:[%s1 + $0xf80] sm:$0xff]
  %v532 = vld [vmem:[%s1 + $0xf88] sm:$0xff]
  %v533 = vld [vmem:[%s1 + $0xf90] sm:$0xff]
  %v534 = vld [vmem:[%s1 + $0xf98] sm:$0xff]
  %v535 = vld [vmem:[%s1 + $0xfa0] sm:$0xff]
  %v536 = vld [vmem:[%s1 + $0xfa8] sm:$0xff]
  %v537 = vld [vmem:[%s1 + $0xfb0] sm:$0xff]
  %v538 = vld [vmem:[%s1 + $0xfb8] sm:$0xff]
  %v539 = vld [vmem:[%s1 + $0xfc0] sm:$0xff]
  %v540 = vld [vmem:[%s1 + $0xfc8] sm:$0xff]
  %v541 = vld [vmem:[%s1 + $0xfd0] sm:$0xff]
  %v542 = vld [vmem:[%s1 + $0xfd8] sm:$0xff]
  %v543 = vld [vmem:[%s1 + $0xfe0] sm:$0xff]
  %v544 = vld [vmem:[%s1 + $0xfe8] sm:$0xff]
  %v545 = vld [vmem:[%s1 + $0xff0] sm:$0xff]
  %v546 = vld [vmem:[%s1 + $0xff8] sm:$0xff]
  %v547 = vld [vmem:[%s2] sm:$0xff]
  %v549 = vlaneseq
  %v550 = vshrl.u32 %v549, 7
  %v551 = vsub.s32 0, %v550
  %v552 = vrot.slane %v547, %v551
  %v553 = vlaneseq
  %v554 = vshrl.u32 %v553, 7
  %v555 = vsub.s32 1, %v554
  %v556 = vrot.slane %v547, %v555
  %v557 = vlaneseq
  %v558 = vshrl.u32 %v557, 7
  %v559 = vsub.s32 2, %v558
  %v560 = vrot.slane %v547, %v559
  %v561 = vlaneseq
  %v562 = vshrl.u32 %v561, 7
  %v563 = vsub.s32 3, %v562
  %v564 = vrot.slane %v547, %v563
  %v565 = vlaneseq
  %v566 = vshrl.u32 %v565, 7
  %v567 = vsub.s32 4, %v566
  %v568 = vrot.slane %v547, %v567
  %v569 = vlaneseq
  %v570 = vshrl.u32 %v569, 7
  %v571 = vsub.s32 5, %v570
  %v572 = vrot.slane %v547, %v571
  %v573 = vlaneseq
  %v574 = vshrl.u32 %v573, 7
  %v575 = vsub.s32 6, %v574
  %v576 = vrot.slane %v547, %v575
  %v577 = vlaneseq
  %v578 = vshrl.u32 %v577, 7
  %v579 = vsub.s32 7, %v578
  %v580 = vrot.slane %v547, %v579
  %v597 = vunpack.c.l.b16 %v27
  %v598 = vunpack.c.h.b16 %v27
  %v599 = vunpack.c.l.b16 %v28
  %v600 = vunpack.c.h.b16 %v28
  %v601 = vunpack.c.l.b16 %v29
  %v602 = vunpack.c.h.b16 %v29
  %v603 = vunpack.c.l.b16 %v30
  %v604 = vunpack.c.h.b16 %v30
  %v605 = vunpack.c.l.b16 %v31
  %v606 = vunpack.c.h.b16 %v31
  %v607 = vunpack.c.l.b16 %v32
  %v608 = vunpack.c.h.b16 %v32
  %v609 = vunpack.c.l.b16 %v33
  %v610 = vunpack.c.h.b16 %v33
  %v611 = vunpack.c.l.b16 %v34
  %v612 = vunpack.c.h.b16 %v34
  %v613 = vpack.c.b16 %v605, %v597
  %v614 = vpack.c.b16 %v606, %v598
  %v615 = vpack.c.b16 %v607, %v599
  %v616 = vpack.c.b16 %v608, %v600
  %v617 = vpack.c.b16 %v609, %v601
  %v618 = vpack.c.b16 %v610, %v602
  %v619 = vpack.c.b16 %v611, %v603
  %v620 = vpack.c.b16 %v612, %v604
  %v1141 = vunpack.c.l.b16 %v35
  %v1142 = vunpack.c.h.b16 %v35
  %v1143 = vunpack.c.l.b16 %v36
  %v1144 = vunpack.c.h.b16 %v36
  %v1145 = vunpack.c.l.b16 %v37
  %v1146 = vunpack.c.h.b16 %v37
  %v1147 = vunpack.c.l.b16 %v38
  %v1148 = vunpack.c.h.b16 %v38
  %v1149 = vunpack.c.l.b16 %v39
  %v1150 = vunpack.c.h.b16 %v39
  %v1151 = vunpack.c.l.b16 %v40
  %v1152 = vunpack.c.h.b16 %v40
  %v1153 = vunpack.c.l.b16 %v41
  %v1154 = vunpack.c.h.b16 %v41
  %v1155 = vunpack.c.l.b16 %v42
  %v1156 = vunpack.c.h.b16 %v42
  %v1157 = vunpack.c.l.b16 %v43
  %v1158 = vunpack.c.h.b16 %v43
  %v1159 = vunpack.c.l.b16 %v44
  %v1160 = vunpack.c.h.b16 %v44
  %v1161 = vunpack.c.l.b16 %v45
  %v1162 = vunpack.c.h.b16 %v45
  %v1163 = vunpack.c.l.b16 %v46
  %v1164 = vunpack.c.h.b16 %v46
  %v1165 = vunpack.c.l.b16 %v47
  %v1166 = vunpack.c.h.b16 %v47
  %v1167 = vunpack.c.l.b16 %v48
  %v1168 = vunpack.c.h.b16 %v48
  %v1169 = vunpack.c.l.b16 %v49
  %v1170 = vunpack.c.h.b16 %v49
  %v1171 = vunpack.c.l.b16 %v50
  %v1172 = vunpack.c.h.b16 %v50
  %v1173 = vunpack.c.l.b16 %v51
  %v1174 = vunpack.c.h.b16 %v51
  %v1175 = vunpack.c.l.b16 %v52
  %v1176 = vunpack.c.h.b16 %v52
  %v1177 = vunpack.c.l.b16 %v53
  %v1178 = vunpack.c.h.b16 %v53
  %v1179 = vunpack.c.l.b16 %v54
  %v1180 = vunpack.c.h.b16 %v54
  %v1181 = vunpack.c.l.b16 %v55
  %v1182 = vunpack.c.h.b16 %v55
  %v1183 = vunpack.c.l.b16 %v56
  %v1184 = vunpack.c.h.b16 %v56
  %v1185 = vunpack.c.l.b16 %v57
  %v1186 = vunpack.c.h.b16 %v57
  %v1187 = vunpack.c.l.b16 %v58
  %v1188 = vunpack.c.h.b16 %v58
  %v1189 = vunpack.c.l.b16 %v59
  %v1190 = vunpack.c.h.b16 %v59
  %v1191 = vunpack.c.l.b16 %v60
  %v1192 = vunpack.c.h.b16 %v60
  %v1193 = vunpack.c.l.b16 %v61
  %v1194 = vunpack.c.h.b16 %v61
  %v1195 = vunpack.c.l.b16 %v62
  %v1196 = vunpack.c.h.b16 %v62
  %v1197 = vunpack.c.l.b16 %v63
  %v1198 = vunpack.c.h.b16 %v63
  %v1199 = vunpack.c.l.b16 %v64
  %v1200 = vunpack.c.h.b16 %v64
  %v1201 = vunpack.c.l.b16 %v65
  %v1202 = vunpack.c.h.b16 %v65
  %v1203 = vunpack.c.l.b16 %v66
  %v1204 = vunpack.c.h.b16 %v66
  %v1205 = vunpack.c.l.b16 %v67
  %v1206 = vunpack.c.h.b16 %v67
  %v1207 = vunpack.c.l.b16 %v68
  %v1208 = vunpack.c.h.b16 %v68
  %v1209 = vunpack.c.l.b16 %v69
  %v1210 = vunpack.c.h.b16 %v69
  %v1211 = vunpack.c.l.b16 %v70
  %v1212 = vunpack.c.h.b16 %v70
  %v1213 = vunpack.c.l.b16 %v71
  %v1214 = vunpack.c.h.b16 %v71
  %v1215 = vunpack.c.l.b16 %v72
  %v1216 = vunpack.c.h.b16 %v72
  %v1217 = vunpack.c.l.b16 %v73
  %v1218 = vunpack.c.h.b16 %v73
  %v1219 = vunpack.c.l.b16 %v74
  %v1220 = vunpack.c.h.b16 %v74
  %v1221 = vunpack.c.l.b16 %v75
  %v1222 = vunpack.c.h.b16 %v75
  %v1223 = vunpack.c.l.b16 %v76
  %v1224 = vunpack.c.h.b16 %v76
  %v1225 = vunpack.c.l.b16 %v77
  %v1226 = vunpack.c.h.b16 %v77
  %v1227 = vunpack.c.l.b16 %v78
  %v1228 = vunpack.c.h.b16 %v78
  %v1229 = vunpack.c.l.b16 %v79
  %v1230 = vunpack.c.h.b16 %v79
  %v1231 = vunpack.c.l.b16 %v80
  %v1232 = vunpack.c.h.b16 %v80
  %v1233 = vunpack.c.l.b16 %v81
  %v1234 = vunpack.c.h.b16 %v81
  %v1235 = vunpack.c.l.b16 %v82
  %v1236 = vunpack.c.h.b16 %v82
  %v1237 = vunpack.c.l.b16 %v83
  %v1238 = vunpack.c.h.b16 %v83
  %v1239 = vunpack.c.l.b16 %v84
  %v1240 = vunpack.c.h.b16 %v84
  %v1241 = vunpack.c.l.b16 %v85
  %v1242 = vunpack.c.h.b16 %v85
  %v1243 = vunpack.c.l.b16 %v86
  %v1244 = vunpack.c.h.b16 %v86
  %v1245 = vunpack.c.l.b16 %v87
  %v1246 = vunpack.c.h.b16 %v87
  %v1247 = vunpack.c.l.b16 %v88
  %v1248 = vunpack.c.h.b16 %v88
  %v1249 = vunpack.c.l.b16 %v89
  %v1250 = vunpack.c.h.b16 %v89
  %v1251 = vunpack.c.l.b16 %v90
  %v1252 = vunpack.c.h.b16 %v90
  %v1253 = vunpack.c.l.b16 %v91
  %v1254 = vunpack.c.h.b16 %v91
  %v1255 = vunpack.c.l.b16 %v92
  %v1256 = vunpack.c.h.b16 %v92
  %v1257 = vunpack.c.l.b16 %v93
  %v1258 = vunpack.c.h.b16 %v93
  %v1259 = vunpack.c.l.b16 %v94
  %v1260 = vunpack.c.h.b16 %v94
  %v1261 = vunpack.c.l.b16 %v95
  %v1262 = vunpack.c.h.b16 %v95
  %v1263 = vunpack.c.l.b16 %v96
  %v1264 = vunpack.c.h.b16 %v96
  %v1265 = vunpack.c.l.b16 %v97
  %v1266 = vunpack.c.h.b16 %v97
  %v1267 = vunpack.c.l.b16 %v98
  %v1268 = vunpack.c.h.b16 %v98
  %v1269 = vunpack.c.l.b16 %v99
  %v1270 = vunpack.c.h.b16 %v99
  %v1271 = vunpack.c.l.b16 %v100
  %v1272 = vunpack.c.h.b16 %v100
  %v1273 = vunpack.c.l.b16 %v101
  %v1274 = vunpack.c.h.b16 %v101
  %v1275 = vunpack.c.l.b16 %v102
  %v1276 = vunpack.c.h.b16 %v102
  %v1277 = vunpack.c.l.b16 %v103
  %v1278 = vunpack.c.h.b16 %v103
  %v1279 = vunpack.c.l.b16 %v104
  %v1280 = vunpack.c.h.b16 %v104
  %v1281 = vunpack.c.l.b16 %v105
  %v1282 = vunpack.c.h.b16 %v105
  %v1283 = vunpack.c.l.b16 %v106
  %v1284 = vunpack.c.h.b16 %v106
  %v1285 = vunpack.c.l.b16 %v107
  %v1286 = vunpack.c.h.b16 %v107
  %v1287 = vunpack.c.l.b16 %v108
  %v1288 = vunpack.c.h.b16 %v108
  %v1289 = vunpack.c.l.b16 %v109
  %v1290 = vunpack.c.h.b16 %v109
  %v1291 = vunpack.c.l.b16 %v110
  %v1292 = vunpack.c.h.b16 %v110
  %v1293 = vunpack.c.l.b16 %v111
  %v1294 = vunpack.c.h.b16 %v111
  %v1295 = vunpack.c.l.b16 %v112
  %v1296 = vunpack.c.h.b16 %v112
  %v1297 = vunpack.c.l.b16 %v113
  %v1298 = vunpack.c.h.b16 %v113
  %v1299 = vunpack.c.l.b16 %v114
  %v1300 = vunpack.c.h.b16 %v114
  %v1301 = vunpack.c.l.b16 %v115
  %v1302 = vunpack.c.h.b16 %v115
  %v1303 = vunpack.c.l.b16 %v116
  %v1304 = vunpack.c.h.b16 %v116
  %v1305 = vunpack.c.l.b16 %v117
  %v1306 = vunpack.c.h.b16 %v117
  %v1307 = vunpack.c.l.b16 %v118
  %v1308 = vunpack.c.h.b16 %v118
  %v1309 = vunpack.c.l.b16 %v119
  %v1310 = vunpack.c.h.b16 %v119
  %v1311 = vunpack.c.l.b16 %v120
  %v1312 = vunpack.c.h.b16 %v120
  %v1313 = vunpack.c.l.b16 %v121
  %v1314 = vunpack.c.h.b16 %v121
  %v1315 = vunpack.c.l.b16 %v122
  %v1316 = vunpack.c.h.b16 %v122
  %v1317 = vunpack.c.l.b16 %v123
  %v1318 = vunpack.c.h.b16 %v123
  %v1319 = vunpack.c.l.b16 %v124
  %v1320 = vunpack.c.h.b16 %v124
  %v1321 = vunpack.c.l.b16 %v125
  %v1322 = vunpack.c.h.b16 %v125
  %v1323 = vunpack.c.l.b16 %v126
  %v1324 = vunpack.c.h.b16 %v126
  %v1325 = vunpack.c.l.b16 %v127
  %v1326 = vunpack.c.h.b16 %v127
  %v1327 = vunpack.c.l.b16 %v128
  %v1328 = vunpack.c.h.b16 %v128
  %v1329 = vunpack.c.l.b16 %v129
  %v1330 = vunpack.c.h.b16 %v129
  %v1331 = vunpack.c.l.b16 %v130
  %v1332 = vunpack.c.h.b16 %v130
  %v1333 = vunpack.c.l.b16 %v131
  %v1334 = vunpack.c.h.b16 %v131
  %v1335 = vunpack.c.l.b16 %v132
  %v1336 = vunpack.c.h.b16 %v132
  %v1337 = vunpack.c.l.b16 %v133
  %v1338 = vunpack.c.h.b16 %v133
  %v1339 = vunpack.c.l.b16 %v134
  %v1340 = vunpack.c.h.b16 %v134
  %v1341 = vunpack.c.l.b16 %v135
  %v1342 = vunpack.c.h.b16 %v135
  %v1343 = vunpack.c.l.b16 %v136
  %v1344 = vunpack.c.h.b16 %v136
  %v1345 = vunpack.c.l.b16 %v137
  %v1346 = vunpack.c.h.b16 %v137
  %v1347 = vunpack.c.l.b16 %v138
  %v1348 = vunpack.c.h.b16 %v138
  %v1349 = vunpack.c.l.b16 %v139
  %v1350 = vunpack.c.h.b16 %v139
  %v1351 = vunpack.c.l.b16 %v140
  %v1352 = vunpack.c.h.b16 %v140
  %v1353 = vunpack.c.l.b16 %v141
  %v1354 = vunpack.c.h.b16 %v141
  %v1355 = vunpack.c.l.b16 %v142
  %v1356 = vunpack.c.h.b16 %v142
  %v1357 = vunpack.c.l.b16 %v143
  %v1358 = vunpack.c.h.b16 %v143
  %v1359 = vunpack.c.l.b16 %v144
  %v1360 = vunpack.c.h.b16 %v144
  %v1361 = vunpack.c.l.b16 %v145
  %v1362 = vunpack.c.h.b16 %v145
  %v1363 = vunpack.c.l.b16 %v146
  %v1364 = vunpack.c.h.b16 %v146
  %v1365 = vunpack.c.l.b16 %v147
  %v1366 = vunpack.c.h.b16 %v147
  %v1367 = vunpack.c.l.b16 %v148
  %v1368 = vunpack.c.h.b16 %v148
  %v1369 = vunpack.c.l.b16 %v149
  %v1370 = vunpack.c.h.b16 %v149
  %v1371 = vunpack.c.l.b16 %v150
  %v1372 = vunpack.c.h.b16 %v150
  %v1373 = vunpack.c.l.b16 %v151
  %v1374 = vunpack.c.h.b16 %v151
  %v1375 = vunpack.c.l.b16 %v152
  %v1376 = vunpack.c.h.b16 %v152
  %v1377 = vunpack.c.l.b16 %v153
  %v1378 = vunpack.c.h.b16 %v153
  %v1379 = vunpack.c.l.b16 %v154
  %v1380 = vunpack.c.h.b16 %v154
  %v1381 = vunpack.c.l.b16 %v155
  %v1382 = vunpack.c.h.b16 %v155
  %v1383 = vunpack.c.l.b16 %v156
  %v1384 = vunpack.c.h.b16 %v156
  %v1385 = vunpack.c.l.b16 %v157
  %v1386 = vunpack.c.h.b16 %v157
  %v1387 = vunpack.c.l.b16 %v158
  %v1388 = vunpack.c.h.b16 %v158
  %v1389 = vunpack.c.l.b16 %v159
  %v1390 = vunpack.c.h.b16 %v159
  %v1391 = vunpack.c.l.b16 %v160
  %v1392 = vunpack.c.h.b16 %v160
  %v1393 = vunpack.c.l.b16 %v161
  %v1394 = vunpack.c.h.b16 %v161
  %v1395 = vunpack.c.l.b16 %v162
  %v1396 = vunpack.c.h.b16 %v162
  %v1397 = vunpack.c.l.b16 %v163
  %v1398 = vunpack.c.h.b16 %v163
  %v1399 = vunpack.c.l.b16 %v164
  %v1400 = vunpack.c.h.b16 %v164
  %v1401 = vunpack.c.l.b16 %v165
  %v1402 = vunpack.c.h.b16 %v165
  %v1403 = vunpack.c.l.b16 %v166
  %v1404 = vunpack.c.h.b16 %v166
  %v1405 = vunpack.c.l.b16 %v167
  %v1406 = vunpack.c.h.b16 %v167
  %v1407 = vunpack.c.l.b16 %v168
  %v1408 = vunpack.c.h.b16 %v168
  %v1409 = vunpack.c.l.b16 %v169
  %v1410 = vunpack.c.h.b16 %v169
  %v1411 = vunpack.c.l.b16 %v170
  %v1412 = vunpack.c.h.b16 %v170
  %v1413 = vunpack.c.l.b16 %v171
  %v1414 = vunpack.c.h.b16 %v171
  %v1415 = vunpack.c.l.b16 %v172
  %v1416 = vunpack.c.h.b16 %v172
  %v1417 = vunpack.c.l.b16 %v173
  %v1418 = vunpack.c.h.b16 %v173
  %v1419 = vunpack.c.l.b16 %v174
  %v1420 = vunpack.c.h.b16 %v174
  %v1421 = vunpack.c.l.b16 %v175
  %v1422 = vunpack.c.h.b16 %v175
  %v1423 = vunpack.c.l.b16 %v176
  %v1424 = vunpack.c.h.b16 %v176
  %v1425 = vunpack.c.l.b16 %v177
  %v1426 = vunpack.c.h.b16 %v177
  %v1427 = vunpack.c.l.b16 %v178
  %v1428 = vunpack.c.h.b16 %v178
  %v1429 = vunpack.c.l.b16 %v179
  %v1430 = vunpack.c.h.b16 %v179
  %v1431 = vunpack.c.l.b16 %v180
  %v1432 = vunpack.c.h.b16 %v180
  %v1433 = vunpack.c.l.b16 %v181
  %v1434 = vunpack.c.h.b16 %v181
  %v1435 = vunpack.c.l.b16 %v182
  %v1436 = vunpack.c.h.b16 %v182
  %v1437 = vunpack.c.l.b16 %v183
  %v1438 = vunpack.c.h.b16 %v183
  %v1439 = vunpack.c.l.b16 %v184
  %v1440 = vunpack.c.h.b16 %v184
  %v1441 = vunpack.c.l.b16 %v185
  %v1442 = vunpack.c.h.b16 %v185
  %v1443 = vunpack.c.l.b16 %v186
  %v1444 = vunpack.c.h.b16 %v186
  %v1445 = vunpack.c.l.b16 %v187
  %v1446 = vunpack.c.h.b16 %v187
  %v1447 = vunpack.c.l.b16 %v188
  %v1448 = vunpack.c.h.b16 %v188
  %v1449 = vunpack.c.l.b16 %v189
  %v1450 = vunpack.c.h.b16 %v189
  %v1451 = vunpack.c.l.b16 %v190
  %v1452 = vunpack.c.h.b16 %v190
  %v1453 = vunpack.c.l.b16 %v191
  %v1454 = vunpack.c.h.b16 %v191
  %v1455 = vunpack.c.l.b16 %v192
  %v1456 = vunpack.c.h.b16 %v192
  %v1457 = vunpack.c.l.b16 %v193
  %v1458 = vunpack.c.h.b16 %v193
  %v1459 = vunpack.c.l.b16 %v194
  %v1460 = vunpack.c.h.b16 %v194
  %v1461 = vunpack.c.l.b16 %v195
  %v1462 = vunpack.c.h.b16 %v195
  %v1463 = vunpack.c.l.b16 %v196
  %v1464 = vunpack.c.h.b16 %v196
  %v1465 = vunpack.c.l.b16 %v197
  %v1466 = vunpack.c.h.b16 %v197
  %v1467 = vunpack.c.l.b16 %v198
  %v1468 = vunpack.c.h.b16 %v198
  %v1469 = vunpack.c.l.b16 %v199
  %v1470 = vunpack.c.h.b16 %v199
  %v1471 = vunpack.c.l.b16 %v200
  %v1472 = vunpack.c.h.b16 %v200
  %v1473 = vunpack.c.l.b16 %v201
  %v1474 = vunpack.c.h.b16 %v201
  %v1475 = vunpack.c.l.b16 %v202
  %v1476 = vunpack.c.h.b16 %v202
  %v1477 = vunpack.c.l.b16 %v203
  %v1478 = vunpack.c.h.b16 %v203
  %v1479 = vunpack.c.l.b16 %v204
  %v1480 = vunpack.c.h.b16 %v204
  %v1481 = vunpack.c.l.b16 %v205
  %v1482 = vunpack.c.h.b16 %v205
  %v1483 = vunpack.c.l.b16 %v206
  %v1484 = vunpack.c.h.b16 %v206
  %v1485 = vunpack.c.l.b16 %v207
  %v1486 = vunpack.c.h.b16 %v207
  %v1487 = vunpack.c.l.b16 %v208
  %v1488 = vunpack.c.h.b16 %v208
  %v1489 = vunpack.c.l.b16 %v209
  %v1490 = vunpack.c.h.b16 %v209
  %v1491 = vunpack.c.l.b16 %v210
  %v1492 = vunpack.c.h.b16 %v210
  %v1493 = vunpack.c.l.b16 %v211
  %v1494 = vunpack.c.h.b16 %v211
  %v1495 = vunpack.c.l.b16 %v212
  %v1496 = vunpack.c.h.b16 %v212
  %v1497 = vunpack.c.l.b16 %v213
  %v1498 = vunpack.c.h.b16 %v213
  %v1499 = vunpack.c.l.b16 %v214
  %v1500 = vunpack.c.h.b16 %v214
  %v1501 = vunpack.c.l.b16 %v215
  %v1502 = vunpack.c.h.b16 %v215
  %v1503 = vunpack.c.l.b16 %v216
  %v1504 = vunpack.c.h.b16 %v216
  %v1505 = vunpack.c.l.b16 %v217
  %v1506 = vunpack.c.h.b16 %v217
  %v1507 = vunpack.c.l.b16 %v218
  %v1508 = vunpack.c.h.b16 %v218
  %v1509 = vunpack.c.l.b16 %v219
  %v1510 = vunpack.c.h.b16 %v219
  %v1511 = vunpack.c.l.b16 %v220
  %v1512 = vunpack.c.h.b16 %v220
  %v1513 = vunpack.c.l.b16 %v221
  %v1514 = vunpack.c.h.b16 %v221
  %v1515 = vunpack.c.l.b16 %v222
  %v1516 = vunpack.c.h.b16 %v222
  %v1517 = vunpack.c.l.b16 %v223
  %v1518 = vunpack.c.h.b16 %v223
  %v1519 = vunpack.c.l.b16 %v224
  %v1520 = vunpack.c.h.b16 %v224
  %v1521 = vunpack.c.l.b16 %v225
  %v1522 = vunpack.c.h.b16 %v225
  %v1523 = vunpack.c.l.b16 %v226
  %v1524 = vunpack.c.h.b16 %v226
  %v1525 = vunpack.c.l.b16 %v227
  %v1526 = vunpack.c.h.b16 %v227
  %v1527 = vunpack.c.l.b16 %v228
  %v1528 = vunpack.c.h.b16 %v228
  %v1529 = vunpack.c.l.b16 %v229
  %v1530 = vunpack.c.h.b16 %v229
  %v1531 = vunpack.c.l.b16 %v230
  %v1532 = vunpack.c.h.b16 %v230
  %v1533 = vunpack.c.l.b16 %v231
  %v1534 = vunpack.c.h.b16 %v231
  %v1535 = vunpack.c.l.b16 %v232
  %v1536 = vunpack.c.h.b16 %v232
  %v1537 = vunpack.c.l.b16 %v233
  %v1538 = vunpack.c.h.b16 %v233
  %v1539 = vunpack.c.l.b16 %v234
  %v1540 = vunpack.c.h.b16 %v234
  %v1541 = vunpack.c.l.b16 %v235
  %v1542 = vunpack.c.h.b16 %v235
  %v1543 = vunpack.c.l.b16 %v236
  %v1544 = vunpack.c.h.b16 %v236
  %v1545 = vunpack.c.l.b16 %v237
  %v1546 = vunpack.c.h.b16 %v237
  %v1547 = vunpack.c.l.b16 %v238
  %v1548 = vunpack.c.h.b16 %v238
  %v1549 = vunpack.c.l.b16 %v239
  %v1550 = vunpack.c.h.b16 %v239
  %v1551 = vunpack.c.l.b16 %v240
  %v1552 = vunpack.c.h.b16 %v240
  %v1553 = vunpack.c.l.b16 %v241
  %v1554 = vunpack.c.h.b16 %v241
  %v1555 = vunpack.c.l.b16 %v242
  %v1556 = vunpack.c.h.b16 %v242
  %v1557 = vunpack.c.l.b16 %v243
  %v1558 = vunpack.c.h.b16 %v243
  %v1559 = vunpack.c.l.b16 %v244
  %v1560 = vunpack.c.h.b16 %v244
  %v1561 = vunpack.c.l.b16 %v245
  %v1562 = vunpack.c.h.b16 %v245
  %v1563 = vunpack.c.l.b16 %v246
  %v1564 = vunpack.c.h.b16 %v246
  %v1565 = vunpack.c.l.b16 %v247
  %v1566 = vunpack.c.h.b16 %v247
  %v1567 = vunpack.c.l.b16 %v248
  %v1568 = vunpack.c.h.b16 %v248
  %v1569 = vunpack.c.l.b16 %v249
  %v1570 = vunpack.c.h.b16 %v249
  %v1571 = vunpack.c.l.b16 %v250
  %v1572 = vunpack.c.h.b16 %v250
  %v1573 = vunpack.c.l.b16 %v251
  %v1574 = vunpack.c.h.b16 %v251
  %v1575 = vunpack.c.l.b16 %v252
  %v1576 = vunpack.c.h.b16 %v252
  %v1577 = vunpack.c.l.b16 %v253
  %v1578 = vunpack.c.h.b16 %v253
  %v1579 = vunpack.c.l.b16 %v254
  %v1580 = vunpack.c.h.b16 %v254
  %v1581 = vunpack.c.l.b16 %v255
  %v1582 = vunpack.c.h.b16 %v255
  %v1583 = vunpack.c.l.b16 %v256
  %v1584 = vunpack.c.h.b16 %v256
  %v1585 = vunpack.c.l.b16 %v257
  %v1586 = vunpack.c.h.b16 %v257
  %v1587 = vunpack.c.l.b16 %v258
  %v1588 = vunpack.c.h.b16 %v258
  %v1589 = vunpack.c.l.b16 %v259
  %v1590 = vunpack.c.h.b16 %v259
  %v1591 = vunpack.c.l.b16 %v260
  %v1592 = vunpack.c.h.b16 %v260
  %v1593 = vunpack.c.l.b16 %v261
  %v1594 = vunpack.c.h.b16 %v261
  %v1595 = vunpack.c.l.b16 %v262
  %v1596 = vunpack.c.h.b16 %v262
  %v1597 = vunpack.c.l.b16 %v263
  %v1598 = vunpack.c.h.b16 %v263
  %v1599 = vunpack.c.l.b16 %v264
  %v1600 = vunpack.c.h.b16 %v264
  %v1601 = vunpack.c.l.b16 %v265
  %v1602 = vunpack.c.h.b16 %v265
  %v1603 = vunpack.c.l.b16 %v266
  %v1604 = vunpack.c.h.b16 %v266
  %v1605 = vunpack.c.l.b16 %v267
  %v1606 = vunpack.c.h.b16 %v267
  %v1607 = vunpack.c.l.b16 %v268
  %v1608 = vunpack.c.h.b16 %v268
  %v1609 = vunpack.c.l.b16 %v269
  %v1610 = vunpack.c.h.b16 %v269
  %v1611 = vunpack.c.l.b16 %v270
  %v1612 = vunpack.c.h.b16 %v270
  %v1613 = vunpack.c.l.b16 %v271
  %v1614 = vunpack.c.h.b16 %v271
  %v1615 = vunpack.c.l.b16 %v272
  %v1616 = vunpack.c.h.b16 %v272
  %v1617 = vunpack.c.l.b16 %v273
  %v1618 = vunpack.c.h.b16 %v273
  %v1619 = vunpack.c.l.b16 %v274
  %v1620 = vunpack.c.h.b16 %v274
  %v1621 = vunpack.c.l.b16 %v275
  %v1622 = vunpack.c.h.b16 %v275
  %v1623 = vunpack.c.l.b16 %v276
  %v1624 = vunpack.c.h.b16 %v276
  %v1625 = vunpack.c.l.b16 %v277
  %v1626 = vunpack.c.h.b16 %v277
  %v1627 = vunpack.c.l.b16 %v278
  %v1628 = vunpack.c.h.b16 %v278
  %v1629 = vunpack.c.l.b16 %v279
  %v1630 = vunpack.c.h.b16 %v279
  %v1631 = vunpack.c.l.b16 %v280
  %v1632 = vunpack.c.h.b16 %v280
  %v1633 = vunpack.c.l.b16 %v281
  %v1634 = vunpack.c.h.b16 %v281
  %v1635 = vunpack.c.l.b16 %v282
  %v1636 = vunpack.c.h.b16 %v282
  %v1637 = vunpack.c.l.b16 %v283
  %v1638 = vunpack.c.h.b16 %v283
  %v1639 = vunpack.c.l.b16 %v284
  %v1640 = vunpack.c.h.b16 %v284
  %v1641 = vunpack.c.l.b16 %v285
  %v1642 = vunpack.c.h.b16 %v285
  %v1643 = vunpack.c.l.b16 %v286
  %v1644 = vunpack.c.h.b16 %v286
  %v1645 = vunpack.c.l.b16 %v287
  %v1646 = vunpack.c.h.b16 %v287
  %v1647 = vunpack.c.l.b16 %v288
  %v1648 = vunpack.c.h.b16 %v288
  %v1649 = vunpack.c.l.b16 %v289
  %v1650 = vunpack.c.h.b16 %v289
  %v1651 = vunpack.c.l.b16 %v290
  %v1652 = vunpack.c.h.b16 %v290
  %v1653 = vunpack.c.l.b16 %v291
  %v1654 = vunpack.c.h.b16 %v291
  %v1655 = vunpack.c.l.b16 %v292
  %v1656 = vunpack.c.h.b16 %v292
  %v1657 = vunpack.c.l.b16 %v293
  %v1658 = vunpack.c.h.b16 %v293
  %v1659 = vunpack.c.l.b16 %v294
  %v1660 = vunpack.c.h.b16 %v294
  %v1661 = vunpack.c.l.b16 %v295
  %v1662 = vunpack.c.h.b16 %v295
  %v1663 = vunpack.c.l.b16 %v296
  %v1664 = vunpack.c.h.b16 %v296
  %v1665 = vunpack.c.l.b16 %v297
  %v1666 = vunpack.c.h.b16 %v297
  %v1667 = vunpack.c.l.b16 %v298
  %v1668 = vunpack.c.h.b16 %v298
  %v1669 = vunpack.c.l.b16 %v299
  %v1670 = vunpack.c.h.b16 %v299
  %v1671 = vunpack.c.l.b16 %v300
  %v1672 = vunpack.c.h.b16 %v300
  %v1673 = vunpack.c.l.b16 %v301
  %v1674 = vunpack.c.h.b16 %v301
  %v1675 = vunpack.c.l.b16 %v302
  %v1676 = vunpack.c.h.b16 %v302
  %v1677 = vunpack.c.l.b16 %v303
  %v1678 = vunpack.c.h.b16 %v303
  %v1679 = vunpack.c.l.b16 %v304
  %v1680 = vunpack.c.h.b16 %v304
  %v1681 = vunpack.c.l.b16 %v305
  %v1682 = vunpack.c.h.b16 %v305
  %v1683 = vunpack.c.l.b16 %v306
  %v1684 = vunpack.c.h.b16 %v306
  %v1685 = vunpack.c.l.b16 %v307
  %v1686 = vunpack.c.h.b16 %v307
  %v1687 = vunpack.c.l.b16 %v308
  %v1688 = vunpack.c.h.b16 %v308
  %v1689 = vunpack.c.l.b16 %v309
  %v1690 = vunpack.c.h.b16 %v309
  %v1691 = vunpack.c.l.b16 %v310
  %v1692 = vunpack.c.h.b16 %v310
  %v1693 = vunpack.c.l.b16 %v311
  %v1694 = vunpack.c.h.b16 %v311
  %v1695 = vunpack.c.l.b16 %v312
  %v1696 = vunpack.c.h.b16 %v312
  %v1697 = vunpack.c.l.b16 %v313
  %v1698 = vunpack.c.h.b16 %v313
  %v1699 = vunpack.c.l.b16 %v314
  %v1700 = vunpack.c.h.b16 %v314
  %v1701 = vunpack.c.l.b16 %v315
  %v1702 = vunpack.c.h.b16 %v315
  %v1703 = vunpack.c.l.b16 %v316
  %v1704 = vunpack.c.h.b16 %v316
  %v1705 = vunpack.c.l.b16 %v317
  %v1706 = vunpack.c.h.b16 %v317
  %v1707 = vunpack.c.l.b16 %v318
  %v1708 = vunpack.c.h.b16 %v318
  %v1709 = vunpack.c.l.b16 %v319
  %v1710 = vunpack.c.h.b16 %v319
  %v1711 = vunpack.c.l.b16 %v320
  %v1712 = vunpack.c.h.b16 %v320
  %v1713 = vunpack.c.l.b16 %v321
  %v1714 = vunpack.c.h.b16 %v321
  %v1715 = vunpack.c.l.b16 %v322
  %v1716 = vunpack.c.h.b16 %v322
  %v1717 = vunpack.c.l.b16 %v323
  %v1718 = vunpack.c.h.b16 %v323
  %v1719 = vunpack.c.l.b16 %v324
  %v1720 = vunpack.c.h.b16 %v324
  %v1721 = vunpack.c.l.b16 %v325
  %v1722 = vunpack.c.h.b16 %v325
  %v1723 = vunpack.c.l.b16 %v326
  %v1724 = vunpack.c.h.b16 %v326
  %v1725 = vunpack.c.l.b16 %v327
  %v1726 = vunpack.c.h.b16 %v327
  %v1727 = vunpack.c.l.b16 %v328
  %v1728 = vunpack.c.h.b16 %v328
  %v1729 = vunpack.c.l.b16 %v329
  %v1730 = vunpack.c.h.b16 %v329
  %v1731 = vunpack.c.l.b16 %v330
  %v1732 = vunpack.c.h.b16 %v330
  %v1733 = vunpack.c.l.b16 %v331
  %v1734 = vunpack.c.h.b16 %v331
  %v1735 = vunpack.c.l.b16 %v332
  %v1736 = vunpack.c.h.b16 %v332
  %v1737 = vunpack.c.l.b16 %v333
  %v1738 = vunpack.c.h.b16 %v333
  %v1739 = vunpack.c.l.b16 %v334
  %v1740 = vunpack.c.h.b16 %v334
  %v1741 = vunpack.c.l.b16 %v335
  %v1742 = vunpack.c.h.b16 %v335
  %v1743 = vunpack.c.l.b16 %v336
  %v1744 = vunpack.c.h.b16 %v336
  %v1745 = vunpack.c.l.b16 %v337
  %v1746 = vunpack.c.h.b16 %v337
  %v1747 = vunpack.c.l.b16 %v338
  %v1748 = vunpack.c.h.b16 %v338
  %v1749 = vunpack.c.l.b16 %v339
  %v1750 = vunpack.c.h.b16 %v339
  %v1751 = vunpack.c.l.b16 %v340
  %v1752 = vunpack.c.h.b16 %v340
  %v1753 = vunpack.c.l.b16 %v341
  %v1754 = vunpack.c.h.b16 %v341
  %v1755 = vunpack.c.l.b16 %v342
  %v1756 = vunpack.c.h.b16 %v342
  %v1757 = vunpack.c.l.b16 %v343
  %v1758 = vunpack.c.h.b16 %v343
  %v1759 = vunpack.c.l.b16 %v344
  %v1760 = vunpack.c.h.b16 %v344
  %v1761 = vunpack.c.l.b16 %v345
  %v1762 = vunpack.c.h.b16 %v345
  %v1763 = vunpack.c.l.b16 %v346
  %v1764 = vunpack.c.h.b16 %v346
  %v1765 = vunpack.c.l.b16 %v347
  %v1766 = vunpack.c.h.b16 %v347
  %v1767 = vunpack.c.l.b16 %v348
  %v1768 = vunpack.c.h.b16 %v348
  %v1769 = vunpack.c.l.b16 %v349
  %v1770 = vunpack.c.h.b16 %v349
  %v1771 = vunpack.c.l.b16 %v350
  %v1772 = vunpack.c.h.b16 %v350
  %v1773 = vunpack.c.l.b16 %v351
  %v1774 = vunpack.c.h.b16 %v351
  %v1775 = vunpack.c.l.b16 %v352
  %v1776 = vunpack.c.h.b16 %v352
  %v1777 = vunpack.c.l.b16 %v353
  %v1778 = vunpack.c.h.b16 %v353
  %v1779 = vunpack.c.l.b16 %v354
  %v1780 = vunpack.c.h.b16 %v354
  %v1781 = vunpack.c.l.b16 %v355
  %v1782 = vunpack.c.h.b16 %v355
  %v1783 = vunpack.c.l.b16 %v356
  %v1784 = vunpack.c.h.b16 %v356
  %v1785 = vunpack.c.l.b16 %v357
  %v1786 = vunpack.c.h.b16 %v357
  %v1787 = vunpack.c.l.b16 %v358
  %v1788 = vunpack.c.h.b16 %v358
  %v1789 = vunpack.c.l.b16 %v359
  %v1790 = vunpack.c.h.b16 %v359
  %v1791 = vunpack.c.l.b16 %v360
  %v1792 = vunpack.c.h.b16 %v360
  %v1793 = vunpack.c.l.b16 %v361
  %v1794 = vunpack.c.h.b16 %v361
  %v1795 = vunpack.c.l.b16 %v362
  %v1796 = vunpack.c.h.b16 %v362
  %v1797 = vunpack.c.l.b16 %v363
  %v1798 = vunpack.c.h.b16 %v363
  %v1799 = vunpack.c.l.b16 %v364
  %v1800 = vunpack.c.h.b16 %v364
  %v1801 = vunpack.c.l.b16 %v365
  %v1802 = vunpack.c.h.b16 %v365
  %v1803 = vunpack.c.l.b16 %v366
  %v1804 = vunpack.c.h.b16 %v366
  %v1805 = vunpack.c.l.b16 %v367
  %v1806 = vunpack.c.h.b16 %v367
  %v1807 = vunpack.c.l.b16 %v368
  %v1808 = vunpack.c.h.b16 %v368
  %v1809 = vunpack.c.l.b16 %v369
  %v1810 = vunpack.c.h.b16 %v369
  %v1811 = vunpack.c.l.b16 %v370
  %v1812 = vunpack.c.h.b16 %v370
  %v1813 = vunpack.c.l.b16 %v371
  %v1814 = vunpack.c.h.b16 %v371
  %v1815 = vunpack.c.l.b16 %v372
  %v1816 = vunpack.c.h.b16 %v372
  %v1817 = vunpack.c.l.b16 %v373
  %v1818 = vunpack.c.h.b16 %v373
  %v1819 = vunpack.c.l.b16 %v374
  %v1820 = vunpack.c.h.b16 %v374
  %v1821 = vunpack.c.l.b16 %v375
  %v1822 = vunpack.c.h.b16 %v375
  %v1823 = vunpack.c.l.b16 %v376
  %v1824 = vunpack.c.h.b16 %v376
  %v1825 = vunpack.c.l.b16 %v377
  %v1826 = vunpack.c.h.b16 %v377
  %v1827 = vunpack.c.l.b16 %v378
  %v1828 = vunpack.c.h.b16 %v378
  %v1829 = vunpack.c.l.b16 %v379
  %v1830 = vunpack.c.h.b16 %v379
  %v1831 = vunpack.c.l.b16 %v380
  %v1832 = vunpack.c.h.b16 %v380
  %v1833 = vunpack.c.l.b16 %v381
  %v1834 = vunpack.c.h.b16 %v381
  %v1835 = vunpack.c.l.b16 %v382
  %v1836 = vunpack.c.h.b16 %v382
  %v1837 = vunpack.c.l.b16 %v383
  %v1838 = vunpack.c.h.b16 %v383
  %v1839 = vunpack.c.l.b16 %v384
  %v1840 = vunpack.c.h.b16 %v384
  %v1841 = vunpack.c.l.b16 %v385
  %v1842 = vunpack.c.h.b16 %v385
  %v1843 = vunpack.c.l.b16 %v386
  %v1844 = vunpack.c.h.b16 %v386
  %v1845 = vunpack.c.l.b16 %v387
  %v1846 = vunpack.c.h.b16 %v387
  %v1847 = vunpack.c.l.b16 %v388
  %v1848 = vunpack.c.h.b16 %v388
  %v1849 = vunpack.c.l.b16 %v389
  %v1850 = vunpack.c.h.b16 %v389
  %v1851 = vunpack.c.l.b16 %v390
  %v1852 = vunpack.c.h.b16 %v390
  %v1853 = vunpack.c.l.b16 %v391
  %v1854 = vunpack.c.h.b16 %v391
  %v1855 = vunpack.c.l.b16 %v392
  %v1856 = vunpack.c.h.b16 %v392
  %v1857 = vunpack.c.l.b16 %v393
  %v1858 = vunpack.c.h.b16 %v393
  %v1859 = vunpack.c.l.b16 %v394
  %v1860 = vunpack.c.h.b16 %v394
  %v1861 = vunpack.c.l.b16 %v395
  %v1862 = vunpack.c.h.b16 %v395
  %v1863 = vunpack.c.l.b16 %v396
  %v1864 = vunpack.c.h.b16 %v396
  %v1865 = vunpack.c.l.b16 %v397
  %v1866 = vunpack.c.h.b16 %v397
  %v1867 = vunpack.c.l.b16 %v398
  %v1868 = vunpack.c.h.b16 %v398
  %v1869 = vunpack.c.l.b16 %v399
  %v1870 = vunpack.c.h.b16 %v399
  %v1871 = vunpack.c.l.b16 %v400
  %v1872 = vunpack.c.h.b16 %v400
  %v1873 = vunpack.c.l.b16 %v401
  %v1874 = vunpack.c.h.b16 %v401
  %v1875 = vunpack.c.l.b16 %v402
  %v1876 = vunpack.c.h.b16 %v402
  %v1877 = vunpack.c.l.b16 %v403
  %v1878 = vunpack.c.h.b16 %v403
  %v1879 = vunpack.c.l.b16 %v404
  %v1880 = vunpack.c.h.b16 %v404
  %v1881 = vunpack.c.l.b16 %v405
  %v1882 = vunpack.c.h.b16 %v405
  %v1883 = vunpack.c.l.b16 %v406
  %v1884 = vunpack.c.h.b16 %v406
  %v1885 = vunpack.c.l.b16 %v407
  %v1886 = vunpack.c.h.b16 %v407
  %v1887 = vunpack.c.l.b16 %v408
  %v1888 = vunpack.c.h.b16 %v408
  %v1889 = vunpack.c.l.b16 %v409
  %v1890 = vunpack.c.h.b16 %v409
  %v1891 = vunpack.c.l.b16 %v410
  %v1892 = vunpack.c.h.b16 %v410
  %v1893 = vunpack.c.l.b16 %v411
  %v1894 = vunpack.c.h.b16 %v411
  %v1895 = vunpack.c.l.b16 %v412
  %v1896 = vunpack.c.h.b16 %v412
  %v1897 = vunpack.c.l.b16 %v413
  %v1898 = vunpack.c.h.b16 %v413
  %v1899 = vunpack.c.l.b16 %v414
  %v1900 = vunpack.c.h.b16 %v414
  %v1901 = vunpack.c.l.b16 %v415
  %v1902 = vunpack.c.h.b16 %v415
  %v1903 = vunpack.c.l.b16 %v416
  %v1904 = vunpack.c.h.b16 %v416
  %v1905 = vunpack.c.l.b16 %v417
  %v1906 = vunpack.c.h.b16 %v417
  %v1907 = vunpack.c.l.b16 %v418
  %v1908 = vunpack.c.h.b16 %v418
  %v1909 = vunpack.c.l.b16 %v419
  %v1910 = vunpack.c.h.b16 %v419
  %v1911 = vunpack.c.l.b16 %v420
  %v1912 = vunpack.c.h.b16 %v420
  %v1913 = vunpack.c.l.b16 %v421
  %v1914 = vunpack.c.h.b16 %v421
  %v1915 = vunpack.c.l.b16 %v422
  %v1916 = vunpack.c.h.b16 %v422
  %v1917 = vunpack.c.l.b16 %v423
  %v1918 = vunpack.c.h.b16 %v423
  %v1919 = vunpack.c.l.b16 %v424
  %v1920 = vunpack.c.h.b16 %v424
  %v1921 = vunpack.c.l.b16 %v425
  %v1922 = vunpack.c.h.b16 %v425
  %v1923 = vunpack.c.l.b16 %v426
  %v1924 = vunpack.c.h.b16 %v426
  %v1925 = vunpack.c.l.b16 %v427
  %v1926 = vunpack.c.h.b16 %v427
  %v1927 = vunpack.c.l.b16 %v428
  %v1928 = vunpack.c.h.b16 %v428
  %v1929 = vunpack.c.l.b16 %v429
  %v1930 = vunpack.c.h.b16 %v429
  %v1931 = vunpack.c.l.b16 %v430
  %v1932 = vunpack.c.h.b16 %v430
  %v1933 = vunpack.c.l.b16 %v431
  %v1934 = vunpack.c.h.b16 %v431
  %v1935 = vunpack.c.l.b16 %v432
  %v1936 = vunpack.c.h.b16 %v432
  %v1937 = vunpack.c.l.b16 %v433
  %v1938 = vunpack.c.h.b16 %v433
  %v1939 = vunpack.c.l.b16 %v434
  %v1940 = vunpack.c.h.b16 %v434
  %v1941 = vunpack.c.l.b16 %v435
  %v1942 = vunpack.c.h.b16 %v435
  %v1943 = vunpack.c.l.b16 %v436
  %v1944 = vunpack.c.h.b16 %v436
  %v1945 = vunpack.c.l.b16 %v437
  %v1946 = vunpack.c.h.b16 %v437
  %v1947 = vunpack.c.l.b16 %v438
  %v1948 = vunpack.c.h.b16 %v438
  %v1949 = vunpack.c.l.b16 %v439
  %v1950 = vunpack.c.h.b16 %v439
  %v1951 = vunpack.c.l.b16 %v440
  %v1952 = vunpack.c.h.b16 %v440
  %v1953 = vunpack.c.l.b16 %v441
  %v1954 = vunpack.c.h.b16 %v441
  %v1955 = vunpack.c.l.b16 %v442
  %v1956 = vunpack.c.h.b16 %v442
  %v1957 = vunpack.c.l.b16 %v443
  %v1958 = vunpack.c.h.b16 %v443
  %v1959 = vunpack.c.l.b16 %v444
  %v1960 = vunpack.c.h.b16 %v444
  %v1961 = vunpack.c.l.b16 %v445
  %v1962 = vunpack.c.h.b16 %v445
  %v1963 = vunpack.c.l.b16 %v446
  %v1964 = vunpack.c.h.b16 %v446
  %v1965 = vunpack.c.l.b16 %v447
  %v1966 = vunpack.c.h.b16 %v447
  %v1967 = vunpack.c.l.b16 %v448
  %v1968 = vunpack.c.h.b16 %v448
  %v1969 = vunpack.c.l.b16 %v449
  %v1970 = vunpack.c.h.b16 %v449
  %v1971 = vunpack.c.l.b16 %v450
  %v1972 = vunpack.c.h.b16 %v450
  %v1973 = vunpack.c.l.b16 %v451
  %v1974 = vunpack.c.h.b16 %v451
  %v1975 = vunpack.c.l.b16 %v452
  %v1976 = vunpack.c.h.b16 %v452
  %v1977 = vunpack.c.l.b16 %v453
  %v1978 = vunpack.c.h.b16 %v453
  %v1979 = vunpack.c.l.b16 %v454
  %v1980 = vunpack.c.h.b16 %v454
  %v1981 = vunpack.c.l.b16 %v455
  %v1982 = vunpack.c.h.b16 %v455
  %v1983 = vunpack.c.l.b16 %v456
  %v1984 = vunpack.c.h.b16 %v456
  %v1985 = vunpack.c.l.b16 %v457
  %v1986 = vunpack.c.h.b16 %v457
  %v1987 = vunpack.c.l.b16 %v458
  %v1988 = vunpack.c.h.b16 %v458
  %v1989 = vunpack.c.l.b16 %v459
  %v1990 = vunpack.c.h.b16 %v459
  %v1991 = vunpack.c.l.b16 %v460
  %v1992 = vunpack.c.h.b16 %v460
  %v1993 = vunpack.c.l.b16 %v461
  %v1994 = vunpack.c.h.b16 %v461
  %v1995 = vunpack.c.l.b16 %v462
  %v1996 = vunpack.c.h.b16 %v462
  %v1997 = vunpack.c.l.b16 %v463
  %v1998 = vunpack.c.h.b16 %v463
  %v1999 = vunpack.c.l.b16 %v464
  %v2000 = vunpack.c.h.b16 %v464
  %v2001 = vunpack.c.l.b16 %v465
  %v2002 = vunpack.c.h.b16 %v465
  %v2003 = vunpack.c.l.b16 %v466
  %v2004 = vunpack.c.h.b16 %v466
  %v2005 = vunpack.c.l.b16 %v467
  %v2006 = vunpack.c.h.b16 %v467
  %v2007 = vunpack.c.l.b16 %v468
  %v2008 = vunpack.c.h.b16 %v468
  %v2009 = vunpack.c.l.b16 %v469
  %v2010 = vunpack.c.h.b16 %v469
  %v2011 = vunpack.c.l.b16 %v470
  %v2012 = vunpack.c.h.b16 %v470
  %v2013 = vunpack.c.l.b16 %v471
  %v2014 = vunpack.c.h.b16 %v471
  %v2015 = vunpack.c.l.b16 %v472
  %v2016 = vunpack.c.h.b16 %v472
  %v2017 = vunpack.c.l.b16 %v473
  %v2018 = vunpack.c.h.b16 %v473
  %v2019 = vunpack.c.l.b16 %v474
  %v2020 = vunpack.c.h.b16 %v474
  %v2021 = vunpack.c.l.b16 %v475
  %v2022 = vunpack.c.h.b16 %v475
  %v2023 = vunpack.c.l.b16 %v476
  %v2024 = vunpack.c.h.b16 %v476
  %v2025 = vunpack.c.l.b16 %v477
  %v2026 = vunpack.c.h.b16 %v477
  %v2027 = vunpack.c.l.b16 %v478
  %v2028 = vunpack.c.h.b16 %v478
  %v2029 = vunpack.c.l.b16 %v479
  %v2030 = vunpack.c.h.b16 %v479
  %v2031 = vunpack.c.l.b16 %v480
  %v2032 = vunpack.c.h.b16 %v480
  %v2033 = vunpack.c.l.b16 %v481
  %v2034 = vunpack.c.h.b16 %v481
  %v2035 = vunpack.c.l.b16 %v482
  %v2036 = vunpack.c.h.b16 %v482
  %v2037 = vunpack.c.l.b16 %v483
  %v2038 = vunpack.c.h.b16 %v483
  %v2039 = vunpack.c.l.b16 %v484
  %v2040 = vunpack.c.h.b16 %v484
  %v2041 = vunpack.c.l.b16 %v485
  %v2042 = vunpack.c.h.b16 %v485
  %v2043 = vunpack.c.l.b16 %v486
  %v2044 = vunpack.c.h.b16 %v486
  %v2045 = vunpack.c.l.b16 %v487
  %v2046 = vunpack.c.h.b16 %v487
  %v2047 = vunpack.c.l.b16 %v488
  %v2048 = vunpack.c.h.b16 %v488
  %v2049 = vunpack.c.l.b16 %v489
  %v2050 = vunpack.c.h.b16 %v489
  %v2051 = vunpack.c.l.b16 %v490
  %v2052 = vunpack.c.h.b16 %v490
  %v2053 = vunpack.c.l.b16 %v491
  %v2054 = vunpack.c.h.b16 %v491
  %v2055 = vunpack.c.l.b16 %v492
  %v2056 = vunpack.c.h.b16 %v492
  %v2057 = vunpack.c.l.b16 %v493
  %v2058 = vunpack.c.h.b16 %v493
  %v2059 = vunpack.c.l.b16 %v494
  %v2060 = vunpack.c.h.b16 %v494
  %v2061 = vunpack.c.l.b16 %v495
  %v2062 = vunpack.c.h.b16 %v495
  %v2063 = vunpack.c.l.b16 %v496
  %v2064 = vunpack.c.h.b16 %v496
  %v2065 = vunpack.c.l.b16 %v497
  %v2066 = vunpack.c.h.b16 %v497
  %v2067 = vunpack.c.l.b16 %v498
  %v2068 = vunpack.c.h.b16 %v498
  %v2069 = vunpack.c.l.b16 %v499
  %v2070 = vunpack.c.h.b16 %v499
  %v2071 = vunpack.c.l.b16 %v500
  %v2072 = vunpack.c.h.b16 %v500
  %v2073 = vunpack.c.l.b16 %v501
  %v2074 = vunpack.c.h.b16 %v501
  %v2075 = vunpack.c.l.b16 %v502
  %v2076 = vunpack.c.h.b16 %v502
  %v2077 = vunpack.c.l.b16 %v503
  %v2078 = vunpack.c.h.b16 %v503
  %v2079 = vunpack.c.l.b16 %v504
  %v2080 = vunpack.c.h.b16 %v504
  %v2081 = vunpack.c.l.b16 %v505
  %v2082 = vunpack.c.h.b16 %v505
  %v2083 = vunpack.c.l.b16 %v506
  %v2084 = vunpack.c.h.b16 %v506
  %v2085 = vunpack.c.l.b16 %v507
  %v2086 = vunpack.c.h.b16 %v507
  %v2087 = vunpack.c.l.b16 %v508
  %v2088 = vunpack.c.h.b16 %v508
  %v2089 = vunpack.c.l.b16 %v509
  %v2090 = vunpack.c.h.b16 %v509
  %v2091 = vunpack.c.l.b16 %v510
  %v2092 = vunpack.c.h.b16 %v510
  %v2093 = vunpack.c.l.b16 %v511
  %v2094 = vunpack.c.h.b16 %v511
  %v2095 = vunpack.c.l.b16 %v512
  %v2096 = vunpack.c.h.b16 %v512
  %v2097 = vunpack.c.l.b16 %v513
  %v2098 = vunpack.c.h.b16 %v513
  %v2099 = vunpack.c.l.b16 %v514
  %v2100 = vunpack.c.h.b16 %v514
  %v2101 = vunpack.c.l.b16 %v515
  %v2102 = vunpack.c.h.b16 %v515
  %v2103 = vunpack.c.l.b16 %v516
  %v2104 = vunpack.c.h.b16 %v516
  %v2105 = vunpack.c.l.b16 %v517
  %v2106 = vunpack.c.h.b16 %v517
  %v2107 = vunpack.c.l.b16 %v518
  %v2108 = vunpack.c.h.b16 %v518
  %v2109 = vunpack.c.l.b16 %v519
  %v2110 = vunpack.c.h.b16 %v519
  %v2111 = vunpack.c.l.b16 %v520
  %v2112 = vunpack.c.h.b16 %v520
  %v2113 = vunpack.c.l.b16 %v521
  %v2114 = vunpack.c.h.b16 %v521
  %v2115 = vunpack.c.l.b16 %v522
  %v2116 = vunpack.c.h.b16 %v522
  %v2117 = vunpack.c.l.b16 %v523
  %v2118 = vunpack.c.h.b16 %v523
  %v2119 = vunpack.c.l.b16 %v524
  %v2120 = vunpack.c.h.b16 %v524
  %v2121 = vunpack.c.l.b16 %v525
  %v2122 = vunpack.c.h.b16 %v525
  %v2123 = vunpack.c.l.b16 %v526
  %v2124 = vunpack.c.h.b16 %v526
  %v2125 = vunpack.c.l.b16 %v527
  %v2126 = vunpack.c.h.b16 %v527
  %v2127 = vunpack.c.l.b16 %v528
  %v2128 = vunpack.c.h.b16 %v528
  %v2129 = vunpack.c.l.b16 %v529
  %v2130 = vunpack.c.h.b16 %v529
  %v2131 = vunpack.c.l.b16 %v530
  %v2132 = vunpack.c.h.b16 %v530
  %v2133 = vunpack.c.l.b16 %v531
  %v2134 = vunpack.c.h.b16 %v531
  %v2135 = vunpack.c.l.b16 %v532
  %v2136 = vunpack.c.h.b16 %v532
  %v2137 = vunpack.c.l.b16 %v533
  %v2138 = vunpack.c.h.b16 %v533
  %v2139 = vunpack.c.l.b16 %v534
  %v2140 = vunpack.c.h.b16 %v534
  %v2141 = vunpack.c.l.b16 %v535
  %v2142 = vunpack.c.h.b16 %v535
  %v2143 = vunpack.c.l.b16 %v536
  %v2144 = vunpack.c.h.b16 %v536
  %v2145 = vunpack.c.l.b16 %v537
  %v2146 = vunpack.c.h.b16 %v537
  %v2147 = vunpack.c.l.b16 %v538
  %v2148 = vunpack.c.h.b16 %v538
  %v2149 = vunpack.c.l.b16 %v539
  %v2150 = vunpack.c.h.b16 %v539
  %v2151 = vunpack.c.l.b16 %v540
  %v2152 = vunpack.c.h.b16 %v540
  %v2153 = vunpack.c.l.b16 %v541
  %v2154 = vunpack.c.h.b16 %v541
  %v2155 = vunpack.c.l.b16 %v542
  %v2156 = vunpack.c.h.b16 %v542
  %v2157 = vunpack.c.l.b16 %v543
  %v2158 = vunpack.c.h.b16 %v543
  %v2159 = vunpack.c.l.b16 %v544
  %v2160 = vunpack.c.h.b16 %v544
  %v2161 = vunpack.c.l.b16 %v545
  %v2162 = vunpack.c.h.b16 %v545
  %v2163 = vunpack.c.l.b16 %v546
  %v2164 = vunpack.c.h.b16 %v546
  %v2165 = vpack.c.b16 %v1149, %v1141
  %v2166 = vpack.c.b16 %v1150, %v1142
  %v2167 = vpack.c.b16 %v1151, %v1143
  %v2168 = vpack.c.b16 %v1152, %v1144
  %v2169 = vpack.c.b16 %v1153, %v1145
  %v2170 = vpack.c.b16 %v1154, %v1146
  %v2171 = vpack.c.b16 %v1155, %v1147
  %v2172 = vpack.c.b16 %v1156, %v1148
  %v2173 = vpack.c.b16 %v1165, %v1157
  %v2174 = vpack.c.b16 %v1166, %v1158
  %v2175 = vpack.c.b16 %v1167, %v1159
  %v2176 = vpack.c.b16 %v1168, %v1160
  %v2177 = vpack.c.b16 %v1169, %v1161
  %v2178 = vpack.c.b16 %v1170, %v1162
  %v2179 = vpack.c.b16 %v1171, %v1163
  %v2180 = vpack.c.b16 %v1172, %v1164
  %v2181 = vpack.c.b16 %v1181, %v1173
  %v2182 = vpack.c.b16 %v1182, %v1174
  %v2183 = vpack.c.b16 %v1183, %v1175
  %v2184 = vpack.c.b16 %v1184, %v1176
  %v2185 = vpack.c.b16 %v1185, %v1177
  %v2186 = vpack.c.b16 %v1186, %v1178
  %v2187 = vpack.c.b16 %v1187, %v1179
  %v2188 = vpack.c.b16 %v1188, %v1180
  %v2189 = vpack.c.b16 %v1197, %v1189
  %v2190 = vpack.c.b16 %v1198, %v1190
  %v2191 = vpack.c.b16 %v1199, %v1191
  %v2192 = vpack.c.b16 %v1200, %v1192
  %v2193 = vpack.c.b16 %v1201, %v1193
  %v2194 = vpack.c.b16 %v1202, %v1194
  %v2195 = vpack.c.b16 %v1203, %v1195
  %v2196 = vpack.c.b16 %v1204, %v1196
  %v2197 = vpack.c.b16 %v1213, %v1205
  %v2198 = vpack.c.b16 %v1214, %v1206
  %v2199 = vpack.c.b16 %v1215, %v1207
  %v2200 = vpack.c.b16 %v1216, %v1208
  %v2201 = vpack.c.b16 %v1217, %v1209
  %v2202 = vpack.c.b16 %v1218, %v1210
  %v2203 = vpack.c.b16 %v1219, %v1211
  %v2204 = vpack.c.b16 %v1220, %v1212
  %v2205 = vpack.c.b16 %v1229, %v1221
  %v2206 = vpack.c.b16 %v1230, %v1222
  %v2207 = vpack.c.b16 %v1231, %v1223
  %v2208 = vpack.c.b16 %v1232, %v1224
  %v2209 = vpack.c.b16 %v1233, %v1225
  %v2210 = vpack.c.b16 %v1234, %v1226
  %v2211 = vpack.c.b16 %v1235, %v1227
  %v2212 = vpack.c.b16 %v1236, %v1228
  %v2213 = vpack.c.b16 %v1245, %v1237
  %v2214 = vpack.c.b16 %v1246, %v1238
  %v2215 = vpack.c.b16 %v1247, %v1239
  %v2216 = vpack.c.b16 %v1248, %v1240
  %v2217 = vpack.c.b16 %v1249, %v1241
  %v2218 = vpack.c.b16 %v1250, %v1242
  %v2219 = vpack.c.b16 %v1251, %v1243
  %v2220 = vpack.c.b16 %v1252, %v1244
  %v2221 = vpack.c.b16 %v1261, %v1253
  %v2222 = vpack.c.b16 %v1262, %v1254
  %v2223 = vpack.c.b16 %v1263, %v1255
  %v2224 = vpack.c.b16 %v1264, %v1256
  %v2225 = vpack.c.b16 %v1265, %v1257
  %v2226 = vpack.c.b16 %v1266, %v1258
  %v2227 = vpack.c.b16 %v1267, %v1259
  %v2228 = vpack.c.b16 %v1268, %v1260
  %v2229 = vpack.c.b16 %v1277, %v1269
  %v2230 = vpack.c.b16 %v1278, %v1270
  %v2231 = vpack.c.b16 %v1279, %v1271
  %v2232 = vpack.c.b16 %v1280, %v1272
  %v2233 = vpack.c.b16 %v1281, %v1273
  %v2234 = vpack.c.b16 %v1282, %v1274
  %v2235 = vpack.c.b16 %v1283, %v1275
  %v2236 = vpack.c.b16 %v1284, %v1276
  %v2237 = vpack.c.b16 %v1293, %v1285
  %v2238 = vpack.c.b16 %v1294, %v1286
  %v2239 = vpack.c.b16 %v1295, %v1287
  %v2240 = vpack.c.b16 %v1296, %v1288
  %v2241 = vpack.c.b16 %v1297, %v1289
  %v2242 = vpack.c.b16 %v1298, %v1290
  %v2243 = vpack.c.b16 %v1299, %v1291
  %v2244 = vpack.c.b16 %v1300, %v1292
  %v2245 = vpack.c.b16 %v1309, %v1301
  %v2246 = vpack.c.b16 %v1310, %v1302
  %v2247 = vpack.c.b16 %v1311, %v1303
  %v2248 = vpack.c.b16 %v1312, %v1304
  %v2249 = vpack.c.b16 %v1313, %v1305
  %v2250 = vpack.c.b16 %v1314, %v1306
  %v2251 = vpack.c.b16 %v1315, %v1307
  %v2252 = vpack.c.b16 %v1316, %v1308
  %v2253 = vpack.c.b16 %v1325, %v1317
  %v2254 = vpack.c.b16 %v1326, %v1318
  %v2255 = vpack.c.b16 %v1327, %v1319
  %v2256 = vpack.c.b16 %v1328, %v1320
  %v2257 = vpack.c.b16 %v1329, %v1321
  %v2258 = vpack.c.b16 %v1330, %v1322
  %v2259 = vpack.c.b16 %v1331, %v1323
  %v2260 = vpack.c.b16 %v1332, %v1324
  %v2261 = vpack.c.b16 %v1341, %v1333
  %v2262 = vpack.c.b16 %v1342, %v1334
  %v2263 = vpack.c.b16 %v1343, %v1335
  %v2264 = vpack.c.b16 %v1344, %v1336
  %v2265 = vpack.c.b16 %v1345, %v1337
  %v2266 = vpack.c.b16 %v1346, %v1338
  %v2267 = vpack.c.b16 %v1347, %v1339
  %v2268 = vpack.c.b16 %v1348, %v1340
  %v2269 = vpack.c.b16 %v1357, %v1349
  %v2270 = vpack.c.b16 %v1358, %v1350
  %v2271 = vpack.c.b16 %v1359, %v1351
  %v2272 = vpack.c.b16 %v1360, %v1352
  %v2273 = vpack.c.b16 %v1361, %v1353
  %v2274 = vpack.c.b16 %v1362, %v1354
  %v2275 = vpack.c.b16 %v1363, %v1355
  %v2276 = vpack.c.b16 %v1364, %v1356
  %v2277 = vpack.c.b16 %v1373, %v1365
  %v2278 = vpack.c.b16 %v1374, %v1366
  %v2279 = vpack.c.b16 %v1375, %v1367
  %v2280 = vpack.c.b16 %v1376, %v1368
  %v2281 = vpack.c.b16 %v1377, %v1369
  %v2282 = vpack.c.b16 %v1378, %v1370
  %v2283 = vpack.c.b16 %v1379, %v1371
  %v2284 = vpack.c.b16 %v1380, %v1372
  %v2285 = vpack.c.b16 %v1389, %v1381
  %v2286 = vpack.c.b16 %v1390, %v1382
  %v2287 = vpack.c.b16 %v1391, %v1383
  %v2288 = vpack.c.b16 %v1392, %v1384
  %v2289 = vpack.c.b16 %v1393, %v1385
  %v2290 = vpack.c.b16 %v1394, %v1386
  %v2291 = vpack.c.b16 %v1395, %v1387
  %v2292 = vpack.c.b16 %v1396, %v1388
  %v2293 = vpack.c.b16 %v1405, %v1397
  %v2294 = vpack.c.b16 %v1406, %v1398
  %v2295 = vpack.c.b16 %v1407, %v1399
  %v2296 = vpack.c.b16 %v1408, %v1400
  %v2297 = vpack.c.b16 %v1409, %v1401
  %v2298 = vpack.c.b16 %v1410, %v1402
  %v2299 = vpack.c.b16 %v1411, %v1403
  %v2300 = vpack.c.b16 %v1412, %v1404
  %v2301 = vpack.c.b16 %v1421, %v1413
  %v2302 = vpack.c.b16 %v1422, %v1414
  %v2303 = vpack.c.b16 %v1423, %v1415
  %v2304 = vpack.c.b16 %v1424, %v1416
  %v2305 = vpack.c.b16 %v1425, %v1417
  %v2306 = vpack.c.b16 %v1426, %v1418
  %v2307 = vpack.c.b16 %v1427, %v1419
  %v2308 = vpack.c.b16 %v1428, %v1420
  %v2309 = vpack.c.b16 %v1437, %v1429
  %v2310 = vpack.c.b16 %v1438, %v1430
  %v2311 = vpack.c.b16 %v1439, %v1431
  %v2312 = vpack.c.b16 %v1440, %v1432
  %v2313 = vpack.c.b16 %v1441, %v1433
  %v2314 = vpack.c.b16 %v1442, %v1434
  %v2315 = vpack.c.b16 %v1443, %v1435
  %v2316 = vpack.c.b16 %v1444, %v1436
  %v2317 = vpack.c.b16 %v1453, %v1445
  %v2318 = vpack.c.b16 %v1454, %v1446
  %v2319 = vpack.c.b16 %v1455, %v1447
  %v2320 = vpack.c.b16 %v1456, %v1448
  %v2321 = vpack.c.b16 %v1457, %v1449
  %v2322 = vpack.c.b16 %v1458, %v1450
  %v2323 = vpack.c.b16 %v1459, %v1451
  %v2324 = vpack.c.b16 %v1460, %v1452
  %v2325 = vpack.c.b16 %v1469, %v1461
  %v2326 = vpack.c.b16 %v1470, %v1462
  %v2327 = vpack.c.b16 %v1471, %v1463
  %v2328 = vpack.c.b16 %v1472, %v1464
  %v2329 = vpack.c.b16 %v1473, %v1465
  %v2330 = vpack.c.b16 %v1474, %v1466
  %v2331 = vpack.c.b16 %v1475, %v1467
  %v2332 = vpack.c.b16 %v1476, %v1468
  %v2333 = vpack.c.b16 %v1485, %v1477
  %v2334 = vpack.c.b16 %v1486, %v1478
  %v2335 = vpack.c.b16 %v1487, %v1479
  %v2336 = vpack.c.b16 %v1488, %v1480
  %v2337 = vpack.c.b16 %v1489, %v1481
  %v2338 = vpack.c.b16 %v1490, %v1482
  %v2339 = vpack.c.b16 %v1491, %v1483
  %v2340 = vpack.c.b16 %v1492, %v1484
  %v2341 = vpack.c.b16 %v1501, %v1493
  %v2342 = vpack.c.b16 %v1502, %v1494
  %v2343 = vpack.c.b16 %v1503, %v1495
  %v2344 = vpack.c.b16 %v1504, %v1496
  %v2345 = vpack.c.b16 %v1505, %v1497
  %v2346 = vpack.c.b16 %v1506, %v1498
  %v2347 = vpack.c.b16 %v1507, %v1499
  %v2348 = vpack.c.b16 %v1508, %v1500
  %v2349 = vpack.c.b16 %v1517, %v1509
  %v2350 = vpack.c.b16 %v1518, %v1510
  %v2351 = vpack.c.b16 %v1519, %v1511
  %v2352 = vpack.c.b16 %v1520, %v1512
  %v2353 = vpack.c.b16 %v1521, %v1513
  %v2354 = vpack.c.b16 %v1522, %v1514
  %v2355 = vpack.c.b16 %v1523, %v1515
  %v2356 = vpack.c.b16 %v1524, %v1516
  %v2357 = vpack.c.b16 %v1533, %v1525
  %v2358 = vpack.c.b16 %v1534, %v1526
  %v2359 = vpack.c.b16 %v1535, %v1527
  %v2360 = vpack.c.b16 %v1536, %v1528
  %v2361 = vpack.c.b16 %v1537, %v1529
  %v2362 = vpack.c.b16 %v1538, %v1530
  %v2363 = vpack.c.b16 %v1539, %v1531
  %v2364 = vpack.c.b16 %v1540, %v1532
  %v2365 = vpack.c.b16 %v1549, %v1541
  %v2366 = vpack.c.b16 %v1550, %v1542
  %v2367 = vpack.c.b16 %v1551, %v1543
  %v2368 = vpack.c.b16 %v1552, %v1544
  %v2369 = vpack.c.b16 %v1553, %v1545
  %v2370 = vpack.c.b16 %v1554, %v1546
  %v2371 = vpack.c.b16 %v1555, %v1547
  %v2372 = vpack.c.b16 %v1556, %v1548
  %v2373 = vpack.c.b16 %v1565, %v1557
  %v2374 = vpack.c.b16 %v1566, %v1558
  %v2375 = vpack.c.b16 %v1567, %v1559
  %v2376 = vpack.c.b16 %v1568, %v1560
  %v2377 = vpack.c.b16 %v1569, %v1561
  %v2378 = vpack.c.b16 %v1570, %v1562
  %v2379 = vpack.c.b16 %v1571, %v1563
  %v2380 = vpack.c.b16 %v1572, %v1564
  %v2381 = vpack.c.b16 %v1581, %v1573
  %v2382 = vpack.c.b16 %v1582, %v1574
  %v2383 = vpack.c.b16 %v1583, %v1575
  %v2384 = vpack.c.b16 %v1584, %v1576
  %v2385 = vpack.c.b16 %v1585, %v1577
  %v2386 = vpack.c.b16 %v1586, %v1578
  %v2387 = vpack.c.b16 %v1587, %v1579
  %v2388 = vpack.c.b16 %v1588, %v1580
  %v2389 = vpack.c.b16 %v1597, %v1589
  %v2390 = vpack.c.b16 %v1598, %v1590
  %v2391 = vpack.c.b16 %v1599, %v1591
  %v2392 = vpack.c.b16 %v1600, %v1592
  %v2393 = vpack.c.b16 %v1601, %v1593
  %v2394 = vpack.c.b16 %v1602, %v1594
  %v2395 = vpack.c.b16 %v1603, %v1595
  %v2396 = vpack.c.b16 %v1604, %v1596
  %v2397 = vpack.c.b16 %v1613, %v1605
  %v2398 = vpack.c.b16 %v1614, %v1606
  %v2399 = vpack.c.b16 %v1615, %v1607
  %v2400 = vpack.c.b16 %v1616, %v1608
  %v2401 = vpack.c.b16 %v1617, %v1609
  %v2402 = vpack.c.b16 %v1618, %v1610
  %v2403 = vpack.c.b16 %v1619, %v1611
  %v2404 = vpack.c.b16 %v1620, %v1612
  %v2405 = vpack.c.b16 %v1629, %v1621
  %v2406 = vpack.c.b16 %v1630, %v1622
  %v2407 = vpack.c.b16 %v1631, %v1623
  %v2408 = vpack.c.b16 %v1632, %v1624
  %v2409 = vpack.c.b16 %v1633, %v1625
  %v2410 = vpack.c.b16 %v1634, %v1626
  %v2411 = vpack.c.b16 %v1635, %v1627
  %v2412 = vpack.c.b16 %v1636, %v1628
  %v2413 = vpack.c.b16 %v1645, %v1637
  %v2414 = vpack.c.b16 %v1646, %v1638
  %v2415 = vpack.c.b16 %v1647, %v1639
  %v2416 = vpack.c.b16 %v1648, %v1640
  %v2417 = vpack.c.b16 %v1649, %v1641
  %v2418 = vpack.c.b16 %v1650, %v1642
  %v2419 = vpack.c.b16 %v1651, %v1643
  %v2420 = vpack.c.b16 %v1652, %v1644
  %v2421 = vpack.c.b16 %v1661, %v1653
  %v2422 = vpack.c.b16 %v1662, %v1654
  %v2423 = vpack.c.b16 %v1663, %v1655
  %v2424 = vpack.c.b16 %v1664, %v1656
  %v2425 = vpack.c.b16 %v1665, %v1657
  %v2426 = vpack.c.b16 %v1666, %v1658
  %v2427 = vpack.c.b16 %v1667, %v1659
  %v2428 = vpack.c.b16 %v1668, %v1660
  %v2429 = vpack.c.b16 %v1677, %v1669
  %v2430 = vpack.c.b16 %v1678, %v1670
  %v2431 = vpack.c.b16 %v1679, %v1671
  %v2432 = vpack.c.b16 %v1680, %v1672
  %v2433 = vpack.c.b16 %v1681, %v1673
  %v2434 = vpack.c.b16 %v1682, %v1674
  %v2435 = vpack.c.b16 %v1683, %v1675
  %v2436 = vpack.c.b16 %v1684, %v1676
  %v2437 = vpack.c.b16 %v1693, %v1685
  %v2438 = vpack.c.b16 %v1694, %v1686
  %v2439 = vpack.c.b16 %v1695, %v1687
  %v2440 = vpack.c.b16 %v1696, %v1688
  %v2441 = vpack.c.b16 %v1697, %v1689
  %v2442 = vpack.c.b16 %v1698, %v1690
  %v2443 = vpack.c.b16 %v1699, %v1691
  %v2444 = vpack.c.b16 %v1700, %v1692
  %v2445 = vpack.c.b16 %v1709, %v1701
  %v2446 = vpack.c.b16 %v1710, %v1702
  %v2447 = vpack.c.b16 %v1711, %v1703
  %v2448 = vpack.c.b16 %v1712, %v1704
  %v2449 = vpack.c.b16 %v1713, %v1705
  %v2450 = vpack.c.b16 %v1714, %v1706
  %v2451 = vpack.c.b16 %v1715, %v1707
  %v2452 = vpack.c.b16 %v1716, %v1708
  %v2453 = vpack.c.b16 %v1725, %v1717
  %v2454 = vpack.c.b16 %v1726, %v1718
  %v2455 = vpack.c.b16 %v1727, %v1719
  %v2456 = vpack.c.b16 %v1728, %v1720
  %v2457 = vpack.c.b16 %v1729, %v1721
  %v2458 = vpack.c.b16 %v1730, %v1722
  %v2459 = vpack.c.b16 %v1731, %v1723
  %v2460 = vpack.c.b16 %v1732, %v1724
  %v2461 = vpack.c.b16 %v1741, %v1733
  %v2462 = vpack.c.b16 %v1742, %v1734
  %v2463 = vpack.c.b16 %v1743, %v1735
  %v2464 = vpack.c.b16 %v1744, %v1736
  %v2465 = vpack.c.b16 %v1745, %v1737
  %v2466 = vpack.c.b16 %v1746, %v1738
  %v2467 = vpack.c.b16 %v1747, %v1739
  %v2468 = vpack.c.b16 %v1748, %v1740
  %v2469 = vpack.c.b16 %v1757, %v1749
  %v2470 = vpack.c.b16 %v1758, %v1750
  %v2471 = vpack.c.b16 %v1759, %v1751
  %v2472 = vpack.c.b16 %v1760, %v1752
  %v2473 = vpack.c.b16 %v1761, %v1753
  %v2474 = vpack.c.b16 %v1762, %v1754
  %v2475 = vpack.c.b16 %v1763, %v1755
  %v2476 = vpack.c.b16 %v1764, %v1756
  %v2477 = vpack.c.b16 %v1773, %v1765
  %v2478 = vpack.c.b16 %v1774, %v1766
  %v2479 = vpack.c.b16 %v1775, %v1767
  %v2480 = vpack.c.b16 %v1776, %v1768
  %v2481 = vpack.c.b16 %v1777, %v1769
  %v2482 = vpack.c.b16 %v1778, %v1770
  %v2483 = vpack.c.b16 %v1779, %v1771
  %v2484 = vpack.c.b16 %v1780, %v1772
  %v2485 = vpack.c.b16 %v1789, %v1781
  %v2486 = vpack.c.b16 %v1790, %v1782
  %v2487 = vpack.c.b16 %v1791, %v1783
  %v2488 = vpack.c.b16 %v1792, %v1784
  %v2489 = vpack.c.b16 %v1793, %v1785
  %v2490 = vpack.c.b16 %v1794, %v1786
  %v2491 = vpack.c.b16 %v1795, %v1787
  %v2492 = vpack.c.b16 %v1796, %v1788
  %v2493 = vpack.c.b16 %v1805, %v1797
  %v2494 = vpack.c.b16 %v1806, %v1798
  %v2495 = vpack.c.b16 %v1807, %v1799
  %v2496 = vpack.c.b16 %v1808, %v1800
  %v2497 = vpack.c.b16 %v1809, %v1801
  %v2498 = vpack.c.b16 %v1810, %v1802
  %v2499 = vpack.c.b16 %v1811, %v1803
  %v2500 = vpack.c.b16 %v1812, %v1804
  %v2501 = vpack.c.b16 %v1821, %v1813
  %v2502 = vpack.c.b16 %v1822, %v1814
  %v2503 = vpack.c.b16 %v1823, %v1815
  %v2504 = vpack.c.b16 %v1824, %v1816
  %v2505 = vpack.c.b16 %v1825, %v1817
  %v2506 = vpack.c.b16 %v1826, %v1818
  %v2507 = vpack.c.b16 %v1827, %v1819
  %v2508 = vpack.c.b16 %v1828, %v1820
  %v2509 = vpack.c.b16 %v1837, %v1829
  %v2510 = vpack.c.b16 %v1838, %v1830
  %v2511 = vpack.c.b16 %v1839, %v1831
  %v2512 = vpack.c.b16 %v1840, %v1832
  %v2513 = vpack.c.b16 %v1841, %v1833
  %v2514 = vpack.c.b16 %v1842, %v1834
  %v2515 = vpack.c.b16 %v1843, %v1835
  %v2516 = vpack.c.b16 %v1844, %v1836
  %v2517 = vpack.c.b16 %v1853, %v1845
  %v2518 = vpack.c.b16 %v1854, %v1846
  %v2519 = vpack.c.b16 %v1855, %v1847
  %v2520 = vpack.c.b16 %v1856, %v1848
  %v2521 = vpack.c.b16 %v1857, %v1849
  %v2522 = vpack.c.b16 %v1858, %v1850
  %v2523 = vpack.c.b16 %v1859, %v1851
  %v2524 = vpack.c.b16 %v1860, %v1852
  %v2525 = vpack.c.b16 %v1869, %v1861
  %v2526 = vpack.c.b16 %v1870, %v1862
  %v2527 = vpack.c.b16 %v1871, %v1863
  %v2528 = vpack.c.b16 %v1872, %v1864
  %v2529 = vpack.c.b16 %v1873, %v1865
  %v2530 = vpack.c.b16 %v1874, %v1866
  %v2531 = vpack.c.b16 %v1875, %v1867
  %v2532 = vpack.c.b16 %v1876, %v1868
  %v2533 = vpack.c.b16 %v1885, %v1877
  %v2534 = vpack.c.b16 %v1886, %v1878
  %v2535 = vpack.c.b16 %v1887, %v1879
  %v2536 = vpack.c.b16 %v1888, %v1880
  %v2537 = vpack.c.b16 %v1889, %v1881
  %v2538 = vpack.c.b16 %v1890, %v1882
  %v2539 = vpack.c.b16 %v1891, %v1883
  %v2540 = vpack.c.b16 %v1892, %v1884
  %v2541 = vpack.c.b16 %v1901, %v1893
  %v2542 = vpack.c.b16 %v1902, %v1894
  %v2543 = vpack.c.b16 %v1903, %v1895
  %v2544 = vpack.c.b16 %v1904, %v1896
  %v2545 = vpack.c.b16 %v1905, %v1897
  %v2546 = vpack.c.b16 %v1906, %v1898
  %v2547 = vpack.c.b16 %v1907, %v1899
  %v2548 = vpack.c.b16 %v1908, %v1900
  %v2549 = vpack.c.b16 %v1917, %v1909
  %v2550 = vpack.c.b16 %v1918, %v1910
  %v2551 = vpack.c.b16 %v1919, %v1911
  %v2552 = vpack.c.b16 %v1920, %v1912
  %v2553 = vpack.c.b16 %v1921, %v1913
  %v2554 = vpack.c.b16 %v1922, %v1914
  %v2555 = vpack.c.b16 %v1923, %v1915
  %v2556 = vpack.c.b16 %v1924, %v1916
  %v2557 = vpack.c.b16 %v1933, %v1925
  %v2558 = vpack.c.b16 %v1934, %v1926
  %v2559 = vpack.c.b16 %v1935, %v1927
  %v2560 = vpack.c.b16 %v1936, %v1928
  %v2561 = vpack.c.b16 %v1937, %v1929
  %v2562 = vpack.c.b16 %v1938, %v1930
  %v2563 = vpack.c.b16 %v1939, %v1931
  %v2564 = vpack.c.b16 %v1940, %v1932
  %v2565 = vpack.c.b16 %v1949, %v1941
  %v2566 = vpack.c.b16 %v1950, %v1942
  %v2567 = vpack.c.b16 %v1951, %v1943
  %v2568 = vpack.c.b16 %v1952, %v1944
  %v2569 = vpack.c.b16 %v1953, %v1945
  %v2570 = vpack.c.b16 %v1954, %v1946
  %v2571 = vpack.c.b16 %v1955, %v1947
  %v2572 = vpack.c.b16 %v1956, %v1948
  %v2573 = vpack.c.b16 %v1965, %v1957
  %v2574 = vpack.c.b16 %v1966, %v1958
  %v2575 = vpack.c.b16 %v1967, %v1959
  %v2576 = vpack.c.b16 %v1968, %v1960
  %v2577 = vpack.c.b16 %v1969, %v1961
  %v2578 = vpack.c.b16 %v1970, %v1962
  %v2579 = vpack.c.b16 %v1971, %v1963
  %v2580 = vpack.c.b16 %v1972, %v1964
  %v2581 = vpack.c.b16 %v1981, %v1973
  %v2582 = vpack.c.b16 %v1982, %v1974
  %v2583 = vpack.c.b16 %v1983, %v1975
  %v2584 = vpack.c.b16 %v1984, %v1976
  %v2585 = vpack.c.b16 %v1985, %v1977
  %v2586 = vpack.c.b16 %v1986, %v1978
  %v2587 = vpack.c.b16 %v1987, %v1979
  %v2588 = vpack.c.b16 %v1988, %v1980
  %v2589 = vpack.c.b16 %v1997, %v1989
  %v2590 = vpack.c.b16 %v1998, %v1990
  %v2591 = vpack.c.b16 %v1999, %v1991
  %v2592 = vpack.c.b16 %v2000, %v1992
  %v2593 = vpack.c.b16 %v2001, %v1993
  %v2594 = vpack.c.b16 %v2002, %v1994
  %v2595 = vpack.c.b16 %v2003, %v1995
  %v2596 = vpack.c.b16 %v2004, %v1996
  %v2597 = vpack.c.b16 %v2013, %v2005
  %v2598 = vpack.c.b16 %v2014, %v2006
  %v2599 = vpack.c.b16 %v2015, %v2007
  %v2600 = vpack.c.b16 %v2016, %v2008
  %v2601 = vpack.c.b16 %v2017, %v2009
  %v2602 = vpack.c.b16 %v2018, %v2010
  %v2603 = vpack.c.b16 %v2019, %v2011
  %v2604 = vpack.c.b16 %v2020, %v2012
  %v2605 = vpack.c.b16 %v2029, %v2021
  %v2606 = vpack.c.b16 %v2030, %v2022
  %v2607 = vpack.c.b16 %v2031, %v2023
  %v2608 = vpack.c.b16 %v2032, %v2024
  %v2609 = vpack.c.b16 %v2033, %v2025
  %v2610 = vpack.c.b16 %v2034, %v2026
  %v2611 = vpack.c.b16 %v2035, %v2027
  %v2612 = vpack.c.b16 %v2036, %v2028
  %v2613 = vpack.c.b16 %v2045, %v2037
  %v2614 = vpack.c.b16 %v2046, %v2038
  %v2615 = vpack.c.b16 %v2047, %v2039
  %v2616 = vpack.c.b16 %v2048, %v2040
  %v2617 = vpack.c.b16 %v2049, %v2041
  %v2618 = vpack.c.b16 %v2050, %v2042
  %v2619 = vpack.c.b16 %v2051, %v2043
  %v2620 = vpack.c.b16 %v2052, %v2044
  %v2621 = vpack.c.b16 %v2061, %v2053
  %v2622 = vpack.c.b16 %v2062, %v2054
  %v2623 = vpack.c.b16 %v2063, %v2055
  %v2624 = vpack.c.b16 %v2064, %v2056
  %v2625 = vpack.c.b16 %v2065, %v2057
  %v2626 = vpack.c.b16 %v2066, %v2058
  %v2627 = vpack.c.b16 %v2067, %v2059
  %v2628 = vpack.c.b16 %v2068, %v2060
  %v2629 = vpack.c.b16 %v2077, %v2069
  %v2630 = vpack.c.b16 %v2078, %v2070
  %v2631 = vpack.c.b16 %v2079, %v2071
  %v2632 = vpack.c.b16 %v2080, %v2072
  %v2633 = vpack.c.b16 %v2081, %v2073
  %v2634 = vpack.c.b16 %v2082, %v2074
  %v2635 = vpack.c.b16 %v2083, %v2075
  %v2636 = vpack.c.b16 %v2084, %v2076
  %v2637 = vpack.c.b16 %v2093, %v2085
  %v2638 = vpack.c.b16 %v2094, %v2086
  %v2639 = vpack.c.b16 %v2095, %v2087
  %v2640 = vpack.c.b16 %v2096, %v2088
  %v2641 = vpack.c.b16 %v2097, %v2089
  %v2642 = vpack.c.b16 %v2098, %v2090
  %v2643 = vpack.c.b16 %v2099, %v2091
  %v2644 = vpack.c.b16 %v2100, %v2092
  %v2645 = vpack.c.b16 %v2109, %v2101
  %v2646 = vpack.c.b16 %v2110, %v2102
  %v2647 = vpack.c.b16 %v2111, %v2103
  %v2648 = vpack.c.b16 %v2112, %v2104
  %v2649 = vpack.c.b16 %v2113, %v2105
  %v2650 = vpack.c.b16 %v2114, %v2106
  %v2651 = vpack.c.b16 %v2115, %v2107
  %v2652 = vpack.c.b16 %v2116, %v2108
  %v2653 = vpack.c.b16 %v2125, %v2117
  %v2654 = vpack.c.b16 %v2126, %v2118
  %v2655 = vpack.c.b16 %v2127, %v2119
  %v2656 = vpack.c.b16 %v2128, %v2120
  %v2657 = vpack.c.b16 %v2129, %v2121
  %v2658 = vpack.c.b16 %v2130, %v2122
  %v2659 = vpack.c.b16 %v2131, %v2123
  %v2660 = vpack.c.b16 %v2132, %v2124
  %v2661 = vpack.c.b16 %v2141, %v2133
  %v2662 = vpack.c.b16 %v2142, %v2134
  %v2663 = vpack.c.b16 %v2143, %v2135
  %v2664 = vpack.c.b16 %v2144, %v2136
  %v2665 = vpack.c.b16 %v2145, %v2137
  %v2666 = vpack.c.b16 %v2146, %v2138
  %v2667 = vpack.c.b16 %v2147, %v2139
  %v2668 = vpack.c.b16 %v2148, %v2140
  %v2669 = vpack.c.b16 %v2157, %v2149
  %v2670 = vpack.c.b16 %v2158, %v2150
  %v2671 = vpack.c.b16 %v2159, %v2151
  %v2672 = vpack.c.b16 %v2160, %v2152
  %v2673 = vpack.c.b16 %v2161, %v2153
  %v2674 = vpack.c.b16 %v2162, %v2154
  %v2675 = vpack.c.b16 %v2163, %v2155
  %v2676 = vpack.c.b16 %v2164, %v2156
  %3189 = vmatprep.subr.bf16.mxu0 %v2166
  %3190 = vmatpush1.bf16.msra.mxu0 %v2165
  %3191 = vmatprep.subr.bf16.mxu0 %v2174
  %3192 = vmatpush1.bf16.msra.mxu0 %v2173
  %3193 = vmatprep.subr.bf16.mxu0 %v2182
  %3194 = vmatpush1.bf16.msra.mxu0 %v2181
  %3195 = vmatprep.subr.bf16.mxu0 %v2190
  %3196 = vmatpush1.bf16.msra.mxu0 %v2189
  %3197 = vmatprep.subr.bf16.mxu0 %v2198
  %3198 = vmatpush1.bf16.msra.mxu0 %v2197
  %3199 = vmatprep.subr.bf16.mxu0 %v2206
  %3200 = vmatpush1.bf16.msra.mxu0 %v2205
  %3201 = vmatprep.subr.bf16.mxu0 %v2214
  %3202 = vmatpush1.bf16.msra.mxu0 %v2213
  %3203 = vmatprep.subr.bf16.mxu0 %v2222
  %3204 = vmatpush1.bf16.msra.mxu0 %v2221
  %3205 = vmatprep.subr.bf16.mxu0 %v2230
  %3206 = vmatpush1.bf16.msra.mxu0 %v2229
  %3207 = vmatprep.subr.bf16.mxu0 %v2238
  %3208 = vmatpush1.bf16.msra.mxu0 %v2237
  %3209 = vmatprep.subr.bf16.mxu0 %v2246
  %3210 = vmatpush1.bf16.msra.mxu0 %v2245
  %3211 = vmatprep.subr.bf16.mxu0 %v2254
  %3212 = vmatpush1.bf16.msra.mxu0 %v2253
  %3213 = vmatprep.subr.bf16.mxu0 %v2262
  %3214 = vmatpush1.bf16.msra.mxu0 %v2261
  %3215 = vmatprep.subr.bf16.mxu0 %v2270
  %3216 = vmatpush1.bf16.msra.mxu0 %v2269
  %3217 = vmatprep.subr.bf16.mxu0 %v2278
  %3218 = vmatpush1.bf16.msra.mxu0 %v2277
  %3219 = vmatprep.subr.bf16.mxu0 %v2286
  %3220 = vmatpush1.bf16.msra.mxu0 %v2285
  %3221 = vmatprep.mubr.bf16.mxu0 %v614
  %3222 = vmatmul.mubr.bf16.gmra.mrb[0].mxu0 %v613
  %v3223 = vpop.f32.mrb[0].mxu0
  %v3224 = vadd.f32 %v552, %v3223
  %v3225 = vpop.f32.mrb[0].mxu0
  %v3226 = vadd.f32 %v556, %v3225
  %v3227 = vpop.f32.mrb[0].mxu0
  %v3228 = vadd.f32 %v552, %v3227
  %v3229 = vpop.f32.mrb[0].mxu0
  %v3230 = vadd.f32 %v556, %v3229
  %3231 = vdwg.mxu0
  %3232 = vmatprep.subr.bf16.mxu0 %v2294
  %3233 = vmatpush1.bf16.msra.mxu0 %v2293
  %3234 = vmatprep.subr.bf16.mxu0 %v2302
  %3235 = vmatpush1.bf16.msra.mxu0 %v2301
  %3236 = vmatprep.subr.bf16.mxu0 %v2310
  %3237 = vmatpush1.bf16.msra.mxu0 %v2309
  %3238 = vmatprep.subr.bf16.mxu0 %v2318
  %3239 = vmatpush1.bf16.msra.mxu0 %v2317
  %3240 = vmatprep.subr.bf16.mxu0 %v2326
  %3241 = vmatpush1.bf16.msra.mxu0 %v2325
  %3242 = vmatprep.subr.bf16.mxu0 %v2334
  %3243 = vmatpush1.bf16.msra.mxu0 %v2333
  %3244 = vmatprep.subr.bf16.mxu0 %v2342
  %3245 = vmatpush1.bf16.msra.mxu0 %v2341
  %3246 = vmatprep.subr.bf16.mxu0 %v2350
  %3247 = vmatpush1.bf16.msra.mxu0 %v2349
  %3248 = vmatprep.subr.bf16.mxu0 %v2358
  %3249 = vmatpush1.bf16.msra.mxu0 %v2357
  %3250 = vmatprep.subr.bf16.mxu0 %v2366
  %3251 = vmatpush1.bf16.msra.mxu0 %v2365
  %3252 = vmatprep.subr.bf16.mxu0 %v2374
  %3253 = vmatpush1.bf16.msra.mxu0 %v2373
  %3254 = vmatprep.subr.bf16.mxu0 %v2382
  %3255 = vmatpush1.bf16.msra.mxu0 %v2381
  %3256 = vmatprep.subr.bf16.mxu0 %v2390
  %3257 = vmatpush1.bf16.msra.mxu0 %v2389
  %3258 = vmatprep.subr.bf16.mxu0 %v2398
  %3259 = vmatpush1.bf16.msra.mxu0 %v2397
  %3260 = vmatprep.subr.bf16.mxu0 %v2406
  %3261 = vmatpush1.bf16.msra.mxu0 %v2405
  %3262 = vmatprep.subr.bf16.mxu0 %v2414
  %3263 = vmatpush1.bf16.msra.mxu0 %v2413
  %3264 = vmatprep.mubr.bf16.mxu0 %v616
  %3265 = vmatmul.mubr.bf16.gmra.mrb[0].mxu0 %v615
  %v3266 = vpop.f32.mrb[0].mxu0
  %v3267 = vadd.f32 %v3224, %v3266
  %v3268 = vpop.f32.mrb[0].mxu0
  %v3269 = vadd.f32 %v3226, %v3268
  %v3270 = vpop.f32.mrb[0].mxu0
  %v3271 = vadd.f32 %v3228, %v3270
  %v3272 = vpop.f32.mrb[0].mxu0
  %v3273 = vadd.f32 %v3230, %v3272
  %3274 = vdwg.mxu0
  %3275 = vmatprep.subr.bf16.mxu0 %v2422
  %3276 = vmatpush1.bf16.msra.mxu0 %v2421
  %3277 = vmatprep.subr.bf16.mxu0 %v2430
  %3278 = vmatpush1.bf16.msra.mxu0 %v2429
  %3279 = vmatprep.subr.bf16.mxu0 %v2438
  %3280 = vmatpush1.bf16.msra.mxu0 %v2437
  %3281 = vmatprep.subr.bf16.mxu0 %v2446
  %3282 = vmatpush1.bf16.msra.mxu0 %v2445
  %3283 = vmatprep.subr.bf16.mxu0 %v2454
  %3284 = vmatpush1.bf16.msra.mxu0 %v2453
  %3285 = vmatprep.subr.bf16.mxu0 %v2462
  %3286 = vmatpush1.bf16.msra.mxu0 %v2461
  %3287 = vmatprep.subr.bf16.mxu0 %v2470
  %3288 = vmatpush1.bf16.msra.mxu0 %v2469
  %3289 = vmatprep.subr.bf16.mxu0 %v2478
  %3290 = vmatpush1.bf16.msra.mxu0 %v2477
  %3291 = vmatprep.subr.bf16.mxu0 %v2486
  %3292 = vmatpush1.bf16.msra.mxu0 %v2485
  %3293 = vmatprep.subr.bf16.mxu0 %v2494
  %3294 = vmatpush1.bf16.msra.mxu0 %v2493
  %3295 = vmatprep.subr.bf16.mxu0 %v2502
  %3296 = vmatpush1.bf16.msra.mxu0 %v2501
  %3297 = vmatprep.subr.bf16.mxu0 %v2510
  %3298 = vmatpush1.bf16.msra.mxu0 %v2509
  %3299 = vmatprep.subr.bf16.mxu0 %v2518
  %3300 = vmatpush1.bf16.msra.mxu0 %v2517
  %3301 = vmatprep.subr.bf16.mxu0 %v2526
  %3302 = vmatpush1.bf16.msra.mxu0 %v2525
  %3303 = vmatprep.subr.bf16.mxu0 %v2534
  %3304 = vmatpush1.bf16.msra.mxu0 %v2533
  %3305 = vmatprep.subr.bf16.mxu0 %v2542
  %3306 = vmatpush1.bf16.msra.mxu0 %v2541
  %3307 = vmatprep.mubr.bf16.mxu0 %v618
  %3308 = vmatmul.mubr.bf16.gmra.mrb[0].mxu0 %v617
  %v3309 = vpop.f32.mrb[0].mxu0
  %v3310 = vadd.f32 %v3267, %v3309
  %v3311 = vpop.f32.mrb[0].mxu0
  %v3312 = vadd.f32 %v3269, %v3311
  %v3313 = vpop.f32.mrb[0].mxu0
  %v3314 = vadd.f32 %v3271, %v3313
  %v3315 = vpop.f32.mrb[0].mxu0
  %v3316 = vadd.f32 %v3273, %v3315
  %3317 = vdwg.mxu0
  %3318 = vmatprep.subr.bf16.mxu0 %v2550
  %3319 = vmatpush1.bf16.msra.mxu0 %v2549
  %3320 = vmatprep.subr.bf16.mxu0 %v2558
  %3321 = vmatpush1.bf16.msra.mxu0 %v2557
  %3322 = vmatprep.subr.bf16.mxu0 %v2566
  %3323 = vmatpush1.bf16.msra.mxu0 %v2565
  %3324 = vmatprep.subr.bf16.mxu0 %v2574
  %3325 = vmatpush1.bf16.msra.mxu0 %v2573
  %3326 = vmatprep.subr.bf16.mxu0 %v2582
  %3327 = vmatpush1.bf16.msra.mxu0 %v2581
  %3328 = vmatprep.subr.bf16.mxu0 %v2590
  %3329 = vmatpush1.bf16.msra.mxu0 %v2589
  %3330 = vmatprep.subr.bf16.mxu0 %v2598
  %3331 = vmatpush1.bf16.msra.mxu0 %v2597
  %3332 = vmatprep.subr.bf16.mxu0 %v2606
  %3333 = vmatpush1.bf16.msra.mxu0 %v2605
  %3334 = vmatprep.subr.bf16.mxu0 %v2614
  %3335 = vmatpush1.bf16.msra.mxu0 %v2613
  %3336 = vmatprep.subr.bf16.mxu0 %v2622
  %3337 = vmatpush1.bf16.msra.mxu0 %v2621
  %3338 = vmatprep.subr.bf16.mxu0 %v2630
  %3339 = vmatpush1.bf16.msra.mxu0 %v2629
  %3340 = vmatprep.subr.bf16.mxu0 %v2638
  %3341 = vmatpush1.bf16.msra.mxu0 %v2637
  %3342 = vmatprep.subr.bf16.mxu0 %v2646
  %3343 = vmatpush1.bf16.msra.mxu0 %v2645
  %3344 = vmatprep.subr.bf16.mxu0 %v2654
  %3345 = vmatpush1.bf16.msra.mxu0 %v2653
  %3346 = vmatprep.subr.bf16.mxu0 %v2662
  %3347 = vmatpush1.bf16.msra.mxu0 %v2661
  %3348 = vmatprep.subr.bf16.mxu0 %v2670
  %3349 = vmatpush1.bf16.msra.mxu0 %v2669
  %3350 = vmatprep.mubr.bf16.mxu0 %v620
  %3351 = vmatmul.mubr.bf16.gmra.mrb[0].mxu0 %v619
  %v3352 = vpop.f32.mrb[0].mxu0
  %v3353 = vadd.f32 %v3310, %v3352
  %v3354 = vpop.f32.mrb[0].mxu0
  %v3355 = vadd.f32 %v3312, %v3354
  %v3356 = vpop.f32.mrb[0].mxu0
  %v3357 = vadd.f32 %v3314, %v3356
  %v3358 = vpop.f32.mrb[0].mxu0
  %v3359 = vadd.f32 %v3316, %v3358
  %3360 = vdwg.mxu0
  %3361 = vmatprep.subr.bf16.mxu0 %v2168
  %3362 = vmatpush1.bf16.msra.mxu0 %v2167
  %3363 = vmatprep.subr.bf16.mxu0 %v2176
  %3364 = vmatpush1.bf16.msra.mxu0 %v2175
  %3365 = vmatprep.subr.bf16.mxu0 %v2184
  %3366 = vmatpush1.bf16.msra.mxu0 %v2183
  %3367 = vmatprep.subr.bf16.mxu0 %v2192
  %3368 = vmatpush1.bf16.msra.mxu0 %v2191
  %3369 = vmatprep.subr.bf16.mxu0 %v2200
  %3370 = vmatpush1.bf16.msra.mxu0 %v2199
  %3371 = vmatprep.subr.bf16.mxu0 %v2208
  %3372 = vmatpush1.bf16.msra.mxu0 %v2207
  %3373 = vmatprep.subr.bf16.mxu0 %v2216
  %3374 = vmatpush1.bf16.msra.mxu0 %v2215
  %3375 = vmatprep.subr.bf16.mxu0 %v2224
  %3376 = vmatpush1.bf16.msra.mxu0 %v2223
  %3377 = vmatprep.subr.bf16.mxu0 %v2232
  %3378 = vmatpush1.bf16.msra.mxu0 %v2231
  %3379 = vmatprep.subr.bf16.mxu0 %v2240
  %3380 = vmatpush1.bf16.msra.mxu0 %v2239
  %3381 = vmatprep.subr.bf16.mxu0 %v2248
  %3382 = vmatpush1.bf16.msra.mxu0 %v2247
  %3383 = vmatprep.subr.bf16.mxu0 %v2256
  %3384 = vmatpush1.bf16.msra.mxu0 %v2255
  %3385 = vmatprep.subr.bf16.mxu0 %v2264
  %3386 = vmatpush1.bf16.msra.mxu0 %v2263
  %3387 = vmatprep.subr.bf16.mxu0 %v2272
  %3388 = vmatpush1.bf16.msra.mxu0 %v2271
  %3389 = vmatprep.subr.bf16.mxu0 %v2280
  %3390 = vmatpush1.bf16.msra.mxu0 %v2279
  %3391 = vmatprep.subr.bf16.mxu0 %v2288
  %3392 = vmatpush1.bf16.msra.mxu0 %v2287
  %3393 = vmatprep.mubr.bf16.mxu0 %v614
  %3394 = vmatmul.mubr.bf16.gmra.mrb[0].mxu0 %v613
  %v3395 = vpop.f32.mrb[0].mxu0
  %v3396 = vadd.f32 %v560, %v3395
  %v3397 = vpop.f32.mrb[0].mxu0
  %v3398 = vadd.f32 %v564, %v3397
  %v3399 = vpop.f32.mrb[0].mxu0
  %v3400 = vadd.f32 %v560, %v3399
  %v3401 = vpop.f32.mrb[0].mxu0
  %v3402 = vadd.f32 %v564, %v3401
  %3403 = vdwg.mxu0
  %3404 = vmatprep.subr.bf16.mxu0 %v2296
  %3405 = vmatpush1.bf16.msra.mxu0 %v2295
  %3406 = vmatprep.subr.bf16.mxu0 %v2304
  %3407 = vmatpush1.bf16.msra.mxu0 %v2303
  %3408 = vmatprep.subr.bf16.mxu0 %v2312
  %3409 = vmatpush1.bf16.msra.mxu0 %v2311
  %3410 = vmatprep.subr.bf16.mxu0 %v2320
  %3411 = vmatpush1.bf16.msra.mxu0 %v2319
  %3412 = vmatprep.subr.bf16.mxu0 %v2328
  %3413 = vmatpush1.bf16.msra.mxu0 %v2327
  %3414 = vmatprep.subr.bf16.mxu0 %v2336
  %3415 = vmatpush1.bf16.msra.mxu0 %v2335
  %3416 = vmatprep.subr.bf16.mxu0 %v2344
  %3417 = vmatpush1.bf16.msra.mxu0 %v2343
  %3418 = vmatprep.subr.bf16.mxu0 %v2352
  %3419 = vmatpush1.bf16.msra.mxu0 %v2351
  %3420 = vmatprep.subr.bf16.mxu0 %v2360
  %3421 = vmatpush1.bf16.msra.mxu0 %v2359
  %3422 = vmatprep.subr.bf16.mxu0 %v2368
  %3423 = vmatpush1.bf16.msra.mxu0 %v2367
  %3424 = vmatprep.subr.bf16.mxu0 %v2376
  %3425 = vmatpush1.bf16.msra.mxu0 %v2375
  %3426 = vmatprep.subr.bf16.mxu0 %v2384
  %3427 = vmatpush1.bf16.msra.mxu0 %v2383
  %3428 = vmatprep.subr.bf16.mxu0 %v2392
  %3429 = vmatpush1.bf16.msra.mxu0 %v2391
  %3430 = vmatprep.subr.bf16.mxu0 %v2400
  %3431 = vmatpush1.bf16.msra.mxu0 %v2399
  %3432 = vmatprep.subr.bf16.mxu0 %v2408
  %3433 = vmatpush1.bf16.msra.mxu0 %v2407
  %3434 = vmatprep.subr.bf16.mxu0 %v2416
  %3435 = vmatpush1.bf16.msra.mxu0 %v2415
  %3436 = vmatprep.mubr.bf16.mxu0 %v616
  %3437 = vmatmul.mubr.bf16.gmra.mrb[0].mxu0 %v615
  %v3438 = vpop.f32.mrb[0].mxu0
  %v3439 = vadd.f32 %v3396, %v3438
  %v3440 = vpop.f32.mrb[0].mxu0
  %v3441 = vadd.f32 %v3398, %v3440
  %v3442 = vpop.f32.mrb[0].mxu0
  %v3443 = vadd.f32 %v3400, %v3442
  %v3444 = vpop.f32.mrb[0].mxu0
  %v3445 = vadd.f32 %v3402, %v3444
  %3446 = vdwg.mxu0
  %3447 = vmatprep.subr.bf16.mxu0 %v2424
  %3448 = vmatpush1.bf16.msra.mxu0 %v2423
  %3449 = vmatprep.subr.bf16.mxu0 %v2432
  %3450 = vmatpush1.bf16.msra.mxu0 %v2431
  %3451 = vmatprep.subr.bf16.mxu0 %v2440
  %3452 = vmatpush1.bf16.msra.mxu0 %v2439
  %3453 = vmatprep.subr.bf16.mxu0 %v2448
  %3454 = vmatpush1.bf16.msra.mxu0 %v2447
  %3455 = vmatprep.subr.bf16.mxu0 %v2456
  %3456 = vmatpush1.bf16.msra.mxu0 %v2455
  %3457 = vmatprep.subr.bf16.mxu0 %v2464
  %3458 = vmatpush1.bf16.msra.mxu0 %v2463
  %3459 = vmatprep.subr.bf16.mxu0 %v2472
  %3460 = vmatpush1.bf16.msra.mxu0 %v2471
  %3461 = vmatprep.subr.bf16.mxu0 %v2480
  %3462 = vmatpush1.bf16.msra.mxu0 %v2479
  %3463 = vmatprep.subr.bf16.mxu0 %v2488
  %3464 = vmatpush1.bf16.msra.mxu0 %v2487
  %3465 = vmatprep.subr.bf16.mxu0 %v2496
  %3466 = vmatpush1.bf16.msra.mxu0 %v2495
  %3467 = vmatprep.subr.bf16.mxu0 %v2504
  %3468 = vmatpush1.bf16.msra.mxu0 %v2503
  %3469 = vmatprep.subr.bf16.mxu0 %v2512
  %3470 = vmatpush1.bf16.msra.mxu0 %v2511
  %3471 = vmatprep.subr.bf16.mxu0 %v2520
  %3472 = vmatpush1.bf16.msra.mxu0 %v2519
  %3473 = vmatprep.subr.bf16.mxu0 %v2528
  %3474 = vmatpush1.bf16.msra.mxu0 %v2527
  %3475 = vmatprep.subr.bf16.mxu0 %v2536
  %3476 = vmatpush1.bf16.msra.mxu0 %v2535
  %3477 = vmatprep.subr.bf16.mxu0 %v2544
  %3478 = vmatpush1.bf16.msra.mxu0 %v2543
  %3479 = vmatprep.mubr.bf16.mxu0 %v618
  %3480 = vmatmul.mubr.bf16.gmra.mrb[0].mxu0 %v617
  %v3481 = vpop.f32.mrb[0].mxu0
  %v3482 = vadd.f32 %v3439, %v3481
  %v3483 = vpop.f32.mrb[0].mxu0
  %v3484 = vadd.f32 %v3441, %v3483
  %v3485 = vpop.f32.mrb[0].mxu0
  %v3486 = vadd.f32 %v3443, %v3485
  %v3487 = vpop.f32.mrb[0].mxu0
  %v3488 = vadd.f32 %v3445, %v3487
  %3489 = vdwg.mxu0
  %3490 = vmatprep.subr.bf16.mxu0 %v2552
  %3491 = vmatpush1.bf16.msra.mxu0 %v2551
  %3492 = vmatprep.subr.bf16.mxu0 %v2560
  %3493 = vmatpush1.bf16.msra.mxu0 %v2559
  %3494 = vmatprep.subr.bf16.mxu0 %v2568
  %3495 = vmatpush1.bf16.msra.mxu0 %v2567
  %3496 = vmatprep.subr.bf16.mxu0 %v2576
  %3497 = vmatpush1.bf16.msra.mxu0 %v2575
  %3498 = vmatprep.subr.bf16.mxu0 %v2584
  %3499 = vmatpush1.bf16.msra.mxu0 %v2583
  %3500 = vmatprep.subr.bf16.mxu0 %v2592
  %3501 = vmatpush1.bf16.msra.mxu0 %v2591
  %3502 = vmatprep.subr.bf16.mxu0 %v2600
  %3503 = vmatpush1.bf16.msra.mxu0 %v2599
  %3504 = vmatprep.subr.bf16.mxu0 %v2608
  %3505 = vmatpush1.bf16.msra.mxu0 %v2607
  %3506 = vmatprep.subr.bf16.mxu0 %v2616
  %3507 = vmatpush1.bf16.msra.mxu0 %v2615
  %3508 = vmatprep.subr.bf16.mxu0 %v2624
  %3509 = vmatpush1.bf16.msra.mxu0 %v2623
  %3510 = vmatprep.subr.bf16.mxu0 %v2632
  %3511 = vmatpush1.bf16.msra.mxu0 %v2631
  %3512 = vmatprep.subr.bf16.mxu0 %v2640
  %3513 = vmatpush1.bf16.msra.mxu0 %v2639
  %3514 = vmatprep.subr.bf16.mxu0 %v2648
  %3515 = vmatpush1.bf16.msra.mxu0 %v2647
  %3516 = vmatprep.subr.bf16.mxu0 %v2656
  %3517 = vmatpush1.bf16.msra.mxu0 %v2655
  %3518 = vmatprep.subr.bf16.mxu0 %v2664
  %3519 = vmatpush1.bf16.msra.mxu0 %v2663
  %3520 = vmatprep.subr.bf16.mxu0 %v2672
  %3521 = vmatpush1.bf16.msra.mxu0 %v2671
  %3522 = vmatprep.mubr.bf16.mxu0 %v620
  %3523 = vmatmul.mubr.bf16.gmra.mrb[0].mxu0 %v619
  %v3524 = vpop.f32.mrb[0].mxu0
  %v3525 = vadd.f32 %v3482, %v3524
  %v3526 = vpop.f32.mrb[0].mxu0
  %v3527 = vadd.f32 %v3484, %v3526
  %v3528 = vpop.f32.mrb[0].mxu0
  %v3529 = vadd.f32 %v3486, %v3528
  %v3530 = vpop.f32.mrb[0].mxu0
  %v3531 = vadd.f32 %v3488, %v3530
  %3532 = vdwg.mxu0
  %3533 = vmatprep.subr.bf16.mxu0 %v2170
  %3534 = vmatpush1.bf16.msra.mxu0 %v2169
  %3535 = vmatprep.subr.bf16.mxu0 %v2178
  %3536 = vmatpush1.bf16.msra.mxu0 %v2177
  %3537 = vmatprep.subr.bf16.mxu0 %v2186
  %3538 = vmatpush1.bf16.msra.mxu0 %v2185
  %3539 = vmatprep.subr.bf16.mxu0 %v2194
  %3540 = vmatpush1.bf16.msra.mxu0 %v2193
  %3541 = vmatprep.subr.bf16.mxu0 %v2202
  %3542 = vmatpush1.bf16.msra.mxu0 %v2201
  %3543 = vmatprep.subr.bf16.mxu0 %v2210
  %3544 = vmatpush1.bf16.msra.mxu0 %v2209
  %3545 = vmatprep.subr.bf16.mxu0 %v2218
  %3546 = vmatpush1.bf16.msra.mxu0 %v2217
  %3547 = vmatprep.subr.bf16.mxu0 %v2226
  %3548 = vmatpush1.bf16.msra.mxu0 %v2225
  %3549 = vmatprep.subr.bf16.mxu0 %v2234
  %3550 = vmatpush1.bf16.msra.mxu0 %v2233
  %3551 = vmatprep.subr.bf16.mxu0 %v2242
  %3552 = vmatpush1.bf16.msra.mxu0 %v2241
  %3553 = vmatprep.subr.bf16.mxu0 %v2250
  %3554 = vmatpush1.bf16.msra.mxu0 %v2249
  %3555 = vmatprep.subr.bf16.mxu0 %v2258
  %3556 = vmatpush1.bf16.msra.mxu0 %v2257
  %3557 = vmatprep.subr.bf16.mxu0 %v2266
  %3558 = vmatpush1.bf16.msra.mxu0 %v2265
  %3559 = vmatprep.subr.bf16.mxu0 %v2274
  %3560 = vmatpush1.bf16.msra.mxu0 %v2273
  %3561 = vmatprep.subr.bf16.mxu0 %v2282
  %3562 = vmatpush1.bf16.msra.mxu0 %v2281
  %3563 = vmatprep.subr.bf16.mxu0 %v2290
  %3564 = vmatpush1.bf16.msra.mxu0 %v2289
  %3565 = vmatprep.mubr.bf16.mxu0 %v614
  %3566 = vmatmul.mubr.bf16.gmra.mrb[0].mxu0 %v613
  %v3567 = vpop.f32.mrb[0].mxu0
  %v3568 = vadd.f32 %v568, %v3567
  %v3569 = vpop.f32.mrb[0].mxu0
  %v3570 = vadd.f32 %v572, %v3569
  %v3571 = vpop.f32.mrb[0].mxu0
  %v3572 = vadd.f32 %v568, %v3571
  %v3573 = vpop.f32.mrb[0].mxu0
  %v3574 = vadd.f32 %v572, %v3573
  %3575 = vdwg.mxu0
  %3576 = vmatprep.subr.bf16.mxu0 %v2298
  %3577 = vmatpush1.bf16.msra.mxu0 %v2297
  %3578 = vmatprep.subr.bf16.mxu0 %v2306
  %3579 = vmatpush1.bf16.msra.mxu0 %v2305
  %3580 = vmatprep.subr.bf16.mxu0 %v2314
  %3581 = vmatpush1.bf16.msra.mxu0 %v2313
  %3582 = vmatprep.subr.bf16.mxu0 %v2322
  %3583 = vmatpush1.bf16.msra.mxu0 %v2321
  %3584 = vmatprep.subr.bf16.mxu0 %v2330
  %3585 = vmatpush1.bf16.msra.mxu0 %v2329
  %3586 = vmatprep.subr.bf16.mxu0 %v2338
  %3587 = vmatpush1.bf16.msra.mxu0 %v2337
  %3588 = vmatprep.subr.bf16.mxu0 %v2346
  %3589 = vmatpush1.bf16.msra.mxu0 %v2345
  %3590 = vmatprep.subr.bf16.mxu0 %v2354
  %3591 = vmatpush1.bf16.msra.mxu0 %v2353
  %3592 = vmatprep.subr.bf16.mxu0 %v2362
  %3593 = vmatpush1.bf16.msra.mxu0 %v2361
  %3594 = vmatprep.subr.bf16.mxu0 %v2370
  %3595 = vmatpush1.bf16.msra.mxu0 %v2369
  %3596 = vmatprep.subr.bf16.mxu0 %v2378
  %3597 = vmatpush1.bf16.msra.mxu0 %v2377
  %3598 = vmatprep.subr.bf16.mxu0 %v2386
  %3599 = vmatpush1.bf16.msra.mxu0 %v2385
  %3600 = vmatprep.subr.bf16.mxu0 %v2394
  %3601 = vmatpush1.bf16.msra.mxu0 %v2393
  %3602 = vmatprep.subr.bf16.mxu0 %v2402
  %3603 = vmatpush1.bf16.msra.mxu0 %v2401
  %3604 = vmatprep.subr.bf16.mxu0 %v2410
  %3605 = vmatpush1.bf16.msra.mxu0 %v2409
  %3606 = vmatprep.subr.bf16.mxu0 %v2418
  %3607 = vmatpush1.bf16.msra.mxu0 %v2417
  %3608 = vmatprep.mubr.bf16.mxu0 %v616
  %3609 = vmatmul.mubr.bf16.gmra.mrb[0].mxu0 %v615
  %v3610 = vpop.f32.mrb[0].mxu0
  %v3611 = vadd.f32 %v3568, %v3610
  %v3612 = vpop.f32.mrb[0].mxu0
  %v3613 = vadd.f32 %v3570, %v3612
  %v3614 = vpop.f32.mrb[0].mxu0
  %v3615 = vadd.f32 %v3572, %v3614
  %v3616 = vpop.f32.mrb[0].mxu0
  %v3617 = vadd.f32 %v3574, %v3616
  %3618 = vdwg.mxu0
  %3619 = vmatprep.subr.bf16.mxu0 %v2426
  %3620 = vmatpush1.bf16.msra.mxu0 %v2425
  %3621 = vmatprep.subr.bf16.mxu0 %v2434
  %3622 = vmatpush1.bf16.msra.mxu0 %v2433
  %3623 = vmatprep.subr.bf16.mxu0 %v2442
  %3624 = vmatpush1.bf16.msra.mxu0 %v2441
  %3625 = vmatprep.subr.bf16.mxu0 %v2450
  %3626 = vmatpush1.bf16.msra.mxu0 %v2449
  %3627 = vmatprep.subr.bf16.mxu0 %v2458
  %3628 = vmatpush1.bf16.msra.mxu0 %v2457
  %3629 = vmatprep.subr.bf16.mxu0 %v2466
  %3630 = vmatpush1.bf16.msra.mxu0 %v2465
  %3631 = vmatprep.subr.bf16.mxu0 %v2474
  %3632 = vmatpush1.bf16.msra.mxu0 %v2473
  %3633 = vmatprep.subr.bf16.mxu0 %v2482
  %3634 = vmatpush1.bf16.msra.mxu0 %v2481
  %3635 = vmatprep.subr.bf16.mxu0 %v2490
  %3636 = vmatpush1.bf16.msra.mxu0 %v2489
  %3637 = vmatprep.subr.bf16.mxu0 %v2498
  %3638 = vmatpush1.bf16.msra.mxu0 %v2497
  %3639 = vmatprep.subr.bf16.mxu0 %v2506
  %3640 = vmatpush1.bf16.msra.mxu0 %v2505
  %3641 = vmatprep.subr.bf16.mxu0 %v2514
  %3642 = vmatpush1.bf16.msra.mxu0 %v2513
  %3643 = vmatprep.subr.bf16.mxu0 %v2522
  %3644 = vmatpush1.bf16.msra.mxu0 %v2521
  %3645 = vmatprep.subr.bf16.mxu0 %v2530
  %3646 = vmatpush1.bf16.msra.mxu0 %v2529
  %3647 = vmatprep.subr.bf16.mxu0 %v2538
  %3648 = vmatpush1.bf16.msra.mxu0 %v2537
  %3649 = vmatprep.subr.bf16.mxu0 %v2546
  %3650 = vmatpush1.bf16.msra.mxu0 %v2545
  %3651 = vmatprep.mubr.bf16.mxu0 %v618
  %3652 = vmatmul.mubr.bf16.gmra.mrb[0].mxu0 %v617
  %v3653 = vpop.f32.mrb[0].mxu0
  %v3654 = vadd.f32 %v3611, %v3653
  %v3655 = vpop.f32.mrb[0].mxu0
  %v3656 = vadd.f32 %v3613, %v3655
  %v3657 = vpop.f32.mrb[0].mxu0
  %v3658 = vadd.f32 %v3615, %v3657
  %v3659 = vpop.f32.mrb[0].mxu0
  %v3660 = vadd.f32 %v3617, %v3659
  %3661 = vdwg.mxu0
  %3662 = vmatprep.subr.bf16.mxu0 %v2554
  %3663 = vmatpush1.bf16.msra.mxu0 %v2553
  %3664 = vmatprep.subr.bf16.mxu0 %v2562
  %3665 = vmatpush1.bf16.msra.mxu0 %v2561
  %3666 = vmatprep.subr.bf16.mxu0 %v2570
  %3667 = vmatpush1.bf16.msra.mxu0 %v2569
  %3668 = vmatprep.subr.bf16.mxu0 %v2578
  %3669 = vmatpush1.bf16.msra.mxu0 %v2577
  %3670 = vmatprep.subr.bf16.mxu0 %v2586
  %3671 = vmatpush1.bf16.msra.mxu0 %v2585
  %3672 = vmatprep.subr.bf16.mxu0 %v2594
  %3673 = vmatpush1.bf16.msra.mxu0 %v2593
  %3674 = vmatprep.subr.bf16.mxu0 %v2602
  %3675 = vmatpush1.bf16.msra.mxu0 %v2601
  %3676 = vmatprep.subr.bf16.mxu0 %v2610
  %3677 = vmatpush1.bf16.msra.mxu0 %v2609
  %3678 = vmatprep.subr.bf16.mxu0 %v2618
  %3679 = vmatpush1.bf16.msra.mxu0 %v2617
  %3680 = vmatprep.subr.bf16.mxu0 %v2626
  %3681 = vmatpush1.bf16.msra.mxu0 %v2625
  %3682 = vmatprep.subr.bf16.mxu0 %v2634
  %3683 = vmatpush1.bf16.msra.mxu0 %v2633
  %3684 = vmatprep.subr.bf16.mxu0 %v2642
  %3685 = vmatpush1.bf16.msra.mxu0 %v2641
  %3686 = vmatprep.subr.bf16.mxu0 %v2650
  %3687 = vmatpush1.bf16.msra.mxu0 %v2649
  %3688 = vmatprep.subr.bf16.mxu0 %v2658
  %3689 = vmatpush1.bf16.msra.mxu0 %v2657
  %3690 = vmatprep.subr.bf16.mxu0 %v2666
  %3691 = vmatpush1.bf16.msra.mxu0 %v2665
  %3692 = vmatprep.subr.bf16.mxu0 %v2674
  %3693 = vmatpush1.bf16.msra.mxu0 %v2673
  %3694 = vmatprep.mubr.bf16.mxu0 %v620
  %3695 = vmatmul.mubr.bf16.gmra.mrb[0].mxu0 %v619
  %v3696 = vpop.f32.mrb[0].mxu0
  %v3697 = vadd.f32 %v3654, %v3696
  %v3698 = vpop.f32.mrb[0].mxu0
  %v3699 = vadd.f32 %v3656, %v3698
  %v3700 = vpop.f32.mrb[0].mxu0
  %v3701 = vadd.f32 %v3658, %v3700
  %v3702 = vpop.f32.mrb[0].mxu0
  %v3703 = vadd.f32 %v3660, %v3702
  %3704 = vdwg.mxu0
  %3705 = vmatprep.subr.bf16.mxu0 %v2172
  %3706 = vmatpush1.bf16.msra.mxu0 %v2171
  %3707 = vmatprep.subr.bf16.mxu0 %v2180
  %3708 = vmatpush1.bf16.msra.mxu0 %v2179
  %3709 = vmatprep.subr.bf16.mxu0 %v2188
  %3710 = vmatpush1.bf16.msra.mxu0 %v2187
  %3711 = vmatprep.subr.bf16.mxu0 %v2196
  %3712 = vmatpush1.bf16.msra.mxu0 %v2195
  %3713 = vmatprep.subr.bf16.mxu0 %v2204
  %3714 = vmatpush1.bf16.msra.mxu0 %v2203
  %3715 = vmatprep.subr.bf16.mxu0 %v2212
  %3716 = vmatpush1.bf16.msra.mxu0 %v2211
  %3717 = vmatprep.subr.bf16.mxu0 %v2220
  %3718 = vmatpush1.bf16.msra.mxu0 %v2219
  %3719 = vmatprep.subr.bf16.mxu0 %v2228
  %3720 = vmatpush1.bf16.msra.mxu0 %v2227
  %3721 = vmatprep.subr.bf16.mxu0 %v2236
  %3722 = vmatpush1.bf16.msra.mxu0 %v2235
  %3723 = vmatprep.subr.bf16.mxu0 %v2244
  %3724 = vmatpush1.bf16.msra.mxu0 %v2243
  %3725 = vmatprep.subr.bf16.mxu0 %v2252
  %3726 = vmatpush1.bf16.msra.mxu0 %v2251
  %3727 = vmatprep.subr.bf16.mxu0 %v2260
  %3728 = vmatpush1.bf16.msra.mxu0 %v2259
  %3729 = vmatprep.subr.bf16.mxu0 %v2268
  %3730 = vmatpush1.bf16.msra.mxu0 %v2267
  %3731 = vmatprep.subr.bf16.mxu0 %v2276
  %3732 = vmatpush1.bf16.msra.mxu0 %v2275
  %3733 = vmatprep.subr.bf16.mxu0 %v2284
  %3734 = vmatpush1.bf16.msra.mxu0 %v2283
  %3735 = vmatprep.subr.bf16.mxu0 %v2292
  %3736 = vmatpush1.bf16.msra.mxu0 %v2291
  %3737 = vmatprep.mubr.bf16.mxu0 %v614
  %3738 = vmatmul.mubr.bf16.gmra.mrb[0].mxu0 %v613
  %v3739 = vpop.f32.mrb[0].mxu0
  %v3740 = vadd.f32 %v576, %v3739
  %v3741 = vpop.f32.mrb[0].mxu0
  %v3742 = vadd.f32 %v580, %v3741
  %v3743 = vpop.f32.mrb[0].mxu0
  %v3744 = vadd.f32 %v576, %v3743
  %v3745 = vpop.f32.mrb[0].mxu0
  %v3746 = vadd.f32 %v580, %v3745
  %3747 = vdwg.mxu0
  %3748 = vmatprep.subr.bf16.mxu0 %v2300
  %3749 = vmatpush1.bf16.msra.mxu0 %v2299
  %3750 = vmatprep.subr.bf16.mxu0 %v2308
  %3751 = vmatpush1.bf16.msra.mxu0 %v2307
  %3752 = vmatprep.subr.bf16.mxu0 %v2316
  %3753 = vmatpush1.bf16.msra.mxu0 %v2315
  %3754 = vmatprep.subr.bf16.mxu0 %v2324
  %3755 = vmatpush1.bf16.msra.mxu0 %v2323
  %3756 = vmatprep.subr.bf16.mxu0 %v2332
  %3757 = vmatpush1.bf16.msra.mxu0 %v2331
  %3758 = vmatprep.subr.bf16.mxu0 %v2340
  %3759 = vmatpush1.bf16.msra.mxu0 %v2339
  %3760 = vmatprep.subr.bf16.mxu0 %v2348
  %3761 = vmatpush1.bf16.msra.mxu0 %v2347
  %3762 = vmatprep.subr.bf16.mxu0 %v2356
  %3763 = vmatpush1.bf16.msra.mxu0 %v2355
  %3764 = vmatprep.subr.bf16.mxu0 %v2364
  %3765 = vmatpush1.bf16.msra.mxu0 %v2363
  %3766 = vmatprep.subr.bf16.mxu0 %v2372
  %3767 = vmatpush1.bf16.msra.mxu0 %v2371
  %3768 = vmatprep.subr.bf16.mxu0 %v2380
  %3769 = vmatpush1.bf16.msra.mxu0 %v2379
  %3770 = vmatprep.subr.bf16.mxu0 %v2388
  %3771 = vmatpush1.bf16.msra.mxu0 %v2387
  %3772 = vmatprep.subr.bf16.mxu0 %v2396
  %3773 = vmatpush1.bf16.msra.mxu0 %v2395
  %3774 = vmatprep.subr.bf16.mxu0 %v2404
  %3775 = vmatpush1.bf16.msra.mxu0 %v2403
  %3776 = vmatprep.subr.bf16.mxu0 %v2412
  %3777 = vmatpush1.bf16.msra.mxu0 %v2411
  %3778 = vmatprep.subr.bf16.mxu0 %v2420
  %3779 = vmatpush1.bf16.msra.mxu0 %v2419
  %3780 = vmatprep.mubr.bf16.mxu0 %v616
  %3781 = vmatmul.mubr.bf16.gmra.mrb[0].mxu0 %v615
  %v3782 = vpop.f32.mrb[0].mxu0
  %v3783 = vadd.f32 %v3740, %v3782
  %v3784 = vpop.f32.mrb[0].mxu0
  %v3785 = vadd.f32 %v3742, %v3784
  %v3786 = vpop.f32.mrb[0].mxu0
  %v3787 = vadd.f32 %v3744, %v3786
  %v3788 = vpop.f32.mrb[0].mxu0
  %v3789 = vadd.f32 %v3746, %v3788
  %3790 = vdwg.mxu0
  %3791 = vmatprep.subr.bf16.mxu0 %v2428
  %3792 = vmatpush1.bf16.msra.mxu0 %v2427
  %3793 = vmatprep.subr.bf16.mxu0 %v2436
  %3794 = vmatpush1.bf16.msra.mxu0 %v2435
  %3795 = vmatprep.subr.bf16.mxu0 %v2444
  %3796 = vmatpush1.bf16.msra.mxu0 %v2443
  %3797 = vmatprep.subr.bf16.mxu0 %v2452
  %3798 = vmatpush1.bf16.msra.mxu0 %v2451
  %3799 = vmatprep.subr.bf16.mxu0 %v2460
  %3800 = vmatpush1.bf16.msra.mxu0 %v2459
  %3801 = vmatprep.subr.bf16.mxu0 %v2468
  %3802 = vmatpush1.bf16.msra.mxu0 %v2467
  %3803 = vmatprep.subr.bf16.mxu0 %v2476
  %3804 = vmatpush1.bf16.msra.mxu0 %v2475
  %3805 = vmatprep.subr.bf16.mxu0 %v2484
  %3806 = vmatpush1.bf16.msra.mxu0 %v2483
  %3807 = vmatprep.subr.bf16.mxu0 %v2492
  %3808 = vmatpush1.bf16.msra.mxu0 %v2491
  %3809 = vmatprep.subr.bf16.mxu0 %v2500
  %3810 = vmatpush1.bf16.msra.mxu0 %v2499
  %3811 = vmatprep.subr.bf16.mxu0 %v2508
  %3812 = vmatpush1.bf16.msra.mxu0 %v2507
  %3813 = vmatprep.subr.bf16.mxu0 %v2516
  %3814 = vmatpush1.bf16.msra.mxu0 %v2515
  %3815 = vmatprep.subr.bf16.mxu0 %v2524
  %3816 = vmatpush1.bf16.msra.mxu0 %v2523
  %3817 = vmatprep.subr.bf16.mxu0 %v2532
  %3818 = vmatpush1.bf16.msra.mxu0 %v2531
  %3819 = vmatprep.subr.bf16.mxu0 %v2540
  %3820 = vmatpush1.bf16.msra.mxu0 %v2539
  %3821 = vmatprep.subr.bf16.mxu0 %v2548
  %3822 = vmatpush1.bf16.msra.mxu0 %v2547
  %3823 = vmatprep.mubr.bf16.mxu0 %v618
  %3824 = vmatmul.mubr.bf16.gmra.mrb[0].mxu0 %v617
  %v3825 = vpop.f32.mrb[0].mxu0
  %v3826 = vadd.f32 %v3783, %v3825
  %v3827 = vpop.f32.mrb[0].mxu0
  %v3828 = vadd.f32 %v3785, %v3827
  %v3829 = vpop.f32.mrb[0].mxu0
  %v3830 = vadd.f32 %v3787, %v3829
  %v3831 = vpop.f32.mrb[0].mxu0
  %v3832 = vadd.f32 %v3789, %v3831
  %3833 = vdwg.mxu0
  %3834 = vmatprep.subr.bf16.mxu0 %v2556
  %3835 = vmatpush1.bf16.msra.mxu0 %v2555
  %3836 = vmatprep.subr.bf16.mxu0 %v2564
  %3837 = vmatpush1.bf16.msra.mxu0 %v2563
  %3838 = vmatprep.subr.bf16.mxu0 %v2572
  %3839 = vmatpush1.bf16.msra.mxu0 %v2571
  %3840 = vmatprep.subr.bf16.mxu0 %v2580
  %3841 = vmatpush1.bf16.msra.mxu0 %v2579
  %3842 = vmatprep.subr.bf16.mxu0 %v2588
  %3843 = vmatpush1.bf16.msra.mxu0 %v2587
  %3844 = vmatprep.subr.bf16.mxu0 %v2596
  %3845 = vmatpush1.bf16.msra.mxu0 %v2595
  %3846 = vmatprep.subr.bf16.mxu0 %v2604
  %3847 = vmatpush1.bf16.msra.mxu0 %v2603
  %3848 = vmatprep.subr.bf16.mxu0 %v2612
  %3849 = vmatpush1.bf16.msra.mxu0 %v2611
  %3850 = vmatprep.subr.bf16.mxu0 %v2620
  %3851 = vmatpush1.bf16.msra.mxu0 %v2619
  %3852 = vmatprep.subr.bf16.mxu0 %v2628
  %3853 = vmatpush1.bf16.msra.mxu0 %v2627
  %3854 = vmatprep.subr.bf16.mxu0 %v2636
  %3855 = vmatpush1.bf16.msra.mxu0 %v2635
  %3856 = vmatprep.subr.bf16.mxu0 %v2644
  %3857 = vmatpush1.bf16.msra.mxu0 %v2643
  %3858 = vmatprep.subr.bf16.mxu0 %v2652
  %3859 = vmatpush1.bf16.msra.mxu0 %v2651
  %3860 = vmatprep.subr.bf16.mxu0 %v2660
  %3861 = vmatpush1.bf16.msra.mxu0 %v2659
  %3862 = vmatprep.subr.bf16.mxu0 %v2668
  %3863 = vmatpush1.bf16.msra.mxu0 %v2667
  %3864 = vmatprep.subr.bf16.mxu0 %v2676
  %3865 = vmatpush1.bf16.msra.mxu0 %v2675
  %3866 = vmatprep.mubr.bf16.mxu0 %v620
  %3867 = vmatmul.mubr.bf16.gmra.mrb[0].mxu0 %v619
  %v3868 = vpop.f32.mrb[0].mxu0
  %v3869 = vadd.f32 %v3826, %v3868
  %v3870 = vpop.f32.mrb[0].mxu0
  %v3871 = vadd.f32 %v3828, %v3870
  %v3872 = vpop.f32.mrb[0].mxu0
  %v3873 = vadd.f32 %v3830, %v3872
  %v3874 = vpop.f32.mrb[0].mxu0
  %v3875 = vadd.f32 %v3832, %v3874
  %3876 = vdwg.mxu0
  %v3877 = vmax.f32 %v3353, 0.0
  %v3878 = vmax.f32 %v3355, 0.0
  %v3879 = vmax.f32 %v3525, 0.0
  %v3880 = vmax.f32 %v3527, 0.0
  %v3881 = vmax.f32 %v3697, 0.0
  %v3882 = vmax.f32 %v3699, 0.0
  %v3883 = vmax.f32 %v3869, 0.0
  %v3884 = vmax.f32 %v3871, 0.0
  %v3885 = vmax.f32 %v3357, 0.0
  %v3886 = vmax.f32 %v3359, 0.0
  %v3887 = vmax.f32 %v3529, 0.0
  %v3888 = vmax.f32 %v3531, 0.0
  %v3889 = vmax.f32 %v3701, 0.0
  %v3890 = vmax.f32 %v3703, 0.0
  %v3891 = vmax.f32 %v3873, 0.0
  %v3892 = vmax.f32 %v3875, 0.0
  %v3893 = vpack.c.bf16 %v3885, %v3877
  %v3894 = vpack.c.bf16 %v3886, %v3878
  %v3895 = vpack.c.bf16 %v3887, %v3879
  %v3896 = vpack.c.bf16 %v3888, %v3880
  %v3897 = vpack.c.bf16 %v3889, %v3881
  %v3898 = vpack.c.bf16 %v3890, %v3882
  %v3899 = vpack.c.bf16 %v3891, %v3883
  %v3900 = vpack.c.bf16 %v3892, %v3884
  %v3901 = vld [vmem:[%s3] sm:$0xff]
  %v3902 = vld [vmem:[%s3 + $0x8] sm:$0xff]
  %v3903 = vld [vmem:[%s3 + $0x10] sm:$0xff]
  %v3904 = vld [vmem:[%s3 + $0x18] sm:$0xff]
  %v3905 = vld [vmem:[%s3 + $0x20] sm:$0xff]
  %v3906 = vld [vmem:[%s3 + $0x28] sm:$0xff]
  %v3907 = vld [vmem:[%s3 + $0x30] sm:$0xff]
  %v3908 = vld [vmem:[%s3 + $0x38] sm:$0xff]
  %v3909 = vld [vmem:[%s3 + $0x40] sm:$0xff]
  %v3910 = vld [vmem:[%s3 + $0x48] sm:$0xff]
  %v3911 = vld [vmem:[%s3 + $0x50] sm:$0xff]
  %v3912 = vld [vmem:[%s3 + $0x58] sm:$0xff]
  %v3913 = vld [vmem:[%s3 + $0x60] sm:$0xff]
  %v3914 = vld [vmem:[%s3 + $0x68] sm:$0xff]
  %v3915 = vld [vmem:[%s3 + $0x70] sm:$0xff]
  %v3916 = vld [vmem:[%s3 + $0x78] sm:$0xff]
  %v3917 = vld [vmem:[%s3 + $0x80] sm:$0xff]
  %v3918 = vld [vmem:[%s3 + $0x88] sm:$0xff]
  %v3919 = vld [vmem:[%s3 + $0x90] sm:$0xff]
  %v3920 = vld [vmem:[%s3 + $0x98] sm:$0xff]
  %v3921 = vld [vmem:[%s3 + $0xa0] sm:$0xff]
  %v3922 = vld [vmem:[%s3 + $0xa8] sm:$0xff]
  %v3923 = vld [vmem:[%s3 + $0xb0] sm:$0xff]
  %v3924 = vld [vmem:[%s3 + $0xb8] sm:$0xff]
  %v3925 = vld [vmem:[%s3 + $0xc0] sm:$0xff]
  %v3926 = vld [vmem:[%s3 + $0xc8] sm:$0xff]
  %v3927 = vld [vmem:[%s3 + $0xd0] sm:$0xff]
  %v3928 = vld [vmem:[%s3 + $0xd8] sm:$0xff]
  %v3929 = vld [vmem:[%s3 + $0xe0] sm:$0xff]
  %v3930 = vld [vmem:[%s3 + $0xe8] sm:$0xff]
  %v3931 = vld [vmem:[%s3 + $0xf0] sm:$0xff]
  %v3932 = vld [vmem:[%s3 + $0xf8] sm:$0xff]
  %v3933 = vld [vmem:[%s3 + $0x100] sm:$0xff]
  %v3934 = vld [vmem:[%s3 + $0x108] sm:$0xff]
  %v3935 = vld [vmem:[%s3 + $0x110] sm:$0xff]
  %v3936 = vld [vmem:[%s3 + $0x118] sm:$0xff]
  %v3937 = vld [vmem:[%s3 + $0x120] sm:$0xff]
  %v3938 = vld [vmem:[%s3 + $0x128] sm:$0xff]
  %v3939 = vld [vmem:[%s3 + $0x130] sm:$0xff]
  %v3940 = vld [vmem:[%s3 + $0x138] sm:$0xff]
  %v3941 = vld [vmem:[%s3 + $0x140] sm:$0xff]
  %v3942 = vld [vmem:[%s3 + $0x148] sm:$0xff]
  %v3943 = vld [vmem:[%s3 + $0x150] sm:$0xff]
  %v3944 = vld [vmem:[%s3 + $0x158] sm:$0xff]
  %v3945 = vld [vmem:[%s3 + $0x160] sm:$0xff]
  %v3946 = vld [vmem:[%s3 + $0x168] sm:$0xff]
  %v3947 = vld [vmem:[%s3 + $0x170] sm:$0xff]
  %v3948 = vld [vmem:[%s3 + $0x178] sm:$0xff]
  %v3949 = vld [vmem:[%s3 + $0x180] sm:$0xff]
  %v3950 = vld [vmem:[%s3 + $0x188] sm:$0xff]
  %v3951 = vld [vmem:[%s3 + $0x190] sm:$0xff]
  %v3952 = vld [vmem:[%s3 + $0x198] sm:$0xff]
  %v3953 = vld [vmem:[%s3 + $0x1a0] sm:$0xff]
  %v3954 = vld [vmem:[%s3 + $0x1a8] sm:$0xff]
  %v3955 = vld [vmem:[%s3 + $0x1b0] sm:$0xff]
  %v3956 = vld [vmem:[%s3 + $0x1b8] sm:$0xff]
  %v3957 = vld [vmem:[%s3 + $0x1c0] sm:$0xff]
  %v3958 = vld [vmem:[%s3 + $0x1c8] sm:$0xff]
  %v3959 = vld [vmem:[%s3 + $0x1d0] sm:$0xff]
  %v3960 = vld [vmem:[%s3 + $0x1d8] sm:$0xff]
  %v3961 = vld [vmem:[%s3 + $0x1e0] sm:$0xff]
  %v3962 = vld [vmem:[%s3 + $0x1e8] sm:$0xff]
  %v3963 = vld [vmem:[%s3 + $0x1f0] sm:$0xff]
  %v3964 = vld [vmem:[%s3 + $0x1f8] sm:$0xff]
  %v3965 = vld [vmem:[%s3 + $0x200] sm:$0xff]
  %v3966 = vld [vmem:[%s3 + $0x208] sm:$0xff]
  %v3967 = vld [vmem:[%s3 + $0x210] sm:$0xff]
  %v3968 = vld [vmem:[%s3 + $0x218] sm:$0xff]
  %v3969 = vld [vmem:[%s3 + $0x220] sm:$0xff]
  %v3970 = vld [vmem:[%s3 + $0x228] sm:$0xff]
  %v3971 = vld [vmem:[%s3 + $0x230] sm:$0xff]
  %v3972 = vld [vmem:[%s3 + $0x238] sm:$0xff]
  %v3973 = vld [vmem:[%s3 + $0x240] sm:$0xff]
  %v3974 = vld [vmem:[%s3 + $0x248] sm:$0xff]
  %v3975 = vld [vmem:[%s3 + $0x250] sm:$0xff]
  %v3976 = vld [vmem:[%s3 + $0x258] sm:$0xff]
  %v3977 = vld [vmem:[%s3 + $0x260] sm:$0xff]
  %v3978 = vld [vmem:[%s3 + $0x268] sm:$0xff]
  %v3979 = vld [vmem:[%s3 + $0x270] sm:$0xff]
  %v3980 = vld [vmem:[%s3 + $0x278] sm:$0xff]
  %v3981 = vld [vmem:[%s3 + $0x280] sm:$0xff]
  %v3982 = vld [vmem:[%s3 + $0x288] sm:$0xff]
  %v3983 = vld [vmem:[%s3 + $0x290] sm:$0xff]
  %v3984 = vld [vmem:[%s3 + $0x298] sm:$0xff]
  %v3985 = vld [vmem:[%s3 + $0x2a0] sm:$0xff]
  %v3986 = vld [vmem:[%s3 + $0x2a8] sm:$0xff]
  %v3987 = vld [vmem:[%s3 + $0x2b0] sm:$0xff]
  %v3988 = vld [vmem:[%s3 + $0x2b8] sm:$0xff]
  %v3989 = vld [vmem:[%s3 + $0x2c0] sm:$0xff]
  %v3990 = vld [vmem:[%s3 + $0x2c8] sm:$0xff]
  %v3991 = vld [vmem:[%s3 + $0x2d0] sm:$0xff]
  %v3992 = vld [vmem:[%s3 + $0x2d8] sm:$0xff]
  %v3993 = vld [vmem:[%s3 + $0x2e0] sm:$0xff]
  %v3994 = vld [vmem:[%s3 + $0x2e8] sm:$0xff]
  %v3995 = vld [vmem:[%s3 + $0x2f0] sm:$0xff]
  %v3996 = vld [vmem:[%s3 + $0x2f8] sm:$0xff]
  %v3997 = vld [vmem:[%s3 + $0x300] sm:$0xff]
  %v3998 = vld [vmem:[%s3 + $0x308] sm:$0xff]
  %v3999 = vld [vmem:[%s3 + $0x310] sm:$0xff]
  %v4000 = vld [vmem:[%s3 + $0x318] sm:$0xff]
  %v4001 = vld [vmem:[%s3 + $0x320] sm:$0xff]
  %v4002 = vld [vmem:[%s3 + $0x328] sm:$0xff]
  %v4003 = vld [vmem:[%s3 + $0x330] sm:$0xff]
  %v4004 = vld [vmem:[%s3 + $0x338] sm:$0xff]
  %v4005 = vld [vmem:[%s3 + $0x340] sm:$0xff]
  %v4006 = vld [vmem:[%s3 + $0x348] sm:$0xff]
  %v4007 = vld [vmem:[%s3 + $0x350] sm:$0xff]
  %v4008 = vld [vmem:[%s3 + $0x358] sm:$0xff]
  %v4009 = vld [vmem:[%s3 + $0x360] sm:$0xff]
  %v4010 = vld [vmem:[%s3 + $0x368] sm:$0xff]
  %v4011 = vld [vmem:[%s3 + $0x370] sm:$0xff]
  %v4012 = vld [vmem:[%s3 + $0x378] sm:$0xff]
  %v4013 = vld [vmem:[%s3 + $0x380] sm:$0xff]
  %v4014 = vld [vmem:[%s3 + $0x388] sm:$0xff]
  %v4015 = vld [vmem:[%s3 + $0x390] sm:$0xff]
  %v4016 = vld [vmem:[%s3 + $0x398] sm:$0xff]
  %v4017 = vld [vmem:[%s3 + $0x3a0] sm:$0xff]
  %v4018 = vld [vmem:[%s3 + $0x3a8] sm:$0xff]
  %v4019 = vld [vmem:[%s3 + $0x3b0] sm:$0xff]
  %v4020 = vld [vmem:[%s3 + $0x3b8] sm:$0xff]
  %v4021 = vld [vmem:[%s3 + $0x3c0] sm:$0xff]
  %v4022 = vld [vmem:[%s3 + $0x3c8] sm:$0xff]
  %v4023 = vld [vmem:[%s3 + $0x3d0] sm:$0xff]
  %v4024 = vld [vmem:[%s3 + $0x3d8] sm:$0xff]
  %v4025 = vld [vmem:[%s3 + $0x3e0] sm:$0xff]
  %v4026 = vld [vmem:[%s3 + $0x3e8] sm:$0xff]
  %v4027 = vld [vmem:[%s3 + $0x3f0] sm:$0xff]
  %v4028 = vld [vmem:[%s3 + $0x3f8] sm:$0xff]
  %v4029 = vld [vmem:[%s4] sm:$0xf]
  %v4031 = vlaneseq
  %v4032 = vshrl.u32 %v4031, 7
  %v4033 = vsub.s32 0, %v4032
  %v4034 = vrot.slane %v4029, %v4033
  %v4035 = vlaneseq
  %v4036 = vshrl.u32 %v4035, 7
  %v4037 = vsub.s32 1, %v4036
  %v4038 = vrot.slane %v4029, %v4037
  %v4039 = vlaneseq
  %v4040 = vshrl.u32 %v4039, 7
  %v4041 = vsub.s32 2, %v4040
  %v4042 = vrot.slane %v4029, %v4041
  %v4043 = vlaneseq
  %v4044 = vshrl.u32 %v4043, 7
  %v4045 = vsub.s32 3, %v4044
  %v4046 = vrot.slane %v4029, %v4045
  %v4179 = vunpack.c.l.b16 %v3901
  %v4180 = vunpack.c.h.b16 %v3901
  %v4181 = vunpack.c.l.b16 %v3902
  %v4182 = vunpack.c.h.b16 %v3902
  %v4183 = vunpack.c.l.b16 %v3903
  %v4184 = vunpack.c.h.b16 %v3903
  %v4185 = vunpack.c.l.b16 %v3904
  %v4186 = vunpack.c.h.b16 %v3904
  %v4187 = vunpack.c.l.b16 %v3905
  %v4188 = vunpack.c.h.b16 %v3905
  %v4189 = vunpack.c.l.b16 %v3906
  %v4190 = vunpack.c.h.b16 %v3906
  %v4191 = vunpack.c.l.b16 %v3907
  %v4192 = vunpack.c.h.b16 %v3907
  %v4193 = vunpack.c.l.b16 %v3908
  %v4194 = vunpack.c.h.b16 %v3908
  %v4195 = vunpack.c.l.b16 %v3909
  %v4196 = vunpack.c.h.b16 %v3909
  %v4197 = vunpack.c.l.b16 %v3910
  %v4198 = vunpack.c.h.b16 %v3910
  %v4199 = vunpack.c.l.b16 %v3911
  %v4200 = vunpack.c.h.b16 %v3911
  %v4201 = vunpack.c.l.b16 %v3912
  %v4202 = vunpack.c.h.b16 %v3912
  %v4203 = vunpack.c.l.b16 %v3913
  %v4204 = vunpack.c.h.b16 %v3913
  %v4205 = vunpack.c.l.b16 %v3914
  %v4206 = vunpack.c.h.b16 %v3914
  %v4207 = vunpack.c.l.b16 %v3915
  %v4208 = vunpack.c.h.b16 %v3915
  %v4209 = vunpack.c.l.b16 %v3916
  %v4210 = vunpack.c.h.b16 %v3916
  %v4211 = vunpack.c.l.b16 %v3917
  %v4212 = vunpack.c.h.b16 %v3917
  %v4213 = vunpack.c.l.b16 %v3918
  %v4214 = vunpack.c.h.b16 %v3918
  %v4215 = vunpack.c.l.b16 %v3919
  %v4216 = vunpack.c.h.b16 %v3919
  %v4217 = vunpack.c.l.b16 %v3920
  %v4218 = vunpack.c.h.b16 %v3920
  %v4219 = vunpack.c.l.b16 %v3921
  %v4220 = vunpack.c.h.b16 %v3921
  %v4221 = vunpack.c.l.b16 %v3922
  %v4222 = vunpack.c.h.b16 %v3922
  %v4223 = vunpack.c.l.b16 %v3923
  %v4224 = vunpack.c.h.b16 %v3923
  %v4225 = vunpack.c.l.b16 %v3924
  %v4226 = vunpack.c.h.b16 %v3924
  %v4227 = vunpack.c.l.b16 %v3925
  %v4228 = vunpack.c.h.b16 %v3925
  %v4229 = vunpack.c.l.b16 %v3926
  %v4230 = vunpack.c.h.b16 %v3926
  %v4231 = vunpack.c.l.b16 %v3927
  %v4232 = vunpack.c.h.b16 %v3927
  %v4233 = vunpack.c.l.b16 %v3928
  %v4234 = vunpack.c.h.b16 %v3928
  %v4235 = vunpack.c.l.b16 %v3929
  %v4236 = vunpack.c.h.b16 %v3929
  %v4237 = vunpack.c.l.b16 %v3930
  %v4238 = vunpack.c.h.b16 %v3930
  %v4239 = vunpack.c.l.b16 %v3931
  %v4240 = vunpack.c.h.b16 %v3931
  %v4241 = vunpack.c.l.b16 %v3932
  %v4242 = vunpack.c.h.b16 %v3932
  %v4243 = vunpack.c.l.b16 %v3933
  %v4244 = vunpack.c.h.b16 %v3933
  %v4245 = vunpack.c.l.b16 %v3934
  %v4246 = vunpack.c.h.b16 %v3934
  %v4247 = vunpack.c.l.b16 %v3935
  %v4248 = vunpack.c.h.b16 %v3935
  %v4249 = vunpack.c.l.b16 %v3936
  %v4250 = vunpack.c.h.b16 %v3936
  %v4251 = vunpack.c.l.b16 %v3937
  %v4252 = vunpack.c.h.b16 %v3937
  %v4253 = vunpack.c.l.b16 %v3938
  %v4254 = vunpack.c.h.b16 %v3938
  %v4255 = vunpack.c.l.b16 %v3939
  %v4256 = vunpack.c.h.b16 %v3939
  %v4257 = vunpack.c.l.b16 %v3940
  %v4258 = vunpack.c.h.b16 %v3940
  %v4259 = vunpack.c.l.b16 %v3941
  %v4260 = vunpack.c.h.b16 %v3941
  %v4261 = vunpack.c.l.b16 %v3942
  %v4262 = vunpack.c.h.b16 %v3942
  %v4263 = vunpack.c.l.b16 %v3943
  %v4264 = vunpack.c.h.b16 %v3943
  %v4265 = vunpack.c.l.b16 %v3944
  %v4266 = vunpack.c.h.b16 %v3944
  %v4267 = vunpack.c.l.b16 %v3945
  %v4268 = vunpack.c.h.b16 %v3945
  %v4269 = vunpack.c.l.b16 %v3946
  %v4270 = vunpack.c.h.b16 %v3946
  %v4271 = vunpack.c.l.b16 %v3947
  %v4272 = vunpack.c.h.b16 %v3947
  %v4273 = vunpack.c.l.b16 %v3948
  %v4274 = vunpack.c.h.b16 %v3948
  %v4275 = vunpack.c.l.b16 %v3949
  %v4276 = vunpack.c.h.b16 %v3949
  %v4277 = vunpack.c.l.b16 %v3950
  %v4278 = vunpack.c.h.b16 %v3950
  %v4279 = vunpack.c.l.b16 %v3951
  %v4280 = vunpack.c.h.b16 %v3951
  %v4281 = vunpack.c.l.b16 %v3952
  %v4282 = vunpack.c.h.b16 %v3952
  %v4283 = vunpack.c.l.b16 %v3953
  %v4284 = vunpack.c.h.b16 %v3953
  %v4285 = vunpack.c.l.b16 %v3954
  %v4286 = vunpack.c.h.b16 %v3954
  %v4287 = vunpack.c.l.b16 %v3955
  %v4288 = vunpack.c.h.b16 %v3955
  %v4289 = vunpack.c.l.b16 %v3956
  %v4290 = vunpack.c.h.b16 %v3956
  %v4291 = vunpack.c.l.b16 %v3957
  %v4292 = vunpack.c.h.b16 %v3957
  %v4293 = vunpack.c.l.b16 %v3958
  %v4294 = vunpack.c.h.b16 %v3958
  %v4295 = vunpack.c.l.b16 %v3959
  %v4296 = vunpack.c.h.b16 %v3959
  %v4297 = vunpack.c.l.b16 %v3960
  %v4298 = vunpack.c.h.b16 %v3960
  %v4299 = vunpack.c.l.b16 %v3961
  %v4300 = vunpack.c.h.b16 %v3961
  %v4301 = vunpack.c.l.b16 %v3962
  %v4302 = vunpack.c.h.b16 %v3962
  %v4303 = vunpack.c.l.b16 %v3963
  %v4304 = vunpack.c.h.b16 %v3963
  %v4305 = vunpack.c.l.b16 %v3964
  %v4306 = vunpack.c.h.b16 %v3964
  %v4307 = vunpack.c.l.b16 %v3965
  %v4308 = vunpack.c.h.b16 %v3965
  %v4309 = vunpack.c.l.b16 %v3966
  %v4310 = vunpack.c.h.b16 %v3966
  %v4311 = vunpack.c.l.b16 %v3967
  %v4312 = vunpack.c.h.b16 %v3967
  %v4313 = vunpack.c.l.b16 %v3968
  %v4314 = vunpack.c.h.b16 %v3968
  %v4315 = vunpack.c.l.b16 %v3969
  %v4316 = vunpack.c.h.b16 %v3969
  %v4317 = vunpack.c.l.b16 %v3970
  %v4318 = vunpack.c.h.b16 %v3970
  %v4319 = vunpack.c.l.b16 %v3971
  %v4320 = vunpack.c.h.b16 %v3971
  %v4321 = vunpack.c.l.b16 %v3972
  %v4322 = vunpack.c.h.b16 %v3972
  %v4323 = vunpack.c.l.b16 %v3973
  %v4324 = vunpack.c.h.b16 %v3973
  %v4325 = vunpack.c.l.b16 %v3974
  %v4326 = vunpack.c.h.b16 %v3974
  %v4327 = vunpack.c.l.b16 %v3975
  %v4328 = vunpack.c.h.b16 %v3975
  %v4329 = vunpack.c.l.b16 %v3976
  %v4330 = vunpack.c.h.b16 %v3976
  %v4331 = vunpack.c.l.b16 %v3977
  %v4332 = vunpack.c.h.b16 %v3977
  %v4333 = vunpack.c.l.b16 %v3978
  %v4334 = vunpack.c.h.b16 %v3978
  %v4335 = vunpack.c.l.b16 %v3979
  %v4336 = vunpack.c.h.b16 %v3979
  %v4337 = vunpack.c.l.b16 %v3980
  %v4338 = vunpack.c.h.b16 %v3980
  %v4339 = vunpack.c.l.b16 %v3981
  %v4340 = vunpack.c.h.b16 %v3981
  %v4341 = vunpack.c.l.b16 %v3982
  %v4342 = vunpack.c.h.b16 %v3982
  %v4343 = vunpack.c.l.b16 %v3983
  %v4344 = vunpack.c.h.b16 %v3983
  %v4345 = vunpack.c.l.b16 %v3984
  %v4346 = vunpack.c.h.b16 %v3984
  %v4347 = vunpack.c.l.b16 %v3985
  %v4348 = vunpack.c.h.b16 %v3985
  %v4349 = vunpack.c.l.b16 %v3986
  %v4350 = vunpack.c.h.b16 %v3986
  %v4351 = vunpack.c.l.b16 %v3987
  %v4352 = vunpack.c.h.b16 %v3987
  %v4353 = vunpack.c.l.b16 %v3988
  %v4354 = vunpack.c.h.b16 %v3988
  %v4355 = vunpack.c.l.b16 %v3989
  %v4356 = vunpack.c.h.b16 %v3989
  %v4357 = vunpack.c.l.b16 %v3990
  %v4358 = vunpack.c.h.b16 %v3990
  %v4359 = vunpack.c.l.b16 %v3991
  %v4360 = vunpack.c.h.b16 %v3991
  %v4361 = vunpack.c.l.b16 %v3992
  %v4362 = vunpack.c.h.b16 %v3992
  %v4363 = vunpack.c.l.b16 %v3993
  %v4364 = vunpack.c.h.b16 %v3993
  %v4365 = vunpack.c.l.b16 %v3994
  %v4366 = vunpack.c.h.b16 %v3994
  %v4367 = vunpack.c.l.b16 %v3995
  %v4368 = vunpack.c.h.b16 %v3995
  %v4369 = vunpack.c.l.b16 %v3996
  %v4370 = vunpack.c.h.b16 %v3996
  %v4371 = vunpack.c.l.b16 %v3997
  %v4372 = vunpack.c.h.b16 %v3997
  %v4373 = vunpack.c.l.b16 %v3998
  %v4374 = vunpack.c.h.b16 %v3998
  %v4375 = vunpack.c.l.b16 %v3999
  %v4376 = vunpack.c.h.b16 %v3999
  %v4377 = vunpack.c.l.b16 %v4000
  %v4378 = vunpack.c.h.b16 %v4000
  %v4379 = vunpack.c.l.b16 %v4001
  %v4380 = vunpack.c.h.b16 %v4001
  %v4381 = vunpack.c.l.b16 %v4002
  %v4382 = vunpack.c.h.b16 %v4002
  %v4383 = vunpack.c.l.b16 %v4003
  %v4384 = vunpack.c.h.b16 %v4003
  %v4385 = vunpack.c.l.b16 %v4004
  %v4386 = vunpack.c.h.b16 %v4004
  %v4387 = vunpack.c.l.b16 %v4005
  %v4388 = vunpack.c.h.b16 %v4005
  %v4389 = vunpack.c.l.b16 %v4006
  %v4390 = vunpack.c.h.b16 %v4006
  %v4391 = vunpack.c.l.b16 %v4007
  %v4392 = vunpack.c.h.b16 %v4007
  %v4393 = vunpack.c.l.b16 %v4008
  %v4394 = vunpack.c.h.b16 %v4008
  %v4395 = vunpack.c.l.b16 %v4009
  %v4396 = vunpack.c.h.b16 %v4009
  %v4397 = vunpack.c.l.b16 %v4010
  %v4398 = vunpack.c.h.b16 %v4010
  %v4399 = vunpack.c.l.b16 %v4011
  %v4400 = vunpack.c.h.b16 %v4011
  %v4401 = vunpack.c.l.b16 %v4012
  %v4402 = vunpack.c.h.b16 %v4012
  %v4403 = vunpack.c.l.b16 %v4013
  %v4404 = vunpack.c.h.b16 %v4013
  %v4405 = vunpack.c.l.b16 %v4014
  %v4406 = vunpack.c.h.b16 %v4014
  %v4407 = vunpack.c.l.b16 %v4015
  %v4408 = vunpack.c.h.b16 %v4015
  %v4409 = vunpack.c.l.b16 %v4016
  %v4410 = vunpack.c.h.b16 %v4016
  %v4411 = vunpack.c.l.b16 %v4017
  %v4412 = vunpack.c.h.b16 %v4017
  %v4413 = vunpack.c.l.b16 %v4018
  %v4414 = vunpack.c.h.b16 %v4018
  %v4415 = vunpack.c.l.b16 %v4019
  %v4416 = vunpack.c.h.b16 %v4019
  %v4417 = vunpack.c.l.b16 %v4020
  %v4418 = vunpack.c.h.b16 %v4020
  %v4419 = vunpack.c.l.b16 %v4021
  %v4420 = vunpack.c.h.b16 %v4021
  %v4421 = vunpack.c.l.b16 %v4022
  %v4422 = vunpack.c.h.b16 %v4022
  %v4423 = vunpack.c.l.b16 %v4023
  %v4424 = vunpack.c.h.b16 %v4023
  %v4425 = vunpack.c.l.b16 %v4024
  %v4426 = vunpack.c.h.b16 %v4024
  %v4427 = vunpack.c.l.b16 %v4025
  %v4428 = vunpack.c.h.b16 %v4025
  %v4429 = vunpack.c.l.b16 %v4026
  %v4430 = vunpack.c.h.b16 %v4026
  %v4431 = vunpack.c.l.b16 %v4027
  %v4432 = vunpack.c.h.b16 %v4027
  %v4433 = vunpack.c.l.b16 %v4028
  %v4434 = vunpack.c.h.b16 %v4028
  %v4435 = vpack.c.b16 %v4183, %v4179
  %v4436 = vpack.c.b16 %v4184, %v4180
  %v4437 = vpack.c.b16 %v4185, %v4181
  %v4438 = vpack.c.b16 %v4186, %v4182
  %v4439 = vpack.c.b16 %v4191, %v4187
  %v4440 = vpack.c.b16 %v4192, %v4188
  %v4441 = vpack.c.b16 %v4193, %v4189
  %v4442 = vpack.c.b16 %v4194, %v4190
  %v4443 = vpack.c.b16 %v4199, %v4195
  %v4444 = vpack.c.b16 %v4200, %v4196
  %v4445 = vpack.c.b16 %v4201, %v4197
  %v4446 = vpack.c.b16 %v4202, %v4198
  %v4447 = vpack.c.b16 %v4207, %v4203
  %v4448 = vpack.c.b16 %v4208, %v4204
  %v4449 = vpack.c.b16 %v4209, %v4205
  %v4450 = vpack.c.b16 %v4210, %v4206
  %v4451 = vpack.c.b16 %v4215, %v4211
  %v4452 = vpack.c.b16 %v4216, %v4212
  %v4453 = vpack.c.b16 %v4217, %v4213
  %v4454 = vpack.c.b16 %v4218, %v4214
  %v4455 = vpack.c.b16 %v4223, %v4219
  %v4456 = vpack.c.b16 %v4224, %v4220
  %v4457 = vpack.c.b16 %v4225, %v4221
  %v4458 = vpack.c.b16 %v4226, %v4222
  %v4459 = vpack.c.b16 %v4231, %v4227
  %v4460 = vpack.c.b16 %v4232, %v4228
  %v4461 = vpack.c.b16 %v4233, %v4229
  %v4462 = vpack.c.b16 %v4234, %v4230
  %v4463 = vpack.c.b16 %v4239, %v4235
  %v4464 = vpack.c.b16 %v4240, %v4236
  %v4465 = vpack.c.b16 %v4241, %v4237
  %v4466 = vpack.c.b16 %v4242, %v4238
  %v4467 = vpack.c.b16 %v4247, %v4243
  %v4468 = vpack.c.b16 %v4248, %v4244
  %v4469 = vpack.c.b16 %v4249, %v4245
  %v4470 = vpack.c.b16 %v4250, %v4246
  %v4471 = vpack.c.b16 %v4255, %v4251
  %v4472 = vpack.c.b16 %v4256, %v4252
  %v4473 = vpack.c.b16 %v4257, %v4253
  %v4474 = vpack.c.b16 %v4258, %v4254
  %v4475 = vpack.c.b16 %v4263, %v4259
  %v4476 = vpack.c.b16 %v4264, %v4260
  %v4477 = vpack.c.b16 %v4265, %v4261
  %v4478 = vpack.c.b16 %v4266, %v4262
  %v4479 = vpack.c.b16 %v4271, %v4267
  %v4480 = vpack.c.b16 %v4272, %v4268
  %v4481 = vpack.c.b16 %v4273, %v4269
  %v4482 = vpack.c.b16 %v4274, %v4270
  %v4483 = vpack.c.b16 %v4279, %v4275
  %v4484 = vpack.c.b16 %v4280, %v4276
  %v4485 = vpack.c.b16 %v4281, %v4277
  %v4486 = vpack.c.b16 %v4282, %v4278
  %v4487 = vpack.c.b16 %v4287, %v4283
  %v4488 = vpack.c.b16 %v4288, %v4284
  %v4489 = vpack.c.b16 %v4289, %v4285
  %v4490 = vpack.c.b16 %v4290, %v4286
  %v4491 = vpack.c.b16 %v4295, %v4291
  %v4492 = vpack.c.b16 %v4296, %v4292
  %v4493 = vpack.c.b16 %v4297, %v4293
  %v4494 = vpack.c.b16 %v4298, %v4294
  %v4495 = vpack.c.b16 %v4303, %v4299
  %v4496 = vpack.c.b16 %v4304, %v4300
  %v4497 = vpack.c.b16 %v4305, %v4301
  %v4498 = vpack.c.b16 %v4306, %v4302
  %v4499 = vpack.c.b16 %v4311, %v4307
  %v4500 = vpack.c.b16 %v4312, %v4308
  %v4501 = vpack.c.b16 %v4313, %v4309
  %v4502 = vpack.c.b16 %v4314, %v4310
  %v4503 = vpack.c.b16 %v4319, %v4315
  %v4504 = vpack.c.b16 %v4320, %v4316
  %v4505 = vpack.c.b16 %v4321, %v4317
  %v4506 = vpack.c.b16 %v4322, %v4318
  %v4507 = vpack.c.b16 %v4327, %v4323
  %v4508 = vpack.c.b16 %v4328, %v4324
  %v4509 = vpack.c.b16 %v4329, %v4325
  %v4510 = vpack.c.b16 %v4330, %v4326
  %v4511 = vpack.c.b16 %v4335, %v4331
  %v4512 = vpack.c.b16 %v4336, %v4332
  %v4513 = vpack.c.b16 %v4337, %v4333
  %v4514 = vpack.c.b16 %v4338, %v4334
  %v4515 = vpack.c.b16 %v4343, %v4339
  %v4516 = vpack.c.b16 %v4344, %v4340
  %v4517 = vpack.c.b16 %v4345, %v4341
  %v4518 = vpack.c.b16 %v4346, %v4342
  %v4519 = vpack.c.b16 %v4351, %v4347
  %v4520 = vpack.c.b16 %v4352, %v4348
  %v4521 = vpack.c.b16 %v4353, %v4349
  %v4522 = vpack.c.b16 %v4354, %v4350
  %v4523 = vpack.c.b16 %v4359, %v4355
  %v4524 = vpack.c.b16 %v4360, %v4356
  %v4525 = vpack.c.b16 %v4361, %v4357
  %v4526 = vpack.c.b16 %v4362, %v4358
  %v4527 = vpack.c.b16 %v4367, %v4363
  %v4528 = vpack.c.b16 %v4368, %v4364
  %v4529 = vpack.c.b16 %v4369, %v4365
  %v4530 = vpack.c.b16 %v4370, %v4366
  %v4531 = vpack.c.b16 %v4375, %v4371
  %v4532 = vpack.c.b16 %v4376, %v4372
  %v4533 = vpack.c.b16 %v4377, %v4373
  %v4534 = vpack.c.b16 %v4378, %v4374
  %v4535 = vpack.c.b16 %v4383, %v4379
  %v4536 = vpack.c.b16 %v4384, %v4380
  %v4537 = vpack.c.b16 %v4385, %v4381
  %v4538 = vpack.c.b16 %v4386, %v4382
  %v4539 = vpack.c.b16 %v4391, %v4387
  %v4540 = vpack.c.b16 %v4392, %v4388
  %v4541 = vpack.c.b16 %v4393, %v4389
  %v4542 = vpack.c.b16 %v4394, %v4390
  %v4543 = vpack.c.b16 %v4399, %v4395
  %v4544 = vpack.c.b16 %v4400, %v4396
  %v4545 = vpack.c.b16 %v4401, %v4397
  %v4546 = vpack.c.b16 %v4402, %v4398
  %v4547 = vpack.c.b16 %v4407, %v4403
  %v4548 = vpack.c.b16 %v4408, %v4404
  %v4549 = vpack.c.b16 %v4409, %v4405
  %v4550 = vpack.c.b16 %v4410, %v4406
  %v4551 = vpack.c.b16 %v4415, %v4411
  %v4552 = vpack.c.b16 %v4416, %v4412
  %v4553 = vpack.c.b16 %v4417, %v4413
  %v4554 = vpack.c.b16 %v4418, %v4414
  %v4555 = vpack.c.b16 %v4423, %v4419
  %v4556 = vpack.c.b16 %v4424, %v4420
  %v4557 = vpack.c.b16 %v4425, %v4421
  %v4558 = vpack.c.b16 %v4426, %v4422
  %v4559 = vpack.c.b16 %v4431, %v4427
  %v4560 = vpack.c.b16 %v4432, %v4428
  %v4561 = vpack.c.b16 %v4433, %v4429
  %v4562 = vpack.c.b16 %v4434, %v4430
  %4691 = vmatprep.subr.bf16.mxu0 %v4436
  %4692 = vmatpush1.bf16.msra.mxu0 %v4435
  %4693 = vmatprep.subr.bf16.mxu0 %v4440
  %4694 = vmatpush1.bf16.msra.mxu0 %v4439
  %4695 = vmatprep.subr.bf16.mxu0 %v4444
  %4696 = vmatpush1.bf16.msra.mxu0 %v4443
  %4697 = vmatprep.subr.bf16.mxu0 %v4448
  %4698 = vmatpush1.bf16.msra.mxu0 %v4447
  %4699 = vmatprep.subr.bf16.mxu0 %v4452
  %4700 = vmatpush1.bf16.msra.mxu0 %v4451
  %4701 = vmatprep.subr.bf16.mxu0 %v4456
  %4702 = vmatpush1.bf16.msra.mxu0 %v4455
  %4703 = vmatprep.subr.bf16.mxu0 %v4460
  %4704 = vmatpush1.bf16.msra.mxu0 %v4459
  %4705 = vmatprep.subr.bf16.mxu0 %v4464
  %4706 = vmatpush1.bf16.msra.mxu0 %v4463
  %4707 = vmatprep.subr.bf16.mxu0 %v4468
  %4708 = vmatpush1.bf16.msra.mxu0 %v4467
  %4709 = vmatprep.subr.bf16.mxu0 %v4472
  %4710 = vmatpush1.bf16.msra.mxu0 %v4471
  %4711 = vmatprep.subr.bf16.mxu0 %v4476
  %4712 = vmatpush1.bf16.msra.mxu0 %v4475
  %4713 = vmatprep.subr.bf16.mxu0 %v4480
  %4714 = vmatpush1.bf16.msra.mxu0 %v4479
  %4715 = vmatprep.subr.bf16.mxu0 %v4484
  %4716 = vmatpush1.bf16.msra.mxu0 %v4483
  %4717 = vmatprep.subr.bf16.mxu0 %v4488
  %4718 = vmatpush1.bf16.msra.mxu0 %v4487
  %4719 = vmatprep.subr.bf16.mxu0 %v4492
  %4720 = vmatpush1.bf16.msra.mxu0 %v4491
  %4721 = vmatprep.subr.bf16.mxu0 %v4496
  %4722 = vmatpush1.bf16.msra.mxu0 %v4495
  %4723 = vmatprep.mubr.bf16.mxu0 %v3894
  %4724 = vmatmul.mubr.bf16.gmra.mrb[0].mxu0 %v3893
  %v4725 = vpop.f32.mrb[0].mxu0
  %v4726 = vadd.f32 %v4034, %v4725
  %v4727 = vpop.f32.mrb[0].mxu0
  %v4728 = vadd.f32 %v4038, %v4727
  %v4729 = vpop.f32.mrb[0].mxu0
  %v4730 = vadd.f32 %v4034, %v4729
  %v4731 = vpop.f32.mrb[0].mxu0
  %v4732 = vadd.f32 %v4038, %v4731
  %4733 = vdwg.mxu0
  %4734 = vmatprep.subr.bf16.mxu0 %v4500
  %4735 = vmatpush1.bf16.msra.mxu0 %v4499
  %4736 = vmatprep.subr.bf16.mxu0 %v4504
  %4737 = vmatpush1.bf16.msra.mxu0 %v4503
  %4738 = vmatprep.subr.bf16.mxu0 %v4508
  %4739 = vmatpush1.bf16.msra.mxu0 %v4507
  %4740 = vmatprep.subr.bf16.mxu0 %v4512
  %4741 = vmatpush1.bf16.msra.mxu0 %v4511
  %4742 = vmatprep.subr.bf16.mxu0 %v4516
  %4743 = vmatpush1.bf16.msra.mxu0 %v4515
  %4744 = vmatprep.subr.bf16.mxu0 %v4520
  %4745 = vmatpush1.bf16.msra.mxu0 %v4519
  %4746 = vmatprep.subr.bf16.mxu0 %v4524
  %4747 = vmatpush1.bf16.msra.mxu0 %v4523
  %4748 = vmatprep.subr.bf16.mxu0 %v4528
  %4749 = vmatpush1.bf16.msra.mxu0 %v4527
  %4750 = vmatprep.subr.bf16.mxu0 %v4532
  %4751 = vmatpush1.bf16.msra.mxu0 %v4531
  %4752 = vmatprep.subr.bf16.mxu0 %v4536
  %4753 = vmatpush1.bf16.msra.mxu0 %v4535
  %4754 = vmatprep.subr.bf16.mxu0 %v4540
  %4755 = vmatpush1.bf16.msra.mxu0 %v4539
  %4756 = vmatprep.subr.bf16.mxu0 %v4544
  %4757 = vmatpush1.bf16.msra.mxu0 %v4543
  %4758 = vmatprep.subr.bf16.mxu0 %v4548
  %4759 = vmatpush1.bf16.msra.mxu0 %v4547
  %4760 = vmatprep.subr.bf16.mxu0 %v4552
  %4761 = vmatpush1.bf16.msra.mxu0 %v4551
  %4762 = vmatprep.subr.bf16.mxu0 %v4556
  %4763 = vmatpush1.bf16.msra.mxu0 %v4555
  %4764 = vmatprep.subr.bf16.mxu0 %v4560
  %4765 = vmatpush1.bf16.msra.mxu0 %v4559
  %4766 = vmatprep.mubr.bf16.mxu0 %v3896
  %4767 = vmatmul.mubr.bf16.gmra.mrb[0].mxu0 %v3895
  %v4768 = vpop.f32.mrb[0].mxu0
  %v4769 = vadd.f32 %v4726, %v4768
  %v4770 = vpop.f32.mrb[0].mxu0
  %v4771 = vadd.f32 %v4728, %v4770
  %v4772 = vpop.f32.mrb[0].mxu0
  %v4773 = vadd.f32 %v4730, %v4772
  %v4774 = vpop.f32.mrb[0].mxu0
  %v4775 = vadd.f32 %v4732, %v4774
  %4776 = vdwg.mxu0
  %4777 = vmatprep.subr.bf16.mxu0 %v4438
  %4778 = vmatpush1.bf16.msra.mxu0 %v4437
  %4779 = vmatprep.subr.bf16.mxu0 %v4442
  %4780 = vmatpush1.bf16.msra.mxu0 %v4441
  %4781 = vmatprep.subr.bf16.mxu0 %v4446
  %4782 = vmatpush1.bf16.msra.mxu0 %v4445
  %4783 = vmatprep.subr.bf16.mxu0 %v4450
  %4784 = vmatpush1.bf16.msra.mxu0 %v4449
  %4785 = vmatprep.subr.bf16.mxu0 %v4454
  %4786 = vmatpush1.bf16.msra.mxu0 %v4453
  %4787 = vmatprep.subr.bf16.mxu0 %v4458
  %4788 = vmatpush1.bf16.msra.mxu0 %v4457
  %4789 = vmatprep.subr.bf16.mxu0 %v4462
  %4790 = vmatpush1.bf16.msra.mxu0 %v4461
  %4791 = vmatprep.subr.bf16.mxu0 %v4466
  %4792 = vmatpush1.bf16.msra.mxu0 %v4465
  %4793 = vmatprep.subr.bf16.mxu0 %v4470
  %4794 = vmatpush1.bf16.msra.mxu0 %v4469
  %4795 = vmatprep.subr.bf16.mxu0 %v4474
  %4796 = vmatpush1.bf16.msra.mxu0 %v4473
  %4797 = vmatprep.subr.bf16.mxu0 %v4478
  %4798 = vmatpush1.bf16.msra.mxu0 %v4477
  %4799 = vmatprep.subr.bf16.mxu0 %v4482
  %4800 = vmatpush1.bf16.msra.mxu0 %v4481
  %4801 = vmatprep.subr.bf16.mxu0 %v4486
  %4802 = vmatpush1.bf16.msra.mxu0 %v4485
  %4803 = vmatprep.subr.bf16.mxu0 %v4490
  %4804 = vmatpush1.bf16.msra.mxu0 %v4489
  %4805 = vmatprep.subr.bf16.mxu0 %v4494
  %4806 = vmatpush1.bf16.msra.mxu0 %v4493
  %4807 = vmatprep.subr.bf16.mxu0 %v4498
  %4808 = vmatpush1.bf16.msra.mxu0 %v4497
  %4809 = vmatprep.mubr.bf16.mxu0 %v3894
  %4810 = vmatmul.mubr.bf16.gmra.mrb[0].mxu0 %v3893
  %v4811 = vpop.f32.mrb[0].mxu0
  %v4812 = vadd.f32 %v4042, %v4811
  %v4813 = vpop.f32.mrb[0].mxu0
  %v4814 = vadd.f32 %v4046, %v4813
  %v4815 = vpop.f32.mrb[0].mxu0
  %v4816 = vadd.f32 %v4042, %v4815
  %v4817 = vpop.f32.mrb[0].mxu0
  %v4818 = vadd.f32 %v4046, %v4817
  %4819 = vdwg.mxu0
  %4820 = vmatprep.subr.bf16.mxu0 %v4502
  %4821 = vmatpush1.bf16.msra.mxu0 %v4501
  %4822 = vmatprep.subr.bf16.mxu0 %v4506
  %4823 = vmatpush1.bf16.msra.mxu0 %v4505
  %4824 = vmatprep.subr.bf16.mxu0 %v4510
  %4825 = vmatpush1.bf16.msra.mxu0 %v4509
  %4826 = vmatprep.subr.bf16.mxu0 %v4514
  %4827 = vmatpush1.bf16.msra.mxu0 %v4513
  %4828 = vmatprep.subr.bf16.mxu0 %v4518
  %4829 = vmatpush1.bf16.msra.mxu0 %v4517
  %4830 = vmatprep.subr.bf16.mxu0 %v4522
  %4831 = vmatpush1.bf16.msra.mxu0 %v4521
  %4832 = vmatprep.subr.bf16.mxu0 %v4526
  %4833 = vmatpush1.bf16.msra.mxu0 %v4525
  %4834 = vmatprep.subr.bf16.mxu0 %v4530
  %4835 = vmatpush1.bf16.msra.mxu0 %v4529
  %4836 = vmatprep.subr.bf16.mxu0 %v4534
  %4837 = vmatpush1.bf16.msra.mxu0 %v4533
  %4838 = vmatprep.subr.bf16.mxu0 %v4538
  %4839 = vmatpush1.bf16.msra.mxu0 %v4537
  %4840 = vmatprep.subr.bf16.mxu0 %v4542
  %4841 = vmatpush1.bf16.msra.mxu0 %v4541
  %4842 = vmatprep.subr.bf16.mxu0 %v4546
  %4843 = vmatpush1.bf16.msra.mxu0 %v4545
  %4844 = vmatprep.subr.bf16.mxu0 %v4550
  %4845 = vmatpush1.bf16.msra.mxu0 %v4549
  %4846 = vmatprep.subr.bf16.mxu0 %v4554
  %4847 = vmatpush1.bf16.msra.mxu0 %v4553
  %4848 = vmatprep.subr.bf16.mxu0 %v4558
  %4849 = vmatpush1.bf16.msra.mxu0 %v4557
  %4850 = vmatprep.subr.bf16.mxu0 %v4562
  %4851 = vmatpush1.bf16.msra.mxu0 %v4561
  %4852 = vmatprep.mubr.bf16.mxu0 %v3896
  %4853 = vmatmul.mubr.bf16.gmra.mrb[0].mxu0 %v3895
  %v4854 = vpop.f32.mrb[0].mxu0
  %v4855 = vadd.f32 %v4812, %v4854
  %v4856 = vpop.f32.mrb[0].mxu0
  %v4857 = vadd.f32 %v4814, %v4856
  %v4858 = vpop.f32.mrb[0].mxu0
  %v4859 = vadd.f32 %v4816, %v4858
  %v4860 = vpop.f32.mrb[0].mxu0
  %v4861 = vadd.f32 %v4818, %v4860
  %4862 = vdwg.mxu0
  %v4863 = vld [vmem:[%s5] sm:$0xf]
  %v4864 = vld [vmem:[%s5 + $0x4] sm:$0xf]
  %v4865 = vld [vmem:[%s5 + $0x8] sm:$0xf]
  %v4866 = vld [vmem:[%s5 + $0xc] sm:$0xf]
  %v4867 = vld [vmem:[%s5 + $0x10] sm:$0xf]
  %v4868 = vld [vmem:[%s5 + $0x14] sm:$0xf]
  %v4869 = vld [vmem:[%s5 + $0x18] sm:$0xf]
  %v4870 = vld [vmem:[%s5 + $0x1c] sm:$0xf]
  %v4871 = vld [vmem:[%s5 + $0x20] sm:$0xf]
  %v4872 = vld [vmem:[%s5 + $0x24] sm:$0xf]
  %v4873 = vld [vmem:[%s5 + $0x28] sm:$0xf]
  %v4874 = vld [vmem:[%s5 + $0x2c] sm:$0xf]
  %v4875 = vld [vmem:[%s5 + $0x30] sm:$0xf]
  %v4876 = vld [vmem:[%s5 + $0x34] sm:$0xf]
  %v4877 = vld [vmem:[%s5 + $0x38] sm:$0xf]
  %v4878 = vld [vmem:[%s5 + $0x3c] sm:$0xf]
  %v4879 = vld [vmem:[%s5 + $0x40] sm:$0xf]
  %v4880 = vld [vmem:[%s5 + $0x44] sm:$0xf]
  %v4881 = vld [vmem:[%s5 + $0x48] sm:$0xf]
  %v4882 = vld [vmem:[%s5 + $0x4c] sm:$0xf]
  %v4883 = vld [vmem:[%s5 + $0x50] sm:$0xf]
  %v4884 = vld [vmem:[%s5 + $0x54] sm:$0xf]
  %v4885 = vld [vmem:[%s5 + $0x58] sm:$0xf]
  %v4886 = vld [vmem:[%s5 + $0x5c] sm:$0xf]
  %v4887 = vld [vmem:[%s5 + $0x60] sm:$0xf]
  %v4888 = vld [vmem:[%s5 + $0x64] sm:$0xf]
  %v4889 = vld [vmem:[%s5 + $0x68] sm:$0xf]
  %v4890 = vld [vmem:[%s5 + $0x6c] sm:$0xf]
  %v4891 = vld [vmem:[%s5 + $0x70] sm:$0xf]
  %v4892 = vld [vmem:[%s5 + $0x74] sm:$0xf]
  %v4893 = vld [vmem:[%s5 + $0x78] sm:$0xf]
  %v4894 = vld [vmem:[%s5 + $0x7c] sm:$0xf]
  %v4895 = vld [vmem:[%s5 + $0x80] sm:$0xf]
  %v4896 = vld [vmem:[%s5 + $0x84] sm:$0xf]
  %v4897 = vld [vmem:[%s5 + $0x88] sm:$0xf]
  %v4898 = vld [vmem:[%s5 + $0x8c] sm:$0xf]
  %v4899 = vld [vmem:[%s5 + $0x90] sm:$0xf]
  %v4900 = vld [vmem:[%s5 + $0x94] sm:$0xf]
  %v4901 = vld [vmem:[%s5 + $0x98] sm:$0xf]
  %v4902 = vld [vmem:[%s5 + $0x9c] sm:$0xf]
  %v4903 = vld [vmem:[%s5 + $0xa0] sm:$0xf]
  %v4904 = vld [vmem:[%s5 + $0xa4] sm:$0xf]
  %v4905 = vld [vmem:[%s5 + $0xa8] sm:$0xf]
  %v4906 = vld [vmem:[%s5 + $0xac] sm:$0xf]
  %v4907 = vld [vmem:[%s5 + $0xb0] sm:$0xf]
  %v4908 = vld [vmem:[%s5 + $0xb4] sm:$0xf]
  %v4909 = vld [vmem:[%s5 + $0xb8] sm:$0xf]
  %v4910 = vld [vmem:[%s5 + $0xbc] sm:$0xf]
  %v4911 = vld [vmem:[%s5 + $0xc0] sm:$0xf]
  %v4912 = vld [vmem:[%s5 + $0xc4] sm:$0xf]
  %v4913 = vld [vmem:[%s5 + $0xc8] sm:$0xf]
  %v4914 = vld [vmem:[%s5 + $0xcc] sm:$0xf]
  %v4915 = vld [vmem:[%s5 + $0xd0] sm:$0xf]
  %v4916 = vld [vmem:[%s5 + $0xd4] sm:$0xf]
  %v4917 = vld [vmem:[%s5 + $0xd8] sm:$0xf]
  %v4918 = vld [vmem:[%s5 + $0xdc] sm:$0xf]
  %v4919 = vld [vmem:[%s5 + $0xe0] sm:$0xf]
  %v4920 = vld [vmem:[%s5 + $0xe4] sm:$0xf]
  %v4921 = vld [vmem:[%s5 + $0xe8] sm:$0xf]
  %v4922 = vld [vmem:[%s5 + $0xec] sm:$0xf]
  %v4923 = vld [vmem:[%s5 + $0xf0] sm:$0xf]
  %v4924 = vld [vmem:[%s5 + $0xf4] sm:$0xf]
  %v4925 = vld [vmem:[%s5 + $0xf8] sm:$0xf]
  %v4926 = vld [vmem:[%s5 + $0xfc] sm:$0xf]
  %v4927 = vld [vmem:[%s6] sm:$0x1]
  %v4929 = vlaneseq
  %v4930 = vshrl.u32 %v4929, 7
  %v4931 = vsub.s32 0, %v4930
  %v4932 = vrot.slane %v4927, %v4931
  %v4998 = vunpack.c.l.b16 %v4863
  %v4999 = vunpack.c.l.b16 %v4864
  %v5000 = vunpack.c.l.b16 %v4865
  %v5001 = vunpack.c.l.b16 %v4866
  %v5002 = vunpack.c.l.b16 %v4867
  %v5003 = vunpack.c.l.b16 %v4868
  %v5004 = vunpack.c.l.b16 %v4869
  %v5005 = vunpack.c.l.b16 %v4870
  %v5006 = vunpack.c.l.b16 %v4871
  %v5007 = vunpack.c.l.b16 %v4872
  %v5008 = vunpack.c.l.b16 %v4873
  %v5009 = vunpack.c.l.b16 %v4874
  %v5010 = vunpack.c.l.b16 %v4875
  %v5011 = vunpack.c.l.b16 %v4876
  %v5012 = vunpack.c.l.b16 %v4877
  %v5013 = vunpack.c.l.b16 %v4878
  %v5014 = vunpack.c.l.b16 %v4879
  %v5015 = vunpack.c.l.b16 %v4880
  %v5016 = vunpack.c.l.b16 %v4881
  %v5017 = vunpack.c.l.b16 %v4882
  %v5018 = vunpack.c.l.b16 %v4883
  %v5019 = vunpack.c.l.b16 %v4884
  %v5020 = vunpack.c.l.b16 %v4885
  %v5021 = vunpack.c.l.b16 %v4886
  %v5022 = vunpack.c.l.b16 %v4887
  %v5023 = vunpack.c.l.b16 %v4888
  %v5024 = vunpack.c.l.b16 %v4889
  %v5025 = vunpack.c.l.b16 %v4890
  %v5026 = vunpack.c.l.b16 %v4891
  %v5027 = vunpack.c.l.b16 %v4892
  %v5028 = vunpack.c.l.b16 %v4893
  %v5029 = vunpack.c.l.b16 %v4894
  %v5030 = vunpack.c.l.b16 %v4895
  %v5031 = vunpack.c.l.b16 %v4896
  %v5032 = vunpack.c.l.b16 %v4897
  %v5033 = vunpack.c.l.b16 %v4898
  %v5034 = vunpack.c.l.b16 %v4899
  %v5035 = vunpack.c.l.b16 %v4900
  %v5036 = vunpack.c.l.b16 %v4901
  %v5037 = vunpack.c.l.b16 %v4902
  %v5038 = vunpack.c.l.b16 %v4903
  %v5039 = vunpack.c.l.b16 %v4904
  %v5040 = vunpack.c.l.b16 %v4905
  %v5041 = vunpack.c.l.b16 %v4906
  %v5042 = vunpack.c.l.b16 %v4907
  %v5043 = vunpack.c.l.b16 %v4908
  %v5044 = vunpack.c.l.b16 %v4909
  %v5045 = vunpack.c.l.b16 %v4910
  %v5046 = vunpack.c.l.b16 %v4911
  %v5047 = vunpack.c.l.b16 %v4912
  %v5048 = vunpack.c.l.b16 %v4913
  %v5049 = vunpack.c.l.b16 %v4914
  %v5050 = vunpack.c.l.b16 %v4915
  %v5051 = vunpack.c.l.b16 %v4916
  %v5052 = vunpack.c.l.b16 %v4917
  %v5053 = vunpack.c.l.b16 %v4918
  %v5054 = vunpack.c.l.b16 %v4919
  %v5055 = vunpack.c.l.b16 %v4920
  %v5056 = vunpack.c.l.b16 %v4921
  %v5057 = vunpack.c.l.b16 %v4922
  %v5058 = vunpack.c.l.b16 %v4923
  %v5059 = vunpack.c.l.b16 %v4924
  %v5060 = vunpack.c.l.b16 %v4925
  %v5061 = vunpack.c.l.b16 %v4926
  %v5062 = vpack.c.b16 %v4999, %v4998
  %v5063 = vpack.c.b16 %v5001, %v5000
  %v5064 = vpack.c.b16 %v5003, %v5002
  %v5065 = vpack.c.b16 %v5005, %v5004
  %v5066 = vpack.c.b16 %v5007, %v5006
  %v5067 = vpack.c.b16 %v5009, %v5008
  %v5068 = vpack.c.b16 %v5011, %v5010
  %v5069 = vpack.c.b16 %v5013, %v5012
  %v5070 = vpack.c.b16 %v5015, %v5014
  %v5071 = vpack.c.b16 %v5017, %v5016
  %v5072 = vpack.c.b16 %v5019, %v5018
  %v5073 = vpack.c.b16 %v5021, %v5020
  %v5074 = vpack.c.b16 %v5023, %v5022
  %v5075 = vpack.c.b16 %v5025, %v5024
  %v5076 = vpack.c.b16 %v5027, %v5026
  %v5077 = vpack.c.b16 %v5029, %v5028
  %v5078 = vpack.c.b16 %v5031, %v5030
  %v5079 = vpack.c.b16 %v5033, %v5032
  %v5080 = vpack.c.b16 %v5035, %v5034
  %v5081 = vpack.c.b16 %v5037, %v5036
  %v5082 = vpack.c.b16 %v5039, %v5038
  %v5083 = vpack.c.b16 %v5041, %v5040
  %v5084 = vpack.c.b16 %v5043, %v5042
  %v5085 = vpack.c.b16 %v5045, %v5044
  %v5086 = vpack.c.b16 %v5047, %v5046
  %v5087 = vpack.c.b16 %v5049, %v5048
  %v5088 = vpack.c.b16 %v5051, %v5050
  %v5089 = vpack.c.b16 %v5053, %v5052
  %v5090 = vpack.c.b16 %v5055, %v5054
  %v5091 = vpack.c.b16 %v5057, %v5056
  %v5092 = vpack.c.b16 %v5059, %v5058
  %v5093 = vpack.c.b16 %v5061, %v5060
  %5126 = vmatprep.subr.bf16.mxu0 0
  %5127 = vmatpush1.bf16.msra.mxu0 %v5062
  %5128 = vmatprep.subr.bf16.mxu0 0
  %5129 = vmatpush1.bf16.msra.mxu0 %v5063
  %5130 = vmatprep.subr.bf16.mxu0 0
  %5131 = vmatpush1.bf16.msra.mxu0 %v5064
  %5132 = vmatprep.subr.bf16.mxu0 0
  %5133 = vmatpush1.bf16.msra.mxu0 %v5065
  %5134 = vmatprep.subr.bf16.mxu0 0
  %5135 = vmatpush1.bf16.msra.mxu0 %v5066
  %5136 = vmatprep.subr.bf16.mxu0 0
  %5137 = vmatpush1.bf16.msra.mxu0 %v5067
  %5138 = vmatprep.subr.bf16.mxu0 0
  %5139 = vmatpush1.bf16.msra.mxu0 %v5068
  %5140 = vmatprep.subr.bf16.mxu0 0
  %5141 = vmatpush1.bf16.msra.mxu0 %v5069
  %5142 = vmatprep.subr.bf16.mxu0 0
  %5143 = vmatpush1.bf16.msra.mxu0 %v5070
  %5144 = vmatprep.subr.bf16.mxu0 0
  %5145 = vmatpush1.bf16.msra.mxu0 %v5071
  %5146 = vmatprep.subr.bf16.mxu0 0
  %5147 = vmatpush1.bf16.msra.mxu0 %v5072
  %5148 = vmatprep.subr.bf16.mxu0 0
  %5149 = vmatpush1.bf16.msra.mxu0 %v5073
  %5150 = vmatprep.subr.bf16.mxu0 0
  %5151 = vmatpush1.bf16.msra.mxu0 %v5074
  %5152 = vmatprep.subr.bf16.mxu0 0
  %5153 = vmatpush1.bf16.msra.mxu0 %v5075
  %5154 = vmatprep.subr.bf16.mxu0 0
  %5155 = vmatpush1.bf16.msra.mxu0 %v5076
  %5156 = vmatprep.subr.bf16.mxu0 0
  %5157 = vmatpush1.bf16.msra.mxu0 %v5077
  %5158 = vmatprep.mubr.bf16.mxu0 %v3898
  %5159 = vmatmul.mubr.bf16.gmra.mrb[0].mxu0 %v3897
  %v5160 = vpop.f32.mrb[0].mxu0
  %v5161 = vadd.f32 %v4932, %v5160
  %v5162 = vpop.f32.mrb[0].mxu0
  %v5163 = vpop.f32.mrb[0].mxu0
  %v5164 = vadd.f32 %v4932, %v5163
  %v5165 = vpop.f32.mrb[0].mxu0
  %5166 = vdwg.mxu0
  %5167 = vmatprep.subr.bf16.mxu0 0
  %5168 = vmatpush1.bf16.msra.mxu0 %v5078
  %5169 = vmatprep.subr.bf16.mxu0 0
  %5170 = vmatpush1.bf16.msra.mxu0 %v5079
  %5171 = vmatprep.subr.bf16.mxu0 0
  %5172 = vmatpush1.bf16.msra.mxu0 %v5080
  %5173 = vmatprep.subr.bf16.mxu0 0
  %5174 = vmatpush1.bf16.msra.mxu0 %v5081
  %5175 = vmatprep.subr.bf16.mxu0 0
  %5176 = vmatpush1.bf16.msra.mxu0 %v5082
  %5177 = vmatprep.subr.bf16.mxu0 0
  %5178 = vmatpush1.bf16.msra.mxu0 %v5083
  %5179 = vmatprep.subr.bf16.mxu0 0
  %5180 = vmatpush1.bf16.msra.mxu0 %v5084
  %5181 = vmatprep.subr.bf16.mxu0 0
  %5182 = vmatpush1.bf16.msra.mxu0 %v5085
  %5183 = vmatprep.subr.bf16.mxu0 0
  %5184 = vmatpush1.bf16.msra.mxu0 %v5086
  %5185 = vmatprep.subr.bf16.mxu0 0
  %5186 = vmatpush1.bf16.msra.mxu0 %v5087
  %5187 = vmatprep.subr.bf16.mxu0 0
  %5188 = vmatpush1.bf16.msra.mxu0 %v5088
  %5189 = vmatprep.subr.bf16.mxu0 0
  %5190 = vmatpush1.bf16.msra.mxu0 %v5089
  %5191 = vmatprep.subr.bf16.mxu0 0
  %5192 = vmatpush1.bf16.msra.mxu0 %v5090
  %5193 = vmatprep.subr.bf16.mxu0 0
  %5194 = vmatpush1.bf16.msra.mxu0 %v5091
  %5195 = vmatprep.subr.bf16.mxu0 0
  %5196 = vmatpush1.bf16.msra.mxu0 %v5092
  %5197 = vmatprep.subr.bf16.mxu0 0
  %5198 = vmatpush1.bf16.msra.mxu0 %v5093
  %5199 = vmatprep.mubr.bf16.mxu0 %v3900
  %5200 = vmatmul.mubr.bf16.gmra.mrb[0].mxu0 %v3899
  %v5201 = vpop.f32.mrb[0].mxu0
  %v5202 = vadd.f32 %v5161, %v5201
  %v5203 = vpop.f32.mrb[0].mxu0
  %v5204 = vpop.f32.mrb[0].mxu0
  %v5205 = vadd.f32 %v5164, %v5204
  %v5206 = vpop.f32.mrb[0].mxu0
  %5207 = vdwg.mxu0
  %v5208 = vadd.f32 %v4769, %v5202
  %v5209 = vadd.f32 %v4773, %v5205
  %5210 = vmax.xlane.f32.xlu0 %v5208
  %v5211 = vpop.xlane.xlu0 %5210
  %5212 = vmax.xlane.f32.xlu0 %v5209
  %v5213 = vpop.xlane.xlu0 %5212
  %v5214 = vsub.f32 %v5208, %v5211
  %v5215 = vsub.f32 %v5209, %v5213
  %v5216 = vmul.f32 %v5214, 1.442695
  %v5217 = vpow.pop %v5216
  %v5218 = vmul.f32 %v5215, 1.442695
  %v5219 = vpow.pop %v5218
  %5220 = vadd.xlane.f32.xlu0 %v5217
  %v5221 = vpop.xlane.xlu0 %5220
  %5222 = vadd.xlane.f32.xlu0 %v5219
  %v5223 = vpop.xlane.xlu0 %5222
  %v5224 = vrcp.pop %v5221
  %v5225 = vmul.f32 %v5217, %v5224
  %v5226 = vrcp.pop %v5223
  %v5227 = vmul.f32 %v5219, %v5226
  %5228 = vst [vmem:[%s7] sm:$0xff] %v5225
  %5229 = vst [vmem:[%s7 + $0x20] sm:$0xff] %v5227
  %v5230 = vadd.f32 %v4771, %v5202
  %v5231 = vadd.f32 %v4775, %v5205
  %5232 = vmax.xlane.f32.xlu0 %v5230
  %v5233 = vpop.xlane.xlu0 %5232
  %5234 = vmax.xlane.f32.xlu0 %v5231
  %v5235 = vpop.xlane.xlu0 %5234
  %v5236 = vsub.f32 %v5230, %v5233
  %v5237 = vsub.f32 %v5231, %v5235
  %v5238 = vmul.f32 %v5236, 1.442695
  %v5239 = vpow.pop %v5238
  %v5240 = vmul.f32 %v5237, 1.442695
  %v5241 = vpow.pop %v5240
  %5242 = vadd.xlane.f32.xlu0 %v5239
  %v5243 = vpop.xlane.xlu0 %5242
  %5244 = vadd.xlane.f32.xlu0 %v5241
  %v5245 = vpop.xlane.xlu0 %5244
  %v5246 = vrcp.pop %v5243
  %v5247 = vmul.f32 %v5239, %v5246
  %v5248 = vrcp.pop %v5245
  %v5249 = vmul.f32 %v5241, %v5248
  %5250 = vst [vmem:[%s7 + $0x8] sm:$0xff] %v5247
  %5251 = vst [vmem:[%s7 + $0x28] sm:$0xff] %v5249
  %v5252 = vadd.f32 %v4855, %v5202
  %v5253 = vadd.f32 %v4859, %v5205
  %5254 = vmax.xlane.f32.xlu0 %v5252
  %v5255 = vpop.xlane.xlu0 %5254
  %5256 = vmax.xlane.f32.xlu0 %v5253
  %v5257 = vpop.xlane.xlu0 %5256
  %v5258 = vsub.f32 %v5252, %v5255
  %v5259 = vsub.f32 %v5253, %v5257
  %v5260 = vmul.f32 %v5258, 1.442695
  %v5261 = vpow.pop %v5260
  %v5262 = vmul.f32 %v5259, 1.442695
  %v5263 = vpow.pop %v5262
  %5264 = vadd.xlane.f32.xlu0 %v5261
  %v5265 = vpop.xlane.xlu0 %5264
  %5266 = vadd.xlane.f32.xlu0 %v5263
  %v5267 = vpop.xlane.xlu0 %5266
  %v5268 = vrcp.pop %v5265
  %v5269 = vmul.f32 %v5261, %v5268
  %v5270 = vrcp.pop %v5267
  %v5271 = vmul.f32 %v5263, %v5270
  %5272 = vst [vmem:[%s7 + $0x10] sm:$0xff] %v5269
  %5273 = vst [vmem:[%s7 + $0x30] sm:$0xff] %v5271
  %v5274 = vadd.f32 %v4857, %v5202
  %v5275 = vadd.f32 %v4861, %v5205
  %5276 = vmax.xlane.f32.xlu0 %v5274
  %v5277 = vpop.xlane.xlu0 %5276
  %5278 = vmax.xlane.f32.xlu0 %v5275
  %v5279 = vpop.xlane.xlu0 %5278
  %v5280 = vsub.f32 %v5274, %v5277
  %v5281 = vsub.f32 %v5275, %v5279
  %v5282 = vmul.f32 %v5280, 1.442695
  %v5283 = vpow.pop %v5282
  %v5284 = vmul.f32 %v5281, 1.442695
  %v5285 = vpow.pop %v5284
  %5286 = vadd.xlane.f32.xlu0 %v5283
  %v5287 = vpop.xlane.xlu0 %5286
  %5288 = vadd.xlane.f32.xlu0 %v5285
  %v5289 = vpop.xlane.xlu0 %5288
  %v5290 = vrcp.pop %v5287
  %v5291 = vmul.f32 %v5283, %v5290
  %v5292 = vrcp.pop %v5289
  %v5293 = vmul.f32 %v5285, %v5292
  %5294 = vst [vmem:[%s7 + $0x18] sm:$0xff] %v5291
  %5295 = vst [vmem:[%s7 + $0x38] sm:$0xff] %v5293
  // Predicated region
  $region30: #{forward.7} parent=0 // pred_check
    _
  $region31: #{forward.7} parent=0 // pred_check_branch
    %5297 = sbr.rel (0) target = $region33
  $region32: #{forward.7} parent=0 // pred_region
    _
  $region33: #{forward.7} parent=0 // pred_fallthru
    _
  // Predicated region
  $region34: #{forward.7} parent=0 // pred_check
    _
  $region35: #{forward.7} parent=0 // pred_check_branch
    %5299 = sbr.rel (0) target = $region37
  $region36: #{forward.7} parent=0 // pred_region
    _
  $region37: #{forward.7} parent=0 // pred_fallthru
    _

</llo_original>
